<compile_context>
chip_gen: v7x
topology: tpu7x:2x2x1
jax: 0.10.0
libtpu: 0.0.40
codegen_flags: <defaults>
</compile_context>

<pallas_src>
import functools

import jax
import jax.numpy as jnp
from jax import lax
from jax.experimental import pallas as pl
from jax.experimental.pallas import tpu as pltpu

# Scoped-VMEM limit: 48 MiB on 128-MiB-VMEM parts (v5e/v6e), ~38 MiB on v7x
# (64 MiB physical per TensorCore).
try:
    _VMEM_CAP = int(pltpu.get_tpu_info().vmem_capacity_bytes)
except Exception:
    _VMEM_CAP = 64 * 1024 * 1024
_VMEM_LIMIT_BYTES = int(min(48 * 1024 * 1024, (_VMEM_CAP * 3) // 5))


def _pick_batch_tile(n, oh, ow):
    """Pack several images per grid step when the per-image tile is small so
    the MXU sees >= ~256 rows per matmul; degenerates to 1 for big images."""
    cap = max(1, 512 // max(oh * ow, 1))
    bt = 1
    for d in range(1, n + 1):
        if n % d == 0 and d <= cap:
            bt = d
    return bt


# ----------------------------------------------------------------------------
# Fused conv kernel: (prev-BN affine + act on input, border re-zero) ->
# shifted-window MXU matmuls -> bias -> [BN stats out] -> [skip add (+affine)]
# -> [output act]
# ----------------------------------------------------------------------------
def _make_conv_kernel(*, KH, KW, OH, OW, BT, fold, in_act, has_in_affine,
                      mask, has_skip, has_skip_affine, out_act, want_stats):
    """mask: None | 'uniform' (1-px border) | 's2d' (per-s2d-group border)."""

    def kernel(*refs):
        i = 0
        x_ref = refs[i]; i += 1
        w_ref = refs[i]; i += 1
        b_ref = refs[i]; i += 1
        if has_in_affine:
            isc_ref = refs[i]; i += 1
            ish_ref = refs[i]; i += 1
        if mask == "s2d":
            rh_ref = refs[i]; i += 1
            rw_ref = refs[i]; i += 1
        if has_skip:
            skip_ref = refs[i]; i += 1
            if has_skip_affine:
                ssc_ref = refs[i]; i += 1
                ssh_ref = refs[i]; i += 1
        o_ref = refs[i]; i += 1
        if want_stats:
            sum_ref = refs[i]; i += 1
            sq_ref = refs[i]; i += 1

        HP, WP, cin = x_ref.shape[1], x_ref.shape[2], x_ref.shape[3]
        cout = o_ref.shape[-1]
        rows_n = BT * OH * OW

        # ---- fused input transform (previous layer's BN affine + activation)
        needs_transform = has_in_affine or (in_act != "none") or (mask is not None)
        if needs_transform:
            # Elementwise math in f32 (v5e VPU/EUP have no bf16 path); one
            # bf16 cast afterwards so the MXU operands stay bf16.
            x = x_ref[...].astype(jnp.float32)
            if has_in_affine:
                x = x * isc_ref[...] + ish_ref[...]
            if in_act == "tanh":
                x = jnp.tanh(x)
            elif in_act == "relu":
                x = jnp.maximum(x, 0.0)
            if mask == "uniform":
                # Spatial zero-padding logically happens *after* the previous
                # layer's activation: re-zero the 1-pixel transformed border.
                rows = lax.broadcasted_iota(jnp.int32, (HP, WP, 1), 0)
                cols = lax.broadcasted_iota(jnp.int32, (HP, WP, 1), 1)
                valid = ((rows >= 1) & (rows < HP - 1) &
                         (cols >= 1) & (cols < WP - 1))
                x = jnp.where(valid, x, 0.0)
            elif mask == "s2d":
                # Space-to-depth layout: only the sub-positions of each 2x2
                # group that were original padding get re-zeroed (group
                # (rh, rw) touches padded row 0 iff rh==0, the padded last row
                # iff rh==1, likewise for columns).
                rows = lax.broadcasted_iota(jnp.int32, (HP, WP, 1), 0)
                cols = lax.broadcasted_iota(jnp.int32, (HP, WP, 1), 1)
                rh = rh_ref[...].reshape(1, 1, cin)
                rw = rw_ref[...].reshape(1, 1, cin)
                pad_pos = (((rows == 0) & (rh < 0.5)) |
                           ((rows == HP - 1) & (rh > 0.5)) |
                           ((cols == 0) & (rw < 0.5)) |
                           ((cols == WP - 1) & (rw > 0.5)))
                x = jnp.where(pad_pos, 0.0, x)
            x = x.astype(jnp.bfloat16)
        else:
            x = x_ref[...]            # bf16, fed straight to the MXU

        # ---- convolution: shifted-window MXU matmuls, f32 accumulation -----
        acc = jnp.zeros((rows_n, cout), jnp.float32)
        if fold:
            # KW taps folded into the contraction dim: KH matmuls, K = KW*cin.
            for dh in range(KH):
                slab = jnp.concatenate(
                    [x[:, dh:dh + OH, dw:dw + OW, :] for dw in range(KW)],
                    axis=-1)
                acc = acc + jnp.dot(slab.reshape(rows_n, KW * cin), w_ref[dh],
                                    preferred_element_type=jnp.float32)
        else:
            t = 0
            for dh in range(KH):
                for dw in range(KW):
                    patch = x[:, dh:dh + OH, dw:dw + OW, :].reshape(rows_n, cin)
                    acc = acc + jnp.dot(patch, w_ref[t],
                                        preferred_element_type=jnp.float32)
                    t += 1
        acc = acc + b_ref[...]

        # ---- fused BatchNorm statistics of this conv's (pre-BN) output -----
        if want_stats:
            # TODO(synk): E[x^2]-E[x]^2 in f32 can cancel for very large
            # N*H*W; a centred two-pass reduction would be more robust.
            sum_ref[...] = jnp.sum(acc, axis=0, keepdims=True)[None]
            sq_ref[...] = jnp.sum(acc * acc, axis=0, keepdims=True)[None]

        # ---- fused residual add (optionally with the pending BN affine) ----
        out = acc
        if has_skip:
            sk = skip_ref[...].astype(jnp.float32).reshape(rows_n, cout)
            if has_skip_affine:
                sk = sk * ssc_ref[...] + ssh_ref[...]
            out = out + sk
        if out_act == "tanh":
            out = jnp.tanh(out)
        elif out_act == "relu":
            out = jnp.maximum(out, 0.0)

        o_ref[...] = out.reshape(BT, OH, OW, cout).astype(o_ref.dtype)

    return kernel


def conv2d_fused(x, w_taps, bias, *, KH, KW, OH, OW,
                 in_act="none", in_affine=None, mask=None, s2d_sel=None,
                 skip=None, skip_affine=None, out_act="none",
                 want_stats=False, out_dtype=jnp.bfloat16):
    """Stride-1 conv over an already (spatially padded / space-to-depth'ed)
    NHWC tensor `x` of shape (N, OH+KH-1, OW+KW-1, Cin).

    w_taps: (KH*KW, Cin, Cout) bf16, tap index = dh*KW + dw.
    bias / affine scales / shifts: f32 with shape (1, C).
    """
    N, HP, WP, Cin = x.shape
    T, Kc, Cout = w_taps.shape
    assert T == KH * KW and Kc == Cin
    assert HP == OH + KH - 1 and WP == OW + KW - 1

    BT = _pick_batch_tile(N, OH, OW)
    G = N // BT

    # Fold KW into the contraction dim only when the concat pieces are
    # lane-aligned (deeper K fills the 256-wide MXU on v6e/v7x; unaligned
    # channel counts would pay lane-shift relayouts instead).
    fold = (KW > 1) and (Cin % 128 == 0)
    w_pass = w_taps.reshape(KH, KW * Cin, Cout) if fold else w_taps

    kernel = _make_conv_kernel(
        KH=KH, KW=KW, OH=OH, OW=OW, BT=BT, fold=fold, in_act=in_act,
        has_in_affine=in_affine is not None, mask=mask,
        has_skip=skip is not None, has_skip_affine=skip_affine is not None,
        out_act=out_act, want_stats=want_stats)

    def vec_spec(c):
        return pl.BlockSpec((1, c), lambda n: (0, 0))

    in_specs = [
        pl.BlockSpec((BT, HP, WP, Cin), lambda n: (n, 0, 0, 0)),
        pl.BlockSpec(tuple(w_pass.shape), lambda n: (0, 0, 0)),
        vec_spec(Cout),
    ]
    args = [x, w_pass, bias]
    if in_affine is not None:
        in_specs += [vec_spec(Cin), vec_spec(Cin)]
        args += [in_affine[0], in_affine[1]]
    if mask == "s2d":
        in_specs += [vec_spec(Cin), vec_spec(Cin)]
        args += [s2d_sel[0], s2d_sel[1]]
    if skip is not None:
        in_specs.append(pl.BlockSpec((BT, OH, OW, Cout), lambda n: (n, 0, 0, 0)))
        args.append(skip)
        if skip_affine is not None:
            in_specs += [vec_spec(Cout), vec_spec(Cout)]
            args += [skip_affine[0], skip_affine[1]]

    out_shapes = [jax.ShapeDtypeStruct((N, OH, OW, Cout), out_dtype)]
    out_specs = [pl.BlockSpec((BT, OH, OW, Cout), lambda n: (n, 0, 0, 0))]
    if want_stats:
        out_shapes += [jax.ShapeDtypeStruct((G, 1, Cout), jnp.float32)] * 2
        out_specs += [pl.BlockSpec((1, 1, Cout), lambda n: (n, 0, 0))] * 2

    flops = 2 * N * OH * OW * (KH * KW * Cin) * Cout
    trans = 0
    if in_act == "tanh":
        trans += N * HP * WP * Cin
    if out_act == "tanh":
        trans += N * OH * OW * Cout
    bytes_accessed = (
        x.size * x.dtype.itemsize
        + w_pass.size * w_pass.dtype.itemsize
        + N * OH * OW * Cout * jnp.dtype(out_dtype).itemsize
        + (skip.size * skip.dtype.itemsize if skip is not None else 0))

    outs = pl.pallas_call(
        kernel,
        out_shape=tuple(out_shapes),
        grid=(G,),
        in_specs=in_specs,
        out_specs=tuple(out_specs),
        compiler_params=pltpu.CompilerParams(
            dimension_semantics=("parallel",),
            vmem_limit_bytes=_VMEM_LIMIT_BYTES),
        cost_estimate=pl.CostEstimate(
            flops=flops, transcendentals=trans, bytes_accessed=bytes_accessed),
    )(*args)
    return outs if want_stats else outs[0]


# ----------------------------------------------------------------------------
# Standalone affine + activation (only needed for the n_resid == 0 edge case).
# ----------------------------------------------------------------------------
def _affine_act_kernel(act, x_ref, s_ref, t_ref, o_ref):
    y = x_ref[...].astype(jnp.float32) * s_ref[...] + t_ref[...]
    if act == "tanh":
        y = jnp.tanh(y)
    elif act == "relu":
        y = jnp.maximum(y, 0.0)
    o_ref[...] = y.astype(o_ref.dtype)


def affine_act(x, scale, shift, act, out_dtype=jnp.bfloat16):
    N, H, W, C = x.shape
    return pl.pallas_call(
        functools.partial(_affine_act_kernel, act),
        out_shape=jax.ShapeDtypeStruct((N, H, W, C), out_dtype),
        grid=(N,),
        in_specs=[pl.BlockSpec((1, H, W, C), lambda n: (n, 0, 0, 0)),
                  pl.BlockSpec((1, C), lambda n: (0, 0)),
                  pl.BlockSpec((1, C), lambda n: (0, 0))],
        out_specs=pl.BlockSpec((1, H, W, C), lambda n: (n, 0, 0, 0)),
        compiler_params=pltpu.CompilerParams(
            dimension_semantics=("parallel",),
            vmem_limit_bytes=_VMEM_LIMIT_BYTES),
    )(x, scale, shift)


# ----------------------------------------------------------------------------
# JAX-side glue: BN finalize, weight relayout, spatial pad / space-to-depth.
# ----------------------------------------------------------------------------
def _bn_scale_shift(sum_gc, sq_gc, count, gamma, beta, eps=1e-5):
    total = jnp.sum(sum_gc, axis=0)                              # (1, C)
    total_sq = jnp.sum(sq_gc, axis=0)
    mean = total / count
    var = jnp.maximum(total_sq / count - mean * mean, 0.0)       # clamp: no NaN
    scale = gamma.reshape(1, -1).astype(jnp.float32) / jnp.sqrt(var + eps)
    shift = beta.reshape(1, -1).astype(jnp.float32) - mean * scale
    return scale, shift


def _prep_conv_weights(w, b, *, s2d=False):
    """(Cout, Cin, KH, KW) PyTorch weights -> (T, Cin_eff, Cout) bf16 taps with
    tap index = dh*KW_eff + dw.  If s2d, a stride-2 KxK conv is folded into a
    stride-1 (K/2)x(K/2) conv over a space-to-depth(2) input whose channel
    order is (rh*2 + rw)*Cin + cin."""
    Cout, Cin, KH, KW = w.shape
    wt = jnp.transpose(w, (2, 3, 1, 0))                           # (KH, KW, Cin, Cout)
    if s2d:
        wt = wt.reshape(KH // 2, 2, KW // 2, 2, Cin, Cout)        # (dh, rh, dw, rw, ci, co)
        wt = jnp.transpose(wt, (0, 2, 1, 3, 4, 5))                # (dh, dw, rh, rw, ci, co)
        taps = wt.reshape((KH // 2) * (KW // 2), 4 * Cin, Cout)
    else:
        taps = wt.reshape(KH * KW, Cin, Cout)
    bias = b.reshape(1, Cout).astype(jnp.float32)
    return taps.astype(jnp.bfloat16), bias


def _pad_spatial(x, pad):
    return jnp.pad(x, ((0, 0), (pad, pad), (pad, pad), (0, 0)))


def _pad_s2d(x, pad):
    """Zero-pad spatially, then space-to-depth by 2 (pure relayout); channel
    order of the result is (rh*2 + rw)*C + c."""
    N, H, W, C = x.shape
    xp = _pad_spatial(x, pad)
    HP, WP = H + 2 * pad, W + 2 * pad
    xs = xp.reshape(N, HP // 2, 2, WP // 2, 2, C)
    xs = jnp.transpose(xs, (0, 1, 3, 2, 4, 5)).reshape(N, HP // 2, WP // 2, 4 * C)
    return xs


# ----------------------------------------------------------------------------
# Parameter init (deterministic, mimics PyTorch default conv init ranges)
# ----------------------------------------------------------------------------
def _conv_params(key, cout, cin, kh, kw):
    kw_, kb_ = jax.random.split(key)
    fan_in = cin * kh * kw
    bound = 1.0 / jnp.sqrt(fan_in)
    w = jax.random.uniform(kw_, (cout, cin, kh, kw), jnp.float32, -bound, bound)
    b = jax.random.uniform(kb_, (cout,), jnp.float32, -bound, bound)
    return w, b


def init_encoder_params(key, feature_dim, n_resid):
    fd2 = feature_dim // 2
    keys = jax.random.split(key, 3 + 2 * max(n_resid, 1))
    p = {}
    p["conv1_w"], p["conv1_b"] = _conv_params(keys[0], fd2, 3, 4, 4)
    p["conv2_w"], p["conv2_b"] = _conv_params(keys[1], feature_dim, fd2, 4, 4)
    p["conv3_w"], p["conv3_b"] = _conv_params(keys[2], feature_dim, feature_dim, 3, 3)
    for name, c in (("bn1", fd2), ("bn2", feature_dim), ("bn3", feature_dim)):
        p[name + "_g"] = jnp.ones((c,), jnp.float32)
        p[name + "_b"] = jnp.zeros((c,), jnp.float32)
    p["res"] = []
    for r in range(n_resid):
        w3, b3 = _conv_params(keys[3 + 2 * r], feature_dim, feature_dim, 3, 3)
        w1, b1 = _conv_params(keys[4 + 2 * r], feature_dim, feature_dim, 1, 1)
        p["res"].append((w3, b3, w1, b1))
    return p


# ----------------------------------------------------------------------------
# Encoder forward
# ----------------------------------------------------------------------------
def encoder_forward(x_nchw, params):
    N, _, H, W = x_nchw.shape
    fd2 = params["conv1_w"].shape[0]
    n_resid = len(params["res"])

    x = jnp.transpose(x_nchw, (0, 2, 3, 1))                       # NCHW -> NHWC

    # ---- Block 1: Conv 4x4 s2 p1 (as 2x2 s1 over s2d input) + BN1 stats ----
    OH1, OW1 = H // 2, W // 2
    xs1 = _pad_s2d(x, 1).astype(jnp.bfloat16)                     # (N, OH1+1, OW1+1, 4*3)
    w1, b1 = _prep_conv_weights(params["conv1_w"], params["conv1_b"], s2d=True)
    c1, s1, q1 = conv2d_fused(xs1, w1, b1, KH=2, KW=2, OH=OH1, OW=OW1,
                              want_stats=True)
    scale1, shift1 = _bn_scale_shift(s1, q1, N * OH1 * OW1,
                                     params["bn1_g"], params["bn1_b"])

    # ---- Block 2: Conv 4x4 s2 p1 (s2d) + BN2 stats --------------------------
    # BN1 affine + tanh fused into conv2's input (no standalone HBM pass):
    # affine vectors tiled over the 4 s2d channel groups, border re-zeroed per
    # s2d sub-position in-kernel.
    OH2, OW2 = OH1 // 2, OW1 // 2
    xs2 = _pad_s2d(c1, 1)                                         # (N, OH2+1, OW2+1, 4*fd2)
    w2, b2 = _prep_conv_weights(params["conv2_w"], params["conv2_b"], s2d=True)
    in_sc2 = jnp.tile(scale1, (1, 4))
    in_sh2 = jnp.tile(shift1, (1, 4))
    grp = jnp.arange(4 * fd2, dtype=jnp.int32) // fd2             # s2d group per channel
    rh_vec = (grp // 2).astype(jnp.float32).reshape(1, -1)
    rw_vec = (grp % 2).astype(jnp.float32).reshape(1, -1)
    c2, s2, q2 = conv2d_fused(xs2, w2, b2, KH=2, KW=2, OH=OH2, OW=OW2,
                              in_act="tanh", in_affine=(in_sc2, in_sh2),
                              mask="s2d", s2d_sel=(rh_vec, rw_vec),
                              want_stats=True)
    scale2, shift2 = _bn_scale_shift(s2, q2, N * OH2 * OW2,
                                     params["bn2_g"], params["bn2_b"])

    # ---- Block 3: Conv 3x3 s1 p1; BN2 affine + tanh fused into the input ----
    w3, b3 = _prep_conv_weights(params["conv3_w"], params["conv3_b"])
    c3, s3, q3 = conv2d_fused(_pad_spatial(c2, 1), w3, b3, KH=3, KW=3,
                              OH=OH2, OW=OW2,
                              in_act="tanh", in_affine=(scale2, shift2),
                              mask="uniform", want_stats=True)
    scale3, shift3 = _bn_scale_shift(s3, q3, N * OH2 * OW2,
                                     params["bn3_g"], params["bn3_b"])

    # ---- ResBlock stack: y = y + Conv1x1(ReLU(Conv3x3(ReLU(y)))), final tanh
    # BN3's affine stays pending in (scale3, shift3) and is fused into the
    # first residual 3x3 conv's input and the first skip path; the inner ReLU
    # is fused into the 3x3 conv's epilogue; the final Tanh is fused into the
    # last 1x1 conv kernel.
    if n_resid == 0:
        y = affine_act(c3, scale3, shift3, "tanh")
    else:
        y = c3
        in_aff = (scale3, shift3)
        skip_aff = (scale3, shift3)
        for r, (w3r, b3r, w1r, b1r) in enumerate(params["res"]):
            last = r == n_resid - 1
            wa, ba = _prep_conv_weights(w3r, b3r)
            wb, bb = _prep_conv_weights(w1r, b1r)
            h = conv2d_fused(_pad_spatial(y, 1), wa, ba, KH=3, KW=3,
                             OH=OH2, OW=OW2,
                             in_act="relu", in_affine=in_aff,
                             mask="uniform" if in_aff is not None else None,
                             out_act="relu")
            y = conv2d_fused(h, wb, bb, KH=1, KW=1, OH=OH2, OW=OW2,
                             skip=y, skip_affine=skip_aff,
                             out_act="tanh" if last else "none")
            in_aff = None
            skip_aff = None

    # Final output is tanh-bounded -> bf16 writeback from the kernel; upcast
    # to f32 (PyTorch output dtype) after the NHWC->NCHW transpose.
    return jnp.transpose(y, (0, 3, 1, 2)).astype(jnp.float32)


# ----------------------------------------------------------------------------
if __name__ == "__main__":
    feature_dim = 32
    n_resid = 2
    N, C, H, W = 2, 3, 16, 16

    key = jax.random.PRNGKey(0)
    k_in, k_par = jax.random.split(key)
    x = jax.random.normal(k_in, (N, C, H, W), jnp.float32)
    params = init_encoder_params(k_par, feature_dim, n_resid)

    out = jax.jit(encoder_forward)(x, params)
    out = jax.block_until_ready(out)

    assert out.shape == (N, feature_dim, H // 4, W // 4), out.shape
    assert bool(jnp.all(jnp.isfinite(out)))
    assert bool(jnp.all(jnp.abs(out) <= 1.0))  # final tanh bound
    print("KERNEL_OK")
</pallas_src>

<mosaic_0001>
module attributes {stable_mosaic.version = 11 : i64} {
  func.func @kernel(%arg0: i32, %arg1: memref<2x9x9x12xbf16, #tpu.memory_space<vmem>>, %arg2: memref<4x12x16xbf16, #tpu.memory_space<vmem>>, %arg3: memref<1x16xf32, #tpu.memory_space<vmem>>, %arg4: memref<2x8x8x16xbf16, #tpu.memory_space<vmem>>, %arg5: memref<1x1x16xf32, #tpu.memory_space<vmem>>, %arg6: memref<1x1x16xf32, #tpu.memory_space<vmem>>) attributes {dimension_semantics = [#tpu.dimension_semantics<parallel>], iteration_bounds = array<i64: 1>, scalar_prefetch = 0 : i64, scratch_operands = 0 : i64, tpu.core_type = #tpu.core_type<tc>, window_params = [{transform_indices = @transform_0, window_bounds = array<i64: 2, 9, 9, 12>}, {pipeline_mode = #tpu.pipeline_mode<synchronous>, transform_indices = @transform_1, window_bounds = array<i64: 4, 12, 16>}, {pipeline_mode = #tpu.pipeline_mode<synchronous>, transform_indices = @transform_2, window_bounds = array<i64: 1, 16>}, {transform_indices = @transform_3, window_bounds = array<i64: 2, 8, 8, 16>}, {transform_indices = @transform_4, window_bounds = array<i64: 1, 1, 16>}, {transform_indices = @transform_5, window_bounds = array<i64: 1, 1, 16>}]} {
    %c0 = arith.constant 0 : index
    %c0_0 = arith.constant 0 : index
    %c0_1 = arith.constant 0 : index
    %c0_2 = arith.constant 0 : index
    %0 = vector.load %arg1[%c0, %c0_0, %c0_1, %c0_2] : memref<2x9x9x12xbf16, #tpu.memory_space<vmem>>, vector<2x9x9x12xbf16>
    %cst = arith.constant 0.000000e+00 : f32
    %1 = vector.broadcast %cst : f32 to vector<128x16xf32>
    %2 = vector.extract_strided_slice %0 {offsets = [0, 0, 0, 0], sizes = [2, 8, 8, 12], strides = [1, 1, 1, 1]} : vector<2x9x9x12xbf16> to vector<2x8x8x12xbf16>
    %3 = vector.shape_cast %2 : vector<2x8x8x12xbf16> to vector<128x12xbf16>
    %c0_3 = arith.constant 0 : index
    %c0_4 = arith.constant 0 : index
    %c0_5 = arith.constant 0 : index
    %4 = vector.load %arg2[%c0_3, %c0_4, %c0_5] : memref<4x12x16xbf16, #tpu.memory_space<vmem>>, vector<1x12x16xbf16>
    %5 = vector.shape_cast %4 : vector<1x12x16xbf16> to vector<12x16xbf16>
    %cst_6 = arith.constant dense<0.000000e+00> : vector<128x16xf32>
    %6 = tpu.matmul %3, %5, %cst_6 {dimension_numbers = #tpu.dot_dimension_numbers<[1], [0], [0], [1], [0, 0, 1, 1], [], []>} : vector<128x12xbf16>, vector<12x16xbf16>, vector<128x16xf32> -> vector<128x16xf32>
    %7 = arith.addf %1, %6 : vector<128x16xf32>
    %8 = vector.extract_strided_slice %0 {offsets = [0, 0, 1, 0], sizes = [2, 8, 8, 12], strides = [1, 1, 1, 1]} : vector<2x9x9x12xbf16> to vector<2x8x8x12xbf16>
    %9 = vector.shape_cast %8 : vector<2x8x8x12xbf16> to vector<128x12xbf16>
    %c1 = arith.constant 1 : index
    %c0_7 = arith.constant 0 : index
    %c0_8 = arith.constant 0 : index
    %10 = vector.load %arg2[%c1, %c0_7, %c0_8] : memref<4x12x16xbf16, #tpu.memory_space<vmem>>, vector<1x12x16xbf16>
    %11 = vector.shape_cast %10 : vector<1x12x16xbf16> to vector<12x16xbf16>
    %cst_9 = arith.constant dense<0.000000e+00> : vector<128x16xf32>
    %12 = tpu.matmul %9, %11, %cst_9 {dimension_numbers = #tpu.dot_dimension_numbers<[1], [0], [0], [1], [0, 0, 1, 1], [], []>} : vector<128x12xbf16>, vector<12x16xbf16>, vector<128x16xf32> -> vector<128x16xf32>
    %13 = arith.addf %7, %12 : vector<128x16xf32>
    %14 = vector.extract_strided_slice %0 {offsets = [0, 1, 0, 0], sizes = [2, 8, 8, 12], strides = [1, 1, 1, 1]} : vector<2x9x9x12xbf16> to vector<2x8x8x12xbf16>
    %15 = vector.shape_cast %14 : vector<2x8x8x12xbf16> to vector<128x12xbf16>
    %c2 = arith.constant 2 : index
    %c0_10 = arith.constant 0 : index
    %c0_11 = arith.constant 0 : index
    %16 = vector.load %arg2[%c2, %c0_10, %c0_11] : memref<4x12x16xbf16, #tpu.memory_space<vmem>>, vector<1x12x16xbf16>
    %17 = vector.shape_cast %16 : vector<1x12x16xbf16> to vector<12x16xbf16>
    %cst_12 = arith.constant dense<0.000000e+00> : vector<128x16xf32>
    %18 = tpu.matmul %15, %17, %cst_12 {dimension_numbers = #tpu.dot_dimension_numbers<[1], [0], [0], [1], [0, 0, 1, 1], [], []>} : vector<128x12xbf16>, vector<12x16xbf16>, vector<128x16xf32> -> vector<128x16xf32>
    %19 = arith.addf %13, %18 : vector<128x16xf32>
    %20 = vector.extract_strided_slice %0 {offsets = [0, 1, 1, 0], sizes = [2, 8, 8, 12], strides = [1, 1, 1, 1]} : vector<2x9x9x12xbf16> to vector<2x8x8x12xbf16>
    %21 = vector.shape_cast %20 : vector<2x8x8x12xbf16> to vector<128x12xbf16>
    %c3 = arith.constant 3 : index
    %c0_13 = arith.constant 0 : index
    %c0_14 = arith.constant 0 : index
    %22 = vector.load %arg2[%c3, %c0_13, %c0_14] : memref<4x12x16xbf16, #tpu.memory_space<vmem>>, vector<1x12x16xbf16>
    %23 = vector.shape_cast %22 : vector<1x12x16xbf16> to vector<12x16xbf16>
    %cst_15 = arith.constant dense<0.000000e+00> : vector<128x16xf32>
    %24 = tpu.matmul %21, %23, %cst_15 {dimension_numbers = #tpu.dot_dimension_numbers<[1], [0], [0], [1], [0, 0, 1, 1], [], []>} : vector<128x12xbf16>, vector<12x16xbf16>, vector<128x16xf32> -> vector<128x16xf32>
    %25 = arith.addf %19, %24 : vector<128x16xf32>
    %c0_16 = arith.constant 0 : index
    %c0_17 = arith.constant 0 : index
    %26 = vector.load %arg3[%c0_16, %c0_17] : memref<1x16xf32, #tpu.memory_space<vmem>>, vector<1x16xf32>
    %27 = vector.broadcast %26 : vector<1x16xf32> to vector<128x16xf32>
    %28 = arith.addf %25, %27 : vector<128x16xf32>
    %cst_18 = arith.constant dense<0.000000e+00> : vector<16xf32>
    %29 = vector.multi_reduction <add>, %28, %cst_18 [0] : vector<128x16xf32> to vector<16xf32>
    %30 = vector.shape_cast %29 : vector<16xf32> to vector<1x16xf32>
    %31 = vector.shape_cast %30 : vector<1x16xf32> to vector<1x1x16xf32>
    %c0_19 = arith.constant 0 : index
    %c0_20 = arith.constant 0 : index
    %c0_21 = arith.constant 0 : index
    %32 = vector.load %arg5[%c0_19, %c0_20, %c0_21] : memref<1x1x16xf32, #tpu.memory_space<vmem>>, vector<1x1x16xf32>
    tpu.vector_store %arg5[%c0_19, %c0_20, %c0_21], %31 {strides = array<i32>} : memref<1x1x16xf32, #tpu.memory_space<vmem>>, vector<1x1x16xf32>,
    %33 = arith.mulf %28, %28 : vector<128x16xf32>
    %cst_22 = arith.constant dense<0.000000e+00> : vector<16xf32>
    %34 = vector.multi_reduction <add>, %33, %cst_22 [0] : vector<128x16xf32> to vector<16xf32>
    %35 = vector.shape_cast %34 : vector<16xf32> to vector<1x16xf32>
    %36 = vector.shape_cast %35 : vector<1x16xf32> to vector<1x1x16xf32>
    %c0_23 = arith.constant 0 : index
    %c0_24 = arith.constant 0 : index
    %c0_25 = arith.constant 0 : index
    %37 = vector.load %arg6[%c0_23, %c0_24, %c0_25] : memref<1x1x16xf32, #tpu.memory_space<vmem>>, vector<1x1x16xf32>
    tpu.vector_store %arg6[%c0_23, %c0_24, %c0_25], %36 {strides = array<i32>} : memref<1x1x16xf32, #tpu.memory_space<vmem>>, vector<1x1x16xf32>,
    %38 = vector.shape_cast %28 : vector<128x16xf32> to vector<2x8x8x16xf32>
    %39 = arith.truncf %38 : vector<2x8x8x16xf32> to vector<2x8x8x16xbf16>
    %c0_26 = arith.constant 0 : index
    %c0_27 = arith.constant 0 : index
    %c0_28 = arith.constant 0 : index
    %c0_29 = arith.constant 0 : index
    %40 = vector.load %arg4[%c0_26, %c0_27, %c0_28, %c0_29] : memref<2x8x8x16xbf16, #tpu.memory_space<vmem>>, vector<2x8x8x16xbf16>
    tpu.vector_store %arg4[%c0_26, %c0_27, %c0_28, %c0_29], %39 {strides = array<i32>} : memref<2x8x8x16xbf16, #tpu.memory_space<vmem>>, vector<2x8x8x16xbf16>,
    return
  }
  func.func @transform_0(%arg0: i32) -> (i32, i32, i32, i32) {
    %c0_i32 = arith.constant 0 : i32
    %c0_i32_0 = arith.constant 0 : i32
    %c0_i32_1 = arith.constant 0 : i32
    %c0_i32_2 = arith.constant 0 : i32
    return %arg0, %c0_i32, %c0_i32_0, %c0_i32_1 : i32, i32, i32, i32
  }
  func.func @transform_1(%arg0: i32) -> (i32, i32, i32) {
    %c0_i32 = arith.constant 0 : i32
    %c0_i32_0 = arith.constant 0 : i32
    %c0_i32_1 = arith.constant 0 : i32
    %c0_i32_2 = arith.constant 0 : i32
    return %c0_i32, %c0_i32_0, %c0_i32_1 : i32, i32, i32
  }
  func.func @transform_2(%arg0: i32) -> (i32, i32) {
    %c0_i32 = arith.constant 0 : i32
    %c0_i32_0 = arith.constant 0 : i32
    %c0_i32_1 = arith.constant 0 : i32
    return %c0_i32, %c0_i32_0 : i32, i32
  }
  func.func @transform_3(%arg0: i32) -> (i32, i32, i32, i32) {
    %c0_i32 = arith.constant 0 : i32
    %c0_i32_0 = arith.constant 0 : i32
    %c0_i32_1 = arith.constant 0 : i32
    %c0_i32_2 = arith.constant 0 : i32
    return %arg0, %c0_i32, %c0_i32_0, %c0_i32_1 : i32, i32, i32, i32
  }
  func.func @transform_4(%arg0: i32) -> (i32, i32, i32) {
    %c0_i32 = arith.constant 0 : i32
    %c0_i32_0 = arith.constant 0 : i32
    %c0_i32_1 = arith.constant 0 : i32
    return %arg0, %c0_i32, %c0_i32_0 : i32, i32, i32
  }
  func.func @transform_5(%arg0: i32) -> (i32, i32, i32) {
    %c0_i32 = arith.constant 0 : i32
    %c0_i32_0 = arith.constant 0 : i32
    %c0_i32_1 = arith.constant 0 : i32
    return %arg0, %c0_i32, %c0_i32_0 : i32, i32, i32
  }
}

module attributes {stable_mosaic.version = 11 : i64} {
  func.func @kernel(%arg0: i32, %arg1: memref<2x5x5x64xbf16, #tpu.memory_space<vmem>>, %arg2: memref<4x64x32xbf16, #tpu.memory_space<vmem>>, %arg3: memref<1x32xf32, #tpu.memory_space<vmem>>, %arg4: memref<1x64xf32, #tpu.memory_space<vmem>>, %arg5: memref<1x64xf32, #tpu.memory_space<vmem>>, %arg6: memref<1x64xf32, #tpu.memory_space<vmem>>, %arg7: memref<1x64xf32, #tpu.memory_space<vmem>>, %arg8: memref<2x4x4x32xbf16, #tpu.memory_space<vmem>>, %arg9: memref<1x1x32xf32, #tpu.memory_space<vmem>>, %arg10: memref<1x1x32xf32, #tpu.memory_space<vmem>>) attributes {dimension_semantics = [#tpu.dimension_semantics<parallel>], iteration_bounds = array<i64: 1>, scalar_prefetch = 0 : i64, scratch_operands = 0 : i64, tpu.core_type = #tpu.core_type<tc>, window_params = [{transform_indices = @transform_0, window_bounds = array<i64: 2, 5, 5, 64>}, {pipeline_mode = #tpu.pipeline_mode<synchronous>, transform_indices = @transform_1, window_bounds = array<i64: 4, 64, 32>}, {pipeline_mode = #tpu.pipeline_mode<synchronous>, transform_indices = @transform_2, window_bounds = array<i64: 1, 32>}, {pipeline_mode = #tpu.pipeline_mode<synchronous>, transform_indices = @transform_3, window_bounds = array<i64: 1, 64>}, {pipeline_mode = #tpu.pipeline_mode<synchronous>, transform_indices = @transform_4, window_bounds = array<i64: 1, 64>}, {pipeline_mode = #tpu.pipeline_mode<synchronous>, transform_indices = @transform_5, window_bounds = array<i64: 1, 64>}, {pipeline_mode = #tpu.pipeline_mode<synchronous>, transform_indices = @transform_6, window_bounds = array<i64: 1, 64>}, {transform_indices = @transform_7, window_bounds = array<i64: 2, 4, 4, 32>}, {transform_indices = @transform_8, window_bounds = array<i64: 1, 1, 32>}, {transform_indices = @transform_9, window_bounds = array<i64: 1, 1, 32>}]} {
    %c0 = arith.constant 0 : index
    %c0_0 = arith.constant 0 : index
    %c0_1 = arith.constant 0 : index
    %c0_2 = arith.constant 0 : index
    %0 = vector.load %arg1[%c0, %c0_0, %c0_1, %c0_2] : memref<2x5x5x64xbf16, #tpu.memory_space<vmem>>, vector<2x5x5x64xbf16>
    %1 = arith.extf %0 : vector<2x5x5x64xbf16> to vector<2x5x5x64xf32>
    %c0_3 = arith.constant 0 : index
    %c0_4 = arith.constant 0 : index
    %2 = vector.load %arg4[%c0_3, %c0_4] : memref<1x64xf32, #tpu.memory_space<vmem>>, vector<1x64xf32>
    %3 = vector.shape_cast %2 : vector<1x64xf32> to vector<1x1x1x64xf32>
    %4 = vector.broadcast %3 : vector<1x1x1x64xf32> to vector<2x5x5x64xf32>
    %5 = arith.mulf %1, %4 : vector<2x5x5x64xf32>
    %c0_5 = arith.constant 0 : index
    %c0_6 = arith.constant 0 : index
    %6 = vector.load %arg5[%c0_5, %c0_6] : memref<1x64xf32, #tpu.memory_space<vmem>>, vector<1x64xf32>
    %7 = vector.shape_cast %6 : vector<1x64xf32> to vector<1x1x1x64xf32>
    %8 = vector.broadcast %7 : vector<1x1x1x64xf32> to vector<2x5x5x64xf32>
    %9 = arith.addf %5, %8 : vector<2x5x5x64xf32>
    %10 = math.tanh %9 : vector<2x5x5x64xf32>
    %11 = tpu.iota {dimensions = array<i32: 0>} : vector<5x5x1xi32>
    %12 = tpu.iota {dimensions = array<i32: 1>} : vector<5x5x1xi32>
    %c0_7 = arith.constant 0 : index
    %c0_8 = arith.constant 0 : index
    %13 = vector.load %arg6[%c0_7, %c0_8] : memref<1x64xf32, #tpu.memory_space<vmem>>, vector<1x64xf32>
    %14 = vector.shape_cast %13 : vector<1x64xf32> to vector<1x1x64xf32>
    %c0_9 = arith.constant 0 : index
    %c0_10 = arith.constant 0 : index
    %15 = vector.load %arg7[%c0_9, %c0_10] : memref<1x64xf32, #tpu.memory_space<vmem>>, vector<1x64xf32>
    %16 = vector.shape_cast %15 : vector<1x64xf32> to vector<1x1x64xf32>
    %c0_i32 = arith.constant 0 : i32
    %17 = vector.broadcast %c0_i32 : i32 to vector<5x5x1xi32>
    %18 = arith.cmpi eq, %11, %17 : vector<5x5x1xi32>
    %cst = arith.constant 5.000000e-01 : f32
    %19 = vector.broadcast %cst : f32 to vector<1x1x64xf32>
    %20 = arith.cmpf olt, %14, %19 : vector<1x1x64xf32>
    %21 = vector.broadcast %18 : vector<5x5x1xi1> to vector<5x5x64xi1>
    %22 = vector.broadcast %20 : vector<1x1x64xi1> to vector<5x5x64xi1>
    %23 = arith.andi %21, %22 : vector<5x5x64xi1>
    %c4_i32 = arith.constant 4 : i32
    %24 = vector.broadcast %c4_i32 : i32 to vector<5x5x1xi32>
    %25 = arith.cmpi eq, %11, %24 : vector<5x5x1xi32>
    %cst_11 = arith.constant 5.000000e-01 : f32
    %26 = vector.broadcast %cst_11 : f32 to vector<1x1x64xf32>
    %27 = arith.cmpf ogt, %14, %26 : vector<1x1x64xf32>
    %28 = vector.broadcast %25 : vector<5x5x1xi1> to vector<5x5x64xi1>
    %29 = vector.broadcast %27 : vector<1x1x64xi1> to vector<5x5x64xi1>
    %30 = arith.andi %28, %29 : vector<5x5x64xi1>
    %31 = arith.ori %23, %30 : vector<5x5x64xi1>
    %c0_i32_12 = arith.constant 0 : i32
    %32 = vector.broadcast %c0_i32_12 : i32 to vector<5x5x1xi32>
    %33 = arith.cmpi eq, %12, %32 : vector<5x5x1xi32>
    %cst_13 = arith.constant 5.000000e-01 : f32
    %34 = vector.broadcast %cst_13 : f32 to vector<1x1x64xf32>
    %35 = arith.cmpf olt, %16, %34 : vector<1x1x64xf32>
    %36 = vector.broadcast %33 : vector<5x5x1xi1> to vector<5x5x64xi1>
    %37 = vector.broadcast %35 : vector<1x1x64xi1> to vector<5x5x64xi1>
    %38 = arith.andi %36, %37 : vector<5x5x64xi1>
    %39 = arith.ori %31, %38 : vector<5x5x64xi1>
    %c4_i32_14 = arith.constant 4 : i32
    %40 = vector.broadcast %c4_i32_14 : i32 to vector<5x5x1xi32>
    %41 = arith.cmpi eq, %12, %40 : vector<5x5x1xi32>
    %cst_15 = arith.constant 5.000000e-01 : f32
    %42 = vector.broadcast %cst_15 : f32 to vector<1x1x64xf32>
    %43 = arith.cmpf ogt, %16, %42 : vector<1x1x64xf32>
    %44 = vector.broadcast %41 : vector<5x5x1xi1> to vector<5x5x64xi1>
    %45 = vector.broadcast %43 : vector<1x1x64xi1> to vector<5x5x64xi1>
    %46 = arith.andi %44, %45 : vector<5x5x64xi1>
    %47 = arith.ori %39, %46 : vector<5x5x64xi1>
    %cst_16 = arith.constant 0.000000e+00 : f32
    %48 = vector.shape_cast %47 : vector<5x5x64xi1> to vector<1x5x5x64xi1>
    %49 = vector.broadcast %48 : vector<1x5x5x64xi1> to vector<2x5x5x64xi1>
    %50 = vector.broadcast %cst_16 : f32 to vector<2x5x5x64xf32>
    %51 = arith.select %49, %50, %10 : vector<2x5x5x64xi1>, vector<2x5x5x64xf32>
    %52 = arith.truncf %51 : vector<2x5x5x64xf32> to vector<2x5x5x64xbf16>
    %cst_17 = arith.constant 0.000000e+00 : f32
    %53 = vector.broadcast %cst_17 : f32 to vector<32x32xf32>
    %54 = vector.extract_strided_slice %52 {offsets = [0, 0, 0, 0], sizes = [2, 4, 4, 64], strides = [1, 1, 1, 1]} : vector<2x5x5x64xbf16> to vector<2x4x4x64xbf16>
    %55 = vector.shape_cast %54 : vector<2x4x4x64xbf16> to vector<32x64xbf16>
    %c0_18 = arith.constant 0 : index
    %c0_19 = arith.constant 0 : index
    %c0_20 = arith.constant 0 : index
    %56 = vector.load %arg2[%c0_18, %c0_19, %c0_20] : memref<4x64x32xbf16, #tpu.memory_space<vmem>>, vector<1x64x32xbf16>
    %57 = vector.shape_cast %56 : vector<1x64x32xbf16> to vector<64x32xbf16>
    %cst_21 = arith.constant dense<0.000000e+00> : vector<32x32xf32>
    %58 = tpu.matmul %55, %57, %cst_21 {dimension_numbers = #tpu.dot_dimension_numbers<[1], [0], [0], [1], [0, 0, 1, 1], [], []>} : vector<32x64xbf16>, vector<64x32xbf16>, vector<32x32xf32> -> vector<32x32xf32>
    %59 = arith.addf %53, %58 : vector<32x32xf32>
    %60 = vector.extract_strided_slice %52 {offsets = [0, 0, 1, 0], sizes = [2, 4, 4, 64], strides = [1, 1, 1, 1]} : vector<2x5x5x64xbf16> to vector<2x4x4x64xbf16>
    %61 = vector.shape_cast %60 : vector<2x4x4x64xbf16> to vector<32x64xbf16>
    %c1 = arith.constant 1 : index
    %c0_22 = arith.constant 0 : index
    %c0_23 = arith.constant 0 : index
    %62 = vector.load %arg2[%c1, %c0_22, %c0_23] : memref<4x64x32xbf16, #tpu.memory_space<vmem>>, vector<1x64x32xbf16>
    %63 = vector.shape_cast %62 : vector<1x64x32xbf16> to vector<64x32xbf16>
    %cst_24 = arith.constant dense<0.000000e+00> : vector<32x32xf32>
    %64 = tpu.matmul %61, %63, %cst_24 {dimension_numbers = #tpu.dot_dimension_numbers<[1], [0], [0], [1], [0, 0, 1, 1], [], []>} : vector<32x64xbf16>, vector<64x32xbf16>, vector<32x32xf32> -> vector<32x32xf32>
    %65 = arith.addf %59, %64 : vector<32x32xf32>
    %66 = vector.extract_strided_slice %52 {offsets = [0, 1, 0, 0], sizes = [2, 4, 4, 64], strides = [1, 1, 1, 1]} : vector<2x5x5x64xbf16> to vector<2x4x4x64xbf16>
    %67 = vector.shape_cast %66 : vector<2x4x4x64xbf16> to vector<32x64xbf16>
    %c2 = arith.constant 2 : index
    %c0_25 = arith.constant 0 : index
    %c0_26 = arith.constant 0 : index
    %68 = vector.load %arg2[%c2, %c0_25, %c0_26] : memref<4x64x32xbf16, #tpu.memory_space<vmem>>, vector<1x64x32xbf16>
    %69 = vector.shape_cast %68 : vector<1x64x32xbf16> to vector<64x32xbf16>
    %cst_27 = arith.constant dense<0.000000e+00> : vector<32x32xf32>
    %70 = tpu.matmul %67, %69, %cst_27 {dimension_numbers = #tpu.dot_dimension_numbers<[1], [0], [0], [1], [0, 0, 1, 1], [], []>} : vector<32x64xbf16>, vector<64x32xbf16>, vector<32x32xf32> -> vector<32x32xf32>
    %71 = arith.addf %65, %70 : vector<32x32xf32>
    %72 = vector.extract_strided_slice %52 {offsets = [0, 1, 1, 0], sizes = [2, 4, 4, 64], strides = [1, 1, 1, 1]} : vector<2x5x5x64xbf16> to vector<2x4x4x64xbf16>
    %73 = vector.shape_cast %72 : vector<2x4x4x64xbf16> to vector<32x64xbf16>
    %c3 = arith.constant 3 : index
    %c0_28 = arith.constant 0 : index
    %c0_29 = arith.constant 0 : index
    %74 = vector.load %arg2[%c3, %c0_28, %c0_29] : memref<4x64x32xbf16, #tpu.memory_space<vmem>>, vector<1x64x32xbf16>
    %75 = vector.shape_cast %74 : vector<1x64x32xbf16> to vector<64x32xbf16>
    %cst_30 = arith.constant dense<0.000000e+00> : vector<32x32xf32>
    %76 = tpu.matmul %73, %75, %cst_30 {dimension_numbers = #tpu.dot_dimension_numbers<[1], [0], [0], [1], [0, 0, 1, 1], [], []>} : vector<32x64xbf16>, vector<64x32xbf16>, vector<32x32xf32> -> vector<32x32xf32>
    %77 = arith.addf %71, %76 : vector<32x32xf32>
    %c0_31 = arith.constant 0 : index
    %c0_32 = arith.constant 0 : index
    %78 = vector.load %arg3[%c0_31, %c0_32] : memref<1x32xf32, #tpu.memory_space<vmem>>, vector<1x32xf32>
    %79 = vector.broadcast %78 : vector<1x32xf32> to vector<32x32xf32>
    %80 = arith.addf %77, %79 : vector<32x32xf32>
    %cst_33 = arith.constant dense<0.000000e+00> : vector<32xf32>
    %81 = vector.multi_reduction <add>, %80, %cst_33 [0] : vector<32x32xf32> to vector<32xf32>
    %82 = vector.shape_cast %81 : vector<32xf32> to vector<1x32xf32>
    %83 = vector.shape_cast %82 : vector<1x32xf32> to vector<1x1x32xf32>
    %c0_34 = arith.constant 0 : index
    %c0_35 = arith.constant 0 : index
    %c0_36 = arith.constant 0 : index
    %84 = vector.load %arg9[%c0_34, %c0_35, %c0_36] : memref<1x1x32xf32, #tpu.memory_space<vmem>>, vector<1x1x32xf32>
    tpu.vector_store %arg9[%c0_34, %c0_35, %c0_36], %83 {strides = array<i32>} : memref<1x1x32xf32, #tpu.memory_space<vmem>>, vector<1x1x32xf32>,
    %85 = arith.mulf %80, %80 : vector<32x32xf32>
    %cst_37 = arith.constant dense<0.000000e+00> : vector<32xf32>
    %86 = vector.multi_reduction <add>, %85, %cst_37 [0] : vector<32x32xf32> to vector<32xf32>
    %87 = vector.shape_cast %86 : vector<32xf32> to vector<1x32xf32>
    %88 = vector.shape_cast %87 : vector<1x32xf32> to vector<1x1x32xf32>
    %c0_38 = arith.constant 0 : index
    %c0_39 = arith.constant 0 : index
    %c0_40 = arith.constant 0 : index
    %89 = vector.load %arg10[%c0_38, %c0_39, %c0_40] : memref<1x1x32xf32, #tpu.memory_space<vmem>>, vector<1x1x32xf32>
    tpu.vector_store %arg10[%c0_38, %c0_39, %c0_40], %88 {strides = array<i32>} : memref<1x1x32xf32, #tpu.memory_space<vmem>>, vector<1x1x32xf32>,
    %90 = vector.shape_cast %80 : vector<32x32xf32> to vector<2x4x4x32xf32>
    %91 = arith.truncf %90 : vector<2x4x4x32xf32> to vector<2x4x4x32xbf16>
    %c0_41 = arith.constant 0 : index
    %c0_42 = arith.constant 0 : index
    %c0_43 = arith.constant 0 : index
    %c0_44 = arith.constant 0 : index
    %92 = vector.load %arg8[%c0_41, %c0_42, %c0_43, %c0_44] : memref<2x4x4x32xbf16, #tpu.memory_space<vmem>>, vector<2x4x4x32xbf16>
    tpu.vector_store %arg8[%c0_41, %c0_42, %c0_43, %c0_44], %91 {strides = array<i32>} : memref<2x4x4x32xbf16, #tpu.memory_space<vmem>>, vector<2x4x4x32xbf16>,
    return
  }
  func.func @transform_0(%arg0: i32) -> (i32, i32, i32, i32) {
    %c0_i32 = arith.constant 0 : i32
    %c0_i32_0 = arith.constant 0 : i32
    %c0_i32_1 = arith.constant 0 : i32
    %c0_i32_2 = arith.constant 0 : i32
    return %arg0, %c0_i32, %c0_i32_0, %c0_i32_1 : i32, i32, i32, i32
  }
  func.func @transform_1(%arg0: i32) -> (i32, i32, i32) {
    %c0_i32 = arith.constant 0 : i32
    %c0_i32_0 = arith.constant 0 : i32
    %c0_i32_1 = arith.constant 0 : i32
    %c0_i32_2 = arith.constant 0 : i32
    return %c0_i32, %c0_i32_0, %c0_i32_1 : i32, i32, i32
  }
  func.func @transform_2(%arg0: i32) -> (i32, i32) {
    %c0_i32 = arith.constant 0 : i32
    %c0_i32_0 = arith.constant 0 : i32
    %c0_i32_1 = arith.constant 0 : i32
    return %c0_i32, %c0_i32_0 : i32, i32
  }
  func.func @transform_3(%arg0: i32) -> (i32, i32) {
    %c0_i32 = arith.constant 0 : i32
    %c0_i32_0 = arith.constant 0 : i32
    %c0_i32_1 = arith.constant 0 : i32
    return %c0_i32, %c0_i32_0 : i32, i32
  }
  func.func @transform_4(%arg0: i32) -> (i32, i32) {
    %c0_i32 = arith.constant 0 : i32
    %c0_i32_0 = arith.constant 0 : i32
    %c0_i32_1 = arith.constant 0 : i32
    return %c0_i32, %c0_i32_0 : i32, i32
  }
  func.func @transform_5(%arg0: i32) -> (i32, i32) {
    %c0_i32 = arith.constant 0 : i32
    %c0_i32_0 = arith.constant 0 : i32
    %c0_i32_1 = arith.constant 0 : i32
    return %c0_i32, %c0_i32_0 : i32, i32
  }
  func.func @transform_6(%arg0: i32) -> (i32, i32) {
    %c0_i32 = arith.constant 0 : i32
    %c0_i32_0 = arith.constant 0 : i32
    %c0_i32_1 = arith.constant 0 : i32
    return %c0_i32, %c0_i32_0 : i32, i32
  }
  func.func @transform_7(%arg0: i32) -> (i32, i32, i32, i32) {
    %c0_i32 = arith.constant 0 : i32
    %c0_i32_0 = arith.constant 0 : i32
    %c0_i32_1 = arith.constant 0 : i32
    %c0_i32_2 = arith.constant 0 : i32
    return %arg0, %c0_i32, %c0_i32_0, %c0_i32_1 : i32, i32, i32, i32
  }
  func.func @transform_8(%arg0: i32) -> (i32, i32, i32) {
    %c0_i32 = arith.constant 0 : i32
    %c0_i32_0 = arith.constant 0 : i32
    %c0_i32_1 = arith.constant 0 : i32
    return %arg0, %c0_i32, %c0_i32_0 : i32, i32, i32
  }
  func.func @transform_9(%arg0: i32) -> (i32, i32, i32) {
    %c0_i32 = arith.constant 0 : i32
    %c0_i32_0 = arith.constant 0 : i32
    %c0_i32_1 = arith.constant 0 : i32
    return %arg0, %c0_i32, %c0_i32_0 : i32, i32, i32
  }
}

module attributes {stable_mosaic.version = 11 : i64} {
  func.func @kernel(%arg0: i32, %arg1: memref<2x4x4x32xbf16, #tpu.memory_space<vmem>>, %arg2: memref<1x32x32xbf16, #tpu.memory_space<vmem>>, %arg3: memref<1x32xf32, #tpu.memory_space<vmem>>, %arg4: memref<2x4x4x32xbf16, #tpu.memory_space<vmem>>, %arg5: memref<1x32xf32, #tpu.memory_space<vmem>>, %arg6: memref<1x32xf32, #tpu.memory_space<vmem>>, %arg7: memref<2x4x4x32xbf16, #tpu.memory_space<vmem>>) attributes {dimension_semantics = [#tpu.dimension_semantics<parallel>], iteration_bounds = array<i64: 1>, scalar_prefetch = 0 : i64, scratch_operands = 0 : i64, tpu.core_type = #tpu.core_type<tc>, window_params = [{transform_indices = @transform_0, window_bounds = array<i64: 2, 4, 4, 32>}, {pipeline_mode = #tpu.pipeline_mode<synchronous>, transform_indices = @transform_1, window_bounds = array<i64: 1, 32, 32>}, {pipeline_mode = #tpu.pipeline_mode<synchronous>, transform_indices = @transform_2, window_bounds = array<i64: 1, 32>}, {transform_indices = @transform_3, window_bounds = array<i64: 2, 4, 4, 32>}, {pipeline_mode = #tpu.pipeline_mode<synchronous>, transform_indices = @transform_4, window_bounds = array<i64: 1, 32>}, {pipeline_mode = #tpu.pipeline_mode<synchronous>, transform_indices = @transform_5, window_bounds = array<i64: 1, 32>}, {transform_indices = @transform_6, window_bounds = array<i64: 2, 4, 4, 32>}]} {
    %c0 = arith.constant 0 : index
    %c0_0 = arith.constant 0 : index
    %c0_1 = arith.constant 0 : index
    %c0_2 = arith.constant 0 : index
    %0 = vector.load %arg1[%c0, %c0_0, %c0_1, %c0_2] : memref<2x4x4x32xbf16, #tpu.memory_space<vmem>>, vector<2x4x4x32xbf16>
    %cst = arith.constant 0.000000e+00 : f32
    %1 = vector.broadcast %cst : f32 to vector<32x32xf32>
    %2 = vector.shape_cast %0 : vector<2x4x4x32xbf16> to vector<32x32xbf16>
    %c0_3 = arith.constant 0 : index
    %c0_4 = arith.constant 0 : index
    %c0_5 = arith.constant 0 : index
    %3 = vector.load %arg2[%c0_3, %c0_4, %c0_5] : memref<1x32x32xbf16, #tpu.memory_space<vmem>>, vector<1x32x32xbf16>
    %4 = vector.shape_cast %3 : vector<1x32x32xbf16> to vector<32x32xbf16>
    %cst_6 = arith.constant dense<0.000000e+00> : vector<32x32xf32>
    %5 = tpu.matmul %2, %4, %cst_6 {dimension_numbers = #tpu.dot_dimension_numbers<[1], [0], [0], [1], [0, 0, 1, 1], [], []>} : vector<32x32xbf16>, vector<32x32xbf16>, vector<32x32xf32> -> vector<32x32xf32>
    %6 = arith.addf %1, %5 : vector<32x32xf32>
    %c0_7 = arith.constant 0 : index
    %c0_8 = arith.constant 0 : index
    %7 = vector.load %arg3[%c0_7, %c0_8] : memref<1x32xf32, #tpu.memory_space<vmem>>, vector<1x32xf32>
    %8 = vector.broadcast %7 : vector<1x32xf32> to vector<32x32xf32>
    %9 = arith.addf %6, %8 : vector<32x32xf32>
    %c0_9 = arith.constant 0 : index
    %c0_10 = arith.constant 0 : index
    %c0_11 = arith.constant 0 : index
    %c0_12 = arith.constant 0 : index
    %10 = vector.load %arg4[%c0_9, %c0_10, %c0_11, %c0_12] : memref<2x4x4x32xbf16, #tpu.memory_space<vmem>>, vector<2x4x4x32xbf16>
    %11 = arith.extf %10 : vector<2x4x4x32xbf16> to vector<2x4x4x32xf32>
    %12 = vector.shape_cast %11 : vector<2x4x4x32xf32> to vector<32x32xf32>
    %c0_13 = arith.constant 0 : index
    %c0_14 = arith.constant 0 : index
    %13 = vector.load %arg5[%c0_13, %c0_14] : memref<1x32xf32, #tpu.memory_space<vmem>>, vector<1x32xf32>
    %14 = vector.broadcast %13 : vector<1x32xf32> to vector<32x32xf32>
    %15 = arith.mulf %12, %14 : vector<32x32xf32>
    %c0_15 = arith.constant 0 : index
    %c0_16 = arith.constant 0 : index
    %16 = vector.load %arg6[%c0_15, %c0_16] : memref<1x32xf32, #tpu.memory_space<vmem>>, vector<1x32xf32>
    %17 = vector.broadcast %16 : vector<1x32xf32> to vector<32x32xf32>
    %18 = arith.addf %15, %17 : vector<32x32xf32>
    %19 = arith.addf %9, %18 : vector<32x32xf32>
    %20 = vector.shape_cast %19 : vector<32x32xf32> to vector<2x4x4x32xf32>
    %21 = arith.truncf %20 : vector<2x4x4x32xf32> to vector<2x4x4x32xbf16>
    %c0_17 = arith.constant 0 : index
    %c0_18 = arith.constant 0 : index
    %c0_19 = arith.constant 0 : index
    %c0_20 = arith.constant 0 : index
    %22 = vector.load %arg7[%c0_17, %c0_18, %c0_19, %c0_20] : memref<2x4x4x32xbf16, #tpu.memory_space<vmem>>, vector<2x4x4x32xbf16>
    tpu.vector_store %arg7[%c0_17, %c0_18, %c0_19, %c0_20], %21 {strides = array<i32>} : memref<2x4x4x32xbf16, #tpu.memory_space<vmem>>, vector<2x4x4x32xbf16>,
    return
  }
  func.func @transform_0(%arg0: i32) -> (i32, i32, i32, i32) {
    %c0_i32 = arith.constant 0 : i32
    %c0_i32_0 = arith.constant 0 : i32
    %c0_i32_1 = arith.constant 0 : i32
    %c0_i32_2 = arith.constant 0 : i32
    return %arg0, %c0_i32, %c0_i32_0, %c0_i32_1 : i32, i32, i32, i32
  }
  func.func @transform_1(%arg0: i32) -> (i32, i32, i32) {
    %c0_i32 = arith.constant 0 : i32
    %c0_i32_0 = arith.constant 0 : i32
    %c0_i32_1 = arith.constant 0 : i32
    %c0_i32_2 = arith.constant 0 : i32
    return %c0_i32, %c0_i32_0, %c0_i32_1 : i32, i32, i32
  }
  func.func @transform_2(%arg0: i32) -> (i32, i32) {
    %c0_i32 = arith.constant 0 : i32
    %c0_i32_0 = arith.constant 0 : i32
    %c0_i32_1 = arith.constant 0 : i32
    return %c0_i32, %c0_i32_0 : i32, i32
  }
  func.func @transform_3(%arg0: i32) -> (i32, i32, i32, i32) {
    %c0_i32 = arith.constant 0 : i32
    %c0_i32_0 = arith.constant 0 : i32
    %c0_i32_1 = arith.constant 0 : i32
    %c0_i32_2 = arith.constant 0 : i32
    return %arg0, %c0_i32, %c0_i32_0, %c0_i32_1 : i32, i32, i32, i32
  }
  func.func @transform_4(%arg0: i32) -> (i32, i32) {
    %c0_i32 = arith.constant 0 : i32
    %c0_i32_0 = arith.constant 0 : i32
    %c0_i32_1 = arith.constant 0 : i32
    return %c0_i32, %c0_i32_0 : i32, i32
  }
  func.func @transform_5(%arg0: i32) -> (i32, i32) {
    %c0_i32 = arith.constant 0 : i32
    %c0_i32_0 = arith.constant 0 : i32
    %c0_i32_1 = arith.constant 0 : i32
    return %c0_i32, %c0_i32_0 : i32, i32
  }
  func.func @transform_6(%arg0: i32) -> (i32, i32, i32, i32) {
    %c0_i32 = arith.constant 0 : i32
    %c0_i32_0 = arith.constant 0 : i32
    %c0_i32_1 = arith.constant 0 : i32
    %c0_i32_2 = arith.constant 0 : i32
    return %arg0, %c0_i32, %c0_i32_0, %c0_i32_1 : i32, i32, i32, i32
  }
}

module attributes {stable_mosaic.version = 11 : i64} {
  func.func @kernel(%arg0: i32, %arg1: memref<2x6x6x32xbf16, #tpu.memory_space<vmem>>, %arg2: memref<9x32x32xbf16, #tpu.memory_space<vmem>>, %arg3: memref<1x32xf32, #tpu.memory_space<vmem>>, %arg4: memref<1x32xf32, #tpu.memory_space<vmem>>, %arg5: memref<1x32xf32, #tpu.memory_space<vmem>>, %arg6: memref<2x4x4x32xbf16, #tpu.memory_space<vmem>>) attributes {dimension_semantics = [#tpu.dimension_semantics<parallel>], iteration_bounds = array<i64: 1>, scalar_prefetch = 0 : i64, scratch_operands = 0 : i64, tpu.core_type = #tpu.core_type<tc>, window_params = [{transform_indices = @transform_0, window_bounds = array<i64: 2, 6, 6, 32>}, {pipeline_mode = #tpu.pipeline_mode<synchronous>, transform_indices = @transform_1, window_bounds = array<i64: 9, 32, 32>}, {pipeline_mode = #tpu.pipeline_mode<synchronous>, transform_indices = @transform_2, window_bounds = array<i64: 1, 32>}, {pipeline_mode = #tpu.pipeline_mode<synchronous>, transform_indices = @transform_3, window_bounds = array<i64: 1, 32>}, {pipeline_mode = #tpu.pipeline_mode<synchronous>, transform_indices = @transform_4, window_bounds = array<i64: 1, 32>}, {transform_indices = @transform_5, window_bounds = array<i64: 2, 4, 4, 32>}]} {
    %c0 = arith.constant 0 : index
    %c0_0 = arith.constant 0 : index
    %c0_1 = arith.constant 0 : index
    %c0_2 = arith.constant 0 : index
    %0 = vector.load %arg1[%c0, %c0_0, %c0_1, %c0_2] : memref<2x6x6x32xbf16, #tpu.memory_space<vmem>>, vector<2x6x6x32xbf16>
    %1 = arith.extf %0 : vector<2x6x6x32xbf16> to vector<2x6x6x32xf32>
    %c0_3 = arith.constant 0 : index
    %c0_4 = arith.constant 0 : index
    %2 = vector.load %arg4[%c0_3, %c0_4] : memref<1x32xf32, #tpu.memory_space<vmem>>, vector<1x32xf32>
    %3 = vector.shape_cast %2 : vector<1x32xf32> to vector<1x1x1x32xf32>
    %4 = vector.broadcast %3 : vector<1x1x1x32xf32> to vector<2x6x6x32xf32>
    %5 = arith.mulf %1, %4 : vector<2x6x6x32xf32>
    %c0_5 = arith.constant 0 : index
    %c0_6 = arith.constant 0 : index
    %6 = vector.load %arg5[%c0_5, %c0_6] : memref<1x32xf32, #tpu.memory_space<vmem>>, vector<1x32xf32>
    %7 = vector.shape_cast %6 : vector<1x32xf32> to vector<1x1x1x32xf32>
    %8 = vector.broadcast %7 : vector<1x1x1x32xf32> to vector<2x6x6x32xf32>
    %9 = arith.addf %5, %8 : vector<2x6x6x32xf32>
    %cst = arith.constant 0.000000e+00 : f32
    %10 = vector.broadcast %cst : f32 to vector<2x6x6x32xf32>
    %11 = arith.maximumf %9, %10 : vector<2x6x6x32xf32>
    %12 = tpu.iota {dimensions = array<i32: 0>} : vector<6x6x1xi32>
    %13 = tpu.iota {dimensions = array<i32: 1>} : vector<6x6x1xi32>
    %c1_i32 = arith.constant 1 : i32
    %14 = vector.broadcast %c1_i32 : i32 to vector<6x6x1xi32>
    %15 = arith.cmpi sge, %12, %14 : vector<6x6x1xi32>
    %c5_i32 = arith.constant 5 : i32
    %16 = vector.broadcast %c5_i32 : i32 to vector<6x6x1xi32>
    %17 = arith.cmpi slt, %12, %16 : vector<6x6x1xi32>
    %18 = arith.andi %15, %17 : vector<6x6x1xi1>
    %c1_i32_7 = arith.constant 1 : i32
    %19 = vector.broadcast %c1_i32_7 : i32 to vector<6x6x1xi32>
    %20 = arith.cmpi sge, %13, %19 : vector<6x6x1xi32>
    %21 = arith.andi %18, %20 : vector<6x6x1xi1>
    %c5_i32_8 = arith.constant 5 : i32
    %22 = vector.broadcast %c5_i32_8 : i32 to vector<6x6x1xi32>
    %23 = arith.cmpi slt, %13, %22 : vector<6x6x1xi32>
    %24 = arith.andi %21, %23 : vector<6x6x1xi1>
    %cst_9 = arith.constant 0.000000e+00 : f32
    %25 = vector.shape_cast %24 : vector<6x6x1xi1> to vector<1x6x6x1xi1>
    %26 = vector.broadcast %25 : vector<1x6x6x1xi1> to vector<2x6x6x32xi1>
    %27 = vector.broadcast %cst_9 : f32 to vector<2x6x6x32xf32>
    %28 = arith.select %26, %11, %27 : vector<2x6x6x32xi1>, vector<2x6x6x32xf32>
    %29 = arith.truncf %28 : vector<2x6x6x32xf32> to vector<2x6x6x32xbf16>
    %cst_10 = arith.constant 0.000000e+00 : f32
    %30 = vector.broadcast %cst_10 : f32 to vector<32x32xf32>
    %31 = vector.extract_strided_slice %29 {offsets = [0, 0, 0, 0], sizes = [2, 4, 4, 32], strides = [1, 1, 1, 1]} : vector<2x6x6x32xbf16> to vector<2x4x4x32xbf16>
    %32 = vector.shape_cast %31 : vector<2x4x4x32xbf16> to vector<32x32xbf16>
    %c0_11 = arith.constant 0 : index
    %c0_12 = arith.constant 0 : index
    %c0_13 = arith.constant 0 : index
    %33 = vector.load %arg2[%c0_11, %c0_12, %c0_13] : memref<9x32x32xbf16, #tpu.memory_space<vmem>>, vector<1x32x32xbf16>
    %34 = vector.shape_cast %33 : vector<1x32x32xbf16> to vector<32x32xbf16>
    %cst_14 = arith.constant dense<0.000000e+00> : vector<32x32xf32>
    %35 = tpu.matmul %32, %34, %cst_14 {dimension_numbers = #tpu.dot_dimension_numbers<[1], [0], [0], [1], [0, 0, 1, 1], [], []>} : vector<32x32xbf16>, vector<32x32xbf16>, vector<32x32xf32> -> vector<32x32xf32>
    %36 = arith.addf %30, %35 : vector<32x32xf32>
    %37 = vector.extract_strided_slice %29 {offsets = [0, 0, 1, 0], sizes = [2, 4, 4, 32], strides = [1, 1, 1, 1]} : vector<2x6x6x32xbf16> to vector<2x4x4x32xbf16>
    %38 = vector.shape_cast %37 : vector<2x4x4x32xbf16> to vector<32x32xbf16>
    %c1 = arith.constant 1 : index
    %c0_15 = arith.constant 0 : index
    %c0_16 = arith.constant 0 : index
    %39 = vector.load %arg2[%c1, %c0_15, %c0_16] : memref<9x32x32xbf16, #tpu.memory_space<vmem>>, vector<1x32x32xbf16>
    %40 = vector.shape_cast %39 : vector<1x32x32xbf16> to vector<32x32xbf16>
    %cst_17 = arith.constant dense<0.000000e+00> : vector<32x32xf32>
    %41 = tpu.matmul %38, %40, %cst_17 {dimension_numbers = #tpu.dot_dimension_numbers<[1], [0], [0], [1], [0, 0, 1, 1], [], []>} : vector<32x32xbf16>, vector<32x32xbf16>, vector<32x32xf32> -> vector<32x32xf32>
    %42 = arith.addf %36, %41 : vector<32x32xf32>
    %43 = vector.extract_strided_slice %29 {offsets = [0, 0, 2, 0], sizes = [2, 4, 4, 32], strides = [1, 1, 1, 1]} : vector<2x6x6x32xbf16> to vector<2x4x4x32xbf16>
    %44 = vector.shape_cast %43 : vector<2x4x4x32xbf16> to vector<32x32xbf16>
    %c2 = arith.constant 2 : index
    %c0_18 = arith.constant 0 : index
    %c0_19 = arith.constant 0 : index
    %45 = vector.load %arg2[%c2, %c0_18, %c0_19] : memref<9x32x32xbf16, #tpu.memory_space<vmem>>, vector<1x32x32xbf16>
    %46 = vector.shape_cast %45 : vector<1x32x32xbf16> to vector<32x32xbf16>
    %cst_20 = arith.constant dense<0.000000e+00> : vector<32x32xf32>
    %47 = tpu.matmul %44, %46, %cst_20 {dimension_numbers = #tpu.dot_dimension_numbers<[1], [0], [0], [1], [0, 0, 1, 1], [], []>} : vector<32x32xbf16>, vector<32x32xbf16>, vector<32x32xf32> -> vector<32x32xf32>
    %48 = arith.addf %42, %47 : vector<32x32xf32>
    %49 = vector.extract_strided_slice %29 {offsets = [0, 1, 0, 0], sizes = [2, 4, 4, 32], strides = [1, 1, 1, 1]} : vector<2x6x6x32xbf16> to vector<2x4x4x32xbf16>
    %50 = vector.shape_cast %49 : vector<2x4x4x32xbf16> to vector<32x32xbf16>
    %c3 = arith.constant 3 : index
    %c0_21 = arith.constant 0 : index
    %c0_22 = arith.constant 0 : index
    %51 = vector.load %arg2[%c3, %c0_21, %c0_22] : memref<9x32x32xbf16, #tpu.memory_space<vmem>>, vector<1x32x32xbf16>
    %52 = vector.shape_cast %51 : vector<1x32x32xbf16> to vector<32x32xbf16>
    %cst_23 = arith.constant dense<0.000000e+00> : vector<32x32xf32>
    %53 = tpu.matmul %50, %52, %cst_23 {dimension_numbers = #tpu.dot_dimension_numbers<[1], [0], [0], [1], [0, 0, 1, 1], [], []>} : vector<32x32xbf16>, vector<32x32xbf16>, vector<32x32xf32> -> vector<32x32xf32>
    %54 = arith.addf %48, %53 : vector<32x32xf32>
    %55 = vector.extract_strided_slice %29 {offsets = [0, 1, 1, 0], sizes = [2, 4, 4, 32], strides = [1, 1, 1, 1]} : vector<2x6x6x32xbf16> to vector<2x4x4x32xbf16>
    %56 = vector.shape_cast %55 : vector<2x4x4x32xbf16> to vector<32x32xbf16>
    %c4 = arith.constant 4 : index
    %c0_24 = arith.constant 0 : index
    %c0_25 = arith.constant 0 : index
    %57 = vector.load %arg2[%c4, %c0_24, %c0_25] : memref<9x32x32xbf16, #tpu.memory_space<vmem>>, vector<1x32x32xbf16>
    %58 = vector.shape_cast %57 : vector<1x32x32xbf16> to vector<32x32xbf16>
    %cst_26 = arith.constant dense<0.000000e+00> : vector<32x32xf32>
    %59 = tpu.matmul %56, %58, %cst_26 {dimension_numbers = #tpu.dot_dimension_numbers<[1], [0], [0], [1], [0, 0, 1, 1], [], []>} : vector<32x32xbf16>, vector<32x32xbf16>, vector<32x32xf32> -> vector<32x32xf32>
    %60 = arith.addf %54, %59 : vector<32x32xf32>
    %61 = vector.extract_strided_slice %29 {offsets = [0, 1, 2, 0], sizes = [2, 4, 4, 32], strides = [1, 1, 1, 1]} : vector<2x6x6x32xbf16> to vector<2x4x4x32xbf16>
    %62 = vector.shape_cast %61 : vector<2x4x4x32xbf16> to vector<32x32xbf16>
    %c5 = arith.constant 5 : index
    %c0_27 = arith.constant 0 : index
    %c0_28 = arith.constant 0 : index
    %63 = vector.load %arg2[%c5, %c0_27, %c0_28] : memref<9x32x32xbf16, #tpu.memory_space<vmem>>, vector<1x32x32xbf16>
    %64 = vector.shape_cast %63 : vector<1x32x32xbf16> to vector<32x32xbf16>
    %cst_29 = arith.constant dense<0.000000e+00> : vector<32x32xf32>
    %65 = tpu.matmul %62, %64, %cst_29 {dimension_numbers = #tpu.dot_dimension_numbers<[1], [0], [0], [1], [0, 0, 1, 1], [], []>} : vector<32x32xbf16>, vector<32x32xbf16>, vector<32x32xf32> -> vector<32x32xf32>
    %66 = arith.addf %60, %65 : vector<32x32xf32>
    %67 = vector.extract_strided_slice %29 {offsets = [0, 2, 0, 0], sizes = [2, 4, 4, 32], strides = [1, 1, 1, 1]} : vector<2x6x6x32xbf16> to vector<2x4x4x32xbf16>
    %68 = vector.shape_cast %67 : vector<2x4x4x32xbf16> to vector<32x32xbf16>
    %c6 = arith.constant 6 : index
    %c0_30 = arith.constant 0 : index
    %c0_31 = arith.constant 0 : index
    %69 = vector.load %arg2[%c6, %c0_30, %c0_31] : memref<9x32x32xbf16, #tpu.memory_space<vmem>>, vector<1x32x32xbf16>
    %70 = vector.shape_cast %69 : vector<1x32x32xbf16> to vector<32x32xbf16>
    %cst_32 = arith.constant dense<0.000000e+00> : vector<32x32xf32>
    %71 = tpu.matmul %68, %70, %cst_32 {dimension_numbers = #tpu.dot_dimension_numbers<[1], [0], [0], [1], [0, 0, 1, 1], [], []>} : vector<32x32xbf16>, vector<32x32xbf16>, vector<32x32xf32> -> vector<32x32xf32>
    %72 = arith.addf %66, %71 : vector<32x32xf32>
    %73 = vector.extract_strided_slice %29 {offsets = [0, 2, 1, 0], sizes = [2, 4, 4, 32], strides = [1, 1, 1, 1]} : vector<2x6x6x32xbf16> to vector<2x4x4x32xbf16>
    %74 = vector.shape_cast %73 : vector<2x4x4x32xbf16> to vector<32x32xbf16>
    %c7 = arith.constant 7 : index
    %c0_33 = arith.constant 0 : index
    %c0_34 = arith.constant 0 : index
    %75 = vector.load %arg2[%c7, %c0_33, %c0_34] : memref<9x32x32xbf16, #tpu.memory_space<vmem>>, vector<1x32x32xbf16>
    %76 = vector.shape_cast %75 : vector<1x32x32xbf16> to vector<32x32xbf16>
    %cst_35 = arith.constant dense<0.000000e+00> : vector<32x32xf32>
    %77 = tpu.matmul %74, %76, %cst_35 {dimension_numbers = #tpu.dot_dimension_numbers<[1], [0], [0], [1], [0, 0, 1, 1], [], []>} : vector<32x32xbf16>, vector<32x32xbf16>, vector<32x32xf32> -> vector<32x32xf32>
    %78 = arith.addf %72, %77 : vector<32x32xf32>
    %79 = vector.extract_strided_slice %29 {offsets = [0, 2, 2, 0], sizes = [2, 4, 4, 32], strides = [1, 1, 1, 1]} : vector<2x6x6x32xbf16> to vector<2x4x4x32xbf16>
    %80 = vector.shape_cast %79 : vector<2x4x4x32xbf16> to vector<32x32xbf16>
    %c8 = arith.constant 8 : index
    %c0_36 = arith.constant 0 : index
    %c0_37 = arith.constant 0 : index
    %81 = vector.load %arg2[%c8, %c0_36, %c0_37] : memref<9x32x32xbf16, #tpu.memory_space<vmem>>, vector<1x32x32xbf16>
    %82 = vector.shape_cast %81 : vector<1x32x32xbf16> to vector<32x32xbf16>
    %cst_38 = arith.constant dense<0.000000e+00> : vector<32x32xf32>
    %83 = tpu.matmul %80, %82, %cst_38 {dimension_numbers = #tpu.dot_dimension_numbers<[1], [0], [0], [1], [0, 0, 1, 1], [], []>} : vector<32x32xbf16>, vector<32x32xbf16>, vector<32x32xf32> -> vector<32x32xf32>
    %84 = arith.addf %78, %83 : vector<32x32xf32>
    %c0_39 = arith.constant 0 : index
    %c0_40 = arith.constant 0 : index
    %85 = vector.load %arg3[%c0_39, %c0_40] : memref<1x32xf32, #tpu.memory_space<vmem>>, vector<1x32xf32>
    %86 = vector.broadcast %85 : vector<1x32xf32> to vector<32x32xf32>
    %87 = arith.addf %84, %86 : vector<32x32xf32>
    %cst_41 = arith.constant 0.000000e+00 : f32
    %88 = vector.broadcast %cst_41 : f32 to vector<32x32xf32>
    %89 = arith.maximumf %87, %88 : vector<32x32xf32>
    %90 = vector.shape_cast %89 : vector<32x32xf32> to vector<2x4x4x32xf32>
    %91 = arith.truncf %90 : vector<2x4x4x32xf32> to vector<2x4x4x32xbf16>
    %c0_42 = arith.constant 0 : index
    %c0_43 = arith.constant 0 : index
    %c0_44 = arith.constant 0 : index
    %c0_45 = arith.constant 0 : index
    %92 = vector.load %arg6[%c0_42, %c0_43, %c0_44, %c0_45] : memref<2x4x4x32xbf16, #tpu.memory_space<vmem>>, vector<2x4x4x32xbf16>
    tpu.vector_store %arg6[%c0_42, %c0_43, %c0_44, %c0_45], %91 {strides = array<i32>} : memref<2x4x4x32xbf16, #tpu.memory_space<vmem>>, vector<2x4x4x32xbf16>,
    return
  }
  func.func @transform_0(%arg0: i32) -> (i32, i32, i32, i32) {
    %c0_i32 = arith.constant 0 : i32
    %c0_i32_0 = arith.constant 0 : i32
    %c0_i32_1 = arith.constant 0 : i32
    %c0_i32_2 = arith.constant 0 : i32
    return %arg0, %c0_i32, %c0_i32_0, %c0_i32_1 : i32, i32, i32, i32
  }
  func.func @transform_1(%arg0: i32) -> (i32, i32, i32) {
    %c0_i32 = arith.constant 0 : i32
    %c0_i32_0 = arith.constant 0 : i32
    %c0_i32_1 = arith.constant 0 : i32
    %c0_i32_2 = arith.constant 0 : i32
    return %c0_i32, %c0_i32_0, %c0_i32_1 : i32, i32, i32
  }
  func.func @transform_2(%arg0: i32) -> (i32, i32) {
    %c0_i32 = arith.constant 0 : i32
    %c0_i32_0 = arith.constant 0 : i32
    %c0_i32_1 = arith.constant 0 : i32
    return %c0_i32, %c0_i32_0 : i32, i32
  }
  func.func @transform_3(%arg0: i32) -> (i32, i32) {
    %c0_i32 = arith.constant 0 : i32
    %c0_i32_0 = arith.constant 0 : i32
    %c0_i32_1 = arith.constant 0 : i32
    return %c0_i32, %c0_i32_0 : i32, i32
  }
  func.func @transform_4(%arg0: i32) -> (i32, i32) {
    %c0_i32 = arith.constant 0 : i32
    %c0_i32_0 = arith.constant 0 : i32
    %c0_i32_1 = arith.constant 0 : i32
    return %c0_i32, %c0_i32_0 : i32, i32
  }
  func.func @transform_5(%arg0: i32) -> (i32, i32, i32, i32) {
    %c0_i32 = arith.constant 0 : i32
    %c0_i32_0 = arith.constant 0 : i32
    %c0_i32_1 = arith.constant 0 : i32
    %c0_i32_2 = arith.constant 0 : i32
    return %arg0, %c0_i32, %c0_i32_0, %c0_i32_1 : i32, i32, i32, i32
  }
}

module attributes {stable_mosaic.version = 11 : i64} {
  func.func @kernel(%arg0: i32, %arg1: memref<2x6x6x32xbf16, #tpu.memory_space<vmem>>, %arg2: memref<9x32x32xbf16, #tpu.memory_space<vmem>>, %arg3: memref<1x32xf32, #tpu.memory_space<vmem>>, %arg4: memref<1x32xf32, #tpu.memory_space<vmem>>, %arg5: memref<1x32xf32, #tpu.memory_space<vmem>>, %arg6: memref<2x4x4x32xbf16, #tpu.memory_space<vmem>>, %arg7: memref<1x1x32xf32, #tpu.memory_space<vmem>>, %arg8: memref<1x1x32xf32, #tpu.memory_space<vmem>>) attributes {dimension_semantics = [#tpu.dimension_semantics<parallel>], iteration_bounds = array<i64: 1>, scalar_prefetch = 0 : i64, scratch_operands = 0 : i64, tpu.core_type = #tpu.core_type<tc>, window_params = [{transform_indices = @transform_0, window_bounds = array<i64: 2, 6, 6, 32>}, {pipeline_mode = #tpu.pipeline_mode<synchronous>, transform_indices = @transform_1, window_bounds = array<i64: 9, 32, 32>}, {pipeline_mode = #tpu.pipeline_mode<synchronous>, transform_indices = @transform_2, window_bounds = array<i64: 1, 32>}, {pipeline_mode = #tpu.pipeline_mode<synchronous>, transform_indices = @transform_3, window_bounds = array<i64: 1, 32>}, {pipeline_mode = #tpu.pipeline_mode<synchronous>, transform_indices = @transform_4, window_bounds = array<i64: 1, 32>}, {transform_indices = @transform_5, window_bounds = array<i64: 2, 4, 4, 32>}, {transform_indices = @transform_6, window_bounds = array<i64: 1, 1, 32>}, {transform_indices = @transform_7, window_bounds = array<i64: 1, 1, 32>}]} {
    %c0 = arith.constant 0 : index
    %c0_0 = arith.constant 0 : index
    %c0_1 = arith.constant 0 : index
    %c0_2 = arith.constant 0 : index
    %0 = vector.load %arg1[%c0, %c0_0, %c0_1, %c0_2] : memref<2x6x6x32xbf16, #tpu.memory_space<vmem>>, vector<2x6x6x32xbf16>
    %1 = arith.extf %0 : vector<2x6x6x32xbf16> to vector<2x6x6x32xf32>
    %c0_3 = arith.constant 0 : index
    %c0_4 = arith.constant 0 : index
    %2 = vector.load %arg4[%c0_3, %c0_4] : memref<1x32xf32, #tpu.memory_space<vmem>>, vector<1x32xf32>
    %3 = vector.shape_cast %2 : vector<1x32xf32> to vector<1x1x1x32xf32>
    %4 = vector.broadcast %3 : vector<1x1x1x32xf32> to vector<2x6x6x32xf32>
    %5 = arith.mulf %1, %4 : vector<2x6x6x32xf32>
    %c0_5 = arith.constant 0 : index
    %c0_6 = arith.constant 0 : index
    %6 = vector.load %arg5[%c0_5, %c0_6] : memref<1x32xf32, #tpu.memory_space<vmem>>, vector<1x32xf32>
    %7 = vector.shape_cast %6 : vector<1x32xf32> to vector<1x1x1x32xf32>
    %8 = vector.broadcast %7 : vector<1x1x1x32xf32> to vector<2x6x6x32xf32>
    %9 = arith.addf %5, %8 : vector<2x6x6x32xf32>
    %10 = math.tanh %9 : vector<2x6x6x32xf32>
    %11 = tpu.iota {dimensions = array<i32: 0>} : vector<6x6x1xi32>
    %12 = tpu.iota {dimensions = array<i32: 1>} : vector<6x6x1xi32>
    %c1_i32 = arith.constant 1 : i32
    %13 = vector.broadcast %c1_i32 : i32 to vector<6x6x1xi32>
    %14 = arith.cmpi sge, %11, %13 : vector<6x6x1xi32>
    %c5_i32 = arith.constant 5 : i32
    %15 = vector.broadcast %c5_i32 : i32 to vector<6x6x1xi32>
    %16 = arith.cmpi slt, %11, %15 : vector<6x6x1xi32>
    %17 = arith.andi %14, %16 : vector<6x6x1xi1>
    %c1_i32_7 = arith.constant 1 : i32
    %18 = vector.broadcast %c1_i32_7 : i32 to vector<6x6x1xi32>
    %19 = arith.cmpi sge, %12, %18 : vector<6x6x1xi32>
    %20 = arith.andi %17, %19 : vector<6x6x1xi1>
    %c5_i32_8 = arith.constant 5 : i32
    %21 = vector.broadcast %c5_i32_8 : i32 to vector<6x6x1xi32>
    %22 = arith.cmpi slt, %12, %21 : vector<6x6x1xi32>
    %23 = arith.andi %20, %22 : vector<6x6x1xi1>
    %cst = arith.constant 0.000000e+00 : f32
    %24 = vector.shape_cast %23 : vector<6x6x1xi1> to vector<1x6x6x1xi1>
    %25 = vector.broadcast %24 : vector<1x6x6x1xi1> to vector<2x6x6x32xi1>
    %26 = vector.broadcast %cst : f32 to vector<2x6x6x32xf32>
    %27 = arith.select %25, %10, %26 : vector<2x6x6x32xi1>, vector<2x6x6x32xf32>
    %28 = arith.truncf %27 : vector<2x6x6x32xf32> to vector<2x6x6x32xbf16>
    %cst_9 = arith.constant 0.000000e+00 : f32
    %29 = vector.broadcast %cst_9 : f32 to vector<32x32xf32>
    %30 = vector.extract_strided_slice %28 {offsets = [0, 0, 0, 0], sizes = [2, 4, 4, 32], strides = [1, 1, 1, 1]} : vector<2x6x6x32xbf16> to vector<2x4x4x32xbf16>
    %31 = vector.shape_cast %30 : vector<2x4x4x32xbf16> to vector<32x32xbf16>
    %c0_10 = arith.constant 0 : index
    %c0_11 = arith.constant 0 : index
    %c0_12 = arith.constant 0 : index
    %32 = vector.load %arg2[%c0_10, %c0_11, %c0_12] : memref<9x32x32xbf16, #tpu.memory_space<vmem>>, vector<1x32x32xbf16>
    %33 = vector.shape_cast %32 : vector<1x32x32xbf16> to vector<32x32xbf16>
    %cst_13 = arith.constant dense<0.000000e+00> : vector<32x32xf32>
    %34 = tpu.matmul %31, %33, %cst_13 {dimension_numbers = #tpu.dot_dimension_numbers<[1], [0], [0], [1], [0, 0, 1, 1], [], []>} : vector<32x32xbf16>, vector<32x32xbf16>, vector<32x32xf32> -> vector<32x32xf32>
    %35 = arith.addf %29, %34 : vector<32x32xf32>
    %36 = vector.extract_strided_slice %28 {offsets = [0, 0, 1, 0], sizes = [2, 4, 4, 32], strides = [1, 1, 1, 1]} : vector<2x6x6x32xbf16> to vector<2x4x4x32xbf16>
    %37 = vector.shape_cast %36 : vector<2x4x4x32xbf16> to vector<32x32xbf16>
    %c1 = arith.constant 1 : index
    %c0_14 = arith.constant 0 : index
    %c0_15 = arith.constant 0 : index
    %38 = vector.load %arg2[%c1, %c0_14, %c0_15] : memref<9x32x32xbf16, #tpu.memory_space<vmem>>, vector<1x32x32xbf16>
    %39 = vector.shape_cast %38 : vector<1x32x32xbf16> to vector<32x32xbf16>
    %cst_16 = arith.constant dense<0.000000e+00> : vector<32x32xf32>
    %40 = tpu.matmul %37, %39, %cst_16 {dimension_numbers = #tpu.dot_dimension_numbers<[1], [0], [0], [1], [0, 0, 1, 1], [], []>} : vector<32x32xbf16>, vector<32x32xbf16>, vector<32x32xf32> -> vector<32x32xf32>
    %41 = arith.addf %35, %40 : vector<32x32xf32>
    %42 = vector.extract_strided_slice %28 {offsets = [0, 0, 2, 0], sizes = [2, 4, 4, 32], strides = [1, 1, 1, 1]} : vector<2x6x6x32xbf16> to vector<2x4x4x32xbf16>
    %43 = vector.shape_cast %42 : vector<2x4x4x32xbf16> to vector<32x32xbf16>
    %c2 = arith.constant 2 : index
    %c0_17 = arith.constant 0 : index
    %c0_18 = arith.constant 0 : index
    %44 = vector.load %arg2[%c2, %c0_17, %c0_18] : memref<9x32x32xbf16, #tpu.memory_space<vmem>>, vector<1x32x32xbf16>
    %45 = vector.shape_cast %44 : vector<1x32x32xbf16> to vector<32x32xbf16>
    %cst_19 = arith.constant dense<0.000000e+00> : vector<32x32xf32>
    %46 = tpu.matmul %43, %45, %cst_19 {dimension_numbers = #tpu.dot_dimension_numbers<[1], [0], [0], [1], [0, 0, 1, 1], [], []>} : vector<32x32xbf16>, vector<32x32xbf16>, vector<32x32xf32> -> vector<32x32xf32>
    %47 = arith.addf %41, %46 : vector<32x32xf32>
    %48 = vector.extract_strided_slice %28 {offsets = [0, 1, 0, 0], sizes = [2, 4, 4, 32], strides = [1, 1, 1, 1]} : vector<2x6x6x32xbf16> to vector<2x4x4x32xbf16>
    %49 = vector.shape_cast %48 : vector<2x4x4x32xbf16> to vector<32x32xbf16>
    %c3 = arith.constant 3 : index
    %c0_20 = arith.constant 0 : index
    %c0_21 = arith.constant 0 : index
    %50 = vector.load %arg2[%c3, %c0_20, %c0_21] : memref<9x32x32xbf16, #tpu.memory_space<vmem>>, vector<1x32x32xbf16>
    %51 = vector.shape_cast %50 : vector<1x32x32xbf16> to vector<32x32xbf16>
    %cst_22 = arith.constant dense<0.000000e+00> : vector<32x32xf32>
    %52 = tpu.matmul %49, %51, %cst_22 {dimension_numbers = #tpu.dot_dimension_numbers<[1], [0], [0], [1], [0, 0, 1, 1], [], []>} : vector<32x32xbf16>, vector<32x32xbf16>, vector<32x32xf32> -> vector<32x32xf32>
    %53 = arith.addf %47, %52 : vector<32x32xf32>
    %54 = vector.extract_strided_slice %28 {offsets = [0, 1, 1, 0], sizes = [2, 4, 4, 32], strides = [1, 1, 1, 1]} : vector<2x6x6x32xbf16> to vector<2x4x4x32xbf16>
    %55 = vector.shape_cast %54 : vector<2x4x4x32xbf16> to vector<32x32xbf16>
    %c4 = arith.constant 4 : index
    %c0_23 = arith.constant 0 : index
    %c0_24 = arith.constant 0 : index
    %56 = vector.load %arg2[%c4, %c0_23, %c0_24] : memref<9x32x32xbf16, #tpu.memory_space<vmem>>, vector<1x32x32xbf16>
    %57 = vector.shape_cast %56 : vector<1x32x32xbf16> to vector<32x32xbf16>
    %cst_25 = arith.constant dense<0.000000e+00> : vector<32x32xf32>
    %58 = tpu.matmul %55, %57, %cst_25 {dimension_numbers = #tpu.dot_dimension_numbers<[1], [0], [0], [1], [0, 0, 1, 1], [], []>} : vector<32x32xbf16>, vector<32x32xbf16>, vector<32x32xf32> -> vector<32x32xf32>
    %59 = arith.addf %53, %58 : vector<32x32xf32>
    %60 = vector.extract_strided_slice %28 {offsets = [0, 1, 2, 0], sizes = [2, 4, 4, 32], strides = [1, 1, 1, 1]} : vector<2x6x6x32xbf16> to vector<2x4x4x32xbf16>
    %61 = vector.shape_cast %60 : vector<2x4x4x32xbf16> to vector<32x32xbf16>
    %c5 = arith.constant 5 : index
    %c0_26 = arith.constant 0 : index
    %c0_27 = arith.constant 0 : index
    %62 = vector.load %arg2[%c5, %c0_26, %c0_27] : memref<9x32x32xbf16, #tpu.memory_space<vmem>>, vector<1x32x32xbf16>
    %63 = vector.shape_cast %62 : vector<1x32x32xbf16> to vector<32x32xbf16>
    %cst_28 = arith.constant dense<0.000000e+00> : vector<32x32xf32>
    %64 = tpu.matmul %61, %63, %cst_28 {dimension_numbers = #tpu.dot_dimension_numbers<[1], [0], [0], [1], [0, 0, 1, 1], [], []>} : vector<32x32xbf16>, vector<32x32xbf16>, vector<32x32xf32> -> vector<32x32xf32>
    %65 = arith.addf %59, %64 : vector<32x32xf32>
    %66 = vector.extract_strided_slice %28 {offsets = [0, 2, 0, 0], sizes = [2, 4, 4, 32], strides = [1, 1, 1, 1]} : vector<2x6x6x32xbf16> to vector<2x4x4x32xbf16>
    %67 = vector.shape_cast %66 : vector<2x4x4x32xbf16> to vector<32x32xbf16>
    %c6 = arith.constant 6 : index
    %c0_29 = arith.constant 0 : index
    %c0_30 = arith.constant 0 : index
    %68 = vector.load %arg2[%c6, %c0_29, %c0_30] : memref<9x32x32xbf16, #tpu.memory_space<vmem>>, vector<1x32x32xbf16>
    %69 = vector.shape_cast %68 : vector<1x32x32xbf16> to vector<32x32xbf16>
    %cst_31 = arith.constant dense<0.000000e+00> : vector<32x32xf32>
    %70 = tpu.matmul %67, %69, %cst_31 {dimension_numbers = #tpu.dot_dimension_numbers<[1], [0], [0], [1], [0, 0, 1, 1], [], []>} : vector<32x32xbf16>, vector<32x32xbf16>, vector<32x32xf32> -> vector<32x32xf32>
    %71 = arith.addf %65, %70 : vector<32x32xf32>
    %72 = vector.extract_strided_slice %28 {offsets = [0, 2, 1, 0], sizes = [2, 4, 4, 32], strides = [1, 1, 1, 1]} : vector<2x6x6x32xbf16> to vector<2x4x4x32xbf16>
    %73 = vector.shape_cast %72 : vector<2x4x4x32xbf16> to vector<32x32xbf16>
    %c7 = arith.constant 7 : index
    %c0_32 = arith.constant 0 : index
    %c0_33 = arith.constant 0 : index
    %74 = vector.load %arg2[%c7, %c0_32, %c0_33] : memref<9x32x32xbf16, #tpu.memory_space<vmem>>, vector<1x32x32xbf16>
    %75 = vector.shape_cast %74 : vector<1x32x32xbf16> to vector<32x32xbf16>
    %cst_34 = arith.constant dense<0.000000e+00> : vector<32x32xf32>
    %76 = tpu.matmul %73, %75, %cst_34 {dimension_numbers = #tpu.dot_dimension_numbers<[1], [0], [0], [1], [0, 0, 1, 1], [], []>} : vector<32x32xbf16>, vector<32x32xbf16>, vector<32x32xf32> -> vector<32x32xf32>
    %77 = arith.addf %71, %76 : vector<32x32xf32>
    %78 = vector.extract_strided_slice %28 {offsets = [0, 2, 2, 0], sizes = [2, 4, 4, 32], strides = [1, 1, 1, 1]} : vector<2x6x6x32xbf16> to vector<2x4x4x32xbf16>
    %79 = vector.shape_cast %78 : vector<2x4x4x32xbf16> to vector<32x32xbf16>
    %c8 = arith.constant 8 : index
    %c0_35 = arith.constant 0 : index
    %c0_36 = arith.constant 0 : index
    %80 = vector.load %arg2[%c8, %c0_35, %c0_36] : memref<9x32x32xbf16, #tpu.memory_space<vmem>>, vector<1x32x32xbf16>
    %81 = vector.shape_cast %80 : vector<1x32x32xbf16> to vector<32x32xbf16>
    %cst_37 = arith.constant dense<0.000000e+00> : vector<32x32xf32>
    %82 = tpu.matmul %79, %81, %cst_37 {dimension_numbers = #tpu.dot_dimension_numbers<[1], [0], [0], [1], [0, 0, 1, 1], [], []>} : vector<32x32xbf16>, vector<32x32xbf16>, vector<32x32xf32> -> vector<32x32xf32>
    %83 = arith.addf %77, %82 : vector<32x32xf32>
    %c0_38 = arith.constant 0 : index
    %c0_39 = arith.constant 0 : index
    %84 = vector.load %arg3[%c0_38, %c0_39] : memref<1x32xf32, #tpu.memory_space<vmem>>, vector<1x32xf32>
    %85 = vector.broadcast %84 : vector<1x32xf32> to vector<32x32xf32>
    %86 = arith.addf %83, %85 : vector<32x32xf32>
    %cst_40 = arith.constant dense<0.000000e+00> : vector<32xf32>
    %87 = vector.multi_reduction <add>, %86, %cst_40 [0] : vector<32x32xf32> to vector<32xf32>
    %88 = vector.shape_cast %87 : vector<32xf32> to vector<1x32xf32>
    %89 = vector.shape_cast %88 : vector<1x32xf32> to vector<1x1x32xf32>
    %c0_41 = arith.constant 0 : index
    %c0_42 = arith.constant 0 : index
    %c0_43 = arith.constant 0 : index
    %90 = vector.load %arg7[%c0_41, %c0_42, %c0_43] : memref<1x1x32xf32, #tpu.memory_space<vmem>>, vector<1x1x32xf32>
    tpu.vector_store %arg7[%c0_41, %c0_42, %c0_43], %89 {strides = array<i32>} : memref<1x1x32xf32, #tpu.memory_space<vmem>>, vector<1x1x32xf32>,
    %91 = arith.mulf %86, %86 : vector<32x32xf32>
    %cst_44 = arith.constant dense<0.000000e+00> : vector<32xf32>
    %92 = vector.multi_reduction <add>, %91, %cst_44 [0] : vector<32x32xf32> to vector<32xf32>
    %93 = vector.shape_cast %92 : vector<32xf32> to vector<1x32xf32>
    %94 = vector.shape_cast %93 : vector<1x32xf32> to vector<1x1x32xf32>
    %c0_45 = arith.constant 0 : index
    %c0_46 = arith.constant 0 : index
    %c0_47 = arith.constant 0 : index
    %95 = vector.load %arg8[%c0_45, %c0_46, %c0_47] : memref<1x1x32xf32, #tpu.memory_space<vmem>>, vector<1x1x32xf32>
    tpu.vector_store %arg8[%c0_45, %c0_46, %c0_47], %94 {strides = array<i32>} : memref<1x1x32xf32, #tpu.memory_space<vmem>>, vector<1x1x32xf32>,
    %96 = vector.shape_cast %86 : vector<32x32xf32> to vector<2x4x4x32xf32>
    %97 = arith.truncf %96 : vector<2x4x4x32xf32> to vector<2x4x4x32xbf16>
    %c0_48 = arith.constant 0 : index
    %c0_49 = arith.constant 0 : index
    %c0_50 = arith.constant 0 : index
    %c0_51 = arith.constant 0 : index
    %98 = vector.load %arg6[%c0_48, %c0_49, %c0_50, %c0_51] : memref<2x4x4x32xbf16, #tpu.memory_space<vmem>>, vector<2x4x4x32xbf16>
    tpu.vector_store %arg6[%c0_48, %c0_49, %c0_50, %c0_51], %97 {strides = array<i32>} : memref<2x4x4x32xbf16, #tpu.memory_space<vmem>>, vector<2x4x4x32xbf16>,
    return
  }
  func.func @transform_0(%arg0: i32) -> (i32, i32, i32, i32) {
    %c0_i32 = arith.constant 0 : i32
    %c0_i32_0 = arith.constant 0 : i32
    %c0_i32_1 = arith.constant 0 : i32
    %c0_i32_2 = arith.constant 0 : i32
    return %arg0, %c0_i32, %c0_i32_0, %c0_i32_1 : i32, i32, i32, i32
  }
  func.func @transform_1(%arg0: i32) -> (i32, i32, i32) {
    %c0_i32 = arith.constant 0 : i32
    %c0_i32_0 = arith.constant 0 : i32
    %c0_i32_1 = arith.constant 0 : i32
    %c0_i32_2 = arith.constant 0 : i32
    return %c0_i32, %c0_i32_0, %c0_i32_1 : i32, i32, i32
  }
  func.func @transform_2(%arg0: i32) -> (i32, i32) {
    %c0_i32 = arith.constant 0 : i32
    %c0_i32_0 = arith.constant 0 : i32
    %c0_i32_1 = arith.constant 0 : i32
    return %c0_i32, %c0_i32_0 : i32, i32
  }
  func.func @transform_3(%arg0: i32) -> (i32, i32) {
    %c0_i32 = arith.constant 0 : i32
    %c0_i32_0 = arith.constant 0 : i32
    %c0_i32_1 = arith.constant 0 : i32
    return %c0_i32, %c0_i32_0 : i32, i32
  }
  func.func @transform_4(%arg0: i32) -> (i32, i32) {
    %c0_i32 = arith.constant 0 : i32
    %c0_i32_0 = arith.constant 0 : i32
    %c0_i32_1 = arith.constant 0 : i32
    return %c0_i32, %c0_i32_0 : i32, i32
  }
  func.func @transform_5(%arg0: i32) -> (i32, i32, i32, i32) {
    %c0_i32 = arith.constant 0 : i32
    %c0_i32_0 = arith.constant 0 : i32
    %c0_i32_1 = arith.constant 0 : i32
    %c0_i32_2 = arith.constant 0 : i32
    return %arg0, %c0_i32, %c0_i32_0, %c0_i32_1 : i32, i32, i32, i32
  }
  func.func @transform_6(%arg0: i32) -> (i32, i32, i32) {
    %c0_i32 = arith.constant 0 : i32
    %c0_i32_0 = arith.constant 0 : i32
    %c0_i32_1 = arith.constant 0 : i32
    return %arg0, %c0_i32, %c0_i32_0 : i32, i32, i32
  }
  func.func @transform_7(%arg0: i32) -> (i32, i32, i32) {
    %c0_i32 = arith.constant 0 : i32
    %c0_i32_0 = arith.constant 0 : i32
    %c0_i32_1 = arith.constant 0 : i32
    return %arg0, %c0_i32, %c0_i32_0 : i32, i32, i32
  }
}

module attributes {stable_mosaic.version = 11 : i64} {
  func.func @kernel(%arg0: i32, %arg1: memref<2x6x6x32xbf16, #tpu.memory_space<vmem>>, %arg2: memref<9x32x32xbf16, #tpu.memory_space<vmem>>, %arg3: memref<1x32xf32, #tpu.memory_space<vmem>>, %arg4: memref<2x4x4x32xbf16, #tpu.memory_space<vmem>>) attributes {dimension_semantics = [#tpu.dimension_semantics<parallel>], iteration_bounds = array<i64: 1>, scalar_prefetch = 0 : i64, scratch_operands = 0 : i64, tpu.core_type = #tpu.core_type<tc>, window_params = [{transform_indices = @transform_0, window_bounds = array<i64: 2, 6, 6, 32>}, {pipeline_mode = #tpu.pipeline_mode<synchronous>, transform_indices = @transform_1, window_bounds = array<i64: 9, 32, 32>}, {pipeline_mode = #tpu.pipeline_mode<synchronous>, transform_indices = @transform_2, window_bounds = array<i64: 1, 32>}, {transform_indices = @transform_3, window_bounds = array<i64: 2, 4, 4, 32>}]} {
    %c0 = arith.constant 0 : index
    %c0_0 = arith.constant 0 : index
    %c0_1 = arith.constant 0 : index
    %c0_2 = arith.constant 0 : index
    %0 = vector.load %arg1[%c0, %c0_0, %c0_1, %c0_2] : memref<2x6x6x32xbf16, #tpu.memory_space<vmem>>, vector<2x6x6x32xbf16>
    %1 = arith.extf %0 : vector<2x6x6x32xbf16> to vector<2x6x6x32xf32>
    %cst = arith.constant 0.000000e+00 : f32
    %2 = vector.broadcast %cst : f32 to vector<2x6x6x32xf32>
    %3 = arith.maximumf %1, %2 : vector<2x6x6x32xf32>
    %4 = arith.truncf %3 : vector<2x6x6x32xf32> to vector<2x6x6x32xbf16>
    %cst_3 = arith.constant 0.000000e+00 : f32
    %5 = vector.broadcast %cst_3 : f32 to vector<32x32xf32>
    %6 = vector.extract_strided_slice %4 {offsets = [0, 0, 0, 0], sizes = [2, 4, 4, 32], strides = [1, 1, 1, 1]} : vector<2x6x6x32xbf16> to vector<2x4x4x32xbf16>
    %7 = vector.shape_cast %6 : vector<2x4x4x32xbf16> to vector<32x32xbf16>
    %c0_4 = arith.constant 0 : index
    %c0_5 = arith.constant 0 : index
    %c0_6 = arith.constant 0 : index
    %8 = vector.load %arg2[%c0_4, %c0_5, %c0_6] : memref<9x32x32xbf16, #tpu.memory_space<vmem>>, vector<1x32x32xbf16>
    %9 = vector.shape_cast %8 : vector<1x32x32xbf16> to vector<32x32xbf16>
    %cst_7 = arith.constant dense<0.000000e+00> : vector<32x32xf32>
    %10 = tpu.matmul %7, %9, %cst_7 {dimension_numbers = #tpu.dot_dimension_numbers<[1], [0], [0], [1], [0, 0, 1, 1], [], []>} : vector<32x32xbf16>, vector<32x32xbf16>, vector<32x32xf32> -> vector<32x32xf32>
    %11 = arith.addf %5, %10 : vector<32x32xf32>
    %12 = vector.extract_strided_slice %4 {offsets = [0, 0, 1, 0], sizes = [2, 4, 4, 32], strides = [1, 1, 1, 1]} : vector<2x6x6x32xbf16> to vector<2x4x4x32xbf16>
    %13 = vector.shape_cast %12 : vector<2x4x4x32xbf16> to vector<32x32xbf16>
    %c1 = arith.constant 1 : index
    %c0_8 = arith.constant 0 : index
    %c0_9 = arith.constant 0 : index
    %14 = vector.load %arg2[%c1, %c0_8, %c0_9] : memref<9x32x32xbf16, #tpu.memory_space<vmem>>, vector<1x32x32xbf16>
    %15 = vector.shape_cast %14 : vector<1x32x32xbf16> to vector<32x32xbf16>
    %cst_10 = arith.constant dense<0.000000e+00> : vector<32x32xf32>
    %16 = tpu.matmul %13, %15, %cst_10 {dimension_numbers = #tpu.dot_dimension_numbers<[1], [0], [0], [1], [0, 0, 1, 1], [], []>} : vector<32x32xbf16>, vector<32x32xbf16>, vector<32x32xf32> -> vector<32x32xf32>
    %17 = arith.addf %11, %16 : vector<32x32xf32>
    %18 = vector.extract_strided_slice %4 {offsets = [0, 0, 2, 0], sizes = [2, 4, 4, 32], strides = [1, 1, 1, 1]} : vector<2x6x6x32xbf16> to vector<2x4x4x32xbf16>
    %19 = vector.shape_cast %18 : vector<2x4x4x32xbf16> to vector<32x32xbf16>
    %c2 = arith.constant 2 : index
    %c0_11 = arith.constant 0 : index
    %c0_12 = arith.constant 0 : index
    %20 = vector.load %arg2[%c2, %c0_11, %c0_12] : memref<9x32x32xbf16, #tpu.memory_space<vmem>>, vector<1x32x32xbf16>
    %21 = vector.shape_cast %20 : vector<1x32x32xbf16> to vector<32x32xbf16>
    %cst_13 = arith.constant dense<0.000000e+00> : vector<32x32xf32>
    %22 = tpu.matmul %19, %21, %cst_13 {dimension_numbers = #tpu.dot_dimension_numbers<[1], [0], [0], [1], [0, 0, 1, 1], [], []>} : vector<32x32xbf16>, vector<32x32xbf16>, vector<32x32xf32> -> vector<32x32xf32>
    %23 = arith.addf %17, %22 : vector<32x32xf32>
    %24 = vector.extract_strided_slice %4 {offsets = [0, 1, 0, 0], sizes = [2, 4, 4, 32], strides = [1, 1, 1, 1]} : vector<2x6x6x32xbf16> to vector<2x4x4x32xbf16>
    %25 = vector.shape_cast %24 : vector<2x4x4x32xbf16> to vector<32x32xbf16>
    %c3 = arith.constant 3 : index
    %c0_14 = arith.constant 0 : index
    %c0_15 = arith.constant 0 : index
    %26 = vector.load %arg2[%c3, %c0_14, %c0_15] : memref<9x32x32xbf16, #tpu.memory_space<vmem>>, vector<1x32x32xbf16>
    %27 = vector.shape_cast %26 : vector<1x32x32xbf16> to vector<32x32xbf16>
    %cst_16 = arith.constant dense<0.000000e+00> : vector<32x32xf32>
    %28 = tpu.matmul %25, %27, %cst_16 {dimension_numbers = #tpu.dot_dimension_numbers<[1], [0], [0], [1], [0, 0, 1, 1], [], []>} : vector<32x32xbf16>, vector<32x32xbf16>, vector<32x32xf32> -> vector<32x32xf32>
    %29 = arith.addf %23, %28 : vector<32x32xf32>
    %30 = vector.extract_strided_slice %4 {offsets = [0, 1, 1, 0], sizes = [2, 4, 4, 32], strides = [1, 1, 1, 1]} : vector<2x6x6x32xbf16> to vector<2x4x4x32xbf16>
    %31 = vector.shape_cast %30 : vector<2x4x4x32xbf16> to vector<32x32xbf16>
    %c4 = arith.constant 4 : index
    %c0_17 = arith.constant 0 : index
    %c0_18 = arith.constant 0 : index
    %32 = vector.load %arg2[%c4, %c0_17, %c0_18] : memref<9x32x32xbf16, #tpu.memory_space<vmem>>, vector<1x32x32xbf16>
    %33 = vector.shape_cast %32 : vector<1x32x32xbf16> to vector<32x32xbf16>
    %cst_19 = arith.constant dense<0.000000e+00> : vector<32x32xf32>
    %34 = tpu.matmul %31, %33, %cst_19 {dimension_numbers = #tpu.dot_dimension_numbers<[1], [0], [0], [1], [0, 0, 1, 1], [], []>} : vector<32x32xbf16>, vector<32x32xbf16>, vector<32x32xf32> -> vector<32x32xf32>
    %35 = arith.addf %29, %34 : vector<32x32xf32>
    %36 = vector.extract_strided_slice %4 {offsets = [0, 1, 2, 0], sizes = [2, 4, 4, 32], strides = [1, 1, 1, 1]} : vector<2x6x6x32xbf16> to vector<2x4x4x32xbf16>
    %37 = vector.shape_cast %36 : vector<2x4x4x32xbf16> to vector<32x32xbf16>
    %c5 = arith.constant 5 : index
    %c0_20 = arith.constant 0 : index
    %c0_21 = arith.constant 0 : index
    %38 = vector.load %arg2[%c5, %c0_20, %c0_21] : memref<9x32x32xbf16, #tpu.memory_space<vmem>>, vector<1x32x32xbf16>
    %39 = vector.shape_cast %38 : vector<1x32x32xbf16> to vector<32x32xbf16>
    %cst_22 = arith.constant dense<0.000000e+00> : vector<32x32xf32>
    %40 = tpu.matmul %37, %39, %cst_22 {dimension_numbers = #tpu.dot_dimension_numbers<[1], [0], [0], [1], [0, 0, 1, 1], [], []>} : vector<32x32xbf16>, vector<32x32xbf16>, vector<32x32xf32> -> vector<32x32xf32>
    %41 = arith.addf %35, %40 : vector<32x32xf32>
    %42 = vector.extract_strided_slice %4 {offsets = [0, 2, 0, 0], sizes = [2, 4, 4, 32], strides = [1, 1, 1, 1]} : vector<2x6x6x32xbf16> to vector<2x4x4x32xbf16>
    %43 = vector.shape_cast %42 : vector<2x4x4x32xbf16> to vector<32x32xbf16>
    %c6 = arith.constant 6 : index
    %c0_23 = arith.constant 0 : index
    %c0_24 = arith.constant 0 : index
    %44 = vector.load %arg2[%c6, %c0_23, %c0_24] : memref<9x32x32xbf16, #tpu.memory_space<vmem>>, vector<1x32x32xbf16>
    %45 = vector.shape_cast %44 : vector<1x32x32xbf16> to vector<32x32xbf16>
    %cst_25 = arith.constant dense<0.000000e+00> : vector<32x32xf32>
    %46 = tpu.matmul %43, %45, %cst_25 {dimension_numbers = #tpu.dot_dimension_numbers<[1], [0], [0], [1], [0, 0, 1, 1], [], []>} : vector<32x32xbf16>, vector<32x32xbf16>, vector<32x32xf32> -> vector<32x32xf32>
    %47 = arith.addf %41, %46 : vector<32x32xf32>
    %48 = vector.extract_strided_slice %4 {offsets = [0, 2, 1, 0], sizes = [2, 4, 4, 32], strides = [1, 1, 1, 1]} : vector<2x6x6x32xbf16> to vector<2x4x4x32xbf16>
    %49 = vector.shape_cast %48 : vector<2x4x4x32xbf16> to vector<32x32xbf16>
    %c7 = arith.constant 7 : index
    %c0_26 = arith.constant 0 : index
    %c0_27 = arith.constant 0 : index
    %50 = vector.load %arg2[%c7, %c0_26, %c0_27] : memref<9x32x32xbf16, #tpu.memory_space<vmem>>, vector<1x32x32xbf16>
    %51 = vector.shape_cast %50 : vector<1x32x32xbf16> to vector<32x32xbf16>
    %cst_28 = arith.constant dense<0.000000e+00> : vector<32x32xf32>
    %52 = tpu.matmul %49, %51, %cst_28 {dimension_numbers = #tpu.dot_dimension_numbers<[1], [0], [0], [1], [0, 0, 1, 1], [], []>} : vector<32x32xbf16>, vector<32x32xbf16>, vector<32x32xf32> -> vector<32x32xf32>
    %53 = arith.addf %47, %52 : vector<32x32xf32>
    %54 = vector.extract_strided_slice %4 {offsets = [0, 2, 2, 0], sizes = [2, 4, 4, 32], strides = [1, 1, 1, 1]} : vector<2x6x6x32xbf16> to vector<2x4x4x32xbf16>
    %55 = vector.shape_cast %54 : vector<2x4x4x32xbf16> to vector<32x32xbf16>
    %c8 = arith.constant 8 : index
    %c0_29 = arith.constant 0 : index
    %c0_30 = arith.constant 0 : index
    %56 = vector.load %arg2[%c8, %c0_29, %c0_30] : memref<9x32x32xbf16, #tpu.memory_space<vmem>>, vector<1x32x32xbf16>
    %57 = vector.shape_cast %56 : vector<1x32x32xbf16> to vector<32x32xbf16>
    %cst_31 = arith.constant dense<0.000000e+00> : vector<32x32xf32>
    %58 = tpu.matmul %55, %57, %cst_31 {dimension_numbers = #tpu.dot_dimension_numbers<[1], [0], [0], [1], [0, 0, 1, 1], [], []>} : vector<32x32xbf16>, vector<32x32xbf16>, vector<32x32xf32> -> vector<32x32xf32>
    %59 = arith.addf %53, %58 : vector<32x32xf32>
    %c0_32 = arith.constant 0 : index
    %c0_33 = arith.constant 0 : index
    %60 = vector.load %arg3[%c0_32, %c0_33] : memref<1x32xf32, #tpu.memory_space<vmem>>, vector<1x32xf32>
    %61 = vector.broadcast %60 : vector<1x32xf32> to vector<32x32xf32>
    %62 = arith.addf %59, %61 : vector<32x32xf32>
    %cst_34 = arith.constant 0.000000e+00 : f32
    %63 = vector.broadcast %cst_34 : f32 to vector<32x32xf32>
    %64 = arith.maximumf %62, %63 : vector<32x32xf32>
    %65 = vector.shape_cast %64 : vector<32x32xf32> to vector<2x4x4x32xf32>
    %66 = arith.truncf %65 : vector<2x4x4x32xf32> to vector<2x4x4x32xbf16>
    %c0_35 = arith.constant 0 : index
    %c0_36 = arith.constant 0 : index
    %c0_37 = arith.constant 0 : index
    %c0_38 = arith.constant 0 : index
    %67 = vector.load %arg4[%c0_35, %c0_36, %c0_37, %c0_38] : memref<2x4x4x32xbf16, #tpu.memory_space<vmem>>, vector<2x4x4x32xbf16>
    tpu.vector_store %arg4[%c0_35, %c0_36, %c0_37, %c0_38], %66 {strides = array<i32>} : memref<2x4x4x32xbf16, #tpu.memory_space<vmem>>, vector<2x4x4x32xbf16>,
    return
  }
  func.func @transform_0(%arg0: i32) -> (i32, i32, i32, i32) {
    %c0_i32 = arith.constant 0 : i32
    %c0_i32_0 = arith.constant 0 : i32
    %c0_i32_1 = arith.constant 0 : i32
    %c0_i32_2 = arith.constant 0 : i32
    return %arg0, %c0_i32, %c0_i32_0, %c0_i32_1 : i32, i32, i32, i32
  }
  func.func @transform_1(%arg0: i32) -> (i32, i32, i32) {
    %c0_i32 = arith.constant 0 : i32
    %c0_i32_0 = arith.constant 0 : i32
    %c0_i32_1 = arith.constant 0 : i32
    %c0_i32_2 = arith.constant 0 : i32
    return %c0_i32, %c0_i32_0, %c0_i32_1 : i32, i32, i32
  }
  func.func @transform_2(%arg0: i32) -> (i32, i32) {
    %c0_i32 = arith.constant 0 : i32
    %c0_i32_0 = arith.constant 0 : i32
    %c0_i32_1 = arith.constant 0 : i32
    return %c0_i32, %c0_i32_0 : i32, i32
  }
  func.func @transform_3(%arg0: i32) -> (i32, i32, i32, i32) {
    %c0_i32 = arith.constant 0 : i32
    %c0_i32_0 = arith.constant 0 : i32
    %c0_i32_1 = arith.constant 0 : i32
    %c0_i32_2 = arith.constant 0 : i32
    return %arg0, %c0_i32, %c0_i32_0, %c0_i32_1 : i32, i32, i32, i32
  }
}

module attributes {stable_mosaic.version = 11 : i64} {
  func.func @kernel(%arg0: i32, %arg1: memref<2x4x4x32xbf16, #tpu.memory_space<vmem>>, %arg2: memref<1x32x32xbf16, #tpu.memory_space<vmem>>, %arg3: memref<1x32xf32, #tpu.memory_space<vmem>>, %arg4: memref<2x4x4x32xbf16, #tpu.memory_space<vmem>>, %arg5: memref<2x4x4x32xbf16, #tpu.memory_space<vmem>>) attributes {dimension_semantics = [#tpu.dimension_semantics<parallel>], iteration_bounds = array<i64: 1>, scalar_prefetch = 0 : i64, scratch_operands = 0 : i64, tpu.core_type = #tpu.core_type<tc>, window_params = [{transform_indices = @transform_0, window_bounds = array<i64: 2, 4, 4, 32>}, {pipeline_mode = #tpu.pipeline_mode<synchronous>, transform_indices = @transform_1, window_bounds = array<i64: 1, 32, 32>}, {pipeline_mode = #tpu.pipeline_mode<synchronous>, transform_indices = @transform_2, window_bounds = array<i64: 1, 32>}, {transform_indices = @transform_3, window_bounds = array<i64: 2, 4, 4, 32>}, {transform_indices = @transform_4, window_bounds = array<i64: 2, 4, 4, 32>}]} {
    %c0 = arith.constant 0 : index
    %c0_0 = arith.constant 0 : index
    %c0_1 = arith.constant 0 : index
    %c0_2 = arith.constant 0 : index
    %0 = vector.load %arg1[%c0, %c0_0, %c0_1, %c0_2] : memref<2x4x4x32xbf16, #tpu.memory_space<vmem>>, vector<2x4x4x32xbf16>
    %cst = arith.constant 0.000000e+00 : f32
    %1 = vector.broadcast %cst : f32 to vector<32x32xf32>
    %2 = vector.shape_cast %0 : vector<2x4x4x32xbf16> to vector<32x32xbf16>
    %c0_3 = arith.constant 0 : index
    %c0_4 = arith.constant 0 : index
    %c0_5 = arith.constant 0 : index
    %3 = vector.load %arg2[%c0_3, %c0_4, %c0_5] : memref<1x32x32xbf16, #tpu.memory_space<vmem>>, vector<1x32x32xbf16>
    %4 = vector.shape_cast %3 : vector<1x32x32xbf16> to vector<32x32xbf16>
    %cst_6 = arith.constant dense<0.000000e+00> : vector<32x32xf32>
    %5 = tpu.matmul %2, %4, %cst_6 {dimension_numbers = #tpu.dot_dimension_numbers<[1], [0], [0], [1], [0, 0, 1, 1], [], []>} : vector<32x32xbf16>, vector<32x32xbf16>, vector<32x32xf32> -> vector<32x32xf32>
    %6 = arith.addf %1, %5 : vector<32x32xf32>
    %c0_7 = arith.constant 0 : index
    %c0_8 = arith.constant 0 : index
    %7 = vector.load %arg3[%c0_7, %c0_8] : memref<1x32xf32, #tpu.memory_space<vmem>>, vector<1x32xf32>
    %8 = vector.broadcast %7 : vector<1x32xf32> to vector<32x32xf32>
    %9 = arith.addf %6, %8 : vector<32x32xf32>
    %c0_9 = arith.constant 0 : index
    %c0_10 = arith.constant 0 : index
    %c0_11 = arith.constant 0 : index
    %c0_12 = arith.constant 0 : index
    %10 = vector.load %arg4[%c0_9, %c0_10, %c0_11, %c0_12] : memref<2x4x4x32xbf16, #tpu.memory_space<vmem>>, vector<2x4x4x32xbf16>
    %11 = arith.extf %10 : vector<2x4x4x32xbf16> to vector<2x4x4x32xf32>
    %12 = vector.shape_cast %11 : vector<2x4x4x32xf32> to vector<32x32xf32>
    %13 = arith.addf %9, %12 : vector<32x32xf32>
    %14 = math.tanh %13 : vector<32x32xf32>
    %15 = vector.shape_cast %14 : vector<32x32xf32> to vector<2x4x4x32xf32>
    %16 = arith.truncf %15 : vector<2x4x4x32xf32> to vector<2x4x4x32xbf16>
    %c0_13 = arith.constant 0 : index
    %c0_14 = arith.constant 0 : index
    %c0_15 = arith.constant 0 : index
    %c0_16 = arith.constant 0 : index
    %17 = vector.load %arg5[%c0_13, %c0_14, %c0_15, %c0_16] : memref<2x4x4x32xbf16, #tpu.memory_space<vmem>>, vector<2x4x4x32xbf16>
    tpu.vector_store %arg5[%c0_13, %c0_14, %c0_15, %c0_16], %16 {strides = array<i32>} : memref<2x4x4x32xbf16, #tpu.memory_space<vmem>>, vector<2x4x4x32xbf16>,
    return
  }
  func.func @transform_0(%arg0: i32) -> (i32, i32, i32, i32) {
    %c0_i32 = arith.constant 0 : i32
    %c0_i32_0 = arith.constant 0 : i32
    %c0_i32_1 = arith.constant 0 : i32
    %c0_i32_2 = arith.constant 0 : i32
    return %arg0, %c0_i32, %c0_i32_0, %c0_i32_1 : i32, i32, i32, i32
  }
  func.func @transform_1(%arg0: i32) -> (i32, i32, i32) {
    %c0_i32 = arith.constant 0 : i32
    %c0_i32_0 = arith.constant 0 : i32
    %c0_i32_1 = arith.constant 0 : i32
    %c0_i32_2 = arith.constant 0 : i32
    return %c0_i32, %c0_i32_0, %c0_i32_1 : i32, i32, i32
  }
  func.func @transform_2(%arg0: i32) -> (i32, i32) {
    %c0_i32 = arith.constant 0 : i32
    %c0_i32_0 = arith.constant 0 : i32
    %c0_i32_1 = arith.constant 0 : i32
    return %c0_i32, %c0_i32_0 : i32, i32
  }
  func.func @transform_3(%arg0: i32) -> (i32, i32, i32, i32) {
    %c0_i32 = arith.constant 0 : i32
    %c0_i32_0 = arith.constant 0 : i32
    %c0_i32_1 = arith.constant 0 : i32
    %c0_i32_2 = arith.constant 0 : i32
    return %arg0, %c0_i32, %c0_i32_0, %c0_i32_1 : i32, i32, i32, i32
  }
  func.func @transform_4(%arg0: i32) -> (i32, i32, i32, i32) {
    %c0_i32 = arith.constant 0 : i32
    %c0_i32_0 = arith.constant 0 : i32
    %c0_i32_1 = arith.constant 0 : i32
    %c0_i32_2 = arith.constant 0 : i32
    return %arg0, %c0_i32, %c0_i32_0, %c0_i32_1 : i32, i32, i32, i32
  }
}

</mosaic_0001>

<llo_original>
// kernel: encoder_forward.7
$region0: #{encoder_forward.7}
  #allocation0 [shape = 'u32[]', space=smem, size = 0x4, offset = 0x4, fixed_abs, tag = 'smem constant byte address 0x4 - core index']
  #allocation1 [shape = 'u32[144,128]{1,0:T(1,128)}', space=vmem, size = 0x12000, scoped, tag = 'internal scratch']
  %s0 = inlined_call_operand.vmem [shape: bf16[2,9,9,12], index: 0, kind: input, shape index: {}]
  %s1 = inlined_call_operand.vmem [shape: bf16[4,12,16], index: 1, kind: input, shape index: {}]
  %s2 = inlined_call_operand.vmem [shape: f32[1,16], index: 2, kind: input, shape index: {}]
  %s3 = inlined_call_operand.vmem [shape: bf16[2,8,8,16], index: 3, kind: output, shape index: {0}]
  %s4 = inlined_call_operand.vmem [shape: f32[1,1,16], index: 4, kind: output, shape index: {1}]
  %s5 = inlined_call_operand.vmem [shape: f32[1,1,16], index: 5, kind: output, shape index: {2}]
  %6 = xla_tuple %s3, %s4, %s5
  %s7 = sld [smem:[#allocation0]]
  $region38: #{encoder_forward.7} parent=0
    _
  %s9 = ssub.s32 1, %s7
  %s10 = scalar_select 0, %s9, %s7
  // Predicated region
  $region2: #{encoder_forward.7} parent=0 // pred_check
    _
  $region3: #{encoder_forward.7} parent=0 // pred_check_branch
    %12 = sbr.rel (0) target = $region5
  $region4: #{encoder_forward.7} parent=0 // pred_region
    _
  $region5: #{encoder_forward.7} parent=0 // pred_fallthru
    _
  // Predicated region
  $region6: #{encoder_forward.7} parent=0 // pred_check
    _
  $region7: #{encoder_forward.7} parent=0 // pred_check_branch
    %14 = sbr.rel (0) target = $region9
  $region8: #{encoder_forward.7} parent=0 // pred_region
    _
  $region9: #{encoder_forward.7} parent=0 // pred_fallthru
    _
  // Predicated region
  $region10: #{encoder_forward.7} parent=0 // pred_check
    _
  $region11: #{encoder_forward.7} parent=0 // pred_check_branch
    %16 = sbr.rel (0) target = $region13
  $region12: #{encoder_forward.7} parent=0 // pred_region
    _
  $region13: #{encoder_forward.7} parent=0 // pred_fallthru
    _
  %v18 = vld [vmem:[%s0] sm:$0xf]
  %v19 = vld [vmem:[%s0 + $0x4] sm:$0x1]
  %v20 = vld [vmem:[%s0 + $0x8] sm:$0xf]
  %v21 = vld [vmem:[%s0 + $0xc] sm:$0x1]
  %v22 = vld [vmem:[%s0 + $0x10] sm:$0xf]
  %v23 = vld [vmem:[%s0 + $0x14] sm:$0x1]
  %v24 = vld [vmem:[%s0 + $0x18] sm:$0xf]
  %v25 = vld [vmem:[%s0 + $0x1c] sm:$0x1]
  %v26 = vld [vmem:[%s0 + $0x20] sm:$0xf]
  %v27 = vld [vmem:[%s0 + $0x24] sm:$0x1]
  %v28 = vld [vmem:[%s0 + $0x28] sm:$0xf]
  %v29 = vld [vmem:[%s0 + $0x2c] sm:$0x1]
  %v30 = vld [vmem:[%s0 + $0x30] sm:$0xf]
  %v31 = vld [vmem:[%s0 + $0x34] sm:$0x1]
  %v32 = vld [vmem:[%s0 + $0x38] sm:$0xf]
  %v33 = vld [vmem:[%s0 + $0x3c] sm:$0x1]
  %v34 = vld [vmem:[%s0 + $0x40] sm:$0xf]
  %v35 = vld [vmem:[%s0 + $0x44] sm:$0x1]
  %v36 = vld [vmem:[%s0 + $0x48] sm:$0xf]
  %v37 = vld [vmem:[%s0 + $0x4c] sm:$0x1]
  %v38 = vld [vmem:[%s0 + $0x50] sm:$0xf]
  %v39 = vld [vmem:[%s0 + $0x54] sm:$0x1]
  %v40 = vld [vmem:[%s0 + $0x58] sm:$0xf]
  %v41 = vld [vmem:[%s0 + $0x5c] sm:$0x1]
  %v42 = vld [vmem:[%s0 + $0x60] sm:$0xf]
  %v43 = vld [vmem:[%s0 + $0x64] sm:$0x1]
  %v44 = vld [vmem:[%s0 + $0x68] sm:$0xf]
  %v45 = vld [vmem:[%s0 + $0x6c] sm:$0x1]
  %v46 = vld [vmem:[%s0 + $0x70] sm:$0xf]
  %v47 = vld [vmem:[%s0 + $0x74] sm:$0x1]
  %v48 = vld [vmem:[%s0 + $0x78] sm:$0xf]
  %v49 = vld [vmem:[%s0 + $0x7c] sm:$0x1]
  %v50 = vld [vmem:[%s0 + $0x80] sm:$0xf]
  %v51 = vld [vmem:[%s0 + $0x84] sm:$0x1]
  %v52 = vld [vmem:[%s0 + $0x88] sm:$0xf]
  %v53 = vld [vmem:[%s0 + $0x8c] sm:$0x1]
  %v54 = vld [vmem:[%s1] sm:$0xf]
  %v55 = vld [vmem:[%s1 + $0x4] sm:$0x3]
  %vm56 = vsmask.f32 3328
  %vm57 = vsmask.f32 7440
  %vm58 = vmor %vm56, %vm57
  %v60 = vshrl.u32 %v18, 16
  %v62 = vrot.slane %v60, 4
  %v63 = vshll.u32 %v18, 16
  %v65 = vrot.slane %v63, 5
  %v66 = vor.u32 %v62, %v65
  %v67 = vrot.slane %v66, 4
  %v69 = vshll.u32 %v19, 16
  %v71 = vrot.slane %v69, 5
  %v72 = vsel %vm58, %v67, %v71
  %v74 = vshrl.u32 %v20, 16
  %v76 = vrot.slane %v74, 4
  %v77 = vshll.u32 %v20, 16
  %v79 = vrot.slane %v77, 5
  %v80 = vor.u32 %v76, %v79
  %v81 = vrot.slane %v80, 4
  %v83 = vshll.u32 %v21, 16
  %v85 = vrot.slane %v83, 5
  %v86 = vsel %vm58, %v81, %v85
  %v88 = vshrl.u32 %v22, 16
  %v90 = vrot.slane %v88, 4
  %v91 = vshll.u32 %v22, 16
  %v93 = vrot.slane %v91, 5
  %v94 = vor.u32 %v90, %v93
  %v95 = vrot.slane %v94, 4
  %v97 = vshll.u32 %v23, 16
  %v99 = vrot.slane %v97, 5
  %v100 = vsel %vm58, %v95, %v99
  %v102 = vshrl.u32 %v24, 16
  %v104 = vrot.slane %v102, 4
  %v105 = vshll.u32 %v24, 16
  %v107 = vrot.slane %v105, 5
  %v108 = vor.u32 %v104, %v107
  %v109 = vrot.slane %v108, 4
  %v111 = vshll.u32 %v25, 16
  %v113 = vrot.slane %v111, 5
  %v114 = vsel %vm58, %v109, %v113
  %v116 = vshrl.u32 %v26, 16
  %v118 = vrot.slane %v116, 4
  %v119 = vshll.u32 %v26, 16
  %v121 = vrot.slane %v119, 5
  %v122 = vor.u32 %v118, %v121
  %v123 = vrot.slane %v122, 4
  %v125 = vshll.u32 %v27, 16
  %v127 = vrot.slane %v125, 5
  %v128 = vsel %vm58, %v123, %v127
  %v130 = vshrl.u32 %v28, 16
  %v132 = vrot.slane %v130, 4
  %v133 = vshll.u32 %v28, 16
  %v135 = vrot.slane %v133, 5
  %v136 = vor.u32 %v132, %v135
  %v137 = vrot.slane %v136, 4
  %v139 = vshll.u32 %v29, 16
  %v141 = vrot.slane %v139, 5
  %v142 = vsel %vm58, %v137, %v141
  %v144 = vshrl.u32 %v30, 16
  %v146 = vrot.slane %v144, 4
  %v147 = vshll.u32 %v30, 16
  %v149 = vrot.slane %v147, 5
  %v150 = vor.u32 %v146, %v149
  %v151 = vrot.slane %v150, 4
  %v153 = vshll.u32 %v31, 16
  %v155 = vrot.slane %v153, 5
  %v156 = vsel %vm58, %v151, %v155
  %v158 = vshrl.u32 %v32, 16
  %v160 = vrot.slane %v158, 4
  %v161 = vshll.u32 %v32, 16
  %v163 = vrot.slane %v161, 5
  %v164 = vor.u32 %v160, %v163
  %v165 = vrot.slane %v164, 4
  %v167 = vshll.u32 %v33, 16
  %v169 = vrot.slane %v167, 5
  %v170 = vsel %vm58, %v165, %v169
  %v172 = vshrl.u32 %v36, 16
  %v174 = vrot.slane %v172, 4
  %v175 = vshll.u32 %v36, 16
  %v177 = vrot.slane %v175, 5
  %v178 = vor.u32 %v174, %v177
  %v179 = vrot.slane %v178, 4
  %v181 = vshll.u32 %v37, 16
  %v183 = vrot.slane %v181, 5
  %v184 = vsel %vm58, %v179, %v183
  %v186 = vshrl.u32 %v38, 16
  %v188 = vrot.slane %v186, 4
  %v189 = vshll.u32 %v38, 16
  %v191 = vrot.slane %v189, 5
  %v192 = vor.u32 %v188, %v191
  %v193 = vrot.slane %v192, 4
  %v195 = vshll.u32 %v39, 16
  %v197 = vrot.slane %v195, 5
  %v198 = vsel %vm58, %v193, %v197
  %v200 = vshrl.u32 %v40, 16
  %v202 = vrot.slane %v200, 4
  %v203 = vshll.u32 %v40, 16
  %v205 = vrot.slane %v203, 5
  %v206 = vor.u32 %v202, %v205
  %v207 = vrot.slane %v206, 4
  %v209 = vshll.u32 %v41, 16
  %v211 = vrot.slane %v209, 5
  %v212 = vsel %vm58, %v207, %v211
  %v214 = vshrl.u32 %v42, 16
  %v216 = vrot.slane %v214, 4
  %v217 = vshll.u32 %v42, 16
  %v219 = vrot.slane %v217, 5
  %v220 = vor.u32 %v216, %v219
  %v221 = vrot.slane %v220, 4
  %v223 = vshll.u32 %v43, 16
  %v225 = vrot.slane %v223, 5
  %v226 = vsel %vm58, %v221, %v225
  %v228 = vshrl.u32 %v44, 16
  %v230 = vrot.slane %v228, 4
  %v231 = vshll.u32 %v44, 16
  %v233 = vrot.slane %v231, 5
  %v234 = vor.u32 %v230, %v233
  %v235 = vrot.slane %v234, 4
  %v237 = vshll.u32 %v45, 16
  %v239 = vrot.slane %v237, 5
  %v240 = vsel %vm58, %v235, %v239
  %v242 = vshrl.u32 %v46, 16
  %v244 = vrot.slane %v242, 4
  %v245 = vshll.u32 %v46, 16
  %v247 = vrot.slane %v245, 5
  %v248 = vor.u32 %v244, %v247
  %v249 = vrot.slane %v248, 4
  %v251 = vshll.u32 %v47, 16
  %v253 = vrot.slane %v251, 5
  %v254 = vsel %vm58, %v249, %v253
  %v256 = vshrl.u32 %v48, 16
  %v258 = vrot.slane %v256, 4
  %v259 = vshll.u32 %v48, 16
  %v261 = vrot.slane %v259, 5
  %v262 = vor.u32 %v258, %v261
  %v263 = vrot.slane %v262, 4
  %v265 = vshll.u32 %v49, 16
  %v267 = vrot.slane %v265, 5
  %v268 = vsel %vm58, %v263, %v267
  %v270 = vshrl.u32 %v50, 16
  %v272 = vrot.slane %v270, 4
  %v273 = vshll.u32 %v50, 16
  %v275 = vrot.slane %v273, 5
  %v276 = vor.u32 %v272, %v275
  %v277 = vrot.slane %v276, 4
  %v279 = vshll.u32 %v51, 16
  %v281 = vrot.slane %v279, 5
  %v282 = vsel %vm58, %v277, %v281
  %s283 = scalar_lea.vmem %s1, 8
  %v284 = vld [vmem:[%s283] sm:$0xf]
  %v285 = vld [vmem:[%s283 + $0x4] sm:$0x3]
  %v286 = vunpack.c.l.b16 %v72
  %v287 = vunpack.c.l.b16 %v86
  %v288 = vunpack.c.l.b16 %v100
  %v289 = vunpack.c.l.b16 %v114
  %v290 = vunpack.c.l.b16 %v128
  %v291 = vunpack.c.l.b16 %v142
  %v292 = vunpack.c.l.b16 %v156
  %v293 = vunpack.c.l.b16 %v170
  %v294 = vunpack.c.l.b16 %v184
  %v295 = vunpack.c.l.b16 %v198
  %v296 = vunpack.c.l.b16 %v212
  %v297 = vunpack.c.l.b16 %v226
  %v298 = vunpack.c.l.b16 %v240
  %v299 = vunpack.c.l.b16 %v254
  %v300 = vunpack.c.l.b16 %v268
  %v301 = vunpack.c.l.b16 %v282
  %v302 = vpack.c.b16 %v287, %v286
  %v303 = vpack.c.b16 %v289, %v288
  %v304 = vpack.c.b16 %v291, %v290
  %v305 = vpack.c.b16 %v293, %v292
  %v306 = vpack.c.b16 %v295, %v294
  %v307 = vpack.c.b16 %v297, %v296
  %v308 = vpack.c.b16 %v299, %v298
  %v309 = vpack.c.b16 %v301, %v300
  %v312 = vunpack.c.l.b16 %v284
  %v313 = vunpack.c.l.b16 %v285
  %v314 = vpack.c.b16 %v313, %v312
  %vm315 = vcmask 97280
  %v317 = vsel %vm315, %v302, 0
  %v320 = vsel %vm315, %v303, 0
  %v323 = vsel %vm315, %v304, 0
  %v326 = vsel %vm315, %v305, 0
  %v329 = vsel %vm315, %v306, 0
  %v332 = vsel %vm315, %v307, 0
  %v335 = vsel %vm315, %v308, 0
  %v338 = vsel %vm315, %v309, 0
  %vm340 = vcmask 1045504
  %v342 = vsel %vm340, %v314, 0
  %344 = vmatprep.subr.bf16.mxu0 0
  %345 = vmatpush1.bf16.msra.mxu0 %v342
  %346 = vmatprep.subr.bf16.mxu0 0
  %347 = vmatpush1.bf16.msra.mxu0 0
  %348 = vmatprep.subr.bf16.mxu0 0
  %349 = vmatpush1.bf16.msra.mxu0 0
  %350 = vmatprep.subr.bf16.mxu0 0
  %351 = vmatpush1.bf16.msra.mxu0 0
  %352 = vmatprep.subr.bf16.mxu0 0
  %353 = vmatpush1.bf16.msra.mxu0 0
  %354 = vmatprep.subr.bf16.mxu0 0
  %355 = vmatpush1.bf16.msra.mxu0 0
  %356 = vmatprep.subr.bf16.mxu0 0
  %357 = vmatpush1.bf16.msra.mxu0 0
  %358 = vmatprep.subr.bf16.mxu0 0
  %359 = vmatpush1.bf16.msra.mxu0 0
  %360 = vmatprep.subr.bf16.mxu0 0
  %361 = vmatpush1.bf16.msra.mxu0 0
  %362 = vmatprep.subr.bf16.mxu0 0
  %363 = vmatpush1.bf16.msra.mxu0 0
  %364 = vmatprep.subr.bf16.mxu0 0
  %365 = vmatpush1.bf16.msra.mxu0 0
  %366 = vmatprep.subr.bf16.mxu0 0
  %367 = vmatpush1.bf16.msra.mxu0 0
  %368 = vmatprep.subr.bf16.mxu0 0
  %369 = vmatpush1.bf16.msra.mxu0 0
  %370 = vmatprep.subr.bf16.mxu0 0
  %371 = vmatpush1.bf16.msra.mxu0 0
  %372 = vmatprep.subr.bf16.mxu0 0
  %373 = vmatpush1.bf16.msra.mxu0 0
  %374 = vmatprep.subr.bf16.mxu0 0
  %375 = vmatpush1.bf16.msra.mxu0 0
  %376 = vmatprep.mubr.bf16.mxu0 0
  %377 = vmatmul.mubr.bf16.gmra.mrb[0].mxu0 %v317
  %v378 = vpop.f32.mrb[0].mxu0
  %v379 = vadd.f32 0.0, %v378
  %v380 = vpop.f32.mrb[0].mxu0
  %v381 = vpop.f32.mrb[0].mxu0
  %v382 = vadd.f32 0.0, %v381
  %v383 = vpop.f32.mrb[0].mxu0
  %384 = vmatprep.mubr.bf16.mxu0 0
  %385 = vmatmul.mubr.bf16.gmra.mrb[0].mxu0 %v320
  %v386 = vpop.f32.mrb[0].mxu0
  %v387 = vadd.f32 0.0, %v386
  %v388 = vpop.f32.mrb[0].mxu0
  %v389 = vpop.f32.mrb[0].mxu0
  %v390 = vadd.f32 0.0, %v389
  %v391 = vpop.f32.mrb[0].mxu0
  %392 = vmatprep.mubr.bf16.mxu0 0
  %393 = vmatmul.mubr.bf16.gmra.mrb[0].mxu0 %v323
  %v394 = vpop.f32.mrb[0].mxu0
  %v395 = vadd.f32 0.0, %v394
  %v396 = vpop.f32.mrb[0].mxu0
  %v397 = vpop.f32.mrb[0].mxu0
  %v398 = vadd.f32 0.0, %v397
  %v399 = vpop.f32.mrb[0].mxu0
  %400 = vmatprep.mubr.bf16.mxu0 0
  %401 = vmatmul.mubr.bf16.gmra.mrb[0].mxu0 %v326
  %v402 = vpop.f32.mrb[0].mxu0
  %v403 = vadd.f32 0.0, %v402
  %v404 = vpop.f32.mrb[0].mxu0
  %v405 = vpop.f32.mrb[0].mxu0
  %v406 = vadd.f32 0.0, %v405
  %v407 = vpop.f32.mrb[0].mxu0
  %408 = vmatprep.mubr.bf16.mxu0 0
  %409 = vmatmul.mubr.bf16.gmra.mrb[0].mxu0 %v329
  %v410 = vpop.f32.mrb[0].mxu0
  %v411 = vadd.f32 0.0, %v410
  %v412 = vpop.f32.mrb[0].mxu0
  %v413 = vpop.f32.mrb[0].mxu0
  %v414 = vadd.f32 0.0, %v413
  %v415 = vpop.f32.mrb[0].mxu0
  %416 = vmatprep.mubr.bf16.mxu0 0
  %417 = vmatmul.mubr.bf16.gmra.mrb[0].mxu0 %v332
  %v418 = vpop.f32.mrb[0].mxu0
  %v419 = vadd.f32 0.0, %v418
  %v420 = vpop.f32.mrb[0].mxu0
  %v421 = vpop.f32.mrb[0].mxu0
  %v422 = vadd.f32 0.0, %v421
  %v423 = vpop.f32.mrb[0].mxu0
  %424 = vmatprep.mubr.bf16.mxu0 0
  %425 = vmatmul.mubr.bf16.gmra.mrb[0].mxu0 %v335
  %v426 = vpop.f32.mrb[0].mxu0
  %v427 = vadd.f32 0.0, %v426
  %v428 = vpop.f32.mrb[0].mxu0
  %v429 = vpop.f32.mrb[0].mxu0
  %v430 = vadd.f32 0.0, %v429
  %v431 = vpop.f32.mrb[0].mxu0
  %432 = vmatprep.mubr.bf16.mxu0 0
  %433 = vmatmul.mubr.bf16.gmra.mrb[0].mxu0 %v338
  %v434 = vpop.f32.mrb[0].mxu0
  %v435 = vadd.f32 0.0, %v434
  %v436 = vpop.f32.mrb[0].mxu0
  %v437 = vpop.f32.mrb[0].mxu0
  %v438 = vadd.f32 0.0, %v437
  %v439 = vpop.f32.mrb[0].mxu0
  %440 = vdwg.mxu0
  %v457 = vunpack.c.l.b16 %v18
  %v458 = vunpack.c.l.b16 %v20
  %v459 = vunpack.c.l.b16 %v22
  %v460 = vunpack.c.l.b16 %v24
  %v461 = vunpack.c.l.b16 %v26
  %v462 = vunpack.c.l.b16 %v28
  %v463 = vunpack.c.l.b16 %v30
  %v464 = vunpack.c.l.b16 %v32
  %v465 = vunpack.c.l.b16 %v36
  %v466 = vunpack.c.l.b16 %v38
  %v467 = vunpack.c.l.b16 %v40
  %v468 = vunpack.c.l.b16 %v42
  %v469 = vunpack.c.l.b16 %v44
  %v470 = vunpack.c.l.b16 %v46
  %v471 = vunpack.c.l.b16 %v48
  %v472 = vunpack.c.l.b16 %v50
  %v473 = vpack.c.b16 %v458, %v457
  %v474 = vpack.c.b16 %v460, %v459
  %v475 = vpack.c.b16 %v462, %v461
  %v476 = vpack.c.b16 %v464, %v463
  %v477 = vpack.c.b16 %v466, %v465
  %v478 = vpack.c.b16 %v468, %v467
  %v479 = vpack.c.b16 %v470, %v469
  %v480 = vpack.c.b16 %v472, %v471
  %v483 = vunpack.c.l.b16 %v54
  %v484 = vunpack.c.l.b16 %v55
  %v485 = vpack.c.b16 %v484, %v483
  %v487 = vsel %vm315, %v473, 0
  %v490 = vsel %vm315, %v474, 0
  %v493 = vsel %vm315, %v475, 0
  %v496 = vsel %vm315, %v476, 0
  %v499 = vsel %vm315, %v477, 0
  %v502 = vsel %vm315, %v478, 0
  %v505 = vsel %vm315, %v479, 0
  %v508 = vsel %vm315, %v480, 0
  %v511 = vsel %vm340, %v485, 0
  %513 = vmatprep.subr.bf16.mxu0 0
  %514 = vmatpush1.bf16.msra.mxu0 %v511
  %515 = vmatprep.subr.bf16.mxu0 0
  %516 = vmatpush1.bf16.msra.mxu0 0
  %517 = vmatprep.subr.bf16.mxu0 0
  %518 = vmatpush1.bf16.msra.mxu0 0
  %519 = vmatprep.subr.bf16.mxu0 0
  %520 = vmatpush1.bf16.msra.mxu0 0
  %521 = vmatprep.subr.bf16.mxu0 0
  %522 = vmatpush1.bf16.msra.mxu0 0
  %523 = vmatprep.subr.bf16.mxu0 0
  %524 = vmatpush1.bf16.msra.mxu0 0
  %525 = vmatprep.subr.bf16.mxu0 0
  %526 = vmatpush1.bf16.msra.mxu0 0
  %527 = vmatprep.subr.bf16.mxu0 0
  %528 = vmatpush1.bf16.msra.mxu0 0
  %529 = vmatprep.subr.bf16.mxu0 0
  %530 = vmatpush1.bf16.msra.mxu0 0
  %531 = vmatprep.subr.bf16.mxu0 0
  %532 = vmatpush1.bf16.msra.mxu0 0
  %533 = vmatprep.subr.bf16.mxu0 0
  %534 = vmatpush1.bf16.msra.mxu0 0
  %535 = vmatprep.subr.bf16.mxu0 0
  %536 = vmatpush1.bf16.msra.mxu0 0
  %537 = vmatprep.subr.bf16.mxu0 0
  %538 = vmatpush1.bf16.msra.mxu0 0
  %539 = vmatprep.subr.bf16.mxu0 0
  %540 = vmatpush1.bf16.msra.mxu0 0
  %541 = vmatprep.subr.bf16.mxu0 0
  %542 = vmatpush1.bf16.msra.mxu0 0
  %543 = vmatprep.subr.bf16.mxu0 0
  %544 = vmatpush1.bf16.msra.mxu0 0
  %545 = vmatprep.mubr.bf16.mxu0 0
  %546 = vmatmul.mubr.bf16.gmra.mrb[0].mxu0 %v487
  %v547 = vpop.f32.mrb[0].mxu0
  %v548 = vadd.f32 %v379, %v547
  %v549 = vpop.f32.mrb[0].mxu0
  %v550 = vpop.f32.mrb[0].mxu0
  %v551 = vadd.f32 %v382, %v550
  %v552 = vpop.f32.mrb[0].mxu0
  %553 = vmatprep.mubr.bf16.mxu0 0
  %554 = vmatmul.mubr.bf16.gmra.mrb[0].mxu0 %v490
  %v555 = vpop.f32.mrb[0].mxu0
  %v556 = vadd.f32 %v387, %v555
  %v557 = vpop.f32.mrb[0].mxu0
  %v558 = vpop.f32.mrb[0].mxu0
  %v559 = vadd.f32 %v390, %v558
  %v560 = vpop.f32.mrb[0].mxu0
  %561 = vmatprep.mubr.bf16.mxu0 0
  %562 = vmatmul.mubr.bf16.gmra.mrb[0].mxu0 %v493
  %v563 = vpop.f32.mrb[0].mxu0
  %v564 = vadd.f32 %v395, %v563
  %v565 = vpop.f32.mrb[0].mxu0
  %v566 = vpop.f32.mrb[0].mxu0
  %v567 = vadd.f32 %v398, %v566
  %v568 = vpop.f32.mrb[0].mxu0
  %569 = vmatprep.mubr.bf16.mxu0 0
  %570 = vmatmul.mubr.bf16.gmra.mrb[0].mxu0 %v496
  %v571 = vpop.f32.mrb[0].mxu0
  %v572 = vadd.f32 %v403, %v571
  %v573 = vpop.f32.mrb[0].mxu0
  %v574 = vpop.f32.mrb[0].mxu0
  %v575 = vadd.f32 %v406, %v574
  %v576 = vpop.f32.mrb[0].mxu0
  %577 = vmatprep.mubr.bf16.mxu0 0
  %578 = vmatmul.mubr.bf16.gmra.mrb[0].mxu0 %v499
  %v579 = vpop.f32.mrb[0].mxu0
  %v580 = vadd.f32 %v411, %v579
  %v581 = vpop.f32.mrb[0].mxu0
  %v582 = vpop.f32.mrb[0].mxu0
  %v583 = vadd.f32 %v414, %v582
  %v584 = vpop.f32.mrb[0].mxu0
  %585 = vmatprep.mubr.bf16.mxu0 0
  %586 = vmatmul.mubr.bf16.gmra.mrb[0].mxu0 %v502
  %v587 = vpop.f32.mrb[0].mxu0
  %v588 = vadd.f32 %v419, %v587
  %v589 = vpop.f32.mrb[0].mxu0
  %v590 = vpop.f32.mrb[0].mxu0
  %v591 = vadd.f32 %v422, %v590
  %v592 = vpop.f32.mrb[0].mxu0
  %593 = vmatprep.mubr.bf16.mxu0 0
  %594 = vmatmul.mubr.bf16.gmra.mrb[0].mxu0 %v505
  %v595 = vpop.f32.mrb[0].mxu0
  %v596 = vadd.f32 %v427, %v595
  %v597 = vpop.f32.mrb[0].mxu0
  %v598 = vpop.f32.mrb[0].mxu0
  %v599 = vadd.f32 %v430, %v598
  %v600 = vpop.f32.mrb[0].mxu0
  %601 = vmatprep.mubr.bf16.mxu0 0
  %602 = vmatmul.mubr.bf16.gmra.mrb[0].mxu0 %v508
  %v603 = vpop.f32.mrb[0].mxu0
  %v604 = vadd.f32 %v435, %v603
  %v605 = vpop.f32.mrb[0].mxu0
  %v606 = vpop.f32.mrb[0].mxu0
  %v607 = vadd.f32 %v438, %v606
  %v608 = vpop.f32.mrb[0].mxu0
  %609 = vdwg.mxu0
  %s610 = scalar_lea.vmem %s1, 16
  %v611 = vld [vmem:[%s610] sm:$0xf]
  %v612 = vld [vmem:[%s610 + $0x4] sm:$0x3]
  %v615 = vunpack.c.l.b16 %v34
  %v616 = vunpack.c.l.b16 %v52
  %v617 = vpack.c.b16 %v459, %v458
  %v618 = vpack.c.b16 %v461, %v460
  %v619 = vpack.c.b16 %v463, %v462
  %v620 = vpack.c.b16 %v615, %v464
  %v621 = vpack.c.b16 %v467, %v466
  %v622 = vpack.c.b16 %v469, %v468
  %v623 = vpack.c.b16 %v471, %v470
  %v624 = vpack.c.b16 %v616, %v472
  %v627 = vunpack.c.l.b16 %v611
  %v628 = vunpack.c.l.b16 %v612
  %v629 = vpack.c.b16 %v628, %v627
  %v631 = vsel %vm315, %v617, 0
  %v634 = vsel %vm315, %v618, 0
  %v637 = vsel %vm315, %v619, 0
  %v640 = vsel %vm315, %v620, 0
  %v643 = vsel %vm315, %v621, 0
  %v646 = vsel %vm315, %v622, 0
  %v649 = vsel %vm315, %v623, 0
  %v652 = vsel %vm315, %v624, 0
  %v655 = vsel %vm340, %v629, 0
  %657 = vmatprep.subr.bf16.mxu0 0
  %658 = vmatpush1.bf16.msra.mxu0 %v655
  %659 = vmatprep.subr.bf16.mxu0 0
  %660 = vmatpush1.bf16.msra.mxu0 0
  %661 = vmatprep.subr.bf16.mxu0 0
  %662 = vmatpush1.bf16.msra.mxu0 0
  %663 = vmatprep.subr.bf16.mxu0 0
  %664 = vmatpush1.bf16.msra.mxu0 0
  %665 = vmatprep.subr.bf16.mxu0 0
  %666 = vmatpush1.bf16.msra.mxu0 0
  %667 = vmatprep.subr.bf16.mxu0 0
  %668 = vmatpush1.bf16.msra.mxu0 0
  %669 = vmatprep.subr.bf16.mxu0 0
  %670 = vmatpush1.bf16.msra.mxu0 0
  %671 = vmatprep.subr.bf16.mxu0 0
  %672 = vmatpush1.bf16.msra.mxu0 0
  %673 = vmatprep.subr.bf16.mxu0 0
  %674 = vmatpush1.bf16.msra.mxu0 0
  %675 = vmatprep.subr.bf16.mxu0 0
  %676 = vmatpush1.bf16.msra.mxu0 0
  %677 = vmatprep.subr.bf16.mxu0 0
  %678 = vmatpush1.bf16.msra.mxu0 0
  %679 = vmatprep.subr.bf16.mxu0 0
  %680 = vmatpush1.bf16.msra.mxu0 0
  %681 = vmatprep.subr.bf16.mxu0 0
  %682 = vmatpush1.bf16.msra.mxu0 0
  %683 = vmatprep.subr.bf16.mxu0 0
  %684 = vmatpush1.bf16.msra.mxu0 0
  %685 = vmatprep.subr.bf16.mxu0 0
  %686 = vmatpush1.bf16.msra.mxu0 0
  %687 = vmatprep.subr.bf16.mxu0 0
  %688 = vmatpush1.bf16.msra.mxu0 0
  %689 = vmatprep.mubr.bf16.mxu0 0
  %690 = vmatmul.mubr.bf16.gmra.mrb[0].mxu0 %v631
  %v691 = vpop.f32.mrb[0].mxu0
  %v692 = vadd.f32 0.0, %v691
  %v693 = vpop.f32.mrb[0].mxu0
  %v694 = vpop.f32.mrb[0].mxu0
  %v695 = vadd.f32 0.0, %v694
  %v696 = vpop.f32.mrb[0].mxu0
  %697 = vmatprep.mubr.bf16.mxu0 0
  %698 = vmatmul.mubr.bf16.gmra.mrb[0].mxu0 %v634
  %v699 = vpop.f32.mrb[0].mxu0
  %v700 = vadd.f32 0.0, %v699
  %v701 = vpop.f32.mrb[0].mxu0
  %v702 = vpop.f32.mrb[0].mxu0
  %v703 = vadd.f32 0.0, %v702
  %v704 = vpop.f32.mrb[0].mxu0
  %705 = vmatprep.mubr.bf16.mxu0 0
  %706 = vmatmul.mubr.bf16.gmra.mrb[0].mxu0 %v637
  %v707 = vpop.f32.mrb[0].mxu0
  %v708 = vadd.f32 0.0, %v707
  %v709 = vpop.f32.mrb[0].mxu0
  %v710 = vpop.f32.mrb[0].mxu0
  %v711 = vadd.f32 0.0, %v710
  %v712 = vpop.f32.mrb[0].mxu0
  %713 = vmatprep.mubr.bf16.mxu0 0
  %714 = vmatmul.mubr.bf16.gmra.mrb[0].mxu0 %v640
  %v715 = vpop.f32.mrb[0].mxu0
  %v716 = vadd.f32 0.0, %v715
  %v717 = vpop.f32.mrb[0].mxu0
  %v718 = vpop.f32.mrb[0].mxu0
  %v719 = vadd.f32 0.0, %v718
  %v720 = vpop.f32.mrb[0].mxu0
  %721 = vmatprep.mubr.bf16.mxu0 0
  %722 = vmatmul.mubr.bf16.gmra.mrb[0].mxu0 %v643
  %v723 = vpop.f32.mrb[0].mxu0
  %v724 = vadd.f32 0.0, %v723
  %v725 = vpop.f32.mrb[0].mxu0
  %v726 = vpop.f32.mrb[0].mxu0
  %v727 = vadd.f32 0.0, %v726
  %v728 = vpop.f32.mrb[0].mxu0
  %729 = vmatprep.mubr.bf16.mxu0 0
  %730 = vmatmul.mubr.bf16.gmra.mrb[0].mxu0 %v646
  %v731 = vpop.f32.mrb[0].mxu0
  %v732 = vadd.f32 0.0, %v731
  %v733 = vpop.f32.mrb[0].mxu0
  %v734 = vpop.f32.mrb[0].mxu0
  %v735 = vadd.f32 0.0, %v734
  %v736 = vpop.f32.mrb[0].mxu0
  %737 = vmatprep.mubr.bf16.mxu0 0
  %738 = vmatmul.mubr.bf16.gmra.mrb[0].mxu0 %v649
  %v739 = vpop.f32.mrb[0].mxu0
  %v740 = vadd.f32 0.0, %v739
  %v741 = vpop.f32.mrb[0].mxu0
  %v742 = vpop.f32.mrb[0].mxu0
  %v743 = vadd.f32 0.0, %v742
  %v744 = vpop.f32.mrb[0].mxu0
  %745 = vmatprep.mubr.bf16.mxu0 0
  %746 = vmatmul.mubr.bf16.gmra.mrb[0].mxu0 %v652
  %v747 = vpop.f32.mrb[0].mxu0
  %v748 = vadd.f32 0.0, %v747
  %v749 = vpop.f32.mrb[0].mxu0
  %v750 = vpop.f32.mrb[0].mxu0
  %v751 = vadd.f32 0.0, %v750
  %v752 = vpop.f32.mrb[0].mxu0
  %753 = vdwg.mxu0
  %v754 = vadd.f32 %v548, %v692
  %v755 = vadd.f32 %v551, %v695
  %v756 = vadd.f32 %v556, %v700
  %v757 = vadd.f32 %v559, %v703
  %v758 = vadd.f32 %v564, %v708
  %v759 = vadd.f32 %v567, %v711
  %v760 = vadd.f32 %v572, %v716
  %v761 = vadd.f32 %v575, %v719
  %v762 = vadd.f32 %v580, %v724
  %v763 = vadd.f32 %v583, %v727
  %v764 = vadd.f32 %v588, %v732
  %v765 = vadd.f32 %v591, %v735
  %v766 = vadd.f32 %v596, %v740
  %v767 = vadd.f32 %v599, %v743
  %v768 = vadd.f32 %v604, %v748
  %v769 = vadd.f32 %v607, %v751
  %v771 = vshrl.u32 %v34, 16
  %v773 = vrot.slane %v771, 4
  %v774 = vshll.u32 %v34, 16
  %v776 = vrot.slane %v774, 5
  %v777 = vor.u32 %v773, %v776
  %v778 = vrot.slane %v777, 4
  %v780 = vshll.u32 %v35, 16
  %v782 = vrot.slane %v780, 5
  %v783 = vsel %vm58, %v778, %v782
  %v785 = vshrl.u32 %v52, 16
  %v787 = vrot.slane %v785, 4
  %v788 = vshll.u32 %v52, 16
  %v790 = vrot.slane %v788, 5
  %v791 = vor.u32 %v787, %v790
  %v792 = vrot.slane %v791, 4
  %v794 = vshll.u32 %v53, 16
  %v796 = vrot.slane %v794, 5
  %v797 = vsel %vm58, %v792, %v796
  %s798 = scalar_lea.vmem %s1, 24
  %v799 = vld [vmem:[%s798] sm:$0xf]
  %v800 = vld [vmem:[%s798 + $0x4] sm:$0x3]
  %v801 = vunpack.c.l.b16 %v783
  %v802 = vunpack.c.l.b16 %v797
  %v803 = vpack.c.b16 %v288, %v287
  %v804 = vpack.c.b16 %v290, %v289
  %v805 = vpack.c.b16 %v292, %v291
  %v806 = vpack.c.b16 %v801, %v293
  %v807 = vpack.c.b16 %v296, %v295
  %v808 = vpack.c.b16 %v298, %v297
  %v809 = vpack.c.b16 %v300, %v299
  %v810 = vpack.c.b16 %v802, %v301
  %v813 = vunpack.c.l.b16 %v799
  %v814 = vunpack.c.l.b16 %v800
  %v815 = vpack.c.b16 %v814, %v813
  %v817 = vsel %vm315, %v803, 0
  %v820 = vsel %vm315, %v804, 0
  %v823 = vsel %vm315, %v805, 0
  %v826 = vsel %vm315, %v806, 0
  %v829 = vsel %vm315, %v807, 0
  %v832 = vsel %vm315, %v808, 0
  %v835 = vsel %vm315, %v809, 0
  %v838 = vsel %vm315, %v810, 0
  %v841 = vsel %vm340, %v815, 0
  %843 = vmatprep.subr.bf16.mxu0 0
  %844 = vmatpush1.bf16.msra.mxu0 %v841
  %845 = vmatprep.subr.bf16.mxu0 0
  %846 = vmatpush1.bf16.msra.mxu0 0
  %847 = vmatprep.subr.bf16.mxu0 0
  %848 = vmatpush1.bf16.msra.mxu0 0
  %849 = vmatprep.subr.bf16.mxu0 0
  %850 = vmatpush1.bf16.msra.mxu0 0
  %851 = vmatprep.subr.bf16.mxu0 0
  %852 = vmatpush1.bf16.msra.mxu0 0
  %853 = vmatprep.subr.bf16.mxu0 0
  %854 = vmatpush1.bf16.msra.mxu0 0
  %855 = vmatprep.subr.bf16.mxu0 0
  %856 = vmatpush1.bf16.msra.mxu0 0
  %857 = vmatprep.subr.bf16.mxu0 0
  %858 = vmatpush1.bf16.msra.mxu0 0
  %859 = vmatprep.subr.bf16.mxu0 0
  %860 = vmatpush1.bf16.msra.mxu0 0
  %861 = vmatprep.subr.bf16.mxu0 0
  %862 = vmatpush1.bf16.msra.mxu0 0
  %863 = vmatprep.subr.bf16.mxu0 0
  %864 = vmatpush1.bf16.msra.mxu0 0
  %865 = vmatprep.subr.bf16.mxu0 0
  %866 = vmatpush1.bf16.msra.mxu0 0
  %867 = vmatprep.subr.bf16.mxu0 0
  %868 = vmatpush1.bf16.msra.mxu0 0
  %869 = vmatprep.subr.bf16.mxu0 0
  %870 = vmatpush1.bf16.msra.mxu0 0
  %871 = vmatprep.subr.bf16.mxu0 0
  %872 = vmatpush1.bf16.msra.mxu0 0
  %873 = vmatprep.subr.bf16.mxu0 0
  %874 = vmatpush1.bf16.msra.mxu0 0
  %875 = vmatprep.mubr.bf16.mxu0 0
  %876 = vmatmul.mubr.bf16.gmra.mrb[0].mxu0 %v817
  %v877 = vpop.f32.mrb[0].mxu0
  %v878 = vadd.f32 0.0, %v877
  %v879 = vpop.f32.mrb[0].mxu0
  %v880 = vpop.f32.mrb[0].mxu0
  %v881 = vadd.f32 0.0, %v880
  %v882 = vpop.f32.mrb[0].mxu0
  %883 = vmatprep.mubr.bf16.mxu0 0
  %884 = vmatmul.mubr.bf16.gmra.mrb[0].mxu0 %v820
  %v885 = vpop.f32.mrb[0].mxu0
  %v886 = vadd.f32 0.0, %v885
  %v887 = vpop.f32.mrb[0].mxu0
  %v888 = vpop.f32.mrb[0].mxu0
  %v889 = vadd.f32 0.0, %v888
  %v890 = vpop.f32.mrb[0].mxu0
  %891 = vmatprep.mubr.bf16.mxu0 0
  %892 = vmatmul.mubr.bf16.gmra.mrb[0].mxu0 %v823
  %v893 = vpop.f32.mrb[0].mxu0
  %v894 = vadd.f32 0.0, %v893
  %v895 = vpop.f32.mrb[0].mxu0
  %v896 = vpop.f32.mrb[0].mxu0
  %v897 = vadd.f32 0.0, %v896
  %v898 = vpop.f32.mrb[0].mxu0
  %899 = vmatprep.mubr.bf16.mxu0 0
  %900 = vmatmul.mubr.bf16.gmra.mrb[0].mxu0 %v826
  %v901 = vpop.f32.mrb[0].mxu0
  %v902 = vadd.f32 0.0, %v901
  %v903 = vpop.f32.mrb[0].mxu0
  %v904 = vpop.f32.mrb[0].mxu0
  %v905 = vadd.f32 0.0, %v904
  %v906 = vpop.f32.mrb[0].mxu0
  %907 = vmatprep.mubr.bf16.mxu0 0
  %908 = vmatmul.mubr.bf16.gmra.mrb[0].mxu0 %v829
  %v909 = vpop.f32.mrb[0].mxu0
  %v910 = vadd.f32 0.0, %v909
  %v911 = vpop.f32.mrb[0].mxu0
  %v912 = vpop.f32.mrb[0].mxu0
  %v913 = vadd.f32 0.0, %v912
  %v914 = vpop.f32.mrb[0].mxu0
  %915 = vmatprep.mubr.bf16.mxu0 0
  %916 = vmatmul.mubr.bf16.gmra.mrb[0].mxu0 %v832
  %v917 = vpop.f32.mrb[0].mxu0
  %v918 = vadd.f32 0.0, %v917
  %v919 = vpop.f32.mrb[0].mxu0
  %v920 = vpop.f32.mrb[0].mxu0
  %v921 = vadd.f32 0.0, %v920
  %v922 = vpop.f32.mrb[0].mxu0
  %923 = vmatprep.mubr.bf16.mxu0 0
  %924 = vmatmul.mubr.bf16.gmra.mrb[0].mxu0 %v835
  %v925 = vpop.f32.mrb[0].mxu0
  %v926 = vadd.f32 0.0, %v925
  %v927 = vpop.f32.mrb[0].mxu0
  %v928 = vpop.f32.mrb[0].mxu0
  %v929 = vadd.f32 0.0, %v928
  %v930 = vpop.f32.mrb[0].mxu0
  %931 = vmatprep.mubr.bf16.mxu0 0
  %932 = vmatmul.mubr.bf16.gmra.mrb[0].mxu0 %v838
  %v933 = vpop.f32.mrb[0].mxu0
  %v934 = vadd.f32 0.0, %v933
  %v935 = vpop.f32.mrb[0].mxu0
  %v936 = vpop.f32.mrb[0].mxu0
  %v937 = vadd.f32 0.0, %v936
  %v938 = vpop.f32.mrb[0].mxu0
  %939 = vdwg.mxu0
  %v940 = vadd.f32 %v754, %v878
  %v941 = vadd.f32 %v755, %v881
  %v942 = vadd.f32 %v756, %v886
  %v943 = vadd.f32 %v757, %v889
  %v944 = vadd.f32 %v758, %v894
  %v945 = vadd.f32 %v759, %v897
  %v946 = vadd.f32 %v760, %v902
  %v947 = vadd.f32 %v761, %v905
  %v948 = vadd.f32 %v762, %v910
  %v949 = vadd.f32 %v763, %v913
  %v950 = vadd.f32 %v764, %v918
  %v951 = vadd.f32 %v765, %v921
  %v952 = vadd.f32 %v766, %v926
  %v953 = vadd.f32 %v767, %v929
  %v954 = vadd.f32 %v768, %v934
  %v955 = vadd.f32 %v769, %v937
  %v956 = vld [vmem:[%s2] sm:$0x1]
  %v958 = vlaneseq
  %v959 = vshrl.u32 %v958, 7
  %v960 = vsub.s32 0, %v959
  %v961 = vrot.slane %v956, %v960
  %v963 = vadd.f32 %v940, %v961
  %v964 = vadd.f32 %v941, %v961
  %v965 = vadd.f32 %v942, %v961
  %v966 = vadd.f32 %v943, %v961
  %v967 = vadd.f32 %v944, %v961
  %v968 = vadd.f32 %v945, %v961
  %v969 = vadd.f32 %v946, %v961
  %v970 = vadd.f32 %v947, %v961
  %v971 = vadd.f32 %v948, %v961
  %v972 = vadd.f32 %v949, %v961
  %v973 = vadd.f32 %v950, %v961
  %v974 = vadd.f32 %v951, %v961
  %v975 = vadd.f32 %v952, %v961
  %v976 = vadd.f32 %v953, %v961
  %v977 = vadd.f32 %v954, %v961
  %v978 = vadd.f32 %v955, %v961
  %vm979 = vcmask 130048
  %v980 = vsel %vm979, %v963, 0.0
  %v981 = vsel %vm979, %v964, 0.0
  %v982 = vadd.f32 %v980, %v981
  %v983 = vsel %vm979, %v965, 0.0
  %v984 = vadd.f32 %v982, %v983
  %v985 = vsel %vm979, %v966, 0.0
  %v986 = vadd.f32 %v984, %v985
  %v987 = vsel %vm979, %v967, 0.0
  %v988 = vadd.f32 %v986, %v987
  %v989 = vsel %vm979, %v968, 0.0
  %v990 = vadd.f32 %v988, %v989
  %v991 = vsel %vm979, %v969, 0.0
  %v992 = vadd.f32 %v990, %v991
  %v993 = vsel %vm979, %v970, 0.0
  %v994 = vadd.f32 %v992, %v993
  %v995 = vsel %vm979, %v971, 0.0
  %v996 = vadd.f32 %v994, %v995
  %v997 = vsel %vm979, %v972, 0.0
  %v998 = vadd.f32 %v996, %v997
  %v999 = vsel %vm979, %v973, 0.0
  %v1000 = vadd.f32 %v998, %v999
  %v1001 = vsel %vm979, %v974, 0.0
  %v1002 = vadd.f32 %v1000, %v1001
  %v1003 = vsel %vm979, %v975, 0.0
  %v1004 = vadd.f32 %v1002, %v1003
  %v1005 = vsel %vm979, %v976, 0.0
  %v1006 = vadd.f32 %v1004, %v1005
  %v1007 = vsel %vm979, %v977, 0.0
  %v1008 = vadd.f32 %v1006, %v1007
  %v1009 = vsel %vm979, %v978, 0.0
  %v1010 = vadd.f32 %v1008, %v1009
  %v1011 = vrot.slane %v1010, 4
  %v1012 = vadd.f32 %v1010, %v1011
  %v1013 = vrot.slane %v1012, 2
  %v1014 = vadd.f32 %v1012, %v1013
  %v1015 = vrot.slane %v1014, 1
  %v1016 = vadd.f32 %v1014, %v1015
  %vm1017 = vcmask 122880
  %1018 = vst.msk [vmem:[%s4] sm:$0x1] %vm1017, %v1016
  %v1019 = vmul.f32 %v963, %v963
  %v1020 = vmul.f32 %v964, %v964
  %v1021 = vmul.f32 %v965, %v965
  %v1022 = vmul.f32 %v966, %v966
  %v1023 = vmul.f32 %v967, %v967
  %v1024 = vmul.f32 %v968, %v968
  %v1025 = vmul.f32 %v969, %v969
  %v1026 = vmul.f32 %v970, %v970
  %v1027 = vmul.f32 %v971, %v971
  %v1028 = vmul.f32 %v972, %v972
  %v1029 = vmul.f32 %v973, %v973
  %v1030 = vmul.f32 %v974, %v974
  %v1031 = vmul.f32 %v975, %v975
  %v1032 = vmul.f32 %v976, %v976
  %v1033 = vmul.f32 %v977, %v977
  %v1034 = vmul.f32 %v978, %v978
  %v1035 = vsel %vm979, %v1019, 0.0
  %v1036 = vsel %vm979, %v1020, 0.0
  %v1037 = vadd.f32 %v1035, %v1036
  %v1038 = vsel %vm979, %v1021, 0.0
  %v1039 = vadd.f32 %v1037, %v1038
  %v1040 = vsel %vm979, %v1022, 0.0
  %v1041 = vadd.f32 %v1039, %v1040
  %v1042 = vsel %vm979, %v1023, 0.0
  %v1043 = vadd.f32 %v1041, %v1042
  %v1044 = vsel %vm979, %v1024, 0.0
  %v1045 = vadd.f32 %v1043, %v1044
  %v1046 = vsel %vm979, %v1025, 0.0
  %v1047 = vadd.f32 %v1045, %v1046
  %v1048 = vsel %vm979, %v1026, 0.0
  %v1049 = vadd.f32 %v1047, %v1048
  %v1050 = vsel %vm979, %v1027, 0.0
  %v1051 = vadd.f32 %v1049, %v1050
  %v1052 = vsel %vm979, %v1028, 0.0
  %v1053 = vadd.f32 %v1051, %v1052
  %v1054 = vsel %vm979, %v1029, 0.0
  %v1055 = vadd.f32 %v1053, %v1054
  %v1056 = vsel %vm979, %v1030, 0.0
  %v1057 = vadd.f32 %v1055, %v1056
  %v1058 = vsel %vm979, %v1031, 0.0
  %v1059 = vadd.f32 %v1057, %v1058
  %v1060 = vsel %vm979, %v1032, 0.0
  %v1061 = vadd.f32 %v1059, %v1060
  %v1062 = vsel %vm979, %v1033, 0.0
  %v1063 = vadd.f32 %v1061, %v1062
  %v1064 = vsel %vm979, %v1034, 0.0
  %v1065 = vadd.f32 %v1063, %v1064
  %v1066 = vrot.slane %v1065, 4
  %v1067 = vadd.f32 %v1065, %v1066
  %v1068 = vrot.slane %v1067, 2
  %v1069 = vadd.f32 %v1067, %v1068
  %v1070 = vrot.slane %v1069, 1
  %v1071 = vadd.f32 %v1069, %v1070
  %1072 = vst.msk [vmem:[%s5] sm:$0x1] %vm1017, %v1071
  %v1073 = vpack.c.bf16 %v963, %v963
  %v1074 = vpack.c.bf16 %v964, %v964
  %v1075 = vpack.c.bf16 %v965, %v965
  %v1076 = vpack.c.bf16 %v966, %v966
  %v1077 = vpack.c.bf16 %v967, %v967
  %v1078 = vpack.c.bf16 %v968, %v968
  %v1079 = vpack.c.bf16 %v969, %v969
  %v1080 = vpack.c.bf16 %v970, %v970
  %v1081 = vpack.c.bf16 %v971, %v971
  %v1082 = vpack.c.bf16 %v972, %v972
  %v1083 = vpack.c.bf16 %v973, %v973
  %v1084 = vpack.c.bf16 %v974, %v974
  %v1085 = vpack.c.bf16 %v975, %v975
  %v1086 = vpack.c.bf16 %v976, %v976
  %v1087 = vpack.c.bf16 %v977, %v977
  %v1088 = vpack.c.bf16 %v978, %v978
  %vm1089 = vcmask 125952
  %1090 = vst.msk [vmem:[%s3] sm:$0xf] %vm1089, %v1073
  %1091 = vst.msk [vmem:[%s3 + $0x4] sm:$0xf] %vm1089, %v1074
  %1092 = vst.msk [vmem:[%s3 + $0x8] sm:$0xf] %vm1089, %v1075
  %1093 = vst.msk [vmem:[%s3 + $0xc] sm:$0xf] %vm1089, %v1076
  %1094 = vst.msk [vmem:[%s3 + $0x10] sm:$0xf] %vm1089, %v1077
  %1095 = vst.msk [vmem:[%s3 + $0x14] sm:$0xf] %vm1089, %v1078
  %1096 = vst.msk [vmem:[%s3 + $0x18] sm:$0xf] %vm1089, %v1079
  %1097 = vst.msk [vmem:[%s3 + $0x1c] sm:$0xf] %vm1089, %v1080
  %1098 = vst.msk [vmem:[%s3 + $0x20] sm:$0xf] %vm1089, %v1081
  %1099 = vst.msk [vmem:[%s3 + $0x24] sm:$0xf] %vm1089, %v1082
  %1100 = vst.msk [vmem:[%s3 + $0x28] sm:$0xf] %vm1089, %v1083
  %1101 = vst.msk [vmem:[%s3 + $0x2c] sm:$0xf] %vm1089, %v1084
  %1102 = vst.msk [vmem:[%s3 + $0x30] sm:$0xf] %vm1089, %v1085
  %1103 = vst.msk [vmem:[%s3 + $0x34] sm:$0xf] %vm1089, %v1086
  %1104 = vst.msk [vmem:[%s3 + $0x38] sm:$0xf] %vm1089, %v1087
  %1105 = vst.msk [vmem:[%s3 + $0x3c] sm:$0xf] %vm1089, %v1088
  // Predicated region
  $region14: #{encoder_forward.7} parent=0 // pred_check
    _
  $region15: #{encoder_forward.7} parent=0 // pred_check_branch
    %1107 = sbr.rel (0) target = $region17
  $region16: #{encoder_forward.7} parent=0 // pred_region
    _
  $region17: #{encoder_forward.7} parent=0 // pred_fallthru
    _
  // Predicated region
  $region18: #{encoder_forward.7} parent=0 // pred_check
    _
  $region19: #{encoder_forward.7} parent=0 // pred_check_branch
    %1109 = sbr.rel (0) target = $region21
  $region20: #{encoder_forward.7} parent=0 // pred_region
    _
  $region21: #{encoder_forward.7} parent=0 // pred_fallthru
    _
  // Predicated region
  $region22: #{encoder_forward.7} parent=0 // pred_check
    _
  $region23: #{encoder_forward.7} parent=0 // pred_check_branch
    %1111 = sbr.rel (0) target = $region25
  $region24: #{encoder_forward.7} parent=0 // pred_region
    _
  $region25: #{encoder_forward.7} parent=0 // pred_fallthru
    _
  // Predicated region
  $region26: #{encoder_forward.7} parent=0 // pred_check
    _
  $region27: #{encoder_forward.7} parent=0 // pred_check_branch
    %1113 = sbr.rel (0) target = $region29
  $region28: #{encoder_forward.7} parent=0 // pred_region
    _
  $region29: #{encoder_forward.7} parent=0 // pred_fallthru
    _
  // Predicated region
  $region30: #{encoder_forward.7} parent=0 // pred_check
    _
  $region31: #{encoder_forward.7} parent=0 // pred_check_branch
    %1115 = sbr.rel (0) target = $region33
  $region32: #{encoder_forward.7} parent=0 // pred_region
    _
  $region33: #{encoder_forward.7} parent=0 // pred_fallthru
    _
  // Predicated region
  $region34: #{encoder_forward.7} parent=0 // pred_check
    _
  $region35: #{encoder_forward.7} parent=0 // pred_check_branch
    %1117 = sbr.rel (0) target = $region37
  $region36: #{encoder_forward.7} parent=0 // pred_region
    _
  $region37: #{encoder_forward.7} parent=0 // pred_fallthru
    _

// kernel: encoder_forward.11
$region0: #{encoder_forward.11}
  #allocation0 [shape = 'u32[]', space=smem, size = 0x4, offset = 0x4, fixed_abs, tag = 'smem constant byte address 0x4 - core index']
  #allocation1 [shape = 'u32[144,128]{1,0:T(1,128)}', space=vmem, size = 0x12000, scoped, tag = 'internal scratch']
  %s0 = inlined_call_operand.vmem [shape: bf16[2,4,4,32], index: 0, kind: input, shape index: {}]
  %s1 = inlined_call_operand.vmem [shape: bf16[1,32,32], index: 1, kind: input, shape index: {}]
  %s2 = inlined_call_operand.vmem [shape: f32[1,32], index: 2, kind: input, shape index: {}]
  %s3 = inlined_call_operand.vmem [shape: bf16[2,4,4,32], index: 3, kind: input, shape index: {}]
  %s4 = inlined_call_operand.vmem [shape: f32[1,32], index: 4, kind: input, shape index: {}]
  %s5 = inlined_call_operand.vmem [shape: f32[1,32], index: 5, kind: input, shape index: {}]
  %s6 = inlined_call_operand.vmem [shape: bf16[2,4,4,32], index: 6, kind: output, shape index: {}]
  %s7 = sld [smem:[#allocation0]]
  $region34: #{encoder_forward.11} parent=0
    _
  %s9 = ssub.s32 1, %s7
  %s10 = scalar_select 0, %s9, %s7
  // Predicated region
  $region2: #{encoder_forward.11} parent=0 // pred_check
    _
  $region3: #{encoder_forward.11} parent=0 // pred_check_branch
    %12 = sbr.rel (0) target = $region5
  $region4: #{encoder_forward.11} parent=0 // pred_region
    _
  $region5: #{encoder_forward.11} parent=0 // pred_fallthru
    _
  // Predicated region
  $region6: #{encoder_forward.11} parent=0 // pred_check
    _
  $region7: #{encoder_forward.11} parent=0 // pred_check_branch
    %14 = sbr.rel (0) target = $region9
  $region8: #{encoder_forward.11} parent=0 // pred_region
    _
  $region9: #{encoder_forward.11} parent=0 // pred_fallthru
    _
  // Predicated region
  $region10: #{encoder_forward.11} parent=0 // pred_check
    _
  $region11: #{encoder_forward.11} parent=0 // pred_check_branch
    %16 = sbr.rel (0) target = $region13
  $region12: #{encoder_forward.11} parent=0 // pred_region
    _
  $region13: #{encoder_forward.11} parent=0 // pred_fallthru
    _
  // Predicated region
  $region14: #{encoder_forward.11} parent=0 // pred_check
    _
  $region15: #{encoder_forward.11} parent=0 // pred_check_branch
    %18 = sbr.rel (0) target = $region17
  $region16: #{encoder_forward.11} parent=0 // pred_region
    _
  $region17: #{encoder_forward.11} parent=0 // pred_fallthru
    _
  // Predicated region
  $region18: #{encoder_forward.11} parent=0 // pred_check
    _
  $region19: #{encoder_forward.11} parent=0 // pred_check_branch
    %20 = sbr.rel (0) target = $region21
  $region20: #{encoder_forward.11} parent=0 // pred_region
    _
  $region21: #{encoder_forward.11} parent=0 // pred_fallthru
    _
  // Predicated region
  $region22: #{encoder_forward.11} parent=0 // pred_check
    _
  $region23: #{encoder_forward.11} parent=0 // pred_check_branch
    %22 = sbr.rel (0) target = $region25
  $region24: #{encoder_forward.11} parent=0 // pred_region
    _
  $region25: #{encoder_forward.11} parent=0 // pred_fallthru
    _
  %v24 = vld [vmem:[%s0] sm:$0x3]
  %v25 = vld [vmem:[%s0 + $0x2] sm:$0x3]
  %v26 = vld [vmem:[%s0 + $0x4] sm:$0x3]
  %v27 = vld [vmem:[%s0 + $0x6] sm:$0x3]
  %v28 = vld [vmem:[%s0 + $0x8] sm:$0x3]
  %v29 = vld [vmem:[%s0 + $0xa] sm:$0x3]
  %v30 = vld [vmem:[%s0 + $0xc] sm:$0x3]
  %v31 = vld [vmem:[%s0 + $0xe] sm:$0x3]
  %v32 = vld [vmem:[%s1] sm:$0xf]
  %v33 = vld [vmem:[%s1 + $0x4] sm:$0xf]
  %v34 = vld [vmem:[%s1 + $0x8] sm:$0xf]
  %v35 = vld [vmem:[%s1 + $0xc] sm:$0xf]
  %v36 = vld [vmem:[%s2] sm:$0x1]
  %v38 = vlaneseq
  %v39 = vshrl.u32 %v38, 7
  %v40 = vsub.s32 0, %v39
  %v41 = vrot.slane %v36, %v40
  %v51 = vcombine.low %v24, %v25
  %v52 = vcombine.low %v26, %v27
  %v54 = vunpack.c.l.s4 1983009808
  %v55 = vunpack.c.0.s8 %v54
  %v56 = vlaneseq
  %v57 = vshrl.u32 %v56, 7
  %v58 = vsub.s32 %v55, %v57
  %v59 = vrot.slane %v51, %v58
  %v61 = vunpack.c.l.s4 1983009808
  %v62 = vunpack.c.0.s8 %v61
  %v63 = vlaneseq
  %v64 = vshrl.u32 %v63, 7
  %v65 = vsub.s32 %v62, %v64
  %v66 = vrot.slane %v52, %v65
  %v67 = vcombine.low %v59, %v66
  %v68 = vcombine.low %v28, %v29
  %v69 = vcombine.low %v30, %v31
  %v71 = vunpack.c.l.s4 1983009808
  %v72 = vunpack.c.0.s8 %v71
  %v73 = vlaneseq
  %v74 = vshrl.u32 %v73, 7
  %v75 = vsub.s32 %v72, %v74
  %v76 = vrot.slane %v68, %v75
  %v78 = vunpack.c.l.s4 1983009808
  %v79 = vunpack.c.0.s8 %v78
  %v80 = vlaneseq
  %v81 = vshrl.u32 %v80, 7
  %v82 = vsub.s32 %v79, %v81
  %v83 = vrot.slane %v69, %v82
  %v84 = vcombine.low %v76, %v83
  %v89 = vunpack.c.l.b16 %v32
  %v90 = vunpack.c.l.b16 %v33
  %v91 = vunpack.c.l.b16 %v34
  %v92 = vunpack.c.l.b16 %v35
  %v93 = vpack.c.b16 %v90, %v89
  %v94 = vpack.c.b16 %v92, %v91
  %vm97 = vcmask 261120
  %v99 = vsel %vm97, %v67, 0
  %v102 = vsel %vm97, %v84, 0
  %104 = vmatprep.subr.bf16.mxu0 0
  %105 = vmatpush1.bf16.msra.mxu0 %v93
  %106 = vmatprep.subr.bf16.mxu0 0
  %107 = vmatpush1.bf16.msra.mxu0 %v94
  %108 = vmatprep.subr.bf16.mxu0 0
  %109 = vmatpush1.bf16.msra.mxu0 0
  %110 = vmatprep.subr.bf16.mxu0 0
  %111 = vmatpush1.bf16.msra.mxu0 0
  %112 = vmatprep.subr.bf16.mxu0 0
  %113 = vmatpush1.bf16.msra.mxu0 0
  %114 = vmatprep.subr.bf16.mxu0 0
  %115 = vmatpush1.bf16.msra.mxu0 0
  %116 = vmatprep.subr.bf16.mxu0 0
  %117 = vmatpush1.bf16.msra.mxu0 0
  %118 = vmatprep.subr.bf16.mxu0 0
  %119 = vmatpush1.bf16.msra.mxu0 0
  %120 = vmatprep.subr.bf16.mxu0 0
  %121 = vmatpush1.bf16.msra.mxu0 0
  %122 = vmatprep.subr.bf16.mxu0 0
  %123 = vmatpush1.bf16.msra.mxu0 0
  %124 = vmatprep.subr.bf16.mxu0 0
  %125 = vmatpush1.bf16.msra.mxu0 0
  %126 = vmatprep.subr.bf16.mxu0 0
  %127 = vmatpush1.bf16.msra.mxu0 0
  %128 = vmatprep.subr.bf16.mxu0 0
  %129 = vmatpush1.bf16.msra.mxu0 0
  %130 = vmatprep.subr.bf16.mxu0 0
  %131 = vmatpush1.bf16.msra.mxu0 0
  %132 = vmatprep.subr.bf16.mxu0 0
  %133 = vmatpush1.bf16.msra.mxu0 0
  %134 = vmatprep.subr.bf16.mxu0 0
  %135 = vmatpush1.bf16.msra.mxu0 0
  %136 = vmatprep.mubr.bf16.mxu0 0
  %137 = vmatmul.mubr.bf16.gmra.mrb[0].mxu0 %v99
  %v138 = vpop.f32.mrb[0].mxu0
  %v139 = vadd.f32 %v41, %v138
  %v140 = vpop.f32.mrb[0].mxu0
  %v141 = vpop.f32.mrb[0].mxu0
  %v142 = vadd.f32 %v41, %v141
  %v143 = vpop.f32.mrb[0].mxu0
  %144 = vmatprep.mubr.bf16.mxu0 0
  %145 = vmatmul.mubr.bf16.gmra.mrb[0].mxu0 %v102
  %v146 = vpop.f32.mrb[0].mxu0
  %v147 = vadd.f32 %v41, %v146
  %v148 = vpop.f32.mrb[0].mxu0
  %v149 = vpop.f32.mrb[0].mxu0
  %v150 = vadd.f32 %v41, %v149
  %v151 = vpop.f32.mrb[0].mxu0
  %152 = vdwg.mxu0
  %v153 = vld [vmem:[%s3] sm:$0x3]
  %v154 = vld [vmem:[%s3 + $0x2] sm:$0x3]
  %v155 = vld [vmem:[%s3 + $0x4] sm:$0x3]
  %v156 = vld [vmem:[%s3 + $0x6] sm:$0x3]
  %v157 = vld [vmem:[%s3 + $0x8] sm:$0x3]
  %v158 = vld [vmem:[%s3 + $0xa] sm:$0x3]
  %v159 = vld [vmem:[%s3 + $0xc] sm:$0x3]
  %v160 = vld [vmem:[%s3 + $0xe] sm:$0x3]
  %v161 = vunpack.c.l.bf16 %v153
  %v162 = vunpack.c.l.bf16 %v154
  %v163 = vunpack.c.l.bf16 %v155
  %v164 = vunpack.c.l.bf16 %v156
  %v165 = vunpack.c.l.bf16 %v157
  %v166 = vunpack.c.l.bf16 %v158
  %v167 = vunpack.c.l.bf16 %v159
  %v168 = vunpack.c.l.bf16 %v160
  %v169 = vld [vmem:[%s4] sm:$0x1]
  %v171 = vlaneseq
  %v172 = vshrl.u32 %v171, 7
  %v173 = vsub.s32 0, %v172
  %v174 = vrot.slane %v169, %v173
  %v176 = vcombine.high %v174, %v174
  %v178 = vmul.f32 %v161, %v174
  %v179 = vmul.f32 %v162, %v176
  %v180 = vmul.f32 %v163, %v174
  %v181 = vmul.f32 %v164, %v176
  %v182 = vmul.f32 %v165, %v174
  %v183 = vmul.f32 %v166, %v176
  %v184 = vmul.f32 %v167, %v174
  %v185 = vmul.f32 %v168, %v176
  %v186 = vld [vmem:[%s5] sm:$0x1]
  %v188 = vlaneseq
  %v189 = vshrl.u32 %v188, 7
  %v190 = vsub.s32 0, %v189
  %v191 = vrot.slane %v186, %v190
  %v193 = vcombine.high %v191, %v191
  %v195 = vadd.f32 %v178, %v191
  %v196 = vadd.f32 %v179, %v193
  %v197 = vadd.f32 %v180, %v191
  %v198 = vadd.f32 %v181, %v193
  %v199 = vadd.f32 %v182, %v191
  %v200 = vadd.f32 %v183, %v193
  %v201 = vadd.f32 %v184, %v191
  %v202 = vadd.f32 %v185, %v193
  %v211 = vcombine.low %v195, %v196
  %v212 = vcombine.low %v197, %v198
  %v213 = vcombine.low %v199, %v200
  %v214 = vcombine.low %v201, %v202
  %v219 = vadd.f32 %v139, %v211
  %v220 = vadd.f32 %v142, %v212
  %v221 = vadd.f32 %v147, %v213
  %v222 = vadd.f32 %v150, %v214
  %v227 = vcombine.high %v219, %v219
  %v228 = vcombine.high %v220, %v220
  %v229 = vcombine.high %v221, %v221
  %v230 = vcombine.high %v222, %v222
  %v235 = vpack.c.bf16 %v219, %v219
  %v236 = vpack.c.bf16 %v227, %v227
  %v237 = vpack.c.bf16 %v220, %v220
  %v238 = vpack.c.bf16 %v228, %v228
  %v239 = vpack.c.bf16 %v221, %v221
  %v240 = vpack.c.bf16 %v229, %v229
  %v241 = vpack.c.bf16 %v222, %v222
  %v242 = vpack.c.bf16 %v230, %v230
  %vm243 = vcmask 254976
  %244 = vst.msk [vmem:[%s6] sm:$0x3] %vm243, %v235
  %245 = vst.msk [vmem:[%s6 + $0x2] sm:$0x3] %vm243, %v236
  %246 = vst.msk [vmem:[%s6 + $0x4] sm:$0x3] %vm243, %v237
  %247 = vst.msk [vmem:[%s6 + $0x6] sm:$0x3] %vm243, %v238
  %248 = vst.msk [vmem:[%s6 + $0x8] sm:$0x3] %vm243, %v239
  %249 = vst.msk [vmem:[%s6 + $0xa] sm:$0x3] %vm243, %v240
  %250 = vst.msk [vmem:[%s6 + $0xc] sm:$0x3] %vm243, %v241
  %251 = vst.msk [vmem:[%s6 + $0xe] sm:$0x3] %vm243, %v242
  // Predicated region
  $region26: #{encoder_forward.11} parent=0 // pred_check
    _
  $region27: #{encoder_forward.11} parent=0 // pred_check_branch
    %253 = sbr.rel (0) target = $region29
  $region28: #{encoder_forward.11} parent=0 // pred_region
    _
  $region29: #{encoder_forward.11} parent=0 // pred_fallthru
    _
  // Predicated region
  $region30: #{encoder_forward.11} parent=0 // pred_check
    _
  $region31: #{encoder_forward.11} parent=0 // pred_check_branch
    %255 = sbr.rel (0) target = $region33
  $region32: #{encoder_forward.11} parent=0 // pred_region
    _
  $region33: #{encoder_forward.11} parent=0 // pred_fallthru
    _

// kernel: encoder_forward.8
$region0: #{encoder_forward.8}
  #allocation0 [shape = 'u32[]', space=smem, size = 0x4, offset = 0x4, fixed_abs, tag = 'smem constant byte address 0x4 - core index']
  #allocation1 [shape = 'u32[144,128]{1,0:T(1,128)}', space=vmem, size = 0x12000, scoped, tag = 'internal scratch']
  %s0 = inlined_call_operand.vmem [shape: bf16[2,5,5,64], index: 0, kind: input, shape index: {}]
  %s1 = inlined_call_operand.vmem [shape: bf16[4,64,32], index: 1, kind: input, shape index: {}]
  %s2 = inlined_call_operand.vmem [shape: f32[1,32], index: 2, kind: input, shape index: {}]
  %s3 = inlined_call_operand.vmem [shape: f32[1,64], index: 3, kind: input, shape index: {}]
  %s4 = inlined_call_operand.vmem [shape: f32[1,64], index: 4, kind: input, shape index: {}]
  %s5 = inlined_call_operand.vmem [shape: f32[1,64], index: 5, kind: input, shape index: {}]
  %s6 = inlined_call_operand.vmem [shape: f32[1,64], index: 6, kind: input, shape index: {}]
  %s7 = inlined_call_operand.vmem [shape: bf16[2,4,4,32], index: 7, kind: output, shape index: {0}]
  %s8 = inlined_call_operand.vmem [shape: f32[1,1,32], index: 8, kind: output, shape index: {1}]
  %s9 = inlined_call_operand.vmem [shape: f32[1,1,32], index: 9, kind: output, shape index: {2}]
  %10 = xla_tuple %s7, %s8, %s9
  %s11 = sld [smem:[#allocation0]]
  $region54: #{encoder_forward.8} parent=0
    _
  %s13 = ssub.s32 1, %s11
  %s14 = scalar_select 0, %s13, %s11
  // Predicated region
  $region2: #{encoder_forward.8} parent=0 // pred_check
    _
  $region3: #{encoder_forward.8} parent=0 // pred_check_branch
    %16 = sbr.rel (0) target = $region5
  $region4: #{encoder_forward.8} parent=0 // pred_region
    _
  $region5: #{encoder_forward.8} parent=0 // pred_fallthru
    _
  // Predicated region
  $region6: #{encoder_forward.8} parent=0 // pred_check
    _
  $region7: #{encoder_forward.8} parent=0 // pred_check_branch
    %18 = sbr.rel (0) target = $region9
  $region8: #{encoder_forward.8} parent=0 // pred_region
    _
  $region9: #{encoder_forward.8} parent=0 // pred_fallthru
    _
  // Predicated region
  $region10: #{encoder_forward.8} parent=0 // pred_check
    _
  $region11: #{encoder_forward.8} parent=0 // pred_check_branch
    %20 = sbr.rel (0) target = $region13
  $region12: #{encoder_forward.8} parent=0 // pred_region
    _
  $region13: #{encoder_forward.8} parent=0 // pred_fallthru
    _
  // Predicated region
  $region14: #{encoder_forward.8} parent=0 // pred_check
    _
  $region15: #{encoder_forward.8} parent=0 // pred_check_branch
    %22 = sbr.rel (0) target = $region17
  $region16: #{encoder_forward.8} parent=0 // pred_region
    _
  $region17: #{encoder_forward.8} parent=0 // pred_fallthru
    _
  // Predicated region
  $region18: #{encoder_forward.8} parent=0 // pred_check
    _
  $region19: #{encoder_forward.8} parent=0 // pred_check_branch
    %24 = sbr.rel (0) target = $region21
  $region20: #{encoder_forward.8} parent=0 // pred_region
    _
  $region21: #{encoder_forward.8} parent=0 // pred_fallthru
    _
  // Predicated region
  $region22: #{encoder_forward.8} parent=0 // pred_check
    _
  $region23: #{encoder_forward.8} parent=0 // pred_check_branch
    %26 = sbr.rel (0) target = $region25
  $region24: #{encoder_forward.8} parent=0 // pred_region
    _
  $region25: #{encoder_forward.8} parent=0 // pred_fallthru
    _
  // Predicated region
  $region26: #{encoder_forward.8} parent=0 // pred_check
    _
  $region27: #{encoder_forward.8} parent=0 // pred_check_branch
    %28 = sbr.rel (0) target = $region29
  $region28: #{encoder_forward.8} parent=0 // pred_region
    _
  $region29: #{encoder_forward.8} parent=0 // pred_fallthru
    _
  %v30 = vld [vmem:[%s0] sm:$0x7]
  %v31 = vld [vmem:[%s0 + $0x4] sm:$0x7]
  %v32 = vld [vmem:[%s0 + $0x8] sm:$0x7]
  %v33 = vld [vmem:[%s0 + $0xc] sm:$0x7]
  %v34 = vld [vmem:[%s0 + $0x10] sm:$0x7]
  %v35 = vld [vmem:[%s0 + $0x14] sm:$0x7]
  %v36 = vld [vmem:[%s0 + $0x18] sm:$0x7]
  %v37 = vld [vmem:[%s0 + $0x1c] sm:$0x7]
  %v38 = vld [vmem:[%s0 + $0x20] sm:$0x7]
  %v39 = vld [vmem:[%s0 + $0x24] sm:$0x7]
  %v40 = vunpack.c.l.bf16 %v30
  %v41 = vunpack.c.l.bf16 %v31
  %v42 = vunpack.c.l.bf16 %v32
  %v43 = vunpack.c.l.bf16 %v33
  %v44 = vunpack.c.l.bf16 %v34
  %v45 = vunpack.c.l.bf16 %v35
  %v46 = vunpack.c.l.bf16 %v36
  %v47 = vunpack.c.l.bf16 %v37
  %v48 = vunpack.c.l.bf16 %v38
  %v49 = vunpack.c.l.bf16 %v39
  %v50 = vld [vmem:[%s3] sm:$0x1]
  %v52 = vlaneseq
  %v53 = vshrl.u32 %v52, 7
  %v54 = vsub.s32 0, %v53
  %v55 = vrot.slane %v50, %v54
  %v57 = vmul.f32 %v40, %v55
  %v58 = vmul.f32 %v41, %v55
  %v59 = vmul.f32 %v42, %v55
  %v60 = vmul.f32 %v43, %v55
  %v61 = vmul.f32 %v44, %v55
  %v62 = vmul.f32 %v45, %v55
  %v63 = vmul.f32 %v46, %v55
  %v64 = vmul.f32 %v47, %v55
  %v65 = vmul.f32 %v48, %v55
  %v66 = vmul.f32 %v49, %v55
  %v67 = vld [vmem:[%s4] sm:$0x1]
  %v69 = vlaneseq
  %v70 = vshrl.u32 %v69, 7
  %v71 = vsub.s32 0, %v70
  %v72 = vrot.slane %v67, %v71
  %v74 = vadd.f32 %v57, %v72
  %v75 = vadd.f32 %v58, %v72
  %v76 = vadd.f32 %v59, %v72
  %v77 = vadd.f32 %v60, %v72
  %v78 = vadd.f32 %v61, %v72
  %v79 = vadd.f32 %v62, %v72
  %v80 = vadd.f32 %v63, %v72
  %v81 = vadd.f32 %v64, %v72
  %v82 = vadd.f32 %v65, %v72
  %v83 = vadd.f32 %v66, %v72
  %v84 = vtanh.pop %v74
  %v85 = vtanh.pop %v75
  %v86 = vtanh.pop %v76
  %v87 = vtanh.pop %v77
  %v88 = vtanh.pop %v78
  %v89 = vtanh.pop %v79
  %v90 = vtanh.pop %v80
  %v91 = vtanh.pop %v81
  %v92 = vtanh.pop %v82
  %v93 = vtanh.pop %v83
  %v94 = vlaneseq
  %v95 = vshrl.u32 %v94, 7
  %v96 = vld [vmem:[%s5] sm:$0x1]
  %v97 = vld [vmem:[%s6] sm:$0x1]
  %vm98 = vcmp.lt.f32.partialorder %v96, 0.5
  %v99 = vsel %vm98, 1, 0
  %v100 = vlaneseq
  %v101 = vshrl.u32 %v100, 7
  %v102 = vsub.s32 0, %v101
  %v103 = vrot.slane %v99, %v102
  %vm104 = vcmp.eq.s32.totalorder %v103, 1
  %vm105 = vmand 1, %vm104
  %vm106 = vmand 0, %vm104
  %vm107 = vcmp.gt.f32.partialorder %v96, 0.5
  %v108 = vsel %vm107, 1, 0
  %v109 = vlaneseq
  %v110 = vshrl.u32 %v109, 7
  %v111 = vsub.s32 0, %v110
  %v112 = vrot.slane %v108, %v111
  %vm113 = vcmp.eq.s32.totalorder %v112, 1
  %vm114 = vmand 0, %vm113
  %vm115 = vmand 1, %vm113
  %vm116 = vmor %vm105, %vm114
  %vm117 = vmor %vm106, %vm114
  %vm118 = vmor %vm106, %vm115
  %vm119 = vcmp.eq.s32.totalorder %v95, 0
  %vm120 = vcmp.lt.f32.partialorder %v97, 0.5
  %v121 = vsel %vm119, 1, 0
  %vm122 = vcmp.eq.s32.totalorder %v121, 1
  %v123 = vsel %vm120, 1, 0
  %v124 = vlaneseq
  %v125 = vshrl.u32 %v124, 7
  %v126 = vsub.s32 0, %v125
  %v127 = vrot.slane %v123, %v126
  %vm128 = vcmp.eq.s32.totalorder %v127, 1
  %vm129 = vmand %vm122, %vm128
  %vm130 = vmor %vm116, %vm129
  %vm131 = vmor %vm117, %vm129
  %vm132 = vmor %vm118, %vm129
  %vm133 = vcmp.eq.s32.totalorder %v95, 4
  %vm134 = vcmp.gt.f32.partialorder %v97, 0.5
  %v135 = vsel %vm133, 1, 0
  %vm136 = vcmp.eq.s32.totalorder %v135, 1
  %v137 = vsel %vm134, 1, 0
  %v138 = vlaneseq
  %v139 = vshrl.u32 %v138, 7
  %v140 = vsub.s32 0, %v139
  %v141 = vrot.slane %v137, %v140
  %vm142 = vcmp.eq.s32.totalorder %v141, 1
  %vm143 = vmand %vm136, %vm142
  %vm144 = vmor %vm130, %vm143
  %vm145 = vmor %vm131, %vm143
  %vm146 = vmor %vm132, %vm143
  %v147 = vsel %vm144, 1, 0
  %v148 = vsel %vm145, 1, 0
  %v149 = vsel %vm146, 1, 0
  %vm150 = vcmp.eq.s32.totalorder %v147, 1
  %vm151 = vcmp.eq.s32.totalorder %v148, 1
  %vm152 = vcmp.eq.s32.totalorder %v149, 1
  %v153 = vsel %vm150, 0.0, %v84
  %v154 = vsel %vm151, 0.0, %v85
  %v155 = vsel %vm151, 0.0, %v86
  %v156 = vsel %vm151, 0.0, %v87
  %v157 = vsel %vm152, 0.0, %v88
  %v158 = vsel %vm150, 0.0, %v89
  %v159 = vsel %vm151, 0.0, %v90
  %v160 = vsel %vm151, 0.0, %v91
  %v161 = vsel %vm151, 0.0, %v92
  %v162 = vsel %vm152, 0.0, %v93
  %v163 = vpack.c.bf16 %v153, %v153
  %v164 = vpack.c.bf16 %v154, %v154
  %v165 = vpack.c.bf16 %v155, %v155
  %v166 = vpack.c.bf16 %v156, %v156
  %v167 = vpack.c.bf16 %v157, %v157
  %v168 = vpack.c.bf16 %v158, %v158
  %v169 = vpack.c.bf16 %v159, %v159
  %v170 = vpack.c.bf16 %v160, %v160
  %v171 = vpack.c.bf16 %v161, %v161
  %v172 = vpack.c.bf16 %v162, %v162
  %v173 = vld [vmem:[%s1] sm:$0xf]
  %v174 = vld [vmem:[%s1 + $0x4] sm:$0xf]
  %v175 = vld [vmem:[%s1 + $0x8] sm:$0xf]
  %v176 = vld [vmem:[%s1 + $0xc] sm:$0xf]
  %v177 = vld [vmem:[%s1 + $0x10] sm:$0xf]
  %v178 = vld [vmem:[%s1 + $0x14] sm:$0xf]
  %v179 = vld [vmem:[%s1 + $0x18] sm:$0xf]
  %v180 = vld [vmem:[%s1 + $0x1c] sm:$0xf]
  %v190 = vunpack.c.l.s4 1983009808
  %v191 = vunpack.c.0.s8 %v190
  %v192 = vlaneseq
  %v193 = vshrl.u32 %v192, 7
  %v194 = vsub.s32 %v191, %v193
  %v195 = vrot.slane %v163, %v194
  %v196 = vcombine.high %v195, %v195
  %v198 = vunpack.c.l.s4 1983009808
  %v199 = vunpack.c.0.s8 %v198
  %v200 = vlaneseq
  %v201 = vshrl.u32 %v200, 7
  %v202 = vsub.s32 %v199, %v201
  %v203 = vrot.slane %v164, %v202
  %v204 = vcombine.high %v203, %v203
  %v206 = vunpack.c.l.s4 1983009808
  %v207 = vunpack.c.0.s8 %v206
  %v208 = vlaneseq
  %v209 = vshrl.u32 %v208, 7
  %v210 = vsub.s32 %v207, %v209
  %v211 = vrot.slane %v165, %v210
  %v212 = vcombine.high %v211, %v211
  %v214 = vunpack.c.l.s4 1983009808
  %v215 = vunpack.c.0.s8 %v214
  %v216 = vlaneseq
  %v217 = vshrl.u32 %v216, 7
  %v218 = vsub.s32 %v215, %v217
  %v219 = vrot.slane %v166, %v218
  %v220 = vcombine.high %v219, %v219
  %v222 = vunpack.c.l.s4 1983009808
  %v223 = vunpack.c.0.s8 %v222
  %v224 = vlaneseq
  %v225 = vshrl.u32 %v224, 7
  %v226 = vsub.s32 %v223, %v225
  %v227 = vrot.slane %v168, %v226
  %v228 = vcombine.high %v227, %v227
  %v230 = vunpack.c.l.s4 1983009808
  %v231 = vunpack.c.0.s8 %v230
  %v232 = vlaneseq
  %v233 = vshrl.u32 %v232, 7
  %v234 = vsub.s32 %v231, %v233
  %v235 = vrot.slane %v169, %v234
  %v236 = vcombine.high %v235, %v235
  %v238 = vunpack.c.l.s4 1983009808
  %v239 = vunpack.c.0.s8 %v238
  %v240 = vlaneseq
  %v241 = vshrl.u32 %v240, 7
  %v242 = vsub.s32 %v239, %v241
  %v243 = vrot.slane %v170, %v242
  %v244 = vcombine.high %v243, %v243
  %v246 = vunpack.c.l.s4 1983009808
  %v247 = vunpack.c.0.s8 %v246
  %v248 = vlaneseq
  %v249 = vshrl.u32 %v248, 7
  %v250 = vsub.s32 %v247, %v249
  %v251 = vrot.slane %v171, %v250
  %v252 = vcombine.high %v251, %v251
  %vm253 = vsmask.f32 1280
  %vm254 = vsmask.f32 3336
  %vm255 = vmor %vm253, %vm254
  %vm256 = vsmask.f32 5392
  %vm257 = vmor %vm255, %vm256
  %vm258 = vsmask.f32 7448
  %vm259 = vmor %vm257, %vm258
  %v261 = vshrl.u32 %v195, 16
  %v263 = vrot.slane %v261, 6
  %v264 = vshll.u32 %v195, 16
  %v266 = vrot.slane %v264, 7
  %v267 = vor.u32 %v263, %v266
  %v268 = vrot.slane %v267, 2
  %v270 = vshll.u32 %v196, 16
  %v272 = vrot.slane %v270, 7
  %v273 = vsel %vm259, %v268, %v272
  %v275 = vshrl.u32 %v203, 16
  %v277 = vrot.slane %v275, 6
  %v278 = vshll.u32 %v203, 16
  %v280 = vrot.slane %v278, 7
  %v281 = vor.u32 %v277, %v280
  %v282 = vrot.slane %v281, 2
  %v284 = vshll.u32 %v204, 16
  %v286 = vrot.slane %v284, 7
  %v287 = vsel %vm259, %v282, %v286
  %v289 = vshrl.u32 %v211, 16
  %v291 = vrot.slane %v289, 6
  %v292 = vshll.u32 %v211, 16
  %v294 = vrot.slane %v292, 7
  %v295 = vor.u32 %v291, %v294
  %v296 = vrot.slane %v295, 2
  %v298 = vshll.u32 %v212, 16
  %v300 = vrot.slane %v298, 7
  %v301 = vsel %vm259, %v296, %v300
  %v303 = vshrl.u32 %v219, 16
  %v305 = vrot.slane %v303, 6
  %v306 = vshll.u32 %v219, 16
  %v308 = vrot.slane %v306, 7
  %v309 = vor.u32 %v305, %v308
  %v310 = vrot.slane %v309, 2
  %v312 = vshll.u32 %v220, 16
  %v314 = vrot.slane %v312, 7
  %v315 = vsel %vm259, %v310, %v314
  %v317 = vshrl.u32 %v227, 16
  %v319 = vrot.slane %v317, 6
  %v320 = vshll.u32 %v227, 16
  %v322 = vrot.slane %v320, 7
  %v323 = vor.u32 %v319, %v322
  %v324 = vrot.slane %v323, 2
  %v326 = vshll.u32 %v228, 16
  %v328 = vrot.slane %v326, 7
  %v329 = vsel %vm259, %v324, %v328
  %v331 = vshrl.u32 %v235, 16
  %v333 = vrot.slane %v331, 6
  %v334 = vshll.u32 %v235, 16
  %v336 = vrot.slane %v334, 7
  %v337 = vor.u32 %v333, %v336
  %v338 = vrot.slane %v337, 2
  %v340 = vshll.u32 %v236, 16
  %v342 = vrot.slane %v340, 7
  %v343 = vsel %vm259, %v338, %v342
  %v345 = vshrl.u32 %v243, 16
  %v347 = vrot.slane %v345, 6
  %v348 = vshll.u32 %v243, 16
  %v350 = vrot.slane %v348, 7
  %v351 = vor.u32 %v347, %v350
  %v352 = vrot.slane %v351, 2
  %v354 = vshll.u32 %v244, 16
  %v356 = vrot.slane %v354, 7
  %v357 = vsel %vm259, %v352, %v356
  %v359 = vshrl.u32 %v251, 16
  %v361 = vrot.slane %v359, 6
  %v362 = vshll.u32 %v251, 16
  %v364 = vrot.slane %v362, 7
  %v365 = vor.u32 %v361, %v364
  %v366 = vrot.slane %v365, 2
  %v368 = vshll.u32 %v252, 16
  %v370 = vrot.slane %v368, 7
  %v371 = vsel %vm259, %v366, %v370
  %s372 = scalar_lea.vmem %s1, 32
  %v373 = vld [vmem:[%s372] sm:$0xf]
  %v374 = vld [vmem:[%s372 + $0x4] sm:$0xf]
  %v375 = vld [vmem:[%s372 + $0x8] sm:$0xf]
  %v376 = vld [vmem:[%s372 + $0xc] sm:$0xf]
  %v377 = vld [vmem:[%s372 + $0x10] sm:$0xf]
  %v378 = vld [vmem:[%s372 + $0x14] sm:$0xf]
  %v379 = vld [vmem:[%s372 + $0x18] sm:$0xf]
  %v380 = vld [vmem:[%s372 + $0x1c] sm:$0xf]
  %v381 = vcombine.low %v273, %v287
  %v382 = vcombine.low %v301, %v315
  %v384 = vunpack.c.l.s4 1983009808
  %v385 = vunpack.c.0.s8 %v384
  %v386 = vlaneseq
  %v387 = vshrl.u32 %v386, 7
  %v388 = vsub.s32 %v385, %v387
  %v389 = vrot.slane %v381, %v388
  %v391 = vunpack.c.l.s4 1983009808
  %v392 = vunpack.c.0.s8 %v391
  %v393 = vlaneseq
  %v394 = vshrl.u32 %v393, 7
  %v395 = vsub.s32 %v392, %v394
  %v396 = vrot.slane %v382, %v395
  %v397 = vcombine.low %v389, %v396
  %v398 = vcombine.low %v329, %v343
  %v399 = vcombine.low %v357, %v371
  %v401 = vunpack.c.l.s4 1983009808
  %v402 = vunpack.c.0.s8 %v401
  %v403 = vlaneseq
  %v404 = vshrl.u32 %v403, 7
  %v405 = vsub.s32 %v402, %v404
  %v406 = vrot.slane %v398, %v405
  %v408 = vunpack.c.l.s4 1983009808
  %v409 = vunpack.c.0.s8 %v408
  %v410 = vlaneseq
  %v411 = vshrl.u32 %v410, 7
  %v412 = vsub.s32 %v409, %v411
  %v413 = vrot.slane %v399, %v412
  %v414 = vcombine.low %v406, %v413
  %v423 = vunpack.c.l.b16 %v373
  %v424 = vunpack.c.l.b16 %v374
  %v425 = vunpack.c.l.b16 %v375
  %v426 = vunpack.c.l.b16 %v376
  %v427 = vunpack.c.l.b16 %v377
  %v428 = vunpack.c.l.b16 %v378
  %v429 = vunpack.c.l.b16 %v379
  %v430 = vunpack.c.l.b16 %v380
  %v431 = vpack.c.b16 %v424, %v423
  %v432 = vpack.c.b16 %v426, %v425
  %v433 = vpack.c.b16 %v428, %v427
  %v434 = vpack.c.b16 %v430, %v429
  %vm439 = vcmask 523264
  %v441 = vsel %vm439, %v397, 0
  %v444 = vsel %vm439, %v414, 0
  %446 = vmatprep.subr.bf16.mxu0 0
  %447 = vmatpush1.bf16.msra.mxu0 %v431
  %448 = vmatprep.subr.bf16.mxu0 0
  %449 = vmatpush1.bf16.msra.mxu0 %v432
  %450 = vmatprep.subr.bf16.mxu0 0
  %451 = vmatpush1.bf16.msra.mxu0 %v433
  %452 = vmatprep.subr.bf16.mxu0 0
  %453 = vmatpush1.bf16.msra.mxu0 %v434
  %454 = vmatprep.subr.bf16.mxu0 0
  %455 = vmatpush1.bf16.msra.mxu0 0
  %456 = vmatprep.subr.bf16.mxu0 0
  %457 = vmatpush1.bf16.msra.mxu0 0
  %458 = vmatprep.subr.bf16.mxu0 0
  %459 = vmatpush1.bf16.msra.mxu0 0
  %460 = vmatprep.subr.bf16.mxu0 0
  %461 = vmatpush1.bf16.msra.mxu0 0
  %462 = vmatprep.subr.bf16.mxu0 0
  %463 = vmatpush1.bf16.msra.mxu0 0
  %464 = vmatprep.subr.bf16.mxu0 0
  %465 = vmatpush1.bf16.msra.mxu0 0
  %466 = vmatprep.subr.bf16.mxu0 0
  %467 = vmatpush1.bf16.msra.mxu0 0
  %468 = vmatprep.subr.bf16.mxu0 0
  %469 = vmatpush1.bf16.msra.mxu0 0
  %470 = vmatprep.subr.bf16.mxu0 0
  %471 = vmatpush1.bf16.msra.mxu0 0
  %472 = vmatprep.subr.bf16.mxu0 0
  %473 = vmatpush1.bf16.msra.mxu0 0
  %474 = vmatprep.subr.bf16.mxu0 0
  %475 = vmatpush1.bf16.msra.mxu0 0
  %476 = vmatprep.subr.bf16.mxu0 0
  %477 = vmatpush1.bf16.msra.mxu0 0
  %478 = vmatprep.mubr.bf16.mxu0 0
  %479 = vmatmul.mubr.bf16.gmra.mrb[0].mxu0 %v441
  %v480 = vpop.f32.mrb[0].mxu0
  %v481 = vadd.f32 0.0, %v480
  %v482 = vpop.f32.mrb[0].mxu0
  %v483 = vpop.f32.mrb[0].mxu0
  %v484 = vadd.f32 0.0, %v483
  %v485 = vpop.f32.mrb[0].mxu0
  %486 = vmatprep.mubr.bf16.mxu0 0
  %487 = vmatmul.mubr.bf16.gmra.mrb[0].mxu0 %v444
  %v488 = vpop.f32.mrb[0].mxu0
  %v489 = vadd.f32 0.0, %v488
  %v490 = vpop.f32.mrb[0].mxu0
  %v491 = vpop.f32.mrb[0].mxu0
  %v492 = vadd.f32 0.0, %v491
  %v493 = vpop.f32.mrb[0].mxu0
  %494 = vdwg.mxu0
  %v495 = vcombine.low %v163, %v164
  %v496 = vcombine.low %v165, %v166
  %v498 = vunpack.c.l.s4 1983009808
  %v499 = vunpack.c.0.s8 %v498
  %v500 = vlaneseq
  %v501 = vshrl.u32 %v500, 7
  %v502 = vsub.s32 %v499, %v501
  %v503 = vrot.slane %v495, %v502
  %v505 = vunpack.c.l.s4 1983009808
  %v506 = vunpack.c.0.s8 %v505
  %v507 = vlaneseq
  %v508 = vshrl.u32 %v507, 7
  %v509 = vsub.s32 %v506, %v508
  %v510 = vrot.slane %v496, %v509
  %v511 = vcombine.low %v503, %v510
  %v512 = vcombine.low %v168, %v169
  %v513 = vcombine.low %v170, %v171
  %v515 = vunpack.c.l.s4 1983009808
  %v516 = vunpack.c.0.s8 %v515
  %v517 = vlaneseq
  %v518 = vshrl.u32 %v517, 7
  %v519 = vsub.s32 %v516, %v518
  %v520 = vrot.slane %v512, %v519
  %v522 = vunpack.c.l.s4 1983009808
  %v523 = vunpack.c.0.s8 %v522
  %v524 = vlaneseq
  %v525 = vshrl.u32 %v524, 7
  %v526 = vsub.s32 %v523, %v525
  %v527 = vrot.slane %v513, %v526
  %v528 = vcombine.low %v520, %v527
  %v537 = vunpack.c.l.b16 %v173
  %v538 = vunpack.c.l.b16 %v174
  %v539 = vunpack.c.l.b16 %v175
  %v540 = vunpack.c.l.b16 %v176
  %v541 = vunpack.c.l.b16 %v177
  %v542 = vunpack.c.l.b16 %v178
  %v543 = vunpack.c.l.b16 %v179
  %v544 = vunpack.c.l.b16 %v180
  %v545 = vpack.c.b16 %v538, %v537
  %v546 = vpack.c.b16 %v540, %v539
  %v547 = vpack.c.b16 %v542, %v541
  %v548 = vpack.c.b16 %v544, %v543
  %v554 = vsel %vm439, %v511, 0
  %v557 = vsel %vm439, %v528, 0
  %559 = vmatprep.subr.bf16.mxu0 0
  %560 = vmatpush1.bf16.msra.mxu0 %v545
  %561 = vmatprep.subr.bf16.mxu0 0
  %562 = vmatpush1.bf16.msra.mxu0 %v546
  %563 = vmatprep.subr.bf16.mxu0 0
  %564 = vmatpush1.bf16.msra.mxu0 %v547
  %565 = vmatprep.subr.bf16.mxu0 0
  %566 = vmatpush1.bf16.msra.mxu0 %v548
  %567 = vmatprep.subr.bf16.mxu0 0
  %568 = vmatpush1.bf16.msra.mxu0 0
  %569 = vmatprep.subr.bf16.mxu0 0
  %570 = vmatpush1.bf16.msra.mxu0 0
  %571 = vmatprep.subr.bf16.mxu0 0
  %572 = vmatpush1.bf16.msra.mxu0 0
  %573 = vmatprep.subr.bf16.mxu0 0
  %574 = vmatpush1.bf16.msra.mxu0 0
  %575 = vmatprep.subr.bf16.mxu0 0
  %576 = vmatpush1.bf16.msra.mxu0 0
  %577 = vmatprep.subr.bf16.mxu0 0
  %578 = vmatpush1.bf16.msra.mxu0 0
  %579 = vmatprep.subr.bf16.mxu0 0
  %580 = vmatpush1.bf16.msra.mxu0 0
  %581 = vmatprep.subr.bf16.mxu0 0
  %582 = vmatpush1.bf16.msra.mxu0 0
  %583 = vmatprep.subr.bf16.mxu0 0
  %584 = vmatpush1.bf16.msra.mxu0 0
  %585 = vmatprep.subr.bf16.mxu0 0
  %586 = vmatpush1.bf16.msra.mxu0 0
  %587 = vmatprep.subr.bf16.mxu0 0
  %588 = vmatpush1.bf16.msra.mxu0 0
  %589 = vmatprep.subr.bf16.mxu0 0
  %590 = vmatpush1.bf16.msra.mxu0 0
  %591 = vmatprep.mubr.bf16.mxu0 0
  %592 = vmatmul.mubr.bf16.gmra.mrb[0].mxu0 %v554
  %v593 = vpop.f32.mrb[0].mxu0
  %v594 = vadd.f32 %v481, %v593
  %v595 = vpop.f32.mrb[0].mxu0
  %v596 = vpop.f32.mrb[0].mxu0
  %v597 = vadd.f32 %v484, %v596
  %v598 = vpop.f32.mrb[0].mxu0
  %599 = vmatprep.mubr.bf16.mxu0 0
  %600 = vmatmul.mubr.bf16.gmra.mrb[0].mxu0 %v557
  %v601 = vpop.f32.mrb[0].mxu0
  %v602 = vadd.f32 %v489, %v601
  %v603 = vpop.f32.mrb[0].mxu0
  %v604 = vpop.f32.mrb[0].mxu0
  %v605 = vadd.f32 %v492, %v604
  %v606 = vpop.f32.mrb[0].mxu0
  %607 = vdwg.mxu0
  %s608 = scalar_lea.vmem %s1, 64
  %v609 = vld [vmem:[%s608] sm:$0xf]
  %v610 = vld [vmem:[%s608 + $0x4] sm:$0xf]
  %v611 = vld [vmem:[%s608 + $0x8] sm:$0xf]
  %v612 = vld [vmem:[%s608 + $0xc] sm:$0xf]
  %v613 = vld [vmem:[%s608 + $0x10] sm:$0xf]
  %v614 = vld [vmem:[%s608 + $0x14] sm:$0xf]
  %v615 = vld [vmem:[%s608 + $0x18] sm:$0xf]
  %v616 = vld [vmem:[%s608 + $0x1c] sm:$0xf]
  %v619 = vcombine.low %v164, %v165
  %v620 = vcombine.low %v166, %v167
  %v622 = vunpack.c.l.s4 1983009808
  %v623 = vunpack.c.0.s8 %v622
  %v624 = vlaneseq
  %v625 = vshrl.u32 %v624, 7
  %v626 = vsub.s32 %v623, %v625
  %v627 = vrot.slane %v619, %v626
  %v629 = vunpack.c.l.s4 1983009808
  %v630 = vunpack.c.0.s8 %v629
  %v631 = vlaneseq
  %v632 = vshrl.u32 %v631, 7
  %v633 = vsub.s32 %v630, %v632
  %v634 = vrot.slane %v620, %v633
  %v635 = vcombine.low %v627, %v634
  %v636 = vcombine.low %v169, %v170
  %v637 = vcombine.low %v171, %v172
  %v639 = vunpack.c.l.s4 1983009808
  %v640 = vunpack.c.0.s8 %v639
  %v641 = vlaneseq
  %v642 = vshrl.u32 %v641, 7
  %v643 = vsub.s32 %v640, %v642
  %v644 = vrot.slane %v636, %v643
  %v646 = vunpack.c.l.s4 1983009808
  %v647 = vunpack.c.0.s8 %v646
  %v648 = vlaneseq
  %v649 = vshrl.u32 %v648, 7
  %v650 = vsub.s32 %v647, %v649
  %v651 = vrot.slane %v637, %v650
  %v652 = vcombine.low %v644, %v651
  %v661 = vunpack.c.l.b16 %v609
  %v662 = vunpack.c.l.b16 %v610
  %v663 = vunpack.c.l.b16 %v611
  %v664 = vunpack.c.l.b16 %v612
  %v665 = vunpack.c.l.b16 %v613
  %v666 = vunpack.c.l.b16 %v614
  %v667 = vunpack.c.l.b16 %v615
  %v668 = vunpack.c.l.b16 %v616
  %v669 = vpack.c.b16 %v662, %v661
  %v670 = vpack.c.b16 %v664, %v663
  %v671 = vpack.c.b16 %v666, %v665
  %v672 = vpack.c.b16 %v668, %v667
  %v678 = vsel %vm439, %v635, 0
  %v681 = vsel %vm439, %v652, 0
  %683 = vmatprep.subr.bf16.mxu0 0
  %684 = vmatpush1.bf16.msra.mxu0 %v669
  %685 = vmatprep.subr.bf16.mxu0 0
  %686 = vmatpush1.bf16.msra.mxu0 %v670
  %687 = vmatprep.subr.bf16.mxu0 0
  %688 = vmatpush1.bf16.msra.mxu0 %v671
  %689 = vmatprep.subr.bf16.mxu0 0
  %690 = vmatpush1.bf16.msra.mxu0 %v672
  %691 = vmatprep.subr.bf16.mxu0 0
  %692 = vmatpush1.bf16.msra.mxu0 0
  %693 = vmatprep.subr.bf16.mxu0 0
  %694 = vmatpush1.bf16.msra.mxu0 0
  %695 = vmatprep.subr.bf16.mxu0 0
  %696 = vmatpush1.bf16.msra.mxu0 0
  %697 = vmatprep.subr.bf16.mxu0 0
  %698 = vmatpush1.bf16.msra.mxu0 0
  %699 = vmatprep.subr.bf16.mxu0 0
  %700 = vmatpush1.bf16.msra.mxu0 0
  %701 = vmatprep.subr.bf16.mxu0 0
  %702 = vmatpush1.bf16.msra.mxu0 0
  %703 = vmatprep.subr.bf16.mxu0 0
  %704 = vmatpush1.bf16.msra.mxu0 0
  %705 = vmatprep.subr.bf16.mxu0 0
  %706 = vmatpush1.bf16.msra.mxu0 0
  %707 = vmatprep.subr.bf16.mxu0 0
  %708 = vmatpush1.bf16.msra.mxu0 0
  %709 = vmatprep.subr.bf16.mxu0 0
  %710 = vmatpush1.bf16.msra.mxu0 0
  %711 = vmatprep.subr.bf16.mxu0 0
  %712 = vmatpush1.bf16.msra.mxu0 0
  %713 = vmatprep.subr.bf16.mxu0 0
  %714 = vmatpush1.bf16.msra.mxu0 0
  %715 = vmatprep.mubr.bf16.mxu0 0
  %716 = vmatmul.mubr.bf16.gmra.mrb[0].mxu0 %v678
  %v717 = vpop.f32.mrb[0].mxu0
  %v718 = vadd.f32 0.0, %v717
  %v719 = vpop.f32.mrb[0].mxu0
  %v720 = vpop.f32.mrb[0].mxu0
  %v721 = vadd.f32 0.0, %v720
  %v722 = vpop.f32.mrb[0].mxu0
  %723 = vmatprep.mubr.bf16.mxu0 0
  %724 = vmatmul.mubr.bf16.gmra.mrb[0].mxu0 %v681
  %v725 = vpop.f32.mrb[0].mxu0
  %v726 = vadd.f32 0.0, %v725
  %v727 = vpop.f32.mrb[0].mxu0
  %v728 = vpop.f32.mrb[0].mxu0
  %v729 = vadd.f32 0.0, %v728
  %v730 = vpop.f32.mrb[0].mxu0
  %731 = vdwg.mxu0
  %v732 = vadd.f32 %v594, %v718
  %v733 = vadd.f32 %v597, %v721
  %v734 = vadd.f32 %v602, %v726
  %v735 = vadd.f32 %v605, %v729
  %v737 = vunpack.c.l.s4 1983009808
  %v738 = vunpack.c.0.s8 %v737
  %v739 = vlaneseq
  %v740 = vshrl.u32 %v739, 7
  %v741 = vsub.s32 %v738, %v740
  %v742 = vrot.slane %v167, %v741
  %v743 = vcombine.high %v742, %v742
  %v745 = vunpack.c.l.s4 1983009808
  %v746 = vunpack.c.0.s8 %v745
  %v747 = vlaneseq
  %v748 = vshrl.u32 %v747, 7
  %v749 = vsub.s32 %v746, %v748
  %v750 = vrot.slane %v172, %v749
  %v751 = vcombine.high %v750, %v750
  %v753 = vshrl.u32 %v742, 16
  %v755 = vrot.slane %v753, 6
  %v756 = vshll.u32 %v742, 16
  %v758 = vrot.slane %v756, 7
  %v759 = vor.u32 %v755, %v758
  %v760 = vrot.slane %v759, 2
  %v762 = vshll.u32 %v743, 16
  %v764 = vrot.slane %v762, 7
  %v765 = vsel %vm259, %v760, %v764
  %v767 = vshrl.u32 %v750, 16
  %v769 = vrot.slane %v767, 6
  %v770 = vshll.u32 %v750, 16
  %v772 = vrot.slane %v770, 7
  %v773 = vor.u32 %v769, %v772
  %v774 = vrot.slane %v773, 2
  %v776 = vshll.u32 %v751, 16
  %v778 = vrot.slane %v776, 7
  %v779 = vsel %vm259, %v774, %v778
  %s780 = scalar_lea.vmem %s1, 96
  %v781 = vld [vmem:[%s780] sm:$0xf]
  %v782 = vld [vmem:[%s780 + $0x4] sm:$0xf]
  %v783 = vld [vmem:[%s780 + $0x8] sm:$0xf]
  %v784 = vld [vmem:[%s780 + $0xc] sm:$0xf]
  %v785 = vld [vmem:[%s780 + $0x10] sm:$0xf]
  %v786 = vld [vmem:[%s780 + $0x14] sm:$0xf]
  %v787 = vld [vmem:[%s780 + $0x18] sm:$0xf]
  %v788 = vld [vmem:[%s780 + $0x1c] sm:$0xf]
  %v789 = vcombine.low %v287, %v301
  %v790 = vcombine.low %v315, %v765
  %v792 = vunpack.c.l.s4 1983009808
  %v793 = vunpack.c.0.s8 %v792
  %v794 = vlaneseq
  %v795 = vshrl.u32 %v794, 7
  %v796 = vsub.s32 %v793, %v795
  %v797 = vrot.slane %v789, %v796
  %v799 = vunpack.c.l.s4 1983009808
  %v800 = vunpack.c.0.s8 %v799
  %v801 = vlaneseq
  %v802 = vshrl.u32 %v801, 7
  %v803 = vsub.s32 %v800, %v802
  %v804 = vrot.slane %v790, %v803
  %v805 = vcombine.low %v797, %v804
  %v806 = vcombine.low %v343, %v357
  %v807 = vcombine.low %v371, %v779
  %v809 = vunpack.c.l.s4 1983009808
  %v810 = vunpack.c.0.s8 %v809
  %v811 = vlaneseq
  %v812 = vshrl.u32 %v811, 7
  %v813 = vsub.s32 %v810, %v812
  %v814 = vrot.slane %v806, %v813
  %v816 = vunpack.c.l.s4 1983009808
  %v817 = vunpack.c.0.s8 %v816
  %v818 = vlaneseq
  %v819 = vshrl.u32 %v818, 7
  %v820 = vsub.s32 %v817, %v819
  %v821 = vrot.slane %v807, %v820
  %v822 = vcombine.low %v814, %v821
  %v831 = vunpack.c.l.b16 %v781
  %v832 = vunpack.c.l.b16 %v782
  %v833 = vunpack.c.l.b16 %v783
  %v834 = vunpack.c.l.b16 %v784
  %v835 = vunpack.c.l.b16 %v785
  %v836 = vunpack.c.l.b16 %v786
  %v837 = vunpack.c.l.b16 %v787
  %v838 = vunpack.c.l.b16 %v788
  %v839 = vpack.c.b16 %v832, %v831
  %v840 = vpack.c.b16 %v834, %v833
  %v841 = vpack.c.b16 %v836, %v835
  %v842 = vpack.c.b16 %v838, %v837
  %v848 = vsel %vm439, %v805, 0
  %v851 = vsel %vm439, %v822, 0
  %853 = vmatprep.subr.bf16.mxu0 0
  %854 = vmatpush1.bf16.msra.mxu0 %v839
  %855 = vmatprep.subr.bf16.mxu0 0
  %856 = vmatpush1.bf16.msra.mxu0 %v840
  %857 = vmatprep.subr.bf16.mxu0 0
  %858 = vmatpush1.bf16.msra.mxu0 %v841
  %859 = vmatprep.subr.bf16.mxu0 0
  %860 = vmatpush1.bf16.msra.mxu0 %v842
  %861 = vmatprep.subr.bf16.mxu0 0
  %862 = vmatpush1.bf16.msra.mxu0 0
  %863 = vmatprep.subr.bf16.mxu0 0
  %864 = vmatpush1.bf16.msra.mxu0 0
  %865 = vmatprep.subr.bf16.mxu0 0
  %866 = vmatpush1.bf16.msra.mxu0 0
  %867 = vmatprep.subr.bf16.mxu0 0
  %868 = vmatpush1.bf16.msra.mxu0 0
  %869 = vmatprep.subr.bf16.mxu0 0
  %870 = vmatpush1.bf16.msra.mxu0 0
  %871 = vmatprep.subr.bf16.mxu0 0
  %872 = vmatpush1.bf16.msra.mxu0 0
  %873 = vmatprep.subr.bf16.mxu0 0
  %874 = vmatpush1.bf16.msra.mxu0 0
  %875 = vmatprep.subr.bf16.mxu0 0
  %876 = vmatpush1.bf16.msra.mxu0 0
  %877 = vmatprep.subr.bf16.mxu0 0
  %878 = vmatpush1.bf16.msra.mxu0 0
  %879 = vmatprep.subr.bf16.mxu0 0
  %880 = vmatpush1.bf16.msra.mxu0 0
  %881 = vmatprep.subr.bf16.mxu0 0
  %882 = vmatpush1.bf16.msra.mxu0 0
  %883 = vmatprep.subr.bf16.mxu0 0
  %884 = vmatpush1.bf16.msra.mxu0 0
  %885 = vmatprep.mubr.bf16.mxu0 0
  %886 = vmatmul.mubr.bf16.gmra.mrb[0].mxu0 %v848
  %v887 = vpop.f32.mrb[0].mxu0
  %v888 = vadd.f32 0.0, %v887
  %v889 = vpop.f32.mrb[0].mxu0
  %v890 = vpop.f32.mrb[0].mxu0
  %v891 = vadd.f32 0.0, %v890
  %v892 = vpop.f32.mrb[0].mxu0
  %893 = vmatprep.mubr.bf16.mxu0 0
  %894 = vmatmul.mubr.bf16.gmra.mrb[0].mxu0 %v851
  %v895 = vpop.f32.mrb[0].mxu0
  %v896 = vadd.f32 0.0, %v895
  %v897 = vpop.f32.mrb[0].mxu0
  %v898 = vpop.f32.mrb[0].mxu0
  %v899 = vadd.f32 0.0, %v898
  %v900 = vpop.f32.mrb[0].mxu0
  %901 = vdwg.mxu0
  %v902 = vadd.f32 %v732, %v888
  %v903 = vadd.f32 %v733, %v891
  %v904 = vadd.f32 %v734, %v896
  %v905 = vadd.f32 %v735, %v899
  %v906 = vld [vmem:[%s2] sm:$0x1]
  %v908 = vlaneseq
  %v909 = vshrl.u32 %v908, 7
  %v910 = vsub.s32 0, %v909
  %v911 = vrot.slane %v906, %v910
  %v913 = vadd.f32 %v902, %v911
  %v914 = vadd.f32 %v903, %v911
  %v915 = vadd.f32 %v904, %v911
  %v916 = vadd.f32 %v905, %v911
  %vm917 = vcmask 261120
  %v918 = vsel %vm917, %v913, 0.0
  %v919 = vsel %vm917, %v914, 0.0
  %v920 = vadd.f32 %v918, %v919
  %v921 = vsel %vm917, %v915, 0.0
  %v922 = vadd.f32 %v920, %v921
  %v923 = vsel %vm917, %v916, 0.0
  %v924 = vadd.f32 %v922, %v923
  %v925 = vrot.slane %v924, 4
  %v926 = vadd.f32 %v924, %v925
  %v927 = vrot.slane %v926, 2
  %v928 = vadd.f32 %v926, %v927
  %v929 = vrot.slane %v928, 1
  %v930 = vadd.f32 %v928, %v929
  %vm931 = vcmask 253952
  %932 = vst.msk [vmem:[%s8] sm:$0x1] %vm931, %v930
  %v933 = vmul.f32 %v913, %v913
  %v934 = vmul.f32 %v914, %v914
  %v935 = vmul.f32 %v915, %v915
  %v936 = vmul.f32 %v916, %v916
  %v937 = vsel %vm917, %v933, 0.0
  %v938 = vsel %vm917, %v934, 0.0
  %v939 = vadd.f32 %v937, %v938
  %v940 = vsel %vm917, %v935, 0.0
  %v941 = vadd.f32 %v939, %v940
  %v942 = vsel %vm917, %v936, 0.0
  %v943 = vadd.f32 %v941, %v942
  %v944 = vrot.slane %v943, 4
  %v945 = vadd.f32 %v943, %v944
  %v946 = vrot.slane %v945, 2
  %v947 = vadd.f32 %v945, %v946
  %v948 = vrot.slane %v947, 1
  %v949 = vadd.f32 %v947, %v948
  %950 = vst.msk [vmem:[%s9] sm:$0x1] %vm931, %v949
  %v955 = vcombine.high %v913, %v913
  %v956 = vcombine.high %v914, %v914
  %v957 = vcombine.high %v915, %v915
  %v958 = vcombine.high %v916, %v916
  %v963 = vpack.c.bf16 %v913, %v913
  %v964 = vpack.c.bf16 %v955, %v955
  %v965 = vpack.c.bf16 %v914, %v914
  %v966 = vpack.c.bf16 %v956, %v956
  %v967 = vpack.c.bf16 %v915, %v915
  %v968 = vpack.c.bf16 %v957, %v957
  %v969 = vpack.c.bf16 %v916, %v916
  %v970 = vpack.c.bf16 %v958, %v958
  %vm971 = vcmask 254976
  %972 = vst.msk [vmem:[%s7] sm:$0x3] %vm971, %v963
  %973 = vst.msk [vmem:[%s7 + $0x2] sm:$0x3] %vm971, %v964
  %974 = vst.msk [vmem:[%s7 + $0x4] sm:$0x3] %vm971, %v965
  %975 = vst.msk [vmem:[%s7 + $0x6] sm:$0x3] %vm971, %v966
  %976 = vst.msk [vmem:[%s7 + $0x8] sm:$0x3] %vm971, %v967
  %977 = vst.msk [vmem:[%s7 + $0xa] sm:$0x3] %vm971, %v968
  %978 = vst.msk [vmem:[%s7 + $0xc] sm:$0x3] %vm971, %v969
  %979 = vst.msk [vmem:[%s7 + $0xe] sm:$0x3] %vm971, %v970
  // Predicated region
  $region30: #{encoder_forward.8} parent=0 // pred_check
    _
  $region31: #{encoder_forward.8} parent=0 // pred_check_branch
    %981 = sbr.rel (0) target = $region33
  $region32: #{encoder_forward.8} parent=0 // pred_region
    _
  $region33: #{encoder_forward.8} parent=0 // pred_fallthru
    _
  // Predicated region
  $region34: #{encoder_forward.8} parent=0 // pred_check
    _
  $region35: #{encoder_forward.8} parent=0 // pred_check_branch
    %983 = sbr.rel (0) target = $region37
  $region36: #{encoder_forward.8} parent=0 // pred_region
    _
  $region37: #{encoder_forward.8} parent=0 // pred_fallthru
    _
  // Predicated region
  $region38: #{encoder_forward.8} parent=0 // pred_check
    _
  $region39: #{encoder_forward.8} parent=0 // pred_check_branch
    %985 = sbr.rel (0) target = $region41
  $region40: #{encoder_forward.8} parent=0 // pred_region
    _
  $region41: #{encoder_forward.8} parent=0 // pred_fallthru
    _
  // Predicated region
  $region42: #{encoder_forward.8} parent=0 // pred_check
    _
  $region43: #{encoder_forward.8} parent=0 // pred_check_branch
    %987 = sbr.rel (0) target = $region45
  $region44: #{encoder_forward.8} parent=0 // pred_region
    _
  $region45: #{encoder_forward.8} parent=0 // pred_fallthru
    _
  // Predicated region
  $region46: #{encoder_forward.8} parent=0 // pred_check
    _
  $region47: #{encoder_forward.8} parent=0 // pred_check_branch
    %989 = sbr.rel (0) target = $region49
  $region48: #{encoder_forward.8} parent=0 // pred_region
    _
  $region49: #{encoder_forward.8} parent=0 // pred_fallthru
    _
  // Predicated region
  $region50: #{encoder_forward.8} parent=0 // pred_check
    _
  $region51: #{encoder_forward.8} parent=0 // pred_check_branch
    %991 = sbr.rel (0) target = $region53
  $region52: #{encoder_forward.8} parent=0 // pred_region
    _
  $region53: #{encoder_forward.8} parent=0 // pred_fallthru
    _

// kernel: encoder_forward.10
$region0: #{encoder_forward.10}
  #allocation0 [shape = 'u32[]', space=smem, size = 0x4, offset = 0x4, fixed_abs, tag = 'smem constant byte address 0x4 - core index']
  #allocation1 [shape = 'u32[144,128]{1,0:T(1,128)}', space=vmem, size = 0x12000, scoped, tag = 'internal scratch']
  %s0 = inlined_call_operand.vmem [shape: bf16[2,6,6,32], index: 0, kind: input, shape index: {}]
  %s1 = inlined_call_operand.vmem [shape: bf16[9,32,32], index: 1, kind: input, shape index: {}]
  %s2 = inlined_call_operand.vmem [shape: f32[1,32], index: 2, kind: input, shape index: {}]
  %s3 = inlined_call_operand.vmem [shape: f32[1,32], index: 3, kind: input, shape index: {}]
  %s4 = inlined_call_operand.vmem [shape: f32[1,32], index: 4, kind: input, shape index: {}]
  %s5 = inlined_call_operand.vmem [shape: bf16[2,4,4,32], index: 5, kind: output, shape index: {}]
  %s6 = sld [smem:[#allocation0]]
  $region30: #{encoder_forward.10} parent=0
    _
  %s8 = ssub.s32 1, %s6
  %s9 = scalar_select 0, %s8, %s6
  // Predicated region
  $region2: #{encoder_forward.10} parent=0 // pred_check
    _
  $region3: #{encoder_forward.10} parent=0 // pred_check_branch
    %11 = sbr.rel (0) target = $region5
  $region4: #{encoder_forward.10} parent=0 // pred_region
    _
  $region5: #{encoder_forward.10} parent=0 // pred_fallthru
    _
  // Predicated region
  $region6: #{encoder_forward.10} parent=0 // pred_check
    _
  $region7: #{encoder_forward.10} parent=0 // pred_check_branch
    %13 = sbr.rel (0) target = $region9
  $region8: #{encoder_forward.10} parent=0 // pred_region
    _
  $region9: #{encoder_forward.10} parent=0 // pred_fallthru
    _
  // Predicated region
  $region10: #{encoder_forward.10} parent=0 // pred_check
    _
  $region11: #{encoder_forward.10} parent=0 // pred_check_branch
    %15 = sbr.rel (0) target = $region13
  $region12: #{encoder_forward.10} parent=0 // pred_region
    _
  $region13: #{encoder_forward.10} parent=0 // pred_fallthru
    _
  // Predicated region
  $region14: #{encoder_forward.10} parent=0 // pred_check
    _
  $region15: #{encoder_forward.10} parent=0 // pred_check_branch
    %17 = sbr.rel (0) target = $region17
  $region16: #{encoder_forward.10} parent=0 // pred_region
    _
  $region17: #{encoder_forward.10} parent=0 // pred_fallthru
    _
  // Predicated region
  $region18: #{encoder_forward.10} parent=0 // pred_check
    _
  $region19: #{encoder_forward.10} parent=0 // pred_check_branch
    %19 = sbr.rel (0) target = $region21
  $region20: #{encoder_forward.10} parent=0 // pred_region
    _
  $region21: #{encoder_forward.10} parent=0 // pred_fallthru
    _
  %v21 = vld [vmem:[%s0] sm:$0x7]
  %v22 = vld [vmem:[%s0 + $0x4] sm:$0x7]
  %v23 = vld [vmem:[%s0 + $0x8] sm:$0x7]
  %v24 = vld [vmem:[%s0 + $0xc] sm:$0x7]
  %v25 = vld [vmem:[%s0 + $0x10] sm:$0x7]
  %v26 = vld [vmem:[%s0 + $0x14] sm:$0x7]
  %v27 = vld [vmem:[%s0 + $0x18] sm:$0x7]
  %v28 = vld [vmem:[%s0 + $0x1c] sm:$0x7]
  %v29 = vld [vmem:[%s0 + $0x20] sm:$0x7]
  %v30 = vld [vmem:[%s0 + $0x24] sm:$0x7]
  %v31 = vld [vmem:[%s0 + $0x28] sm:$0x7]
  %v32 = vld [vmem:[%s0 + $0x2c] sm:$0x7]
  %v33 = vunpack.c.l.bf16 %v21
  %v34 = vunpack.c.l.bf16 %v22
  %v35 = vunpack.c.l.bf16 %v23
  %v36 = vunpack.c.l.bf16 %v24
  %v37 = vunpack.c.l.bf16 %v25
  %v38 = vunpack.c.l.bf16 %v26
  %v39 = vunpack.c.l.bf16 %v27
  %v40 = vunpack.c.l.bf16 %v28
  %v41 = vunpack.c.l.bf16 %v29
  %v42 = vunpack.c.l.bf16 %v30
  %v43 = vunpack.c.l.bf16 %v31
  %v44 = vunpack.c.l.bf16 %v32
  %v45 = vld [vmem:[%s3] sm:$0x1]
  %v47 = vlaneseq
  %v48 = vshrl.u32 %v47, 7
  %v49 = vsub.s32 0, %v48
  %v50 = vrot.slane %v45, %v49
  %v52 = vmul.f32 %v33, %v50
  %v53 = vmul.f32 %v34, %v50
  %v54 = vmul.f32 %v35, %v50
  %v55 = vmul.f32 %v36, %v50
  %v56 = vmul.f32 %v37, %v50
  %v57 = vmul.f32 %v38, %v50
  %v58 = vmul.f32 %v39, %v50
  %v59 = vmul.f32 %v40, %v50
  %v60 = vmul.f32 %v41, %v50
  %v61 = vmul.f32 %v42, %v50
  %v62 = vmul.f32 %v43, %v50
  %v63 = vmul.f32 %v44, %v50
  %v64 = vld [vmem:[%s4] sm:$0x1]
  %v66 = vlaneseq
  %v67 = vshrl.u32 %v66, 7
  %v68 = vsub.s32 0, %v67
  %v69 = vrot.slane %v64, %v68
  %v71 = vadd.f32 %v52, %v69
  %v72 = vadd.f32 %v53, %v69
  %v73 = vadd.f32 %v54, %v69
  %v74 = vadd.f32 %v55, %v69
  %v75 = vadd.f32 %v56, %v69
  %v76 = vadd.f32 %v57, %v69
  %v77 = vadd.f32 %v58, %v69
  %v78 = vadd.f32 %v59, %v69
  %v79 = vadd.f32 %v60, %v69
  %v80 = vadd.f32 %v61, %v69
  %v81 = vadd.f32 %v62, %v69
  %v82 = vadd.f32 %v63, %v69
  %v83 = vmax.f32 %v71, 0.0
  %v84 = vmax.f32 %v72, 0.0
  %v85 = vmax.f32 %v73, 0.0
  %v86 = vmax.f32 %v74, 0.0
  %v87 = vmax.f32 %v75, 0.0
  %v88 = vmax.f32 %v76, 0.0
  %v89 = vmax.f32 %v77, 0.0
  %v90 = vmax.f32 %v78, 0.0
  %v91 = vmax.f32 %v79, 0.0
  %v92 = vmax.f32 %v80, 0.0
  %v93 = vmax.f32 %v81, 0.0
  %v94 = vmax.f32 %v82, 0.0
  %v95 = vlaneseq
  %v96 = vshrl.u32 %v95, 7
  %vm97 = vcmp.ge.s32.totalorder %v96, 1
  %vm98 = vmand 0, %vm97
  %vm99 = vmand 1, %vm97
  %vm100 = vcmp.lt.s32.totalorder %v96, 5
  %vm101 = vmand %vm98, %vm100
  %vm102 = vmand %vm99, %vm100
  %v103 = vsel %vm101, 1, 0
  %v104 = vsel %vm102, 1, 0
  %vm105 = vcmp.eq.s32.totalorder %v103, 1
  %vm106 = vcmp.eq.s32.totalorder %v104, 1
  %v107 = vsel %vm105, %v83, 0.0
  %v108 = vsel %vm106, %v84, 0.0
  %v109 = vsel %vm106, %v85, 0.0
  %v110 = vsel %vm106, %v86, 0.0
  %v111 = vsel %vm106, %v87, 0.0
  %v112 = vsel %vm105, %v88, 0.0
  %v113 = vsel %vm105, %v89, 0.0
  %v114 = vsel %vm106, %v90, 0.0
  %v115 = vsel %vm106, %v91, 0.0
  %v116 = vsel %vm106, %v92, 0.0
  %v117 = vsel %vm106, %v93, 0.0
  %v118 = vsel %vm105, %v94, 0.0
  %v119 = vpack.c.bf16 %v107, %v107
  %v120 = vpack.c.bf16 %v108, %v108
  %v121 = vpack.c.bf16 %v109, %v109
  %v122 = vpack.c.bf16 %v110, %v110
  %v123 = vpack.c.bf16 %v111, %v111
  %v124 = vpack.c.bf16 %v112, %v112
  %v125 = vpack.c.bf16 %v113, %v113
  %v126 = vpack.c.bf16 %v114, %v114
  %v127 = vpack.c.bf16 %v115, %v115
  %v128 = vpack.c.bf16 %v116, %v116
  %v129 = vpack.c.bf16 %v117, %v117
  %v130 = vpack.c.bf16 %v118, %v118
  %v131 = vld [vmem:[%s1] sm:$0xf]
  %v132 = vld [vmem:[%s1 + $0x4] sm:$0xf]
  %v133 = vld [vmem:[%s1 + $0x8] sm:$0xf]
  %v134 = vld [vmem:[%s1 + $0xc] sm:$0xf]
  %v144 = vunpack.c.l.s4 1983009808
  %v145 = vunpack.c.0.s8 %v144
  %v146 = vlaneseq
  %v147 = vshrl.u32 %v146, 7
  %v148 = vsub.s32 %v145, %v147
  %v149 = vrot.slane %v119, %v148
  %v150 = vcombine.high %v149, %v149
  %v152 = vunpack.c.l.s4 1983009808
  %v153 = vunpack.c.0.s8 %v152
  %v154 = vlaneseq
  %v155 = vshrl.u32 %v154, 7
  %v156 = vsub.s32 %v153, %v155
  %v157 = vrot.slane %v120, %v156
  %v158 = vcombine.high %v157, %v157
  %v160 = vunpack.c.l.s4 1983009808
  %v161 = vunpack.c.0.s8 %v160
  %v162 = vlaneseq
  %v163 = vshrl.u32 %v162, 7
  %v164 = vsub.s32 %v161, %v163
  %v165 = vrot.slane %v121, %v164
  %v166 = vcombine.high %v165, %v165
  %v168 = vunpack.c.l.s4 1983009808
  %v169 = vunpack.c.0.s8 %v168
  %v170 = vlaneseq
  %v171 = vshrl.u32 %v170, 7
  %v172 = vsub.s32 %v169, %v171
  %v173 = vrot.slane %v122, %v172
  %v174 = vcombine.high %v173, %v173
  %v176 = vunpack.c.l.s4 1983009808
  %v177 = vunpack.c.0.s8 %v176
  %v178 = vlaneseq
  %v179 = vshrl.u32 %v178, 7
  %v180 = vsub.s32 %v177, %v179
  %v181 = vrot.slane %v125, %v180
  %v182 = vcombine.high %v181, %v181
  %v184 = vunpack.c.l.s4 1983009808
  %v185 = vunpack.c.0.s8 %v184
  %v186 = vlaneseq
  %v187 = vshrl.u32 %v186, 7
  %v188 = vsub.s32 %v185, %v187
  %v189 = vrot.slane %v126, %v188
  %v190 = vcombine.high %v189, %v189
  %v192 = vunpack.c.l.s4 1983009808
  %v193 = vunpack.c.0.s8 %v192
  %v194 = vlaneseq
  %v195 = vshrl.u32 %v194, 7
  %v196 = vsub.s32 %v193, %v195
  %v197 = vrot.slane %v127, %v196
  %v198 = vcombine.high %v197, %v197
  %v200 = vunpack.c.l.s4 1983009808
  %v201 = vunpack.c.0.s8 %v200
  %v202 = vlaneseq
  %v203 = vshrl.u32 %v202, 7
  %v204 = vsub.s32 %v201, %v203
  %v205 = vrot.slane %v128, %v204
  %v206 = vcombine.high %v205, %v205
  %vm207 = vsmask.f32 1280
  %vm208 = vsmask.f32 3336
  %vm209 = vmor %vm207, %vm208
  %vm210 = vsmask.f32 5392
  %vm211 = vmor %vm209, %vm210
  %vm212 = vsmask.f32 7448
  %vm213 = vmor %vm211, %vm212
  %v215 = vshrl.u32 %v149, 16
  %v217 = vrot.slane %v215, 6
  %v218 = vshll.u32 %v149, 16
  %v220 = vrot.slane %v218, 7
  %v221 = vor.u32 %v217, %v220
  %v222 = vrot.slane %v221, 2
  %v224 = vshll.u32 %v150, 16
  %v226 = vrot.slane %v224, 7
  %v227 = vsel %vm213, %v222, %v226
  %v229 = vshrl.u32 %v157, 16
  %v231 = vrot.slane %v229, 6
  %v232 = vshll.u32 %v157, 16
  %v234 = vrot.slane %v232, 7
  %v235 = vor.u32 %v231, %v234
  %v236 = vrot.slane %v235, 2
  %v238 = vshll.u32 %v158, 16
  %v240 = vrot.slane %v238, 7
  %v241 = vsel %vm213, %v236, %v240
  %v243 = vshrl.u32 %v165, 16
  %v245 = vrot.slane %v243, 6
  %v246 = vshll.u32 %v165, 16
  %v248 = vrot.slane %v246, 7
  %v249 = vor.u32 %v245, %v248
  %v250 = vrot.slane %v249, 2
  %v252 = vshll.u32 %v166, 16
  %v254 = vrot.slane %v252, 7
  %v255 = vsel %vm213, %v250, %v254
  %v257 = vshrl.u32 %v173, 16
  %v259 = vrot.slane %v257, 6
  %v260 = vshll.u32 %v173, 16
  %v262 = vrot.slane %v260, 7
  %v263 = vor.u32 %v259, %v262
  %v264 = vrot.slane %v263, 2
  %v266 = vshll.u32 %v174, 16
  %v268 = vrot.slane %v266, 7
  %v269 = vsel %vm213, %v264, %v268
  %v271 = vshrl.u32 %v181, 16
  %v273 = vrot.slane %v271, 6
  %v274 = vshll.u32 %v181, 16
  %v276 = vrot.slane %v274, 7
  %v277 = vor.u32 %v273, %v276
  %v278 = vrot.slane %v277, 2
  %v280 = vshll.u32 %v182, 16
  %v282 = vrot.slane %v280, 7
  %v283 = vsel %vm213, %v278, %v282
  %v285 = vshrl.u32 %v189, 16
  %v287 = vrot.slane %v285, 6
  %v288 = vshll.u32 %v189, 16
  %v290 = vrot.slane %v288, 7
  %v291 = vor.u32 %v287, %v290
  %v292 = vrot.slane %v291, 2
  %v294 = vshll.u32 %v190, 16
  %v296 = vrot.slane %v294, 7
  %v297 = vsel %vm213, %v292, %v296
  %v299 = vshrl.u32 %v197, 16
  %v301 = vrot.slane %v299, 6
  %v302 = vshll.u32 %v197, 16
  %v304 = vrot.slane %v302, 7
  %v305 = vor.u32 %v301, %v304
  %v306 = vrot.slane %v305, 2
  %v308 = vshll.u32 %v198, 16
  %v310 = vrot.slane %v308, 7
  %v311 = vsel %vm213, %v306, %v310
  %v313 = vshrl.u32 %v205, 16
  %v315 = vrot.slane %v313, 6
  %v316 = vshll.u32 %v205, 16
  %v318 = vrot.slane %v316, 7
  %v319 = vor.u32 %v315, %v318
  %v320 = vrot.slane %v319, 2
  %v322 = vshll.u32 %v206, 16
  %v324 = vrot.slane %v322, 7
  %v325 = vsel %vm213, %v320, %v324
  %s326 = scalar_lea.vmem %s1, 16
  %v327 = vld [vmem:[%s326] sm:$0xf]
  %v328 = vld [vmem:[%s326 + $0x4] sm:$0xf]
  %v329 = vld [vmem:[%s326 + $0x8] sm:$0xf]
  %v330 = vld [vmem:[%s326 + $0xc] sm:$0xf]
  %v331 = vcombine.low %v227, %v241
  %v332 = vcombine.low %v255, %v269
  %v334 = vunpack.c.l.s4 1983009808
  %v335 = vunpack.c.0.s8 %v334
  %v336 = vlaneseq
  %v337 = vshrl.u32 %v336, 7
  %v338 = vsub.s32 %v335, %v337
  %v339 = vrot.slane %v331, %v338
  %v341 = vunpack.c.l.s4 1983009808
  %v342 = vunpack.c.0.s8 %v341
  %v343 = vlaneseq
  %v344 = vshrl.u32 %v343, 7
  %v345 = vsub.s32 %v342, %v344
  %v346 = vrot.slane %v332, %v345
  %v347 = vcombine.low %v339, %v346
  %v348 = vcombine.low %v283, %v297
  %v349 = vcombine.low %v311, %v325
  %v351 = vunpack.c.l.s4 1983009808
  %v352 = vunpack.c.0.s8 %v351
  %v353 = vlaneseq
  %v354 = vshrl.u32 %v353, 7
  %v355 = vsub.s32 %v352, %v354
  %v356 = vrot.slane %v348, %v355
  %v358 = vunpack.c.l.s4 1983009808
  %v359 = vunpack.c.0.s8 %v358
  %v360 = vlaneseq
  %v361 = vshrl.u32 %v360, 7
  %v362 = vsub.s32 %v359, %v361
  %v363 = vrot.slane %v349, %v362
  %v364 = vcombine.low %v356, %v363
  %v369 = vunpack.c.l.b16 %v327
  %v370 = vunpack.c.l.b16 %v328
  %v371 = vunpack.c.l.b16 %v329
  %v372 = vunpack.c.l.b16 %v330
  %v373 = vpack.c.b16 %v370, %v369
  %v374 = vpack.c.b16 %v372, %v371
  %vm377 = vcmask 261120
  %v379 = vsel %vm377, %v347, 0
  %v382 = vsel %vm377, %v364, 0
  %384 = vmatprep.subr.bf16.mxu0 0
  %385 = vmatpush1.bf16.msra.mxu0 %v373
  %386 = vmatprep.subr.bf16.mxu0 0
  %387 = vmatpush1.bf16.msra.mxu0 %v374
  %388 = vmatprep.subr.bf16.mxu0 0
  %389 = vmatpush1.bf16.msra.mxu0 0
  %390 = vmatprep.subr.bf16.mxu0 0
  %391 = vmatpush1.bf16.msra.mxu0 0
  %392 = vmatprep.subr.bf16.mxu0 0
  %393 = vmatpush1.bf16.msra.mxu0 0
  %394 = vmatprep.subr.bf16.mxu0 0
  %395 = vmatpush1.bf16.msra.mxu0 0
  %396 = vmatprep.subr.bf16.mxu0 0
  %397 = vmatpush1.bf16.msra.mxu0 0
  %398 = vmatprep.subr.bf16.mxu0 0
  %399 = vmatpush1.bf16.msra.mxu0 0
  %400 = vmatprep.subr.bf16.mxu0 0
  %401 = vmatpush1.bf16.msra.mxu0 0
  %402 = vmatprep.subr.bf16.mxu0 0
  %403 = vmatpush1.bf16.msra.mxu0 0
  %404 = vmatprep.subr.bf16.mxu0 0
  %405 = vmatpush1.bf16.msra.mxu0 0
  %406 = vmatprep.subr.bf16.mxu0 0
  %407 = vmatpush1.bf16.msra.mxu0 0
  %408 = vmatprep.subr.bf16.mxu0 0
  %409 = vmatpush1.bf16.msra.mxu0 0
  %410 = vmatprep.subr.bf16.mxu0 0
  %411 = vmatpush1.bf16.msra.mxu0 0
  %412 = vmatprep.subr.bf16.mxu0 0
  %413 = vmatpush1.bf16.msra.mxu0 0
  %414 = vmatprep.subr.bf16.mxu0 0
  %415 = vmatpush1.bf16.msra.mxu0 0
  %416 = vmatprep.mubr.bf16.mxu0 0
  %417 = vmatmul.mubr.bf16.gmra.mrb[0].mxu0 %v379
  %v418 = vpop.f32.mrb[0].mxu0
  %v419 = vadd.f32 0.0, %v418
  %v420 = vpop.f32.mrb[0].mxu0
  %v421 = vpop.f32.mrb[0].mxu0
  %v422 = vadd.f32 0.0, %v421
  %v423 = vpop.f32.mrb[0].mxu0
  %424 = vmatprep.mubr.bf16.mxu0 0
  %425 = vmatmul.mubr.bf16.gmra.mrb[0].mxu0 %v382
  %v426 = vpop.f32.mrb[0].mxu0
  %v427 = vadd.f32 0.0, %v426
  %v428 = vpop.f32.mrb[0].mxu0
  %v429 = vpop.f32.mrb[0].mxu0
  %v430 = vadd.f32 0.0, %v429
  %v431 = vpop.f32.mrb[0].mxu0
  %432 = vdwg.mxu0
  %v433 = vcombine.low %v119, %v120
  %v434 = vcombine.low %v121, %v122
  %v436 = vunpack.c.l.s4 1983009808
  %v437 = vunpack.c.0.s8 %v436
  %v438 = vlaneseq
  %v439 = vshrl.u32 %v438, 7
  %v440 = vsub.s32 %v437, %v439
  %v441 = vrot.slane %v433, %v440
  %v443 = vunpack.c.l.s4 1983009808
  %v444 = vunpack.c.0.s8 %v443
  %v445 = vlaneseq
  %v446 = vshrl.u32 %v445, 7
  %v447 = vsub.s32 %v444, %v446
  %v448 = vrot.slane %v434, %v447
  %v449 = vcombine.low %v441, %v448
  %v450 = vcombine.low %v125, %v126
  %v451 = vcombine.low %v127, %v128
  %v453 = vunpack.c.l.s4 1983009808
  %v454 = vunpack.c.0.s8 %v453
  %v455 = vlaneseq
  %v456 = vshrl.u32 %v455, 7
  %v457 = vsub.s32 %v454, %v456
  %v458 = vrot.slane %v450, %v457
  %v460 = vunpack.c.l.s4 1983009808
  %v461 = vunpack.c.0.s8 %v460
  %v462 = vlaneseq
  %v463 = vshrl.u32 %v462, 7
  %v464 = vsub.s32 %v461, %v463
  %v465 = vrot.slane %v451, %v464
  %v466 = vcombine.low %v458, %v465
  %v471 = vunpack.c.l.b16 %v131
  %v472 = vunpack.c.l.b16 %v132
  %v473 = vunpack.c.l.b16 %v133
  %v474 = vunpack.c.l.b16 %v134
  %v475 = vpack.c.b16 %v472, %v471
  %v476 = vpack.c.b16 %v474, %v473
  %v480 = vsel %vm377, %v449, 0
  %v483 = vsel %vm377, %v466, 0
  %485 = vmatprep.subr.bf16.mxu0 0
  %486 = vmatpush1.bf16.msra.mxu0 %v475
  %487 = vmatprep.subr.bf16.mxu0 0
  %488 = vmatpush1.bf16.msra.mxu0 %v476
  %489 = vmatprep.subr.bf16.mxu0 0
  %490 = vmatpush1.bf16.msra.mxu0 0
  %491 = vmatprep.subr.bf16.mxu0 0
  %492 = vmatpush1.bf16.msra.mxu0 0
  %493 = vmatprep.subr.bf16.mxu0 0
  %494 = vmatpush1.bf16.msra.mxu0 0
  %495 = vmatprep.subr.bf16.mxu0 0
  %496 = vmatpush1.bf16.msra.mxu0 0
  %497 = vmatprep.subr.bf16.mxu0 0
  %498 = vmatpush1.bf16.msra.mxu0 0
  %499 = vmatprep.subr.bf16.mxu0 0
  %500 = vmatpush1.bf16.msra.mxu0 0
  %501 = vmatprep.subr.bf16.mxu0 0
  %502 = vmatpush1.bf16.msra.mxu0 0
  %503 = vmatprep.subr.bf16.mxu0 0
  %504 = vmatpush1.bf16.msra.mxu0 0
  %505 = vmatprep.subr.bf16.mxu0 0
  %506 = vmatpush1.bf16.msra.mxu0 0
  %507 = vmatprep.subr.bf16.mxu0 0
  %508 = vmatpush1.bf16.msra.mxu0 0
  %509 = vmatprep.subr.bf16.mxu0 0
  %510 = vmatpush1.bf16.msra.mxu0 0
  %511 = vmatprep.subr.bf16.mxu0 0
  %512 = vmatpush1.bf16.msra.mxu0 0
  %513 = vmatprep.subr.bf16.mxu0 0
  %514 = vmatpush1.bf16.msra.mxu0 0
  %515 = vmatprep.subr.bf16.mxu0 0
  %516 = vmatpush1.bf16.msra.mxu0 0
  %517 = vmatprep.mubr.bf16.mxu0 0
  %518 = vmatmul.mubr.bf16.gmra.mrb[0].mxu0 %v480
  %v519 = vpop.f32.mrb[0].mxu0
  %v520 = vadd.f32 %v419, %v519
  %v521 = vpop.f32.mrb[0].mxu0
  %v522 = vpop.f32.mrb[0].mxu0
  %v523 = vadd.f32 %v422, %v522
  %v524 = vpop.f32.mrb[0].mxu0
  %525 = vmatprep.mubr.bf16.mxu0 0
  %526 = vmatmul.mubr.bf16.gmra.mrb[0].mxu0 %v483
  %v527 = vpop.f32.mrb[0].mxu0
  %v528 = vadd.f32 %v427, %v527
  %v529 = vpop.f32.mrb[0].mxu0
  %v530 = vpop.f32.mrb[0].mxu0
  %v531 = vadd.f32 %v430, %v530
  %v532 = vpop.f32.mrb[0].mxu0
  %533 = vdwg.mxu0
  %vm534 = vcmask 1040384
  %vm535 = vcmask 1042434
  %vm536 = vmor %vm534, %vm535
  %vm537 = vcmask 1044484
  %vm538 = vmor %vm536, %vm537
  %vm539 = vcmask 1046534
  %vm540 = vmor %vm538, %vm539
  %v541 = vrot.slane %v149, 7
  %v542 = vrot.slane %v541, 2
  %v543 = vrot.slane %v150, 7
  %v544 = vsel %vm540, %v542, %v543
  %v545 = vrot.slane %v157, 7
  %v546 = vrot.slane %v545, 2
  %v547 = vrot.slane %v158, 7
  %v548 = vsel %vm540, %v546, %v547
  %v549 = vrot.slane %v165, 7
  %v550 = vrot.slane %v549, 2
  %v551 = vrot.slane %v166, 7
  %v552 = vsel %vm540, %v550, %v551
  %v553 = vrot.slane %v173, 7
  %v554 = vrot.slane %v553, 2
  %v555 = vrot.slane %v174, 7
  %v556 = vsel %vm540, %v554, %v555
  %v557 = vrot.slane %v181, 7
  %v558 = vrot.slane %v557, 2
  %v559 = vrot.slane %v182, 7
  %v560 = vsel %vm540, %v558, %v559
  %v561 = vrot.slane %v189, 7
  %v562 = vrot.slane %v561, 2
  %v563 = vrot.slane %v190, 7
  %v564 = vsel %vm540, %v562, %v563
  %v565 = vrot.slane %v197, 7
  %v566 = vrot.slane %v565, 2
  %v567 = vrot.slane %v198, 7
  %v568 = vsel %vm540, %v566, %v567
  %v569 = vrot.slane %v205, 7
  %v570 = vrot.slane %v569, 2
  %v571 = vrot.slane %v206, 7
  %v572 = vsel %vm540, %v570, %v571
  %s573 = scalar_lea.vmem %s1, 32
  %v574 = vld [vmem:[%s573] sm:$0xf]
  %v575 = vld [vmem:[%s573 + $0x4] sm:$0xf]
  %v576 = vld [vmem:[%s573 + $0x8] sm:$0xf]
  %v577 = vld [vmem:[%s573 + $0xc] sm:$0xf]
  %v578 = vcombine.low %v544, %v548
  %v579 = vcombine.low %v552, %v556
  %v581 = vunpack.c.l.s4 1983009808
  %v582 = vunpack.c.0.s8 %v581
  %v583 = vlaneseq
  %v584 = vshrl.u32 %v583, 7
  %v585 = vsub.s32 %v582, %v584
  %v586 = vrot.slane %v578, %v585
  %v588 = vunpack.c.l.s4 1983009808
  %v589 = vunpack.c.0.s8 %v588
  %v590 = vlaneseq
  %v591 = vshrl.u32 %v590, 7
  %v592 = vsub.s32 %v589, %v591
  %v593 = vrot.slane %v579, %v592
  %v594 = vcombine.low %v586, %v593
  %v595 = vcombine.low %v560, %v564
  %v596 = vcombine.low %v568, %v572
  %v598 = vunpack.c.l.s4 1983009808
  %v599 = vunpack.c.0.s8 %v598
  %v600 = vlaneseq
  %v601 = vshrl.u32 %v600, 7
  %v602 = vsub.s32 %v599, %v601
  %v603 = vrot.slane %v595, %v602
  %v605 = vunpack.c.l.s4 1983009808
  %v606 = vunpack.c.0.s8 %v605
  %v607 = vlaneseq
  %v608 = vshrl.u32 %v607, 7
  %v609 = vsub.s32 %v606, %v608
  %v610 = vrot.slane %v596, %v609
  %v611 = vcombine.low %v603, %v610
  %v616 = vunpack.c.l.b16 %v574
  %v617 = vunpack.c.l.b16 %v575
  %v618 = vunpack.c.l.b16 %v576
  %v619 = vunpack.c.l.b16 %v577
  %v620 = vpack.c.b16 %v617, %v616
  %v621 = vpack.c.b16 %v619, %v618
  %v625 = vsel %vm377, %v594, 0
  %v628 = vsel %vm377, %v611, 0
  %630 = vmatprep.subr.bf16.mxu0 0
  %631 = vmatpush1.bf16.msra.mxu0 %v620
  %632 = vmatprep.subr.bf16.mxu0 0
  %633 = vmatpush1.bf16.msra.mxu0 %v621
  %634 = vmatprep.subr.bf16.mxu0 0
  %635 = vmatpush1.bf16.msra.mxu0 0
  %636 = vmatprep.subr.bf16.mxu0 0
  %637 = vmatpush1.bf16.msra.mxu0 0
  %638 = vmatprep.subr.bf16.mxu0 0
  %639 = vmatpush1.bf16.msra.mxu0 0
  %640 = vmatprep.subr.bf16.mxu0 0
  %641 = vmatpush1.bf16.msra.mxu0 0
  %642 = vmatprep.subr.bf16.mxu0 0
  %643 = vmatpush1.bf16.msra.mxu0 0
  %644 = vmatprep.subr.bf16.mxu0 0
  %645 = vmatpush1.bf16.msra.mxu0 0
  %646 = vmatprep.subr.bf16.mxu0 0
  %647 = vmatpush1.bf16.msra.mxu0 0
  %648 = vmatprep.subr.bf16.mxu0 0
  %649 = vmatpush1.bf16.msra.mxu0 0
  %650 = vmatprep.subr.bf16.mxu0 0
  %651 = vmatpush1.bf16.msra.mxu0 0
  %652 = vmatprep.subr.bf16.mxu0 0
  %653 = vmatpush1.bf16.msra.mxu0 0
  %654 = vmatprep.subr.bf16.mxu0 0
  %655 = vmatpush1.bf16.msra.mxu0 0
  %656 = vmatprep.subr.bf16.mxu0 0
  %657 = vmatpush1.bf16.msra.mxu0 0
  %658 = vmatprep.subr.bf16.mxu0 0
  %659 = vmatpush1.bf16.msra.mxu0 0
  %660 = vmatprep.subr.bf16.mxu0 0
  %661 = vmatpush1.bf16.msra.mxu0 0
  %662 = vmatprep.mubr.bf16.mxu0 0
  %663 = vmatmul.mubr.bf16.gmra.mrb[0].mxu0 %v625
  %v664 = vpop.f32.mrb[0].mxu0
  %v665 = vadd.f32 0.0, %v664
  %v666 = vpop.f32.mrb[0].mxu0
  %v667 = vpop.f32.mrb[0].mxu0
  %v668 = vadd.f32 0.0, %v667
  %v669 = vpop.f32.mrb[0].mxu0
  %670 = vmatprep.mubr.bf16.mxu0 0
  %671 = vmatmul.mubr.bf16.gmra.mrb[0].mxu0 %v628
  %v672 = vpop.f32.mrb[0].mxu0
  %v673 = vadd.f32 0.0, %v672
  %v674 = vpop.f32.mrb[0].mxu0
  %v675 = vpop.f32.mrb[0].mxu0
  %v676 = vadd.f32 0.0, %v675
  %v677 = vpop.f32.mrb[0].mxu0
  %678 = vdwg.mxu0
  %v679 = vadd.f32 %v520, %v665
  %v680 = vadd.f32 %v523, %v668
  %v681 = vadd.f32 %v528, %v673
  %v682 = vadd.f32 %v531, %v676
  %s683 = scalar_lea.vmem %s1, 48
  %v684 = vld [vmem:[%s683] sm:$0xf]
  %v685 = vld [vmem:[%s683 + $0x4] sm:$0xf]
  %v686 = vld [vmem:[%s683 + $0x8] sm:$0xf]
  %v687 = vld [vmem:[%s683 + $0xc] sm:$0xf]
  %v690 = vcombine.low %v120, %v121
  %v691 = vcombine.low %v122, %v123
  %v693 = vunpack.c.l.s4 1983009808
  %v694 = vunpack.c.0.s8 %v693
  %v695 = vlaneseq
  %v696 = vshrl.u32 %v695, 7
  %v697 = vsub.s32 %v694, %v696
  %v698 = vrot.slane %v690, %v697
  %v700 = vunpack.c.l.s4 1983009808
  %v701 = vunpack.c.0.s8 %v700
  %v702 = vlaneseq
  %v703 = vshrl.u32 %v702, 7
  %v704 = vsub.s32 %v701, %v703
  %v705 = vrot.slane %v691, %v704
  %v706 = vcombine.low %v698, %v705
  %v707 = vcombine.low %v126, %v127
  %v708 = vcombine.low %v128, %v129
  %v710 = vunpack.c.l.s4 1983009808
  %v711 = vunpack.c.0.s8 %v710
  %v712 = vlaneseq
  %v713 = vshrl.u32 %v712, 7
  %v714 = vsub.s32 %v711, %v713
  %v715 = vrot.slane %v707, %v714
  %v717 = vunpack.c.l.s4 1983009808
  %v718 = vunpack.c.0.s8 %v717
  %v719 = vlaneseq
  %v720 = vshrl.u32 %v719, 7
  %v721 = vsub.s32 %v718, %v720
  %v722 = vrot.slane %v708, %v721
  %v723 = vcombine.low %v715, %v722
  %v728 = vunpack.c.l.b16 %v684
  %v729 = vunpack.c.l.b16 %v685
  %v730 = vunpack.c.l.b16 %v686
  %v731 = vunpack.c.l.b16 %v687
  %v732 = vpack.c.b16 %v729, %v728
  %v733 = vpack.c.b16 %v731, %v730
  %v737 = vsel %vm377, %v706, 0
  %v740 = vsel %vm377, %v723, 0
  %742 = vmatprep.subr.bf16.mxu0 0
  %743 = vmatpush1.bf16.msra.mxu0 %v732
  %744 = vmatprep.subr.bf16.mxu0 0
  %745 = vmatpush1.bf16.msra.mxu0 %v733
  %746 = vmatprep.subr.bf16.mxu0 0
  %747 = vmatpush1.bf16.msra.mxu0 0
  %748 = vmatprep.subr.bf16.mxu0 0
  %749 = vmatpush1.bf16.msra.mxu0 0
  %750 = vmatprep.subr.bf16.mxu0 0
  %751 = vmatpush1.bf16.msra.mxu0 0
  %752 = vmatprep.subr.bf16.mxu0 0
  %753 = vmatpush1.bf16.msra.mxu0 0
  %754 = vmatprep.subr.bf16.mxu0 0
  %755 = vmatpush1.bf16.msra.mxu0 0
  %756 = vmatprep.subr.bf16.mxu0 0
  %757 = vmatpush1.bf16.msra.mxu0 0
  %758 = vmatprep.subr.bf16.mxu0 0
  %759 = vmatpush1.bf16.msra.mxu0 0
  %760 = vmatprep.subr.bf16.mxu0 0
  %761 = vmatpush1.bf16.msra.mxu0 0
  %762 = vmatprep.subr.bf16.mxu0 0
  %763 = vmatpush1.bf16.msra.mxu0 0
  %764 = vmatprep.subr.bf16.mxu0 0
  %765 = vmatpush1.bf16.msra.mxu0 0
  %766 = vmatprep.subr.bf16.mxu0 0
  %767 = vmatpush1.bf16.msra.mxu0 0
  %768 = vmatprep.subr.bf16.mxu0 0
  %769 = vmatpush1.bf16.msra.mxu0 0
  %770 = vmatprep.subr.bf16.mxu0 0
  %771 = vmatpush1.bf16.msra.mxu0 0
  %772 = vmatprep.subr.bf16.mxu0 0
  %773 = vmatpush1.bf16.msra.mxu0 0
  %774 = vmatprep.mubr.bf16.mxu0 0
  %775 = vmatmul.mubr.bf16.gmra.mrb[0].mxu0 %v737
  %v776 = vpop.f32.mrb[0].mxu0
  %v777 = vadd.f32 0.0, %v776
  %v778 = vpop.f32.mrb[0].mxu0
  %v779 = vpop.f32.mrb[0].mxu0
  %v780 = vadd.f32 0.0, %v779
  %v781 = vpop.f32.mrb[0].mxu0
  %782 = vmatprep.mubr.bf16.mxu0 0
  %783 = vmatmul.mubr.bf16.gmra.mrb[0].mxu0 %v740
  %v784 = vpop.f32.mrb[0].mxu0
  %v785 = vadd.f32 0.0, %v784
  %v786 = vpop.f32.mrb[0].mxu0
  %v787 = vpop.f32.mrb[0].mxu0
  %v788 = vadd.f32 0.0, %v787
  %v789 = vpop.f32.mrb[0].mxu0
  %790 = vdwg.mxu0
  %v791 = vadd.f32 %v679, %v777
  %v792 = vadd.f32 %v680, %v780
  %v793 = vadd.f32 %v681, %v785
  %v794 = vadd.f32 %v682, %v788
  %v796 = vunpack.c.l.s4 1983009808
  %v797 = vunpack.c.0.s8 %v796
  %v798 = vlaneseq
  %v799 = vshrl.u32 %v798, 7
  %v800 = vsub.s32 %v797, %v799
  %v801 = vrot.slane %v123, %v800
  %v802 = vcombine.high %v801, %v801
  %v804 = vunpack.c.l.s4 1983009808
  %v805 = vunpack.c.0.s8 %v804
  %v806 = vlaneseq
  %v807 = vshrl.u32 %v806, 7
  %v808 = vsub.s32 %v805, %v807
  %v809 = vrot.slane %v129, %v808
  %v810 = vcombine.high %v809, %v809
  %v812 = vshrl.u32 %v801, 16
  %v814 = vrot.slane %v812, 6
  %v815 = vshll.u32 %v801, 16
  %v817 = vrot.slane %v815, 7
  %v818 = vor.u32 %v814, %v817
  %v819 = vrot.slane %v818, 2
  %v821 = vshll.u32 %v802, 16
  %v823 = vrot.slane %v821, 7
  %v824 = vsel %vm213, %v819, %v823
  %v826 = vshrl.u32 %v809, 16
  %v828 = vrot.slane %v826, 6
  %v829 = vshll.u32 %v809, 16
  %v831 = vrot.slane %v829, 7
  %v832 = vor.u32 %v828, %v831
  %v833 = vrot.slane %v832, 2
  %v835 = vshll.u32 %v810, 16
  %v837 = vrot.slane %v835, 7
  %v838 = vsel %vm213, %v833, %v837
  %s839 = scalar_lea.vmem %s1, 64
  %v840 = vld [vmem:[%s839] sm:$0xf]
  %v841 = vld [vmem:[%s839 + $0x4] sm:$0xf]
  %v842 = vld [vmem:[%s839 + $0x8] sm:$0xf]
  %v843 = vld [vmem:[%s839 + $0xc] sm:$0xf]
  %v844 = vcombine.low %v241, %v255
  %v845 = vcombine.low %v269, %v824
  %v847 = vunpack.c.l.s4 1983009808
  %v848 = vunpack.c.0.s8 %v847
  %v849 = vlaneseq
  %v850 = vshrl.u32 %v849, 7
  %v851 = vsub.s32 %v848, %v850
  %v852 = vrot.slane %v844, %v851
  %v854 = vunpack.c.l.s4 1983009808
  %v855 = vunpack.c.0.s8 %v854
  %v856 = vlaneseq
  %v857 = vshrl.u32 %v856, 7
  %v858 = vsub.s32 %v855, %v857
  %v859 = vrot.slane %v845, %v858
  %v860 = vcombine.low %v852, %v859
  %v861 = vcombine.low %v297, %v311
  %v862 = vcombine.low %v325, %v838
  %v864 = vunpack.c.l.s4 1983009808
  %v865 = vunpack.c.0.s8 %v864
  %v866 = vlaneseq
  %v867 = vshrl.u32 %v866, 7
  %v868 = vsub.s32 %v865, %v867
  %v869 = vrot.slane %v861, %v868
  %v871 = vunpack.c.l.s4 1983009808
  %v872 = vunpack.c.0.s8 %v871
  %v873 = vlaneseq
  %v874 = vshrl.u32 %v873, 7
  %v875 = vsub.s32 %v872, %v874
  %v876 = vrot.slane %v862, %v875
  %v877 = vcombine.low %v869, %v876
  %v882 = vunpack.c.l.b16 %v840
  %v883 = vunpack.c.l.b16 %v841
  %v884 = vunpack.c.l.b16 %v842
  %v885 = vunpack.c.l.b16 %v843
  %v886 = vpack.c.b16 %v883, %v882
  %v887 = vpack.c.b16 %v885, %v884
  %v891 = vsel %vm377, %v860, 0
  %v894 = vsel %vm377, %v877, 0
  %896 = vmatprep.subr.bf16.mxu0 0
  %897 = vmatpush1.bf16.msra.mxu0 %v886
  %898 = vmatprep.subr.bf16.mxu0 0
  %899 = vmatpush1.bf16.msra.mxu0 %v887
  %900 = vmatprep.subr.bf16.mxu0 0
  %901 = vmatpush1.bf16.msra.mxu0 0
  %902 = vmatprep.subr.bf16.mxu0 0
  %903 = vmatpush1.bf16.msra.mxu0 0
  %904 = vmatprep.subr.bf16.mxu0 0
  %905 = vmatpush1.bf16.msra.mxu0 0
  %906 = vmatprep.subr.bf16.mxu0 0
  %907 = vmatpush1.bf16.msra.mxu0 0
  %908 = vmatprep.subr.bf16.mxu0 0
  %909 = vmatpush1.bf16.msra.mxu0 0
  %910 = vmatprep.subr.bf16.mxu0 0
  %911 = vmatpush1.bf16.msra.mxu0 0
  %912 = vmatprep.subr.bf16.mxu0 0
  %913 = vmatpush1.bf16.msra.mxu0 0
  %914 = vmatprep.subr.bf16.mxu0 0
  %915 = vmatpush1.bf16.msra.mxu0 0
  %916 = vmatprep.subr.bf16.mxu0 0
  %917 = vmatpush1.bf16.msra.mxu0 0
  %918 = vmatprep.subr.bf16.mxu0 0
  %919 = vmatpush1.bf16.msra.mxu0 0
  %920 = vmatprep.subr.bf16.mxu0 0
  %921 = vmatpush1.bf16.msra.mxu0 0
  %922 = vmatprep.subr.bf16.mxu0 0
  %923 = vmatpush1.bf16.msra.mxu0 0
  %924 = vmatprep.subr.bf16.mxu0 0
  %925 = vmatpush1.bf16.msra.mxu0 0
  %926 = vmatprep.subr.bf16.mxu0 0
  %927 = vmatpush1.bf16.msra.mxu0 0
  %928 = vmatprep.mubr.bf16.mxu0 0
  %929 = vmatmul.mubr.bf16.gmra.mrb[0].mxu0 %v891
  %v930 = vpop.f32.mrb[0].mxu0
  %v931 = vadd.f32 0.0, %v930
  %v932 = vpop.f32.mrb[0].mxu0
  %v933 = vpop.f32.mrb[0].mxu0
  %v934 = vadd.f32 0.0, %v933
  %v935 = vpop.f32.mrb[0].mxu0
  %936 = vmatprep.mubr.bf16.mxu0 0
  %937 = vmatmul.mubr.bf16.gmra.mrb[0].mxu0 %v894
  %v938 = vpop.f32.mrb[0].mxu0
  %v939 = vadd.f32 0.0, %v938
  %v940 = vpop.f32.mrb[0].mxu0
  %v941 = vpop.f32.mrb[0].mxu0
  %v942 = vadd.f32 0.0, %v941
  %v943 = vpop.f32.mrb[0].mxu0
  %944 = vdwg.mxu0
  %v945 = vadd.f32 %v791, %v931
  %v946 = vadd.f32 %v792, %v934
  %v947 = vadd.f32 %v793, %v939
  %v948 = vadd.f32 %v794, %v942
  %v949 = vrot.slane %v801, 7
  %v950 = vrot.slane %v949, 2
  %v951 = vrot.slane %v802, 7
  %v952 = vsel %vm540, %v950, %v951
  %v953 = vrot.slane %v809, 7
  %v954 = vrot.slane %v953, 2
  %v955 = vrot.slane %v810, 7
  %v956 = vsel %vm540, %v954, %v955
  %s957 = scalar_lea.vmem %s1, 80
  %v958 = vld [vmem:[%s957] sm:$0xf]
  %v959 = vld [vmem:[%s957 + $0x4] sm:$0xf]
  %v960 = vld [vmem:[%s957 + $0x8] sm:$0xf]
  %v961 = vld [vmem:[%s957 + $0xc] sm:$0xf]
  %v962 = vcombine.low %v548, %v552
  %v963 = vcombine.low %v556, %v952
  %v965 = vunpack.c.l.s4 1983009808
  %v966 = vunpack.c.0.s8 %v965
  %v967 = vlaneseq
  %v968 = vshrl.u32 %v967, 7
  %v969 = vsub.s32 %v966, %v968
  %v970 = vrot.slane %v962, %v969
  %v972 = vunpack.c.l.s4 1983009808
  %v973 = vunpack.c.0.s8 %v972
  %v974 = vlaneseq
  %v975 = vshrl.u32 %v974, 7
  %v976 = vsub.s32 %v973, %v975
  %v977 = vrot.slane %v963, %v976
  %v978 = vcombine.low %v970, %v977
  %v979 = vcombine.low %v564, %v568
  %v980 = vcombine.low %v572, %v956
  %v982 = vunpack.c.l.s4 1983009808
  %v983 = vunpack.c.0.s8 %v982
  %v984 = vlaneseq
  %v985 = vshrl.u32 %v984, 7
  %v986 = vsub.s32 %v983, %v985
  %v987 = vrot.slane %v979, %v986
  %v989 = vunpack.c.l.s4 1983009808
  %v990 = vunpack.c.0.s8 %v989
  %v991 = vlaneseq
  %v992 = vshrl.u32 %v991, 7
  %v993 = vsub.s32 %v990, %v992
  %v994 = vrot.slane %v980, %v993
  %v995 = vcombine.low %v987, %v994
  %v1000 = vunpack.c.l.b16 %v958
  %v1001 = vunpack.c.l.b16 %v959
  %v1002 = vunpack.c.l.b16 %v960
  %v1003 = vunpack.c.l.b16 %v961
  %v1004 = vpack.c.b16 %v1001, %v1000
  %v1005 = vpack.c.b16 %v1003, %v1002
  %v1009 = vsel %vm377, %v978, 0
  %v1012 = vsel %vm377, %v995, 0
  %1014 = vmatprep.subr.bf16.mxu0 0
  %1015 = vmatpush1.bf16.msra.mxu0 %v1004
  %1016 = vmatprep.subr.bf16.mxu0 0
  %1017 = vmatpush1.bf16.msra.mxu0 %v1005
  %1018 = vmatprep.subr.bf16.mxu0 0
  %1019 = vmatpush1.bf16.msra.mxu0 0
  %1020 = vmatprep.subr.bf16.mxu0 0
  %1021 = vmatpush1.bf16.msra.mxu0 0
  %1022 = vmatprep.subr.bf16.mxu0 0
  %1023 = vmatpush1.bf16.msra.mxu0 0
  %1024 = vmatprep.subr.bf16.mxu0 0
  %1025 = vmatpush1.bf16.msra.mxu0 0
  %1026 = vmatprep.subr.bf16.mxu0 0
  %1027 = vmatpush1.bf16.msra.mxu0 0
  %1028 = vmatprep.subr.bf16.mxu0 0
  %1029 = vmatpush1.bf16.msra.mxu0 0
  %1030 = vmatprep.subr.bf16.mxu0 0
  %1031 = vmatpush1.bf16.msra.mxu0 0
  %1032 = vmatprep.subr.bf16.mxu0 0
  %1033 = vmatpush1.bf16.msra.mxu0 0
  %1034 = vmatprep.subr.bf16.mxu0 0
  %1035 = vmatpush1.bf16.msra.mxu0 0
  %1036 = vmatprep.subr.bf16.mxu0 0
  %1037 = vmatpush1.bf16.msra.mxu0 0
  %1038 = vmatprep.subr.bf16.mxu0 0
  %1039 = vmatpush1.bf16.msra.mxu0 0
  %1040 = vmatprep.subr.bf16.mxu0 0
  %1041 = vmatpush1.bf16.msra.mxu0 0
  %1042 = vmatprep.subr.bf16.mxu0 0
  %1043 = vmatpush1.bf16.msra.mxu0 0
  %1044 = vmatprep.subr.bf16.mxu0 0
  %1045 = vmatpush1.bf16.msra.mxu0 0
  %1046 = vmatprep.mubr.bf16.mxu0 0
  %1047 = vmatmul.mubr.bf16.gmra.mrb[0].mxu0 %v1009
  %v1048 = vpop.f32.mrb[0].mxu0
  %v1049 = vadd.f32 0.0, %v1048
  %v1050 = vpop.f32.mrb[0].mxu0
  %v1051 = vpop.f32.mrb[0].mxu0
  %v1052 = vadd.f32 0.0, %v1051
  %v1053 = vpop.f32.mrb[0].mxu0
  %1054 = vmatprep.mubr.bf16.mxu0 0
  %1055 = vmatmul.mubr.bf16.gmra.mrb[0].mxu0 %v1012
  %v1056 = vpop.f32.mrb[0].mxu0
  %v1057 = vadd.f32 0.0, %v1056
  %v1058 = vpop.f32.mrb[0].mxu0
  %v1059 = vpop.f32.mrb[0].mxu0
  %v1060 = vadd.f32 0.0, %v1059
  %v1061 = vpop.f32.mrb[0].mxu0
  %1062 = vdwg.mxu0
  %v1063 = vadd.f32 %v945, %v1049
  %v1064 = vadd.f32 %v946, %v1052
  %v1065 = vadd.f32 %v947, %v1057
  %v1066 = vadd.f32 %v948, %v1060
  %s1067 = scalar_lea.vmem %s1, 96
  %v1068 = vld [vmem:[%s1067] sm:$0xf]
  %v1069 = vld [vmem:[%s1067 + $0x4] sm:$0xf]
  %v1070 = vld [vmem:[%s1067 + $0x8] sm:$0xf]
  %v1071 = vld [vmem:[%s1067 + $0xc] sm:$0xf]
  %v1074 = vcombine.low %v123, %v124
  %v1076 = vunpack.c.l.s4 1983009808
  %v1077 = vunpack.c.0.s8 %v1076
  %v1078 = vlaneseq
  %v1079 = vshrl.u32 %v1078, 7
  %v1080 = vsub.s32 %v1077, %v1079
  %v1081 = vrot.slane %v1074, %v1080
  %v1082 = vcombine.low %v448, %v1081
  %v1083 = vcombine.low %v129, %v130
  %v1085 = vunpack.c.l.s4 1983009808
  %v1086 = vunpack.c.0.s8 %v1085
  %v1087 = vlaneseq
  %v1088 = vshrl.u32 %v1087, 7
  %v1089 = vsub.s32 %v1086, %v1088
  %v1090 = vrot.slane %v1083, %v1089
  %v1091 = vcombine.low %v465, %v1090
  %v1096 = vunpack.c.l.b16 %v1068
  %v1097 = vunpack.c.l.b16 %v1069
  %v1098 = vunpack.c.l.b16 %v1070
  %v1099 = vunpack.c.l.b16 %v1071
  %v1100 = vpack.c.b16 %v1097, %v1096
  %v1101 = vpack.c.b16 %v1099, %v1098
  %v1105 = vsel %vm377, %v1082, 0
  %v1108 = vsel %vm377, %v1091, 0
  %1110 = vmatprep.subr.bf16.mxu0 0
  %1111 = vmatpush1.bf16.msra.mxu0 %v1100
  %1112 = vmatprep.subr.bf16.mxu0 0
  %1113 = vmatpush1.bf16.msra.mxu0 %v1101
  %1114 = vmatprep.subr.bf16.mxu0 0
  %1115 = vmatpush1.bf16.msra.mxu0 0
  %1116 = vmatprep.subr.bf16.mxu0 0
  %1117 = vmatpush1.bf16.msra.mxu0 0
  %1118 = vmatprep.subr.bf16.mxu0 0
  %1119 = vmatpush1.bf16.msra.mxu0 0
  %1120 = vmatprep.subr.bf16.mxu0 0
  %1121 = vmatpush1.bf16.msra.mxu0 0
  %1122 = vmatprep.subr.bf16.mxu0 0
  %1123 = vmatpush1.bf16.msra.mxu0 0
  %1124 = vmatprep.subr.bf16.mxu0 0
  %1125 = vmatpush1.bf16.msra.mxu0 0
  %1126 = vmatprep.subr.bf16.mxu0 0
  %1127 = vmatpush1.bf16.msra.mxu0 0
  %1128 = vmatprep.subr.bf16.mxu0 0
  %1129 = vmatpush1.bf16.msra.mxu0 0
  %1130 = vmatprep.subr.bf16.mxu0 0
  %1131 = vmatpush1.bf16.msra.mxu0 0
  %1132 = vmatprep.subr.bf16.mxu0 0
  %1133 = vmatpush1.bf16.msra.mxu0 0
  %1134 = vmatprep.subr.bf16.mxu0 0
  %1135 = vmatpush1.bf16.msra.mxu0 0
  %1136 = vmatprep.subr.bf16.mxu0 0
  %1137 = vmatpush1.bf16.msra.mxu0 0
  %1138 = vmatprep.subr.bf16.mxu0 0
  %1139 = vmatpush1.bf16.msra.mxu0 0
  %1140 = vmatprep.subr.bf16.mxu0 0
  %1141 = vmatpush1.bf16.msra.mxu0 0
  %1142 = vmatprep.mubr.bf16.mxu0 0
  %1143 = vmatmul.mubr.bf16.gmra.mrb[0].mxu0 %v1105
  %v1144 = vpop.f32.mrb[0].mxu0
  %v1145 = vadd.f32 0.0, %v1144
  %v1146 = vpop.f32.mrb[0].mxu0
  %v1147 = vpop.f32.mrb[0].mxu0
  %v1148 = vadd.f32 0.0, %v1147
  %v1149 = vpop.f32.mrb[0].mxu0
  %1150 = vmatprep.mubr.bf16.mxu0 0
  %1151 = vmatmul.mubr.bf16.gmra.mrb[0].mxu0 %v1108
  %v1152 = vpop.f32.mrb[0].mxu0
  %v1153 = vadd.f32 0.0, %v1152
  %v1154 = vpop.f32.mrb[0].mxu0
  %v1155 = vpop.f32.mrb[0].mxu0
  %v1156 = vadd.f32 0.0, %v1155
  %v1157 = vpop.f32.mrb[0].mxu0
  %1158 = vdwg.mxu0
  %v1159 = vadd.f32 %v1063, %v1145
  %v1160 = vadd.f32 %v1064, %v1148
  %v1161 = vadd.f32 %v1065, %v1153
  %v1162 = vadd.f32 %v1066, %v1156
  %v1164 = vunpack.c.l.s4 1983009808
  %v1165 = vunpack.c.0.s8 %v1164
  %v1166 = vlaneseq
  %v1167 = vshrl.u32 %v1166, 7
  %v1168 = vsub.s32 %v1165, %v1167
  %v1169 = vrot.slane %v124, %v1168
  %v1170 = vcombine.high %v1169, %v1169
  %v1172 = vunpack.c.l.s4 1983009808
  %v1173 = vunpack.c.0.s8 %v1172
  %v1174 = vlaneseq
  %v1175 = vshrl.u32 %v1174, 7
  %v1176 = vsub.s32 %v1173, %v1175
  %v1177 = vrot.slane %v130, %v1176
  %v1178 = vcombine.high %v1177, %v1177
  %v1180 = vshrl.u32 %v1169, 16
  %v1182 = vrot.slane %v1180, 6
  %v1183 = vshll.u32 %v1169, 16
  %v1185 = vrot.slane %v1183, 7
  %v1186 = vor.u32 %v1182, %v1185
  %v1187 = vrot.slane %v1186, 2
  %v1189 = vshll.u32 %v1170, 16
  %v1191 = vrot.slane %v1189, 7
  %v1192 = vsel %vm213, %v1187, %v1191
  %v1194 = vshrl.u32 %v1177, 16
  %v1196 = vrot.slane %v1194, 6
  %v1197 = vshll.u32 %v1177, 16
  %v1199 = vrot.slane %v1197, 7
  %v1200 = vor.u32 %v1196, %v1199
  %v1201 = vrot.slane %v1200, 2
  %v1203 = vshll.u32 %v1178, 16
  %v1205 = vrot.slane %v1203, 7
  %v1206 = vsel %vm213, %v1201, %v1205
  %s1207 = scalar_lea.vmem %s1, 112
  %v1208 = vld [vmem:[%s1207] sm:$0xf]
  %v1209 = vld [vmem:[%s1207 + $0x4] sm:$0xf]
  %v1210 = vld [vmem:[%s1207 + $0x8] sm:$0xf]
  %v1211 = vld [vmem:[%s1207 + $0xc] sm:$0xf]
  %v1212 = vcombine.low %v824, %v1192
  %v1214 = vunpack.c.l.s4 1983009808
  %v1215 = vunpack.c.0.s8 %v1214
  %v1216 = vlaneseq
  %v1217 = vshrl.u32 %v1216, 7
  %v1218 = vsub.s32 %v1215, %v1217
  %v1219 = vrot.slane %v1212, %v1218
  %v1220 = vcombine.low %v346, %v1219
  %v1221 = vcombine.low %v838, %v1206
  %v1223 = vunpack.c.l.s4 1983009808
  %v1224 = vunpack.c.0.s8 %v1223
  %v1225 = vlaneseq
  %v1226 = vshrl.u32 %v1225, 7
  %v1227 = vsub.s32 %v1224, %v1226
  %v1228 = vrot.slane %v1221, %v1227
  %v1229 = vcombine.low %v363, %v1228
  %v1234 = vunpack.c.l.b16 %v1208
  %v1235 = vunpack.c.l.b16 %v1209
  %v1236 = vunpack.c.l.b16 %v1210
  %v1237 = vunpack.c.l.b16 %v1211
  %v1238 = vpack.c.b16 %v1235, %v1234
  %v1239 = vpack.c.b16 %v1237, %v1236
  %v1243 = vsel %vm377, %v1220, 0
  %v1246 = vsel %vm377, %v1229, 0
  %1248 = vmatprep.subr.bf16.mxu0 0
  %1249 = vmatpush1.bf16.msra.mxu0 %v1238
  %1250 = vmatprep.subr.bf16.mxu0 0
  %1251 = vmatpush1.bf16.msra.mxu0 %v1239
  %1252 = vmatprep.subr.bf16.mxu0 0
  %1253 = vmatpush1.bf16.msra.mxu0 0
  %1254 = vmatprep.subr.bf16.mxu0 0
  %1255 = vmatpush1.bf16.msra.mxu0 0
  %1256 = vmatprep.subr.bf16.mxu0 0
  %1257 = vmatpush1.bf16.msra.mxu0 0
  %1258 = vmatprep.subr.bf16.mxu0 0
  %1259 = vmatpush1.bf16.msra.mxu0 0
  %1260 = vmatprep.subr.bf16.mxu0 0
  %1261 = vmatpush1.bf16.msra.mxu0 0
  %1262 = vmatprep.subr.bf16.mxu0 0
  %1263 = vmatpush1.bf16.msra.mxu0 0
  %1264 = vmatprep.subr.bf16.mxu0 0
  %1265 = vmatpush1.bf16.msra.mxu0 0
  %1266 = vmatprep.subr.bf16.mxu0 0
  %1267 = vmatpush1.bf16.msra.mxu0 0
  %1268 = vmatprep.subr.bf16.mxu0 0
  %1269 = vmatpush1.bf16.msra.mxu0 0
  %1270 = vmatprep.subr.bf16.mxu0 0
  %1271 = vmatpush1.bf16.msra.mxu0 0
  %1272 = vmatprep.subr.bf16.mxu0 0
  %1273 = vmatpush1.bf16.msra.mxu0 0
  %1274 = vmatprep.subr.bf16.mxu0 0
  %1275 = vmatpush1.bf16.msra.mxu0 0
  %1276 = vmatprep.subr.bf16.mxu0 0
  %1277 = vmatpush1.bf16.msra.mxu0 0
  %1278 = vmatprep.subr.bf16.mxu0 0
  %1279 = vmatpush1.bf16.msra.mxu0 0
  %1280 = vmatprep.mubr.bf16.mxu0 0
  %1281 = vmatmul.mubr.bf16.gmra.mrb[0].mxu0 %v1243
  %v1282 = vpop.f32.mrb[0].mxu0
  %v1283 = vadd.f32 0.0, %v1282
  %v1284 = vpop.f32.mrb[0].mxu0
  %v1285 = vpop.f32.mrb[0].mxu0
  %v1286 = vadd.f32 0.0, %v1285
  %v1287 = vpop.f32.mrb[0].mxu0
  %1288 = vmatprep.mubr.bf16.mxu0 0
  %1289 = vmatmul.mubr.bf16.gmra.mrb[0].mxu0 %v1246
  %v1290 = vpop.f32.mrb[0].mxu0
  %v1291 = vadd.f32 0.0, %v1290
  %v1292 = vpop.f32.mrb[0].mxu0
  %v1293 = vpop.f32.mrb[0].mxu0
  %v1294 = vadd.f32 0.0, %v1293
  %v1295 = vpop.f32.mrb[0].mxu0
  %1296 = vdwg.mxu0
  %v1297 = vadd.f32 %v1159, %v1283
  %v1298 = vadd.f32 %v1160, %v1286
  %v1299 = vadd.f32 %v1161, %v1291
  %v1300 = vadd.f32 %v1162, %v1294
  %v1301 = vrot.slane %v1169, 7
  %v1302 = vrot.slane %v1301, 2
  %v1303 = vrot.slane %v1170, 7
  %v1304 = vsel %vm540, %v1302, %v1303
  %v1305 = vrot.slane %v1177, 7
  %v1306 = vrot.slane %v1305, 2
  %v1307 = vrot.slane %v1178, 7
  %v1308 = vsel %vm540, %v1306, %v1307
  %s1309 = scalar_lea.vmem %s1, 128
  %v1310 = vld [vmem:[%s1309] sm:$0xf]
  %v1311 = vld [vmem:[%s1309 + $0x4] sm:$0xf]
  %v1312 = vld [vmem:[%s1309 + $0x8] sm:$0xf]
  %v1313 = vld [vmem:[%s1309 + $0xc] sm:$0xf]
  %v1314 = vcombine.low %v952, %v1304
  %v1316 = vunpack.c.l.s4 1983009808
  %v1317 = vunpack.c.0.s8 %v1316
  %v1318 = vlaneseq
  %v1319 = vshrl.u32 %v1318, 7
  %v1320 = vsub.s32 %v1317, %v1319
  %v1321 = vrot.slane %v1314, %v1320
  %v1322 = vcombine.low %v593, %v1321
  %v1323 = vcombine.low %v956, %v1308
  %v1325 = vunpack.c.l.s4 1983009808
  %v1326 = vunpack.c.0.s8 %v1325
  %v1327 = vlaneseq
  %v1328 = vshrl.u32 %v1327, 7
  %v1329 = vsub.s32 %v1326, %v1328
  %v1330 = vrot.slane %v1323, %v1329
  %v1331 = vcombine.low %v610, %v1330
  %v1336 = vunpack.c.l.b16 %v1310
  %v1337 = vunpack.c.l.b16 %v1311
  %v1338 = vunpack.c.l.b16 %v1312
  %v1339 = vunpack.c.l.b16 %v1313
  %v1340 = vpack.c.b16 %v1337, %v1336
  %v1341 = vpack.c.b16 %v1339, %v1338
  %v1345 = vsel %vm377, %v1322, 0
  %v1348 = vsel %vm377, %v1331, 0
  %1350 = vmatprep.subr.bf16.mxu0 0
  %1351 = vmatpush1.bf16.msra.mxu0 %v1340
  %1352 = vmatprep.subr.bf16.mxu0 0
  %1353 = vmatpush1.bf16.msra.mxu0 %v1341
  %1354 = vmatprep.subr.bf16.mxu0 0
  %1355 = vmatpush1.bf16.msra.mxu0 0
  %1356 = vmatprep.subr.bf16.mxu0 0
  %1357 = vmatpush1.bf16.msra.mxu0 0
  %1358 = vmatprep.subr.bf16.mxu0 0
  %1359 = vmatpush1.bf16.msra.mxu0 0
  %1360 = vmatprep.subr.bf16.mxu0 0
  %1361 = vmatpush1.bf16.msra.mxu0 0
  %1362 = vmatprep.subr.bf16.mxu0 0
  %1363 = vmatpush1.bf16.msra.mxu0 0
  %1364 = vmatprep.subr.bf16.mxu0 0
  %1365 = vmatpush1.bf16.msra.mxu0 0
  %1366 = vmatprep.subr.bf16.mxu0 0
  %1367 = vmatpush1.bf16.msra.mxu0 0
  %1368 = vmatprep.subr.bf16.mxu0 0
  %1369 = vmatpush1.bf16.msra.mxu0 0
  %1370 = vmatprep.subr.bf16.mxu0 0
  %1371 = vmatpush1.bf16.msra.mxu0 0
  %1372 = vmatprep.subr.bf16.mxu0 0
  %1373 = vmatpush1.bf16.msra.mxu0 0
  %1374 = vmatprep.subr.bf16.mxu0 0
  %1375 = vmatpush1.bf16.msra.mxu0 0
  %1376 = vmatprep.subr.bf16.mxu0 0
  %1377 = vmatpush1.bf16.msra.mxu0 0
  %1378 = vmatprep.subr.bf16.mxu0 0
  %1379 = vmatpush1.bf16.msra.mxu0 0
  %1380 = vmatprep.subr.bf16.mxu0 0
  %1381 = vmatpush1.bf16.msra.mxu0 0
  %1382 = vmatprep.mubr.bf16.mxu0 0
  %1383 = vmatmul.mubr.bf16.gmra.mrb[0].mxu0 %v1345
  %v1384 = vpop.f32.mrb[0].mxu0
  %v1385 = vadd.f32 0.0, %v1384
  %v1386 = vpop.f32.mrb[0].mxu0
  %v1387 = vpop.f32.mrb[0].mxu0
  %v1388 = vadd.f32 0.0, %v1387
  %v1389 = vpop.f32.mrb[0].mxu0
  %1390 = vmatprep.mubr.bf16.mxu0 0
  %1391 = vmatmul.mubr.bf16.gmra.mrb[0].mxu0 %v1348
  %v1392 = vpop.f32.mrb[0].mxu0
  %v1393 = vadd.f32 0.0, %v1392
  %v1394 = vpop.f32.mrb[0].mxu0
  %v1395 = vpop.f32.mrb[0].mxu0
  %v1396 = vadd.f32 0.0, %v1395
  %v1397 = vpop.f32.mrb[0].mxu0
  %1398 = vdwg.mxu0
  %v1399 = vadd.f32 %v1297, %v1385
  %v1400 = vadd.f32 %v1298, %v1388
  %v1401 = vadd.f32 %v1299, %v1393
  %v1402 = vadd.f32 %v1300, %v1396
  %v1403 = vld [vmem:[%s2] sm:$0x1]
  %v1405 = vlaneseq
  %v1406 = vshrl.u32 %v1405, 7
  %v1407 = vsub.s32 0, %v1406
  %v1408 = vrot.slane %v1403, %v1407
  %v1410 = vadd.f32 %v1399, %v1408
  %v1411 = vadd.f32 %v1400, %v1408
  %v1412 = vadd.f32 %v1401, %v1408
  %v1413 = vadd.f32 %v1402, %v1408
  %v1414 = vmax.f32 %v1410, 0.0
  %v1415 = vmax.f32 %v1411, 0.0
  %v1416 = vmax.f32 %v1412, 0.0
  %v1417 = vmax.f32 %v1413, 0.0
  %v1422 = vcombine.high %v1414, %v1414
  %v1423 = vcombine.high %v1415, %v1415
  %v1424 = vcombine.high %v1416, %v1416
  %v1425 = vcombine.high %v1417, %v1417
  %v1430 = vpack.c.bf16 %v1414, %v1414
  %v1431 = vpack.c.bf16 %v1422, %v1422
  %v1432 = vpack.c.bf16 %v1415, %v1415
  %v1433 = vpack.c.bf16 %v1423, %v1423
  %v1434 = vpack.c.bf16 %v1416, %v1416
  %v1435 = vpack.c.bf16 %v1424, %v1424
  %v1436 = vpack.c.bf16 %v1417, %v1417
  %v1437 = vpack.c.bf16 %v1425, %v1425
  %vm1438 = vcmask 254976
  %1439 = vst.msk [vmem:[%s5] sm:$0x3] %vm1438, %v1430
  %1440 = vst.msk [vmem:[%s5 + $0x2] sm:$0x3] %vm1438, %v1431
  %1441 = vst.msk [vmem:[%s5 + $0x4] sm:$0x3] %vm1438, %v1432
  %1442 = vst.msk [vmem:[%s5 + $0x6] sm:$0x3] %vm1438, %v1433
  %1443 = vst.msk [vmem:[%s5 + $0x8] sm:$0x3] %vm1438, %v1434
  %1444 = vst.msk [vmem:[%s5 + $0xa] sm:$0x3] %vm1438, %v1435
  %1445 = vst.msk [vmem:[%s5 + $0xc] sm:$0x3] %vm1438, %v1436
  %1446 = vst.msk [vmem:[%s5 + $0xe] sm:$0x3] %vm1438, %v1437
  // Predicated region
  $region22: #{encoder_forward.10} parent=0 // pred_check
    _
  $region23: #{encoder_forward.10} parent=0 // pred_check_branch
    %1448 = sbr.rel (0) target = $region25
  $region24: #{encoder_forward.10} parent=0 // pred_region
    _
  $region25: #{encoder_forward.10} parent=0 // pred_fallthru
    _
  // Predicated region
  $region26: #{encoder_forward.10} parent=0 // pred_check
    _
  $region27: #{encoder_forward.10} parent=0 // pred_check_branch
    %1450 = sbr.rel (0) target = $region29
  $region28: #{encoder_forward.10} parent=0 // pred_region
    _
  $region29: #{encoder_forward.10} parent=0 // pred_fallthru
    _

// kernel: encoder_forward.13
$region0: #{encoder_forward.13}
  #allocation0 [shape = 'u32[]', space=smem, size = 0x4, offset = 0x4, fixed_abs, tag = 'smem constant byte address 0x4 - core index']
  #allocation1 [shape = 'u32[144,128]{1,0:T(1,128)}', space=vmem, size = 0x12000, scoped, tag = 'internal scratch']
  %s0 = inlined_call_operand.vmem [shape: bf16[2,4,4,32], index: 0, kind: input, shape index: {}]
  %s1 = inlined_call_operand.vmem [shape: bf16[1,32,32], index: 1, kind: input, shape index: {}]
  %s2 = inlined_call_operand.vmem [shape: f32[1,32], index: 2, kind: input, shape index: {}]
  %s3 = inlined_call_operand.vmem [shape: bf16[2,4,4,32], index: 3, kind: input, shape index: {}]
  %s4 = inlined_call_operand.vmem [shape: bf16[2,4,4,32], index: 4, kind: output, shape index: {}]
  %s5 = sld [smem:[#allocation0]]
  $region26: #{encoder_forward.13} parent=0
    _
  %s7 = ssub.s32 1, %s5
  %s8 = scalar_select 0, %s7, %s5
  // Predicated region
  $region2: #{encoder_forward.13} parent=0 // pred_check
    _
  $region3: #{encoder_forward.13} parent=0 // pred_check_branch
    %10 = sbr.rel (0) target = $region5
  $region4: #{encoder_forward.13} parent=0 // pred_region
    _
  $region5: #{encoder_forward.13} parent=0 // pred_fallthru
    _
  // Predicated region
  $region6: #{encoder_forward.13} parent=0 // pred_check
    _
  $region7: #{encoder_forward.13} parent=0 // pred_check_branch
    %12 = sbr.rel (0) target = $region9
  $region8: #{encoder_forward.13} parent=0 // pred_region
    _
  $region9: #{encoder_forward.13} parent=0 // pred_fallthru
    _
  // Predicated region
  $region10: #{encoder_forward.13} parent=0 // pred_check
    _
  $region11: #{encoder_forward.13} parent=0 // pred_check_branch
    %14 = sbr.rel (0) target = $region13
  $region12: #{encoder_forward.13} parent=0 // pred_region
    _
  $region13: #{encoder_forward.13} parent=0 // pred_fallthru
    _
  // Predicated region
  $region14: #{encoder_forward.13} parent=0 // pred_check
    _
  $region15: #{encoder_forward.13} parent=0 // pred_check_branch
    %16 = sbr.rel (0) target = $region17
  $region16: #{encoder_forward.13} parent=0 // pred_region
    _
  $region17: #{encoder_forward.13} parent=0 // pred_fallthru
    _
  %v18 = vld [vmem:[%s0] sm:$0x3]
  %v19 = vld [vmem:[%s0 + $0x2] sm:$0x3]
  %v20 = vld [vmem:[%s0 + $0x4] sm:$0x3]
  %v21 = vld [vmem:[%s0 + $0x6] sm:$0x3]
  %v22 = vld [vmem:[%s0 + $0x8] sm:$0x3]
  %v23 = vld [vmem:[%s0 + $0xa] sm:$0x3]
  %v24 = vld [vmem:[%s0 + $0xc] sm:$0x3]
  %v25 = vld [vmem:[%s0 + $0xe] sm:$0x3]
  %v26 = vld [vmem:[%s1] sm:$0xf]
  %v27 = vld [vmem:[%s1 + $0x4] sm:$0xf]
  %v28 = vld [vmem:[%s1 + $0x8] sm:$0xf]
  %v29 = vld [vmem:[%s1 + $0xc] sm:$0xf]
  %v30 = vld [vmem:[%s2] sm:$0x1]
  %v32 = vlaneseq
  %v33 = vshrl.u32 %v32, 7
  %v34 = vsub.s32 0, %v33
  %v35 = vrot.slane %v30, %v34
  %v45 = vcombine.low %v18, %v19
  %v46 = vcombine.low %v20, %v21
  %v48 = vunpack.c.l.s4 1983009808
  %v49 = vunpack.c.0.s8 %v48
  %v50 = vlaneseq
  %v51 = vshrl.u32 %v50, 7
  %v52 = vsub.s32 %v49, %v51
  %v53 = vrot.slane %v45, %v52
  %v55 = vunpack.c.l.s4 1983009808
  %v56 = vunpack.c.0.s8 %v55
  %v57 = vlaneseq
  %v58 = vshrl.u32 %v57, 7
  %v59 = vsub.s32 %v56, %v58
  %v60 = vrot.slane %v46, %v59
  %v61 = vcombine.low %v53, %v60
  %v62 = vcombine.low %v22, %v23
  %v63 = vcombine.low %v24, %v25
  %v65 = vunpack.c.l.s4 1983009808
  %v66 = vunpack.c.0.s8 %v65
  %v67 = vlaneseq
  %v68 = vshrl.u32 %v67, 7
  %v69 = vsub.s32 %v66, %v68
  %v70 = vrot.slane %v62, %v69
  %v72 = vunpack.c.l.s4 1983009808
  %v73 = vunpack.c.0.s8 %v72
  %v74 = vlaneseq
  %v75 = vshrl.u32 %v74, 7
  %v76 = vsub.s32 %v73, %v75
  %v77 = vrot.slane %v63, %v76
  %v78 = vcombine.low %v70, %v77
  %v83 = vunpack.c.l.b16 %v26
  %v84 = vunpack.c.l.b16 %v27
  %v85 = vunpack.c.l.b16 %v28
  %v86 = vunpack.c.l.b16 %v29
  %v87 = vpack.c.b16 %v84, %v83
  %v88 = vpack.c.b16 %v86, %v85
  %vm91 = vcmask 261120
  %v93 = vsel %vm91, %v61, 0
  %v96 = vsel %vm91, %v78, 0
  %98 = vmatprep.subr.bf16.mxu0 0
  %99 = vmatpush1.bf16.msra.mxu0 %v87
  %100 = vmatprep.subr.bf16.mxu0 0
  %101 = vmatpush1.bf16.msra.mxu0 %v88
  %102 = vmatprep.subr.bf16.mxu0 0
  %103 = vmatpush1.bf16.msra.mxu0 0
  %104 = vmatprep.subr.bf16.mxu0 0
  %105 = vmatpush1.bf16.msra.mxu0 0
  %106 = vmatprep.subr.bf16.mxu0 0
  %107 = vmatpush1.bf16.msra.mxu0 0
  %108 = vmatprep.subr.bf16.mxu0 0
  %109 = vmatpush1.bf16.msra.mxu0 0
  %110 = vmatprep.subr.bf16.mxu0 0
  %111 = vmatpush1.bf16.msra.mxu0 0
  %112 = vmatprep.subr.bf16.mxu0 0
  %113 = vmatpush1.bf16.msra.mxu0 0
  %114 = vmatprep.subr.bf16.mxu0 0
  %115 = vmatpush1.bf16.msra.mxu0 0
  %116 = vmatprep.subr.bf16.mxu0 0
  %117 = vmatpush1.bf16.msra.mxu0 0
  %118 = vmatprep.subr.bf16.mxu0 0
  %119 = vmatpush1.bf16.msra.mxu0 0
  %120 = vmatprep.subr.bf16.mxu0 0
  %121 = vmatpush1.bf16.msra.mxu0 0
  %122 = vmatprep.subr.bf16.mxu0 0
  %123 = vmatpush1.bf16.msra.mxu0 0
  %124 = vmatprep.subr.bf16.mxu0 0
  %125 = vmatpush1.bf16.msra.mxu0 0
  %126 = vmatprep.subr.bf16.mxu0 0
  %127 = vmatpush1.bf16.msra.mxu0 0
  %128 = vmatprep.subr.bf16.mxu0 0
  %129 = vmatpush1.bf16.msra.mxu0 0
  %130 = vmatprep.mubr.bf16.mxu0 0
  %131 = vmatmul.mubr.bf16.gmra.mrb[0].mxu0 %v93
  %v132 = vpop.f32.mrb[0].mxu0
  %v133 = vadd.f32 %v35, %v132
  %v134 = vpop.f32.mrb[0].mxu0
  %v135 = vpop.f32.mrb[0].mxu0
  %v136 = vadd.f32 %v35, %v135
  %v137 = vpop.f32.mrb[0].mxu0
  %138 = vmatprep.mubr.bf16.mxu0 0
  %139 = vmatmul.mubr.bf16.gmra.mrb[0].mxu0 %v96
  %v140 = vpop.f32.mrb[0].mxu0
  %v141 = vadd.f32 %v35, %v140
  %v142 = vpop.f32.mrb[0].mxu0
  %v143 = vpop.f32.mrb[0].mxu0
  %v144 = vadd.f32 %v35, %v143
  %v145 = vpop.f32.mrb[0].mxu0
  %146 = vdwg.mxu0
  %v147 = vld [vmem:[%s3] sm:$0x3]
  %v148 = vld [vmem:[%s3 + $0x2] sm:$0x3]
  %v149 = vld [vmem:[%s3 + $0x4] sm:$0x3]
  %v150 = vld [vmem:[%s3 + $0x6] sm:$0x3]
  %v151 = vld [vmem:[%s3 + $0x8] sm:$0x3]
  %v152 = vld [vmem:[%s3 + $0xa] sm:$0x3]
  %v153 = vld [vmem:[%s3 + $0xc] sm:$0x3]
  %v154 = vld [vmem:[%s3 + $0xe] sm:$0x3]
  %v155 = vunpack.c.l.bf16 %v147
  %v156 = vunpack.c.l.bf16 %v148
  %v157 = vunpack.c.l.bf16 %v149
  %v158 = vunpack.c.l.bf16 %v150
  %v159 = vunpack.c.l.bf16 %v151
  %v160 = vunpack.c.l.bf16 %v152
  %v161 = vunpack.c.l.bf16 %v153
  %v162 = vunpack.c.l.bf16 %v154
  %v171 = vcombine.low %v155, %v156
  %v172 = vcombine.low %v157, %v158
  %v173 = vcombine.low %v159, %v160
  %v174 = vcombine.low %v161, %v162
  %v179 = vadd.f32 %v133, %v171
  %v180 = vadd.f32 %v136, %v172
  %v181 = vadd.f32 %v141, %v173
  %v182 = vadd.f32 %v144, %v174
  %v183 = vtanh.pop %v179
  %v184 = vtanh.pop %v180
  %v185 = vtanh.pop %v181
  %v186 = vtanh.pop %v182
  %v191 = vcombine.high %v183, %v183
  %v192 = vcombine.high %v184, %v184
  %v193 = vcombine.high %v185, %v185
  %v194 = vcombine.high %v186, %v186
  %v199 = vpack.c.bf16 %v183, %v183
  %v200 = vpack.c.bf16 %v191, %v191
  %v201 = vpack.c.bf16 %v184, %v184
  %v202 = vpack.c.bf16 %v192, %v192
  %v203 = vpack.c.bf16 %v185, %v185
  %v204 = vpack.c.bf16 %v193, %v193
  %v205 = vpack.c.bf16 %v186, %v186
  %v206 = vpack.c.bf16 %v194, %v194
  %vm207 = vcmask 254976
  %208 = vst.msk [vmem:[%s4] sm:$0x3] %vm207, %v199
  %209 = vst.msk [vmem:[%s4 + $0x2] sm:$0x3] %vm207, %v200
  %210 = vst.msk [vmem:[%s4 + $0x4] sm:$0x3] %vm207, %v201
  %211 = vst.msk [vmem:[%s4 + $0x6] sm:$0x3] %vm207, %v202
  %212 = vst.msk [vmem:[%s4 + $0x8] sm:$0x3] %vm207, %v203
  %213 = vst.msk [vmem:[%s4 + $0xa] sm:$0x3] %vm207, %v204
  %214 = vst.msk [vmem:[%s4 + $0xc] sm:$0x3] %vm207, %v205
  %215 = vst.msk [vmem:[%s4 + $0xe] sm:$0x3] %vm207, %v206
  // Predicated region
  $region18: #{encoder_forward.13} parent=0 // pred_check
    _
  $region19: #{encoder_forward.13} parent=0 // pred_check_branch
    %217 = sbr.rel (0) target = $region21
  $region20: #{encoder_forward.13} parent=0 // pred_region
    _
  $region21: #{encoder_forward.13} parent=0 // pred_fallthru
    _
  // Predicated region
  $region22: #{encoder_forward.13} parent=0 // pred_check
    _
  $region23: #{encoder_forward.13} parent=0 // pred_check_branch
    %219 = sbr.rel (0) target = $region25
  $region24: #{encoder_forward.13} parent=0 // pred_region
    _
  $region25: #{encoder_forward.13} parent=0 // pred_fallthru
    _

// kernel: encoder_forward.9
$region0: #{encoder_forward.9}
  #allocation0 [shape = 'u32[]', space=smem, size = 0x4, offset = 0x4, fixed_abs, tag = 'smem constant byte address 0x4 - core index']
  #allocation1 [shape = 'u32[144,128]{1,0:T(1,128)}', space=vmem, size = 0x12000, scoped, tag = 'internal scratch']
  %s0 = inlined_call_operand.vmem [shape: bf16[2,6,6,32], index: 0, kind: input, shape index: {}]
  %s1 = inlined_call_operand.vmem [shape: bf16[9,32,32], index: 1, kind: input, shape index: {}]
  %s2 = inlined_call_operand.vmem [shape: f32[1,32], index: 2, kind: input, shape index: {}]
  %s3 = inlined_call_operand.vmem [shape: f32[1,32], index: 3, kind: input, shape index: {}]
  %s4 = inlined_call_operand.vmem [shape: f32[1,32], index: 4, kind: input, shape index: {}]
  %s5 = inlined_call_operand.vmem [shape: bf16[2,4,4,32], index: 5, kind: output, shape index: {0}]
  %s6 = inlined_call_operand.vmem [shape: f32[1,1,32], index: 6, kind: output, shape index: {1}]
  %s7 = inlined_call_operand.vmem [shape: f32[1,1,32], index: 7, kind: output, shape index: {2}]
  %8 = xla_tuple %s5, %s6, %s7
  %s9 = sld [smem:[#allocation0]]
  $region46: #{encoder_forward.9} parent=0
    _
  %s11 = ssub.s32 1, %s9
  %s12 = scalar_select 0, %s11, %s9
  // Predicated region
  $region2: #{encoder_forward.9} parent=0 // pred_check
    _
  $region3: #{encoder_forward.9} parent=0 // pred_check_branch
    %14 = sbr.rel (0) target = $region5
  $region4: #{encoder_forward.9} parent=0 // pred_region
    _
  $region5: #{encoder_forward.9} parent=0 // pred_fallthru
    _
  // Predicated region
  $region6: #{encoder_forward.9} parent=0 // pred_check
    _
  $region7: #{encoder_forward.9} parent=0 // pred_check_branch
    %16 = sbr.rel (0) target = $region9
  $region8: #{encoder_forward.9} parent=0 // pred_region
    _
  $region9: #{encoder_forward.9} parent=0 // pred_fallthru
    _
  // Predicated region
  $region10: #{encoder_forward.9} parent=0 // pred_check
    _
  $region11: #{encoder_forward.9} parent=0 // pred_check_branch
    %18 = sbr.rel (0) target = $region13
  $region12: #{encoder_forward.9} parent=0 // pred_region
    _
  $region13: #{encoder_forward.9} parent=0 // pred_fallthru
    _
  // Predicated region
  $region14: #{encoder_forward.9} parent=0 // pred_check
    _
  $region15: #{encoder_forward.9} parent=0 // pred_check_branch
    %20 = sbr.rel (0) target = $region17
  $region16: #{encoder_forward.9} parent=0 // pred_region
    _
  $region17: #{encoder_forward.9} parent=0 // pred_fallthru
    _
  // Predicated region
  $region18: #{encoder_forward.9} parent=0 // pred_check
    _
  $region19: #{encoder_forward.9} parent=0 // pred_check_branch
    %22 = sbr.rel (0) target = $region21
  $region20: #{encoder_forward.9} parent=0 // pred_region
    _
  $region21: #{encoder_forward.9} parent=0 // pred_fallthru
    _
  %v24 = vld [vmem:[%s0] sm:$0x7]
  %v25 = vld [vmem:[%s0 + $0x4] sm:$0x7]
  %v26 = vld [vmem:[%s0 + $0x8] sm:$0x7]
  %v27 = vld [vmem:[%s0 + $0xc] sm:$0x7]
  %v28 = vld [vmem:[%s0 + $0x10] sm:$0x7]
  %v29 = vld [vmem:[%s0 + $0x14] sm:$0x7]
  %v30 = vld [vmem:[%s0 + $0x18] sm:$0x7]
  %v31 = vld [vmem:[%s0 + $0x1c] sm:$0x7]
  %v32 = vld [vmem:[%s0 + $0x20] sm:$0x7]
  %v33 = vld [vmem:[%s0 + $0x24] sm:$0x7]
  %v34 = vld [vmem:[%s0 + $0x28] sm:$0x7]
  %v35 = vld [vmem:[%s0 + $0x2c] sm:$0x7]
  %v36 = vunpack.c.l.bf16 %v24
  %v37 = vunpack.c.l.bf16 %v25
  %v38 = vunpack.c.l.bf16 %v26
  %v39 = vunpack.c.l.bf16 %v27
  %v40 = vunpack.c.l.bf16 %v28
  %v41 = vunpack.c.l.bf16 %v29
  %v42 = vunpack.c.l.bf16 %v30
  %v43 = vunpack.c.l.bf16 %v31
  %v44 = vunpack.c.l.bf16 %v32
  %v45 = vunpack.c.l.bf16 %v33
  %v46 = vunpack.c.l.bf16 %v34
  %v47 = vunpack.c.l.bf16 %v35
  %v48 = vld [vmem:[%s3] sm:$0x1]
  %v50 = vlaneseq
  %v51 = vshrl.u32 %v50, 7
  %v52 = vsub.s32 0, %v51
  %v53 = vrot.slane %v48, %v52
  %v55 = vmul.f32 %v36, %v53
  %v56 = vmul.f32 %v37, %v53
  %v57 = vmul.f32 %v38, %v53
  %v58 = vmul.f32 %v39, %v53
  %v59 = vmul.f32 %v40, %v53
  %v60 = vmul.f32 %v41, %v53
  %v61 = vmul.f32 %v42, %v53
  %v62 = vmul.f32 %v43, %v53
  %v63 = vmul.f32 %v44, %v53
  %v64 = vmul.f32 %v45, %v53
  %v65 = vmul.f32 %v46, %v53
  %v66 = vmul.f32 %v47, %v53
  %v67 = vld [vmem:[%s4] sm:$0x1]
  %v69 = vlaneseq
  %v70 = vshrl.u32 %v69, 7
  %v71 = vsub.s32 0, %v70
  %v72 = vrot.slane %v67, %v71
  %v74 = vadd.f32 %v55, %v72
  %v75 = vadd.f32 %v56, %v72
  %v76 = vadd.f32 %v57, %v72
  %v77 = vadd.f32 %v58, %v72
  %v78 = vadd.f32 %v59, %v72
  %v79 = vadd.f32 %v60, %v72
  %v80 = vadd.f32 %v61, %v72
  %v81 = vadd.f32 %v62, %v72
  %v82 = vadd.f32 %v63, %v72
  %v83 = vadd.f32 %v64, %v72
  %v84 = vadd.f32 %v65, %v72
  %v85 = vadd.f32 %v66, %v72
  %v86 = vtanh.pop %v74
  %v87 = vtanh.pop %v75
  %v88 = vtanh.pop %v76
  %v89 = vtanh.pop %v77
  %v90 = vtanh.pop %v78
  %v91 = vtanh.pop %v79
  %v92 = vtanh.pop %v80
  %v93 = vtanh.pop %v81
  %v94 = vtanh.pop %v82
  %v95 = vtanh.pop %v83
  %v96 = vtanh.pop %v84
  %v97 = vtanh.pop %v85
  %v98 = vlaneseq
  %v99 = vshrl.u32 %v98, 7
  %vm100 = vcmp.ge.s32.totalorder %v99, 1
  %vm101 = vmand 0, %vm100
  %vm102 = vmand 1, %vm100
  %vm103 = vcmp.lt.s32.totalorder %v99, 5
  %vm104 = vmand %vm101, %vm103
  %vm105 = vmand %vm102, %vm103
  %v106 = vsel %vm104, 1, 0
  %v107 = vsel %vm105, 1, 0
  %vm108 = vcmp.eq.s32.totalorder %v106, 1
  %vm109 = vcmp.eq.s32.totalorder %v107, 1
  %v110 = vsel %vm108, %v86, 0.0
  %v111 = vsel %vm109, %v87, 0.0
  %v112 = vsel %vm109, %v88, 0.0
  %v113 = vsel %vm109, %v89, 0.0
  %v114 = vsel %vm109, %v90, 0.0
  %v115 = vsel %vm108, %v91, 0.0
  %v116 = vsel %vm108, %v92, 0.0
  %v117 = vsel %vm109, %v93, 0.0
  %v118 = vsel %vm109, %v94, 0.0
  %v119 = vsel %vm109, %v95, 0.0
  %v120 = vsel %vm109, %v96, 0.0
  %v121 = vsel %vm108, %v97, 0.0
  %v122 = vpack.c.bf16 %v110, %v110
  %v123 = vpack.c.bf16 %v111, %v111
  %v124 = vpack.c.bf16 %v112, %v112
  %v125 = vpack.c.bf16 %v113, %v113
  %v126 = vpack.c.bf16 %v114, %v114
  %v127 = vpack.c.bf16 %v115, %v115
  %v128 = vpack.c.bf16 %v116, %v116
  %v129 = vpack.c.bf16 %v117, %v117
  %v130 = vpack.c.bf16 %v118, %v118
  %v131 = vpack.c.bf16 %v119, %v119
  %v132 = vpack.c.bf16 %v120, %v120
  %v133 = vpack.c.bf16 %v121, %v121
  %v134 = vld [vmem:[%s1] sm:$0xf]
  %v135 = vld [vmem:[%s1 + $0x4] sm:$0xf]
  %v136 = vld [vmem:[%s1 + $0x8] sm:$0xf]
  %v137 = vld [vmem:[%s1 + $0xc] sm:$0xf]
  %v147 = vunpack.c.l.s4 1983009808
  %v148 = vunpack.c.0.s8 %v147
  %v149 = vlaneseq
  %v150 = vshrl.u32 %v149, 7
  %v151 = vsub.s32 %v148, %v150
  %v152 = vrot.slane %v122, %v151
  %v153 = vcombine.high %v152, %v152
  %v155 = vunpack.c.l.s4 1983009808
  %v156 = vunpack.c.0.s8 %v155
  %v157 = vlaneseq
  %v158 = vshrl.u32 %v157, 7
  %v159 = vsub.s32 %v156, %v158
  %v160 = vrot.slane %v123, %v159
  %v161 = vcombine.high %v160, %v160
  %v163 = vunpack.c.l.s4 1983009808
  %v164 = vunpack.c.0.s8 %v163
  %v165 = vlaneseq
  %v166 = vshrl.u32 %v165, 7
  %v167 = vsub.s32 %v164, %v166
  %v168 = vrot.slane %v124, %v167
  %v169 = vcombine.high %v168, %v168
  %v171 = vunpack.c.l.s4 1983009808
  %v172 = vunpack.c.0.s8 %v171
  %v173 = vlaneseq
  %v174 = vshrl.u32 %v173, 7
  %v175 = vsub.s32 %v172, %v174
  %v176 = vrot.slane %v125, %v175
  %v177 = vcombine.high %v176, %v176
  %v179 = vunpack.c.l.s4 1983009808
  %v180 = vunpack.c.0.s8 %v179
  %v181 = vlaneseq
  %v182 = vshrl.u32 %v181, 7
  %v183 = vsub.s32 %v180, %v182
  %v184 = vrot.slane %v128, %v183
  %v185 = vcombine.high %v184, %v184
  %v187 = vunpack.c.l.s4 1983009808
  %v188 = vunpack.c.0.s8 %v187
  %v189 = vlaneseq
  %v190 = vshrl.u32 %v189, 7
  %v191 = vsub.s32 %v188, %v190
  %v192 = vrot.slane %v129, %v191
  %v193 = vcombine.high %v192, %v192
  %v195 = vunpack.c.l.s4 1983009808
  %v196 = vunpack.c.0.s8 %v195
  %v197 = vlaneseq
  %v198 = vshrl.u32 %v197, 7
  %v199 = vsub.s32 %v196, %v198
  %v200 = vrot.slane %v130, %v199
  %v201 = vcombine.high %v200, %v200
  %v203 = vunpack.c.l.s4 1983009808
  %v204 = vunpack.c.0.s8 %v203
  %v205 = vlaneseq
  %v206 = vshrl.u32 %v205, 7
  %v207 = vsub.s32 %v204, %v206
  %v208 = vrot.slane %v131, %v207
  %v209 = vcombine.high %v208, %v208
  %vm210 = vsmask.f32 1280
  %vm211 = vsmask.f32 3336
  %vm212 = vmor %vm210, %vm211
  %vm213 = vsmask.f32 5392
  %vm214 = vmor %vm212, %vm213
  %vm215 = vsmask.f32 7448
  %vm216 = vmor %vm214, %vm215
  %v218 = vshrl.u32 %v152, 16
  %v220 = vrot.slane %v218, 6
  %v221 = vshll.u32 %v152, 16
  %v223 = vrot.slane %v221, 7
  %v224 = vor.u32 %v220, %v223
  %v225 = vrot.slane %v224, 2
  %v227 = vshll.u32 %v153, 16
  %v229 = vrot.slane %v227, 7
  %v230 = vsel %vm216, %v225, %v229
  %v232 = vshrl.u32 %v160, 16
  %v234 = vrot.slane %v232, 6
  %v235 = vshll.u32 %v160, 16
  %v237 = vrot.slane %v235, 7
  %v238 = vor.u32 %v234, %v237
  %v239 = vrot.slane %v238, 2
  %v241 = vshll.u32 %v161, 16
  %v243 = vrot.slane %v241, 7
  %v244 = vsel %vm216, %v239, %v243
  %v246 = vshrl.u32 %v168, 16
  %v248 = vrot.slane %v246, 6
  %v249 = vshll.u32 %v168, 16
  %v251 = vrot.slane %v249, 7
  %v252 = vor.u32 %v248, %v251
  %v253 = vrot.slane %v252, 2
  %v255 = vshll.u32 %v169, 16
  %v257 = vrot.slane %v255, 7
  %v258 = vsel %vm216, %v253, %v257
  %v260 = vshrl.u32 %v176, 16
  %v262 = vrot.slane %v260, 6
  %v263 = vshll.u32 %v176, 16
  %v265 = vrot.slane %v263, 7
  %v266 = vor.u32 %v262, %v265
  %v267 = vrot.slane %v266, 2
  %v269 = vshll.u32 %v177, 16
  %v271 = vrot.slane %v269, 7
  %v272 = vsel %vm216, %v267, %v271
  %v274 = vshrl.u32 %v184, 16
  %v276 = vrot.slane %v274, 6
  %v277 = vshll.u32 %v184, 16
  %v279 = vrot.slane %v277, 7
  %v280 = vor.u32 %v276, %v279
  %v281 = vrot.slane %v280, 2
  %v283 = vshll.u32 %v185, 16
  %v285 = vrot.slane %v283, 7
  %v286 = vsel %vm216, %v281, %v285
  %v288 = vshrl.u32 %v192, 16
  %v290 = vrot.slane %v288, 6
  %v291 = vshll.u32 %v192, 16
  %v293 = vrot.slane %v291, 7
  %v294 = vor.u32 %v290, %v293
  %v295 = vrot.slane %v294, 2
  %v297 = vshll.u32 %v193, 16
  %v299 = vrot.slane %v297, 7
  %v300 = vsel %vm216, %v295, %v299
  %v302 = vshrl.u32 %v200, 16
  %v304 = vrot.slane %v302, 6
  %v305 = vshll.u32 %v200, 16
  %v307 = vrot.slane %v305, 7
  %v308 = vor.u32 %v304, %v307
  %v309 = vrot.slane %v308, 2
  %v311 = vshll.u32 %v201, 16
  %v313 = vrot.slane %v311, 7
  %v314 = vsel %vm216, %v309, %v313
  %v316 = vshrl.u32 %v208, 16
  %v318 = vrot.slane %v316, 6
  %v319 = vshll.u32 %v208, 16
  %v321 = vrot.slane %v319, 7
  %v322 = vor.u32 %v318, %v321
  %v323 = vrot.slane %v322, 2
  %v325 = vshll.u32 %v209, 16
  %v327 = vrot.slane %v325, 7
  %v328 = vsel %vm216, %v323, %v327
  %s329 = scalar_lea.vmem %s1, 16
  %v330 = vld [vmem:[%s329] sm:$0xf]
  %v331 = vld [vmem:[%s329 + $0x4] sm:$0xf]
  %v332 = vld [vmem:[%s329 + $0x8] sm:$0xf]
  %v333 = vld [vmem:[%s329 + $0xc] sm:$0xf]
  %v334 = vcombine.low %v230, %v244
  %v335 = vcombine.low %v258, %v272
  %v337 = vunpack.c.l.s4 1983009808
  %v338 = vunpack.c.0.s8 %v337
  %v339 = vlaneseq
  %v340 = vshrl.u32 %v339, 7
  %v341 = vsub.s32 %v338, %v340
  %v342 = vrot.slane %v334, %v341
  %v344 = vunpack.c.l.s4 1983009808
  %v345 = vunpack.c.0.s8 %v344
  %v346 = vlaneseq
  %v347 = vshrl.u32 %v346, 7
  %v348 = vsub.s32 %v345, %v347
  %v349 = vrot.slane %v335, %v348
  %v350 = vcombine.low %v342, %v349
  %v351 = vcombine.low %v286, %v300
  %v352 = vcombine.low %v314, %v328
  %v354 = vunpack.c.l.s4 1983009808
  %v355 = vunpack.c.0.s8 %v354
  %v356 = vlaneseq
  %v357 = vshrl.u32 %v356, 7
  %v358 = vsub.s32 %v355, %v357
  %v359 = vrot.slane %v351, %v358
  %v361 = vunpack.c.l.s4 1983009808
  %v362 = vunpack.c.0.s8 %v361
  %v363 = vlaneseq
  %v364 = vshrl.u32 %v363, 7
  %v365 = vsub.s32 %v362, %v364
  %v366 = vrot.slane %v352, %v365
  %v367 = vcombine.low %v359, %v366
  %v372 = vunpack.c.l.b16 %v330
  %v373 = vunpack.c.l.b16 %v331
  %v374 = vunpack.c.l.b16 %v332
  %v375 = vunpack.c.l.b16 %v333
  %v376 = vpack.c.b16 %v373, %v372
  %v377 = vpack.c.b16 %v375, %v374
  %vm380 = vcmask 261120
  %v382 = vsel %vm380, %v350, 0
  %v385 = vsel %vm380, %v367, 0
  %387 = vmatprep.subr.bf16.mxu0 0
  %388 = vmatpush1.bf16.msra.mxu0 %v376
  %389 = vmatprep.subr.bf16.mxu0 0
  %390 = vmatpush1.bf16.msra.mxu0 %v377
  %391 = vmatprep.subr.bf16.mxu0 0
  %392 = vmatpush1.bf16.msra.mxu0 0
  %393 = vmatprep.subr.bf16.mxu0 0
  %394 = vmatpush1.bf16.msra.mxu0 0
  %395 = vmatprep.subr.bf16.mxu0 0
  %396 = vmatpush1.bf16.msra.mxu0 0
  %397 = vmatprep.subr.bf16.mxu0 0
  %398 = vmatpush1.bf16.msra.mxu0 0
  %399 = vmatprep.subr.bf16.mxu0 0
  %400 = vmatpush1.bf16.msra.mxu0 0
  %401 = vmatprep.subr.bf16.mxu0 0
  %402 = vmatpush1.bf16.msra.mxu0 0
  %403 = vmatprep.subr.bf16.mxu0 0
  %404 = vmatpush1.bf16.msra.mxu0 0
  %405 = vmatprep.subr.bf16.mxu0 0
  %406 = vmatpush1.bf16.msra.mxu0 0
  %407 = vmatprep.subr.bf16.mxu0 0
  %408 = vmatpush1.bf16.msra.mxu0 0
  %409 = vmatprep.subr.bf16.mxu0 0
  %410 = vmatpush1.bf16.msra.mxu0 0
  %411 = vmatprep.subr.bf16.mxu0 0
  %412 = vmatpush1.bf16.msra.mxu0 0
  %413 = vmatprep.subr.bf16.mxu0 0
  %414 = vmatpush1.bf16.msra.mxu0 0
  %415 = vmatprep.subr.bf16.mxu0 0
  %416 = vmatpush1.bf16.msra.mxu0 0
  %417 = vmatprep.subr.bf16.mxu0 0
  %418 = vmatpush1.bf16.msra.mxu0 0
  %419 = vmatprep.mubr.bf16.mxu0 0
  %420 = vmatmul.mubr.bf16.gmra.mrb[0].mxu0 %v382
  %v421 = vpop.f32.mrb[0].mxu0
  %v422 = vadd.f32 0.0, %v421
  %v423 = vpop.f32.mrb[0].mxu0
  %v424 = vpop.f32.mrb[0].mxu0
  %v425 = vadd.f32 0.0, %v424
  %v426 = vpop.f32.mrb[0].mxu0
  %427 = vmatprep.mubr.bf16.mxu0 0
  %428 = vmatmul.mubr.bf16.gmra.mrb[0].mxu0 %v385
  %v429 = vpop.f32.mrb[0].mxu0
  %v430 = vadd.f32 0.0, %v429
  %v431 = vpop.f32.mrb[0].mxu0
  %v432 = vpop.f32.mrb[0].mxu0
  %v433 = vadd.f32 0.0, %v432
  %v434 = vpop.f32.mrb[0].mxu0
  %435 = vdwg.mxu0
  %v436 = vcombine.low %v122, %v123
  %v437 = vcombine.low %v124, %v125
  %v439 = vunpack.c.l.s4 1983009808
  %v440 = vunpack.c.0.s8 %v439
  %v441 = vlaneseq
  %v442 = vshrl.u32 %v441, 7
  %v443 = vsub.s32 %v440, %v442
  %v444 = vrot.slane %v436, %v443
  %v446 = vunpack.c.l.s4 1983009808
  %v447 = vunpack.c.0.s8 %v446
  %v448 = vlaneseq
  %v449 = vshrl.u32 %v448, 7
  %v450 = vsub.s32 %v447, %v449
  %v451 = vrot.slane %v437, %v450
  %v452 = vcombine.low %v444, %v451
  %v453 = vcombine.low %v128, %v129
  %v454 = vcombine.low %v130, %v131
  %v456 = vunpack.c.l.s4 1983009808
  %v457 = vunpack.c.0.s8 %v456
  %v458 = vlaneseq
  %v459 = vshrl.u32 %v458, 7
  %v460 = vsub.s32 %v457, %v459
  %v461 = vrot.slane %v453, %v460
  %v463 = vunpack.c.l.s4 1983009808
  %v464 = vunpack.c.0.s8 %v463
  %v465 = vlaneseq
  %v466 = vshrl.u32 %v465, 7
  %v467 = vsub.s32 %v464, %v466
  %v468 = vrot.slane %v454, %v467
  %v469 = vcombine.low %v461, %v468
  %v474 = vunpack.c.l.b16 %v134
  %v475 = vunpack.c.l.b16 %v135
  %v476 = vunpack.c.l.b16 %v136
  %v477 = vunpack.c.l.b16 %v137
  %v478 = vpack.c.b16 %v475, %v474
  %v479 = vpack.c.b16 %v477, %v476
  %v483 = vsel %vm380, %v452, 0
  %v486 = vsel %vm380, %v469, 0
  %488 = vmatprep.subr.bf16.mxu0 0
  %489 = vmatpush1.bf16.msra.mxu0 %v478
  %490 = vmatprep.subr.bf16.mxu0 0
  %491 = vmatpush1.bf16.msra.mxu0 %v479
  %492 = vmatprep.subr.bf16.mxu0 0
  %493 = vmatpush1.bf16.msra.mxu0 0
  %494 = vmatprep.subr.bf16.mxu0 0
  %495 = vmatpush1.bf16.msra.mxu0 0
  %496 = vmatprep.subr.bf16.mxu0 0
  %497 = vmatpush1.bf16.msra.mxu0 0
  %498 = vmatprep.subr.bf16.mxu0 0
  %499 = vmatpush1.bf16.msra.mxu0 0
  %500 = vmatprep.subr.bf16.mxu0 0
  %501 = vmatpush1.bf16.msra.mxu0 0
  %502 = vmatprep.subr.bf16.mxu0 0
  %503 = vmatpush1.bf16.msra.mxu0 0
  %504 = vmatprep.subr.bf16.mxu0 0
  %505 = vmatpush1.bf16.msra.mxu0 0
  %506 = vmatprep.subr.bf16.mxu0 0
  %507 = vmatpush1.bf16.msra.mxu0 0
  %508 = vmatprep.subr.bf16.mxu0 0
  %509 = vmatpush1.bf16.msra.mxu0 0
  %510 = vmatprep.subr.bf16.mxu0 0
  %511 = vmatpush1.bf16.msra.mxu0 0
  %512 = vmatprep.subr.bf16.mxu0 0
  %513 = vmatpush1.bf16.msra.mxu0 0
  %514 = vmatprep.subr.bf16.mxu0 0
  %515 = vmatpush1.bf16.msra.mxu0 0
  %516 = vmatprep.subr.bf16.mxu0 0
  %517 = vmatpush1.bf16.msra.mxu0 0
  %518 = vmatprep.subr.bf16.mxu0 0
  %519 = vmatpush1.bf16.msra.mxu0 0
  %520 = vmatprep.mubr.bf16.mxu0 0
  %521 = vmatmul.mubr.bf16.gmra.mrb[0].mxu0 %v483
  %v522 = vpop.f32.mrb[0].mxu0
  %v523 = vadd.f32 %v422, %v522
  %v524 = vpop.f32.mrb[0].mxu0
  %v525 = vpop.f32.mrb[0].mxu0
  %v526 = vadd.f32 %v425, %v525
  %v527 = vpop.f32.mrb[0].mxu0
  %528 = vmatprep.mubr.bf16.mxu0 0
  %529 = vmatmul.mubr.bf16.gmra.mrb[0].mxu0 %v486
  %v530 = vpop.f32.mrb[0].mxu0
  %v531 = vadd.f32 %v430, %v530
  %v532 = vpop.f32.mrb[0].mxu0
  %v533 = vpop.f32.mrb[0].mxu0
  %v534 = vadd.f32 %v433, %v533
  %v535 = vpop.f32.mrb[0].mxu0
  %536 = vdwg.mxu0
  %vm537 = vcmask 1040384
  %vm538 = vcmask 1042434
  %vm539 = vmor %vm537, %vm538
  %vm540 = vcmask 1044484
  %vm541 = vmor %vm539, %vm540
  %vm542 = vcmask 1046534
  %vm543 = vmor %vm541, %vm542
  %v544 = vrot.slane %v152, 7
  %v545 = vrot.slane %v544, 2
  %v546 = vrot.slane %v153, 7
  %v547 = vsel %vm543, %v545, %v546
  %v548 = vrot.slane %v160, 7
  %v549 = vrot.slane %v548, 2
  %v550 = vrot.slane %v161, 7
  %v551 = vsel %vm543, %v549, %v550
  %v552 = vrot.slane %v168, 7
  %v553 = vrot.slane %v552, 2
  %v554 = vrot.slane %v169, 7
  %v555 = vsel %vm543, %v553, %v554
  %v556 = vrot.slane %v176, 7
  %v557 = vrot.slane %v556, 2
  %v558 = vrot.slane %v177, 7
  %v559 = vsel %vm543, %v557, %v558
  %v560 = vrot.slane %v184, 7
  %v561 = vrot.slane %v560, 2
  %v562 = vrot.slane %v185, 7
  %v563 = vsel %vm543, %v561, %v562
  %v564 = vrot.slane %v192, 7
  %v565 = vrot.slane %v564, 2
  %v566 = vrot.slane %v193, 7
  %v567 = vsel %vm543, %v565, %v566
  %v568 = vrot.slane %v200, 7
  %v569 = vrot.slane %v568, 2
  %v570 = vrot.slane %v201, 7
  %v571 = vsel %vm543, %v569, %v570
  %v572 = vrot.slane %v208, 7
  %v573 = vrot.slane %v572, 2
  %v574 = vrot.slane %v209, 7
  %v575 = vsel %vm543, %v573, %v574
  %s576 = scalar_lea.vmem %s1, 32
  %v577 = vld [vmem:[%s576] sm:$0xf]
  %v578 = vld [vmem:[%s576 + $0x4] sm:$0xf]
  %v579 = vld [vmem:[%s576 + $0x8] sm:$0xf]
  %v580 = vld [vmem:[%s576 + $0xc] sm:$0xf]
  %v581 = vcombine.low %v547, %v551
  %v582 = vcombine.low %v555, %v559
  %v584 = vunpack.c.l.s4 1983009808
  %v585 = vunpack.c.0.s8 %v584
  %v586 = vlaneseq
  %v587 = vshrl.u32 %v586, 7
  %v588 = vsub.s32 %v585, %v587
  %v589 = vrot.slane %v581, %v588
  %v591 = vunpack.c.l.s4 1983009808
  %v592 = vunpack.c.0.s8 %v591
  %v593 = vlaneseq
  %v594 = vshrl.u32 %v593, 7
  %v595 = vsub.s32 %v592, %v594
  %v596 = vrot.slane %v582, %v595
  %v597 = vcombine.low %v589, %v596
  %v598 = vcombine.low %v563, %v567
  %v599 = vcombine.low %v571, %v575
  %v601 = vunpack.c.l.s4 1983009808
  %v602 = vunpack.c.0.s8 %v601
  %v603 = vlaneseq
  %v604 = vshrl.u32 %v603, 7
  %v605 = vsub.s32 %v602, %v604
  %v606 = vrot.slane %v598, %v605
  %v608 = vunpack.c.l.s4 1983009808
  %v609 = vunpack.c.0.s8 %v608
  %v610 = vlaneseq
  %v611 = vshrl.u32 %v610, 7
  %v612 = vsub.s32 %v609, %v611
  %v613 = vrot.slane %v599, %v612
  %v614 = vcombine.low %v606, %v613
  %v619 = vunpack.c.l.b16 %v577
  %v620 = vunpack.c.l.b16 %v578
  %v621 = vunpack.c.l.b16 %v579
  %v622 = vunpack.c.l.b16 %v580
  %v623 = vpack.c.b16 %v620, %v619
  %v624 = vpack.c.b16 %v622, %v621
  %v628 = vsel %vm380, %v597, 0
  %v631 = vsel %vm380, %v614, 0
  %633 = vmatprep.subr.bf16.mxu0 0
  %634 = vmatpush1.bf16.msra.mxu0 %v623
  %635 = vmatprep.subr.bf16.mxu0 0
  %636 = vmatpush1.bf16.msra.mxu0 %v624
  %637 = vmatprep.subr.bf16.mxu0 0
  %638 = vmatpush1.bf16.msra.mxu0 0
  %639 = vmatprep.subr.bf16.mxu0 0
  %640 = vmatpush1.bf16.msra.mxu0 0
  %641 = vmatprep.subr.bf16.mxu0 0
  %642 = vmatpush1.bf16.msra.mxu0 0
  %643 = vmatprep.subr.bf16.mxu0 0
  %644 = vmatpush1.bf16.msra.mxu0 0
  %645 = vmatprep.subr.bf16.mxu0 0
  %646 = vmatpush1.bf16.msra.mxu0 0
  %647 = vmatprep.subr.bf16.mxu0 0
  %648 = vmatpush1.bf16.msra.mxu0 0
  %649 = vmatprep.subr.bf16.mxu0 0
  %650 = vmatpush1.bf16.msra.mxu0 0
  %651 = vmatprep.subr.bf16.mxu0 0
  %652 = vmatpush1.bf16.msra.mxu0 0
  %653 = vmatprep.subr.bf16.mxu0 0
  %654 = vmatpush1.bf16.msra.mxu0 0
  %655 = vmatprep.subr.bf16.mxu0 0
  %656 = vmatpush1.bf16.msra.mxu0 0
  %657 = vmatprep.subr.bf16.mxu0 0
  %658 = vmatpush1.bf16.msra.mxu0 0
  %659 = vmatprep.subr.bf16.mxu0 0
  %660 = vmatpush1.bf16.msra.mxu0 0
  %661 = vmatprep.subr.bf16.mxu0 0
  %662 = vmatpush1.bf16.msra.mxu0 0
  %663 = vmatprep.subr.bf16.mxu0 0
  %664 = vmatpush1.bf16.msra.mxu0 0
  %665 = vmatprep.mubr.bf16.mxu0 0
  %666 = vmatmul.mubr.bf16.gmra.mrb[0].mxu0 %v628
  %v667 = vpop.f32.mrb[0].mxu0
  %v668 = vadd.f32 0.0, %v667
  %v669 = vpop.f32.mrb[0].mxu0
  %v670 = vpop.f32.mrb[0].mxu0
  %v671 = vadd.f32 0.0, %v670
  %v672 = vpop.f32.mrb[0].mxu0
  %673 = vmatprep.mubr.bf16.mxu0 0
  %674 = vmatmul.mubr.bf16.gmra.mrb[0].mxu0 %v631
  %v675 = vpop.f32.mrb[0].mxu0
  %v676 = vadd.f32 0.0, %v675
  %v677 = vpop.f32.mrb[0].mxu0
  %v678 = vpop.f32.mrb[0].mxu0
  %v679 = vadd.f32 0.0, %v678
  %v680 = vpop.f32.mrb[0].mxu0
  %681 = vdwg.mxu0
  %v682 = vadd.f32 %v523, %v668
  %v683 = vadd.f32 %v526, %v671
  %v684 = vadd.f32 %v531, %v676
  %v685 = vadd.f32 %v534, %v679
  %s686 = scalar_lea.vmem %s1, 48
  %v687 = vld [vmem:[%s686] sm:$0xf]
  %v688 = vld [vmem:[%s686 + $0x4] sm:$0xf]
  %v689 = vld [vmem:[%s686 + $0x8] sm:$0xf]
  %v690 = vld [vmem:[%s686 + $0xc] sm:$0xf]
  %v693 = vcombine.low %v123, %v124
  %v694 = vcombine.low %v125, %v126
  %v696 = vunpack.c.l.s4 1983009808
  %v697 = vunpack.c.0.s8 %v696
  %v698 = vlaneseq
  %v699 = vshrl.u32 %v698, 7
  %v700 = vsub.s32 %v697, %v699
  %v701 = vrot.slane %v693, %v700
  %v703 = vunpack.c.l.s4 1983009808
  %v704 = vunpack.c.0.s8 %v703
  %v705 = vlaneseq
  %v706 = vshrl.u32 %v705, 7
  %v707 = vsub.s32 %v704, %v706
  %v708 = vrot.slane %v694, %v707
  %v709 = vcombine.low %v701, %v708
  %v710 = vcombine.low %v129, %v130
  %v711 = vcombine.low %v131, %v132
  %v713 = vunpack.c.l.s4 1983009808
  %v714 = vunpack.c.0.s8 %v713
  %v715 = vlaneseq
  %v716 = vshrl.u32 %v715, 7
  %v717 = vsub.s32 %v714, %v716
  %v718 = vrot.slane %v710, %v717
  %v720 = vunpack.c.l.s4 1983009808
  %v721 = vunpack.c.0.s8 %v720
  %v722 = vlaneseq
  %v723 = vshrl.u32 %v722, 7
  %v724 = vsub.s32 %v721, %v723
  %v725 = vrot.slane %v711, %v724
  %v726 = vcombine.low %v718, %v725
  %v731 = vunpack.c.l.b16 %v687
  %v732 = vunpack.c.l.b16 %v688
  %v733 = vunpack.c.l.b16 %v689
  %v734 = vunpack.c.l.b16 %v690
  %v735 = vpack.c.b16 %v732, %v731
  %v736 = vpack.c.b16 %v734, %v733
  %v740 = vsel %vm380, %v709, 0
  %v743 = vsel %vm380, %v726, 0
  %745 = vmatprep.subr.bf16.mxu0 0
  %746 = vmatpush1.bf16.msra.mxu0 %v735
  %747 = vmatprep.subr.bf16.mxu0 0
  %748 = vmatpush1.bf16.msra.mxu0 %v736
  %749 = vmatprep.subr.bf16.mxu0 0
  %750 = vmatpush1.bf16.msra.mxu0 0
  %751 = vmatprep.subr.bf16.mxu0 0
  %752 = vmatpush1.bf16.msra.mxu0 0
  %753 = vmatprep.subr.bf16.mxu0 0
  %754 = vmatpush1.bf16.msra.mxu0 0
  %755 = vmatprep.subr.bf16.mxu0 0
  %756 = vmatpush1.bf16.msra.mxu0 0
  %757 = vmatprep.subr.bf16.mxu0 0
  %758 = vmatpush1.bf16.msra.mxu0 0
  %759 = vmatprep.subr.bf16.mxu0 0
  %760 = vmatpush1.bf16.msra.mxu0 0
  %761 = vmatprep.subr.bf16.mxu0 0
  %762 = vmatpush1.bf16.msra.mxu0 0
  %763 = vmatprep.subr.bf16.mxu0 0
  %764 = vmatpush1.bf16.msra.mxu0 0
  %765 = vmatprep.subr.bf16.mxu0 0
  %766 = vmatpush1.bf16.msra.mxu0 0
  %767 = vmatprep.subr.bf16.mxu0 0
  %768 = vmatpush1.bf16.msra.mxu0 0
  %769 = vmatprep.subr.bf16.mxu0 0
  %770 = vmatpush1.bf16.msra.mxu0 0
  %771 = vmatprep.subr.bf16.mxu0 0
  %772 = vmatpush1.bf16.msra.mxu0 0
  %773 = vmatprep.subr.bf16.mxu0 0
  %774 = vmatpush1.bf16.msra.mxu0 0
  %775 = vmatprep.subr.bf16.mxu0 0
  %776 = vmatpush1.bf16.msra.mxu0 0
  %777 = vmatprep.mubr.bf16.mxu0 0
  %778 = vmatmul.mubr.bf16.gmra.mrb[0].mxu0 %v740
  %v779 = vpop.f32.mrb[0].mxu0
  %v780 = vadd.f32 0.0, %v779
  %v781 = vpop.f32.mrb[0].mxu0
  %v782 = vpop.f32.mrb[0].mxu0
  %v783 = vadd.f32 0.0, %v782
  %v784 = vpop.f32.mrb[0].mxu0
  %785 = vmatprep.mubr.bf16.mxu0 0
  %786 = vmatmul.mubr.bf16.gmra.mrb[0].mxu0 %v743
  %v787 = vpop.f32.mrb[0].mxu0
  %v788 = vadd.f32 0.0, %v787
  %v789 = vpop.f32.mrb[0].mxu0
  %v790 = vpop.f32.mrb[0].mxu0
  %v791 = vadd.f32 0.0, %v790
  %v792 = vpop.f32.mrb[0].mxu0
  %793 = vdwg.mxu0
  %v794 = vadd.f32 %v682, %v780
  %v795 = vadd.f32 %v683, %v783
  %v796 = vadd.f32 %v684, %v788
  %v797 = vadd.f32 %v685, %v791
  %v799 = vunpack.c.l.s4 1983009808
  %v800 = vunpack.c.0.s8 %v799
  %v801 = vlaneseq
  %v802 = vshrl.u32 %v801, 7
  %v803 = vsub.s32 %v800, %v802
  %v804 = vrot.slane %v126, %v803
  %v805 = vcombine.high %v804, %v804
  %v807 = vunpack.c.l.s4 1983009808
  %v808 = vunpack.c.0.s8 %v807
  %v809 = vlaneseq
  %v810 = vshrl.u32 %v809, 7
  %v811 = vsub.s32 %v808, %v810
  %v812 = vrot.slane %v132, %v811
  %v813 = vcombine.high %v812, %v812
  %v815 = vshrl.u32 %v804, 16
  %v817 = vrot.slane %v815, 6
  %v818 = vshll.u32 %v804, 16
  %v820 = vrot.slane %v818, 7
  %v821 = vor.u32 %v817, %v820
  %v822 = vrot.slane %v821, 2
  %v824 = vshll.u32 %v805, 16
  %v826 = vrot.slane %v824, 7
  %v827 = vsel %vm216, %v822, %v826
  %v829 = vshrl.u32 %v812, 16
  %v831 = vrot.slane %v829, 6
  %v832 = vshll.u32 %v812, 16
  %v834 = vrot.slane %v832, 7
  %v835 = vor.u32 %v831, %v834
  %v836 = vrot.slane %v835, 2
  %v838 = vshll.u32 %v813, 16
  %v840 = vrot.slane %v838, 7
  %v841 = vsel %vm216, %v836, %v840
  %s842 = scalar_lea.vmem %s1, 64
  %v843 = vld [vmem:[%s842] sm:$0xf]
  %v844 = vld [vmem:[%s842 + $0x4] sm:$0xf]
  %v845 = vld [vmem:[%s842 + $0x8] sm:$0xf]
  %v846 = vld [vmem:[%s842 + $0xc] sm:$0xf]
  %v847 = vcombine.low %v244, %v258
  %v848 = vcombine.low %v272, %v827
  %v850 = vunpack.c.l.s4 1983009808
  %v851 = vunpack.c.0.s8 %v850
  %v852 = vlaneseq
  %v853 = vshrl.u32 %v852, 7
  %v854 = vsub.s32 %v851, %v853
  %v855 = vrot.slane %v847, %v854
  %v857 = vunpack.c.l.s4 1983009808
  %v858 = vunpack.c.0.s8 %v857
  %v859 = vlaneseq
  %v860 = vshrl.u32 %v859, 7
  %v861 = vsub.s32 %v858, %v860
  %v862 = vrot.slane %v848, %v861
  %v863 = vcombine.low %v855, %v862
  %v864 = vcombine.low %v300, %v314
  %v865 = vcombine.low %v328, %v841
  %v867 = vunpack.c.l.s4 1983009808
  %v868 = vunpack.c.0.s8 %v867
  %v869 = vlaneseq
  %v870 = vshrl.u32 %v869, 7
  %v871 = vsub.s32 %v868, %v870
  %v872 = vrot.slane %v864, %v871
  %v874 = vunpack.c.l.s4 1983009808
  %v875 = vunpack.c.0.s8 %v874
  %v876 = vlaneseq
  %v877 = vshrl.u32 %v876, 7
  %v878 = vsub.s32 %v875, %v877
  %v879 = vrot.slane %v865, %v878
  %v880 = vcombine.low %v872, %v879
  %v885 = vunpack.c.l.b16 %v843
  %v886 = vunpack.c.l.b16 %v844
  %v887 = vunpack.c.l.b16 %v845
  %v888 = vunpack.c.l.b16 %v846
  %v889 = vpack.c.b16 %v886, %v885
  %v890 = vpack.c.b16 %v888, %v887
  %v894 = vsel %vm380, %v863, 0
  %v897 = vsel %vm380, %v880, 0
  %899 = vmatprep.subr.bf16.mxu0 0
  %900 = vmatpush1.bf16.msra.mxu0 %v889
  %901 = vmatprep.subr.bf16.mxu0 0
  %902 = vmatpush1.bf16.msra.mxu0 %v890
  %903 = vmatprep.subr.bf16.mxu0 0
  %904 = vmatpush1.bf16.msra.mxu0 0
  %905 = vmatprep.subr.bf16.mxu0 0
  %906 = vmatpush1.bf16.msra.mxu0 0
  %907 = vmatprep.subr.bf16.mxu0 0
  %908 = vmatpush1.bf16.msra.mxu0 0
  %909 = vmatprep.subr.bf16.mxu0 0
  %910 = vmatpush1.bf16.msra.mxu0 0
  %911 = vmatprep.subr.bf16.mxu0 0
  %912 = vmatpush1.bf16.msra.mxu0 0
  %913 = vmatprep.subr.bf16.mxu0 0
  %914 = vmatpush1.bf16.msra.mxu0 0
  %915 = vmatprep.subr.bf16.mxu0 0
  %916 = vmatpush1.bf16.msra.mxu0 0
  %917 = vmatprep.subr.bf16.mxu0 0
  %918 = vmatpush1.bf16.msra.mxu0 0
  %919 = vmatprep.subr.bf16.mxu0 0
  %920 = vmatpush1.bf16.msra.mxu0 0
  %921 = vmatprep.subr.bf16.mxu0 0
  %922 = vmatpush1.bf16.msra.mxu0 0
  %923 = vmatprep.subr.bf16.mxu0 0
  %924 = vmatpush1.bf16.msra.mxu0 0
  %925 = vmatprep.subr.bf16.mxu0 0
  %926 = vmatpush1.bf16.msra.mxu0 0
  %927 = vmatprep.subr.bf16.mxu0 0
  %928 = vmatpush1.bf16.msra.mxu0 0
  %929 = vmatprep.subr.bf16.mxu0 0
  %930 = vmatpush1.bf16.msra.mxu0 0
  %931 = vmatprep.mubr.bf16.mxu0 0
  %932 = vmatmul.mubr.bf16.gmra.mrb[0].mxu0 %v894
  %v933 = vpop.f32.mrb[0].mxu0
  %v934 = vadd.f32 0.0, %v933
  %v935 = vpop.f32.mrb[0].mxu0
  %v936 = vpop.f32.mrb[0].mxu0
  %v937 = vadd.f32 0.0, %v936
  %v938 = vpop.f32.mrb[0].mxu0
  %939 = vmatprep.mubr.bf16.mxu0 0
  %940 = vmatmul.mubr.bf16.gmra.mrb[0].mxu0 %v897
  %v941 = vpop.f32.mrb[0].mxu0
  %v942 = vadd.f32 0.0, %v941
  %v943 = vpop.f32.mrb[0].mxu0
  %v944 = vpop.f32.mrb[0].mxu0
  %v945 = vadd.f32 0.0, %v944
  %v946 = vpop.f32.mrb[0].mxu0
  %947 = vdwg.mxu0
  %v948 = vadd.f32 %v794, %v934
  %v949 = vadd.f32 %v795, %v937
  %v950 = vadd.f32 %v796, %v942
  %v951 = vadd.f32 %v797, %v945
  %v952 = vrot.slane %v804, 7
  %v953 = vrot.slane %v952, 2
  %v954 = vrot.slane %v805, 7
  %v955 = vsel %vm543, %v953, %v954
  %v956 = vrot.slane %v812, 7
  %v957 = vrot.slane %v956, 2
  %v958 = vrot.slane %v813, 7
  %v959 = vsel %vm543, %v957, %v958
  %s960 = scalar_lea.vmem %s1, 80
  %v961 = vld [vmem:[%s960] sm:$0xf]
  %v962 = vld [vmem:[%s960 + $0x4] sm:$0xf]
  %v963 = vld [vmem:[%s960 + $0x8] sm:$0xf]
  %v964 = vld [vmem:[%s960 + $0xc] sm:$0xf]
  %v965 = vcombine.low %v551, %v555
  %v966 = vcombine.low %v559, %v955
  %v968 = vunpack.c.l.s4 1983009808
  %v969 = vunpack.c.0.s8 %v968
  %v970 = vlaneseq
  %v971 = vshrl.u32 %v970, 7
  %v972 = vsub.s32 %v969, %v971
  %v973 = vrot.slane %v965, %v972
  %v975 = vunpack.c.l.s4 1983009808
  %v976 = vunpack.c.0.s8 %v975
  %v977 = vlaneseq
  %v978 = vshrl.u32 %v977, 7
  %v979 = vsub.s32 %v976, %v978
  %v980 = vrot.slane %v966, %v979
  %v981 = vcombine.low %v973, %v980
  %v982 = vcombine.low %v567, %v571
  %v983 = vcombine.low %v575, %v959
  %v985 = vunpack.c.l.s4 1983009808
  %v986 = vunpack.c.0.s8 %v985
  %v987 = vlaneseq
  %v988 = vshrl.u32 %v987, 7
  %v989 = vsub.s32 %v986, %v988
  %v990 = vrot.slane %v982, %v989
  %v992 = vunpack.c.l.s4 1983009808
  %v993 = vunpack.c.0.s8 %v992
  %v994 = vlaneseq
  %v995 = vshrl.u32 %v994, 7
  %v996 = vsub.s32 %v993, %v995
  %v997 = vrot.slane %v983, %v996
  %v998 = vcombine.low %v990, %v997
  %v1003 = vunpack.c.l.b16 %v961
  %v1004 = vunpack.c.l.b16 %v962
  %v1005 = vunpack.c.l.b16 %v963
  %v1006 = vunpack.c.l.b16 %v964
  %v1007 = vpack.c.b16 %v1004, %v1003
  %v1008 = vpack.c.b16 %v1006, %v1005
  %v1012 = vsel %vm380, %v981, 0
  %v1015 = vsel %vm380, %v998, 0
  %1017 = vmatprep.subr.bf16.mxu0 0
  %1018 = vmatpush1.bf16.msra.mxu0 %v1007
  %1019 = vmatprep.subr.bf16.mxu0 0
  %1020 = vmatpush1.bf16.msra.mxu0 %v1008
  %1021 = vmatprep.subr.bf16.mxu0 0
  %1022 = vmatpush1.bf16.msra.mxu0 0
  %1023 = vmatprep.subr.bf16.mxu0 0
  %1024 = vmatpush1.bf16.msra.mxu0 0
  %1025 = vmatprep.subr.bf16.mxu0 0
  %1026 = vmatpush1.bf16.msra.mxu0 0
  %1027 = vmatprep.subr.bf16.mxu0 0
  %1028 = vmatpush1.bf16.msra.mxu0 0
  %1029 = vmatprep.subr.bf16.mxu0 0
  %1030 = vmatpush1.bf16.msra.mxu0 0
  %1031 = vmatprep.subr.bf16.mxu0 0
  %1032 = vmatpush1.bf16.msra.mxu0 0
  %1033 = vmatprep.subr.bf16.mxu0 0
  %1034 = vmatpush1.bf16.msra.mxu0 0
  %1035 = vmatprep.subr.bf16.mxu0 0
  %1036 = vmatpush1.bf16.msra.mxu0 0
  %1037 = vmatprep.subr.bf16.mxu0 0
  %1038 = vmatpush1.bf16.msra.mxu0 0
  %1039 = vmatprep.subr.bf16.mxu0 0
  %1040 = vmatpush1.bf16.msra.mxu0 0
  %1041 = vmatprep.subr.bf16.mxu0 0
  %1042 = vmatpush1.bf16.msra.mxu0 0
  %1043 = vmatprep.subr.bf16.mxu0 0
  %1044 = vmatpush1.bf16.msra.mxu0 0
  %1045 = vmatprep.subr.bf16.mxu0 0
  %1046 = vmatpush1.bf16.msra.mxu0 0
  %1047 = vmatprep.subr.bf16.mxu0 0
  %1048 = vmatpush1.bf16.msra.mxu0 0
  %1049 = vmatprep.mubr.bf16.mxu0 0
  %1050 = vmatmul.mubr.bf16.gmra.mrb[0].mxu0 %v1012
  %v1051 = vpop.f32.mrb[0].mxu0
  %v1052 = vadd.f32 0.0, %v1051
  %v1053 = vpop.f32.mrb[0].mxu0
  %v1054 = vpop.f32.mrb[0].mxu0
  %v1055 = vadd.f32 0.0, %v1054
  %v1056 = vpop.f32.mrb[0].mxu0
  %1057 = vmatprep.mubr.bf16.mxu0 0
  %1058 = vmatmul.mubr.bf16.gmra.mrb[0].mxu0 %v1015
  %v1059 = vpop.f32.mrb[0].mxu0
  %v1060 = vadd.f32 0.0, %v1059
  %v1061 = vpop.f32.mrb[0].mxu0
  %v1062 = vpop.f32.mrb[0].mxu0
  %v1063 = vadd.f32 0.0, %v1062
  %v1064 = vpop.f32.mrb[0].mxu0
  %1065 = vdwg.mxu0
  %v1066 = vadd.f32 %v948, %v1052
  %v1067 = vadd.f32 %v949, %v1055
  %v1068 = vadd.f32 %v950, %v1060
  %v1069 = vadd.f32 %v951, %v1063
  %s1070 = scalar_lea.vmem %s1, 96
  %v1071 = vld [vmem:[%s1070] sm:$0xf]
  %v1072 = vld [vmem:[%s1070 + $0x4] sm:$0xf]
  %v1073 = vld [vmem:[%s1070 + $0x8] sm:$0xf]
  %v1074 = vld [vmem:[%s1070 + $0xc] sm:$0xf]
  %v1077 = vcombine.low %v126, %v127
  %v1079 = vunpack.c.l.s4 1983009808
  %v1080 = vunpack.c.0.s8 %v1079
  %v1081 = vlaneseq
  %v1082 = vshrl.u32 %v1081, 7
  %v1083 = vsub.s32 %v1080, %v1082
  %v1084 = vrot.slane %v1077, %v1083
  %v1085 = vcombine.low %v451, %v1084
  %v1086 = vcombine.low %v132, %v133
  %v1088 = vunpack.c.l.s4 1983009808
  %v1089 = vunpack.c.0.s8 %v1088
  %v1090 = vlaneseq
  %v1091 = vshrl.u32 %v1090, 7
  %v1092 = vsub.s32 %v1089, %v1091
  %v1093 = vrot.slane %v1086, %v1092
  %v1094 = vcombine.low %v468, %v1093
  %v1099 = vunpack.c.l.b16 %v1071
  %v1100 = vunpack.c.l.b16 %v1072
  %v1101 = vunpack.c.l.b16 %v1073
  %v1102 = vunpack.c.l.b16 %v1074
  %v1103 = vpack.c.b16 %v1100, %v1099
  %v1104 = vpack.c.b16 %v1102, %v1101
  %v1108 = vsel %vm380, %v1085, 0
  %v1111 = vsel %vm380, %v1094, 0
  %1113 = vmatprep.subr.bf16.mxu0 0
  %1114 = vmatpush1.bf16.msra.mxu0 %v1103
  %1115 = vmatprep.subr.bf16.mxu0 0
  %1116 = vmatpush1.bf16.msra.mxu0 %v1104
  %1117 = vmatprep.subr.bf16.mxu0 0
  %1118 = vmatpush1.bf16.msra.mxu0 0
  %1119 = vmatprep.subr.bf16.mxu0 0
  %1120 = vmatpush1.bf16.msra.mxu0 0
  %1121 = vmatprep.subr.bf16.mxu0 0
  %1122 = vmatpush1.bf16.msra.mxu0 0
  %1123 = vmatprep.subr.bf16.mxu0 0
  %1124 = vmatpush1.bf16.msra.mxu0 0
  %1125 = vmatprep.subr.bf16.mxu0 0
  %1126 = vmatpush1.bf16.msra.mxu0 0
  %1127 = vmatprep.subr.bf16.mxu0 0
  %1128 = vmatpush1.bf16.msra.mxu0 0
  %1129 = vmatprep.subr.bf16.mxu0 0
  %1130 = vmatpush1.bf16.msra.mxu0 0
  %1131 = vmatprep.subr.bf16.mxu0 0
  %1132 = vmatpush1.bf16.msra.mxu0 0
  %1133 = vmatprep.subr.bf16.mxu0 0
  %1134 = vmatpush1.bf16.msra.mxu0 0
  %1135 = vmatprep.subr.bf16.mxu0 0
  %1136 = vmatpush1.bf16.msra.mxu0 0
  %1137 = vmatprep.subr.bf16.mxu0 0
  %1138 = vmatpush1.bf16.msra.mxu0 0
  %1139 = vmatprep.subr.bf16.mxu0 0
  %1140 = vmatpush1.bf16.msra.mxu0 0
  %1141 = vmatprep.subr.bf16.mxu0 0
  %1142 = vmatpush1.bf16.msra.mxu0 0
  %1143 = vmatprep.subr.bf16.mxu0 0
  %1144 = vmatpush1.bf16.msra.mxu0 0
  %1145 = vmatprep.mubr.bf16.mxu0 0
  %1146 = vmatmul.mubr.bf16.gmra.mrb[0].mxu0 %v1108
  %v1147 = vpop.f32.mrb[0].mxu0
  %v1148 = vadd.f32 0.0, %v1147
  %v1149 = vpop.f32.mrb[0].mxu0
  %v1150 = vpop.f32.mrb[0].mxu0
  %v1151 = vadd.f32 0.0, %v1150
  %v1152 = vpop.f32.mrb[0].mxu0
  %1153 = vmatprep.mubr.bf16.mxu0 0
  %1154 = vmatmul.mubr.bf16.gmra.mrb[0].mxu0 %v1111
  %v1155 = vpop.f32.mrb[0].mxu0
  %v1156 = vadd.f32 0.0, %v1155
  %v1157 = vpop.f32.mrb[0].mxu0
  %v1158 = vpop.f32.mrb[0].mxu0
  %v1159 = vadd.f32 0.0, %v1158
  %v1160 = vpop.f32.mrb[0].mxu0
  %1161 = vdwg.mxu0
  %v1162 = vadd.f32 %v1066, %v1148
  %v1163 = vadd.f32 %v1067, %v1151
  %v1164 = vadd.f32 %v1068, %v1156
  %v1165 = vadd.f32 %v1069, %v1159
  %v1167 = vunpack.c.l.s4 1983009808
  %v1168 = vunpack.c.0.s8 %v1167
  %v1169 = vlaneseq
  %v1170 = vshrl.u32 %v1169, 7
  %v1171 = vsub.s32 %v1168, %v1170
  %v1172 = vrot.slane %v127, %v1171
  %v1173 = vcombine.high %v1172, %v1172
  %v1175 = vunpack.c.l.s4 1983009808
  %v1176 = vunpack.c.0.s8 %v1175
  %v1177 = vlaneseq
  %v1178 = vshrl.u32 %v1177, 7
  %v1179 = vsub.s32 %v1176, %v1178
  %v1180 = vrot.slane %v133, %v1179
  %v1181 = vcombine.high %v1180, %v1180
  %v1183 = vshrl.u32 %v1172, 16
  %v1185 = vrot.slane %v1183, 6
  %v1186 = vshll.u32 %v1172, 16
  %v1188 = vrot.slane %v1186, 7
  %v1189 = vor.u32 %v1185, %v1188
  %v1190 = vrot.slane %v1189, 2
  %v1192 = vshll.u32 %v1173, 16
  %v1194 = vrot.slane %v1192, 7
  %v1195 = vsel %vm216, %v1190, %v1194
  %v1197 = vshrl.u32 %v1180, 16
  %v1199 = vrot.slane %v1197, 6
  %v1200 = vshll.u32 %v1180, 16
  %v1202 = vrot.slane %v1200, 7
  %v1203 = vor.u32 %v1199, %v1202
  %v1204 = vrot.slane %v1203, 2
  %v1206 = vshll.u32 %v1181, 16
  %v1208 = vrot.slane %v1206, 7
  %v1209 = vsel %vm216, %v1204, %v1208
  %s1210 = scalar_lea.vmem %s1, 112
  %v1211 = vld [vmem:[%s1210] sm:$0xf]
  %v1212 = vld [vmem:[%s1210 + $0x4] sm:$0xf]
  %v1213 = vld [vmem:[%s1210 + $0x8] sm:$0xf]
  %v1214 = vld [vmem:[%s1210 + $0xc] sm:$0xf]
  %v1215 = vcombine.low %v827, %v1195
  %v1217 = vunpack.c.l.s4 1983009808
  %v1218 = vunpack.c.0.s8 %v1217
  %v1219 = vlaneseq
  %v1220 = vshrl.u32 %v1219, 7
  %v1221 = vsub.s32 %v1218, %v1220
  %v1222 = vrot.slane %v1215, %v1221
  %v1223 = vcombine.low %v349, %v1222
  %v1224 = vcombine.low %v841, %v1209
  %v1226 = vunpack.c.l.s4 1983009808
  %v1227 = vunpack.c.0.s8 %v1226
  %v1228 = vlaneseq
  %v1229 = vshrl.u32 %v1228, 7
  %v1230 = vsub.s32 %v1227, %v1229
  %v1231 = vrot.slane %v1224, %v1230
  %v1232 = vcombine.low %v366, %v1231
  %v1237 = vunpack.c.l.b16 %v1211
  %v1238 = vunpack.c.l.b16 %v1212
  %v1239 = vunpack.c.l.b16 %v1213
  %v1240 = vunpack.c.l.b16 %v1214
  %v1241 = vpack.c.b16 %v1238, %v1237
  %v1242 = vpack.c.b16 %v1240, %v1239
  %v1246 = vsel %vm380, %v1223, 0
  %v1249 = vsel %vm380, %v1232, 0
  %1251 = vmatprep.subr.bf16.mxu0 0
  %1252 = vmatpush1.bf16.msra.mxu0 %v1241
  %1253 = vmatprep.subr.bf16.mxu0 0
  %1254 = vmatpush1.bf16.msra.mxu0 %v1242
  %1255 = vmatprep.subr.bf16.mxu0 0
  %1256 = vmatpush1.bf16.msra.mxu0 0
  %1257 = vmatprep.subr.bf16.mxu0 0
  %1258 = vmatpush1.bf16.msra.mxu0 0
  %1259 = vmatprep.subr.bf16.mxu0 0
  %1260 = vmatpush1.bf16.msra.mxu0 0
  %1261 = vmatprep.subr.bf16.mxu0 0
  %1262 = vmatpush1.bf16.msra.mxu0 0
  %1263 = vmatprep.subr.bf16.mxu0 0
  %1264 = vmatpush1.bf16.msra.mxu0 0
  %1265 = vmatprep.subr.bf16.mxu0 0
  %1266 = vmatpush1.bf16.msra.mxu0 0
  %1267 = vmatprep.subr.bf16.mxu0 0
  %1268 = vmatpush1.bf16.msra.mxu0 0
  %1269 = vmatprep.subr.bf16.mxu0 0
  %1270 = vmatpush1.bf16.msra.mxu0 0
  %1271 = vmatprep.subr.bf16.mxu0 0
  %1272 = vmatpush1.bf16.msra.mxu0 0
  %1273 = vmatprep.subr.bf16.mxu0 0
  %1274 = vmatpush1.bf16.msra.mxu0 0
  %1275 = vmatprep.subr.bf16.mxu0 0
  %1276 = vmatpush1.bf16.msra.mxu0 0
  %1277 = vmatprep.subr.bf16.mxu0 0
  %1278 = vmatpush1.bf16.msra.mxu0 0
  %1279 = vmatprep.subr.bf16.mxu0 0
  %1280 = vmatpush1.bf16.msra.mxu0 0
  %1281 = vmatprep.subr.bf16.mxu0 0
  %1282 = vmatpush1.bf16.msra.mxu0 0
  %1283 = vmatprep.mubr.bf16.mxu0 0
  %1284 = vmatmul.mubr.bf16.gmra.mrb[0].mxu0 %v1246
  %v1285 = vpop.f32.mrb[0].mxu0
  %v1286 = vadd.f32 0.0, %v1285
  %v1287 = vpop.f32.mrb[0].mxu0
  %v1288 = vpop.f32.mrb[0].mxu0
  %v1289 = vadd.f32 0.0, %v1288
  %v1290 = vpop.f32.mrb[0].mxu0
  %1291 = vmatprep.mubr.bf16.mxu0 0
  %1292 = vmatmul.mubr.bf16.gmra.mrb[0].mxu0 %v1249
  %v1293 = vpop.f32.mrb[0].mxu0
  %v1294 = vadd.f32 0.0, %v1293
  %v1295 = vpop.f32.mrb[0].mxu0
  %v1296 = vpop.f32.mrb[0].mxu0
  %v1297 = vadd.f32 0.0, %v1296
  %v1298 = vpop.f32.mrb[0].mxu0
  %1299 = vdwg.mxu0
  %v1300 = vadd.f32 %v1162, %v1286
  %v1301 = vadd.f32 %v1163, %v1289
  %v1302 = vadd.f32 %v1164, %v1294
  %v1303 = vadd.f32 %v1165, %v1297
  %v1304 = vrot.slane %v1172, 7
  %v1305 = vrot.slane %v1304, 2
  %v1306 = vrot.slane %v1173, 7
  %v1307 = vsel %vm543, %v1305, %v1306
  %v1308 = vrot.slane %v1180, 7
  %v1309 = vrot.slane %v1308, 2
  %v1310 = vrot.slane %v1181, 7
  %v1311 = vsel %vm543, %v1309, %v1310
  %s1312 = scalar_lea.vmem %s1, 128
  %v1313 = vld [vmem:[%s1312] sm:$0xf]
  %v1314 = vld [vmem:[%s1312 + $0x4] sm:$0xf]
  %v1315 = vld [vmem:[%s1312 + $0x8] sm:$0xf]
  %v1316 = vld [vmem:[%s1312 + $0xc] sm:$0xf]
  %v1317 = vcombine.low %v955, %v1307
  %v1319 = vunpack.c.l.s4 1983009808
  %v1320 = vunpack.c.0.s8 %v1319
  %v1321 = vlaneseq
  %v1322 = vshrl.u32 %v1321, 7
  %v1323 = vsub.s32 %v1320, %v1322
  %v1324 = vrot.slane %v1317, %v1323
  %v1325 = vcombine.low %v596, %v1324
  %v1326 = vcombine.low %v959, %v1311
  %v1328 = vunpack.c.l.s4 1983009808
  %v1329 = vunpack.c.0.s8 %v1328
  %v1330 = vlaneseq
  %v1331 = vshrl.u32 %v1330, 7
  %v1332 = vsub.s32 %v1329, %v1331
  %v1333 = vrot.slane %v1326, %v1332
  %v1334 = vcombine.low %v613, %v1333
  %v1339 = vunpack.c.l.b16 %v1313
  %v1340 = vunpack.c.l.b16 %v1314
  %v1341 = vunpack.c.l.b16 %v1315
  %v1342 = vunpack.c.l.b16 %v1316
  %v1343 = vpack.c.b16 %v1340, %v1339
  %v1344 = vpack.c.b16 %v1342, %v1341
  %v1348 = vsel %vm380, %v1325, 0
  %v1351 = vsel %vm380, %v1334, 0
  %1353 = vmatprep.subr.bf16.mxu0 0
  %1354 = vmatpush1.bf16.msra.mxu0 %v1343
  %1355 = vmatprep.subr.bf16.mxu0 0
  %1356 = vmatpush1.bf16.msra.mxu0 %v1344
  %1357 = vmatprep.subr.bf16.mxu0 0
  %1358 = vmatpush1.bf16.msra.mxu0 0
  %1359 = vmatprep.subr.bf16.mxu0 0
  %1360 = vmatpush1.bf16.msra.mxu0 0
  %1361 = vmatprep.subr.bf16.mxu0 0
  %1362 = vmatpush1.bf16.msra.mxu0 0
  %1363 = vmatprep.subr.bf16.mxu0 0
  %1364 = vmatpush1.bf16.msra.mxu0 0
  %1365 = vmatprep.subr.bf16.mxu0 0
  %1366 = vmatpush1.bf16.msra.mxu0 0
  %1367 = vmatprep.subr.bf16.mxu0 0
  %1368 = vmatpush1.bf16.msra.mxu0 0
  %1369 = vmatprep.subr.bf16.mxu0 0
  %1370 = vmatpush1.bf16.msra.mxu0 0
  %1371 = vmatprep.subr.bf16.mxu0 0
  %1372 = vmatpush1.bf16.msra.mxu0 0
  %1373 = vmatprep.subr.bf16.mxu0 0
  %1374 = vmatpush1.bf16.msra.mxu0 0
  %1375 = vmatprep.subr.bf16.mxu0 0
  %1376 = vmatpush1.bf16.msra.mxu0 0
  %1377 = vmatprep.subr.bf16.mxu0 0
  %1378 = vmatpush1.bf16.msra.mxu0 0
  %1379 = vmatprep.subr.bf16.mxu0 0
  %1380 = vmatpush1.bf16.msra.mxu0 0
  %1381 = vmatprep.subr.bf16.mxu0 0
  %1382 = vmatpush1.bf16.msra.mxu0 0
  %1383 = vmatprep.subr.bf16.mxu0 0
  %1384 = vmatpush1.bf16.msra.mxu0 0
  %1385 = vmatprep.mubr.bf16.mxu0 0
  %1386 = vmatmul.mubr.bf16.gmra.mrb[0].mxu0 %v1348
  %v1387 = vpop.f32.mrb[0].mxu0
  %v1388 = vadd.f32 0.0, %v1387
  %v1389 = vpop.f32.mrb[0].mxu0
  %v1390 = vpop.f32.mrb[0].mxu0
  %v1391 = vadd.f32 0.0, %v1390
  %v1392 = vpop.f32.mrb[0].mxu0
  %1393 = vmatprep.mubr.bf16.mxu0 0
  %1394 = vmatmul.mubr.bf16.gmra.mrb[0].mxu0 %v1351
  %v1395 = vpop.f32.mrb[0].mxu0
  %v1396 = vadd.f32 0.0, %v1395
  %v1397 = vpop.f32.mrb[0].mxu0
  %v1398 = vpop.f32.mrb[0].mxu0
  %v1399 = vadd.f32 0.0, %v1398
  %v1400 = vpop.f32.mrb[0].mxu0
  %1401 = vdwg.mxu0
  %v1402 = vadd.f32 %v1300, %v1388
  %v1403 = vadd.f32 %v1301, %v1391
  %v1404 = vadd.f32 %v1302, %v1396
  %v1405 = vadd.f32 %v1303, %v1399
  %v1406 = vld [vmem:[%s2] sm:$0x1]
  %v1408 = vlaneseq
  %v1409 = vshrl.u32 %v1408, 7
  %v1410 = vsub.s32 0, %v1409
  %v1411 = vrot.slane %v1406, %v1410
  %v1413 = vadd.f32 %v1402, %v1411
  %v1414 = vadd.f32 %v1403, %v1411
  %v1415 = vadd.f32 %v1404, %v1411
  %v1416 = vadd.f32 %v1405, %v1411
  %v1417 = vsel %vm380, %v1413, 0.0
  %v1418 = vsel %vm380, %v1414, 0.0
  %v1419 = vadd.f32 %v1417, %v1418
  %v1420 = vsel %vm380, %v1415, 0.0
  %v1421 = vadd.f32 %v1419, %v1420
  %v1422 = vsel %vm380, %v1416, 0.0
  %v1423 = vadd.f32 %v1421, %v1422
  %v1424 = vrot.slane %v1423, 4
  %v1425 = vadd.f32 %v1423, %v1424
  %v1426 = vrot.slane %v1425, 2
  %v1427 = vadd.f32 %v1425, %v1426
  %v1428 = vrot.slane %v1427, 1
  %v1429 = vadd.f32 %v1427, %v1428
  %vm1430 = vcmask 253952
  %1431 = vst.msk [vmem:[%s6] sm:$0x1] %vm1430, %v1429
  %v1432 = vmul.f32 %v1413, %v1413
  %v1433 = vmul.f32 %v1414, %v1414
  %v1434 = vmul.f32 %v1415, %v1415
  %v1435 = vmul.f32 %v1416, %v1416
  %v1436 = vsel %vm380, %v1432, 0.0
  %v1437 = vsel %vm380, %v1433, 0.0
  %v1438 = vadd.f32 %v1436, %v1437
  %v1439 = vsel %vm380, %v1434, 0.0
  %v1440 = vadd.f32 %v1438, %v1439
  %v1441 = vsel %vm380, %v1435, 0.0
  %v1442 = vadd.f32 %v1440, %v1441
  %v1443 = vrot.slane %v1442, 4
  %v1444 = vadd.f32 %v1442, %v1443
  %v1445 = vrot.slane %v1444, 2
  %v1446 = vadd.f32 %v1444, %v1445
  %v1447 = vrot.slane %v1446, 1
  %v1448 = vadd.f32 %v1446, %v1447
  %1449 = vst.msk [vmem:[%s7] sm:$0x1] %vm1430, %v1448
  %v1454 = vcombine.high %v1413, %v1413
  %v1455 = vcombine.high %v1414, %v1414
  %v1456 = vcombine.high %v1415, %v1415
  %v1457 = vcombine.high %v1416, %v1416
  %v1462 = vpack.c.bf16 %v1413, %v1413
  %v1463 = vpack.c.bf16 %v1454, %v1454
  %v1464 = vpack.c.bf16 %v1414, %v1414
  %v1465 = vpack.c.bf16 %v1455, %v1455
  %v1466 = vpack.c.bf16 %v1415, %v1415
  %v1467 = vpack.c.bf16 %v1456, %v1456
  %v1468 = vpack.c.bf16 %v1416, %v1416
  %v1469 = vpack.c.bf16 %v1457, %v1457
  %vm1470 = vcmask 254976
  %1471 = vst.msk [vmem:[%s5] sm:$0x3] %vm1470, %v1462
  %1472 = vst.msk [vmem:[%s5 + $0x2] sm:$0x3] %vm1470, %v1463
  %1473 = vst.msk [vmem:[%s5 + $0x4] sm:$0x3] %vm1470, %v1464
  %1474 = vst.msk [vmem:[%s5 + $0x6] sm:$0x3] %vm1470, %v1465
  %1475 = vst.msk [vmem:[%s5 + $0x8] sm:$0x3] %vm1470, %v1466
  %1476 = vst.msk [vmem:[%s5 + $0xa] sm:$0x3] %vm1470, %v1467
  %1477 = vst.msk [vmem:[%s5 + $0xc] sm:$0x3] %vm1470, %v1468
  %1478 = vst.msk [vmem:[%s5 + $0xe] sm:$0x3] %vm1470, %v1469
  // Predicated region
  $region22: #{encoder_forward.9} parent=0 // pred_check
    _
  $region23: #{encoder_forward.9} parent=0 // pred_check_branch
    %1480 = sbr.rel (0) target = $region25
  $region24: #{encoder_forward.9} parent=0 // pred_region
    _
  $region25: #{encoder_forward.9} parent=0 // pred_fallthru
    _
  // Predicated region
  $region26: #{encoder_forward.9} parent=0 // pred_check
    _
  $region27: #{encoder_forward.9} parent=0 // pred_check_branch
    %1482 = sbr.rel (0) target = $region29
  $region28: #{encoder_forward.9} parent=0 // pred_region
    _
  $region29: #{encoder_forward.9} parent=0 // pred_fallthru
    _
  // Predicated region
  $region30: #{encoder_forward.9} parent=0 // pred_check
    _
  $region31: #{encoder_forward.9} parent=0 // pred_check_branch
    %1484 = sbr.rel (0) target = $region33
  $region32: #{encoder_forward.9} parent=0 // pred_region
    _
  $region33: #{encoder_forward.9} parent=0 // pred_fallthru
    _
  // Predicated region
  $region34: #{encoder_forward.9} parent=0 // pred_check
    _
  $region35: #{encoder_forward.9} parent=0 // pred_check_branch
    %1486 = sbr.rel (0) target = $region37
  $region36: #{encoder_forward.9} parent=0 // pred_region
    _
  $region37: #{encoder_forward.9} parent=0 // pred_fallthru
    _
  // Predicated region
  $region38: #{encoder_forward.9} parent=0 // pred_check
    _
  $region39: #{encoder_forward.9} parent=0 // pred_check_branch
    %1488 = sbr.rel (0) target = $region41
  $region40: #{encoder_forward.9} parent=0 // pred_region
    _
  $region41: #{encoder_forward.9} parent=0 // pred_fallthru
    _
  // Predicated region
  $region42: #{encoder_forward.9} parent=0 // pred_check
    _
  $region43: #{encoder_forward.9} parent=0 // pred_check_branch
    %1490 = sbr.rel (0) target = $region45
  $region44: #{encoder_forward.9} parent=0 // pred_region
    _
  $region45: #{encoder_forward.9} parent=0 // pred_fallthru
    _

// kernel: encoder_forward.12
$region0: #{encoder_forward.12}
  #allocation0 [shape = 'u32[]', space=smem, size = 0x4, offset = 0x4, fixed_abs, tag = 'smem constant byte address 0x4 - core index']
  #allocation1 [shape = 'u32[144,128]{1,0:T(1,128)}', space=vmem, size = 0x12000, scoped, tag = 'internal scratch']
  %s0 = inlined_call_operand.vmem [shape: bf16[2,6,6,32], index: 0, kind: input, shape index: {}]
  %s1 = inlined_call_operand.vmem [shape: bf16[9,32,32], index: 1, kind: input, shape index: {}]
  %s2 = inlined_call_operand.vmem [shape: f32[1,32], index: 2, kind: input, shape index: {}]
  %s3 = inlined_call_operand.vmem [shape: bf16[2,4,4,32], index: 3, kind: output, shape index: {}]
  %s4 = sld [smem:[#allocation0]]
  $region22: #{encoder_forward.12} parent=0
    _
  %s6 = ssub.s32 1, %s4
  %s7 = scalar_select 0, %s6, %s4
  // Predicated region
  $region2: #{encoder_forward.12} parent=0 // pred_check
    _
  $region3: #{encoder_forward.12} parent=0 // pred_check_branch
    %9 = sbr.rel (0) target = $region5
  $region4: #{encoder_forward.12} parent=0 // pred_region
    _
  $region5: #{encoder_forward.12} parent=0 // pred_fallthru
    _
  // Predicated region
  $region6: #{encoder_forward.12} parent=0 // pred_check
    _
  $region7: #{encoder_forward.12} parent=0 // pred_check_branch
    %11 = sbr.rel (0) target = $region9
  $region8: #{encoder_forward.12} parent=0 // pred_region
    _
  $region9: #{encoder_forward.12} parent=0 // pred_fallthru
    _
  // Predicated region
  $region10: #{encoder_forward.12} parent=0 // pred_check
    _
  $region11: #{encoder_forward.12} parent=0 // pred_check_branch
    %13 = sbr.rel (0) target = $region13
  $region12: #{encoder_forward.12} parent=0 // pred_region
    _
  $region13: #{encoder_forward.12} parent=0 // pred_fallthru
    _
  %v15 = vld [vmem:[%s0] sm:$0x7]
  %v16 = vld [vmem:[%s0 + $0x4] sm:$0x7]
  %v17 = vld [vmem:[%s0 + $0x8] sm:$0x7]
  %v18 = vld [vmem:[%s0 + $0xc] sm:$0x7]
  %v19 = vld [vmem:[%s0 + $0x10] sm:$0x7]
  %v20 = vld [vmem:[%s0 + $0x14] sm:$0x7]
  %v21 = vld [vmem:[%s0 + $0x18] sm:$0x7]
  %v22 = vld [vmem:[%s0 + $0x1c] sm:$0x7]
  %v23 = vld [vmem:[%s0 + $0x20] sm:$0x7]
  %v24 = vld [vmem:[%s0 + $0x24] sm:$0x7]
  %v25 = vld [vmem:[%s0 + $0x28] sm:$0x7]
  %v26 = vld [vmem:[%s0 + $0x2c] sm:$0x7]
  %v27 = vunpack.c.l.bf16 %v15
  %v28 = vunpack.c.l.bf16 %v16
  %v29 = vunpack.c.l.bf16 %v17
  %v30 = vunpack.c.l.bf16 %v18
  %v31 = vunpack.c.l.bf16 %v19
  %v32 = vunpack.c.l.bf16 %v20
  %v33 = vunpack.c.l.bf16 %v21
  %v34 = vunpack.c.l.bf16 %v22
  %v35 = vunpack.c.l.bf16 %v23
  %v36 = vunpack.c.l.bf16 %v24
  %v37 = vunpack.c.l.bf16 %v25
  %v38 = vunpack.c.l.bf16 %v26
  %v39 = vmax.f32 %v27, 0.0
  %v40 = vmax.f32 %v28, 0.0
  %v41 = vmax.f32 %v29, 0.0
  %v42 = vmax.f32 %v30, 0.0
  %v43 = vmax.f32 %v31, 0.0
  %v44 = vmax.f32 %v32, 0.0
  %v45 = vmax.f32 %v33, 0.0
  %v46 = vmax.f32 %v34, 0.0
  %v47 = vmax.f32 %v35, 0.0
  %v48 = vmax.f32 %v36, 0.0
  %v49 = vmax.f32 %v37, 0.0
  %v50 = vmax.f32 %v38, 0.0
  %v51 = vpack.c.bf16 %v39, %v39
  %v52 = vpack.c.bf16 %v40, %v40
  %v53 = vpack.c.bf16 %v41, %v41
  %v54 = vpack.c.bf16 %v42, %v42
  %v55 = vpack.c.bf16 %v43, %v43
  %v56 = vpack.c.bf16 %v44, %v44
  %v57 = vpack.c.bf16 %v45, %v45
  %v58 = vpack.c.bf16 %v46, %v46
  %v59 = vpack.c.bf16 %v47, %v47
  %v60 = vpack.c.bf16 %v48, %v48
  %v61 = vpack.c.bf16 %v49, %v49
  %v62 = vpack.c.bf16 %v50, %v50
  %v63 = vld [vmem:[%s1] sm:$0xf]
  %v64 = vld [vmem:[%s1 + $0x4] sm:$0xf]
  %v65 = vld [vmem:[%s1 + $0x8] sm:$0xf]
  %v66 = vld [vmem:[%s1 + $0xc] sm:$0xf]
  %v76 = vunpack.c.l.s4 1983009808
  %v77 = vunpack.c.0.s8 %v76
  %v78 = vlaneseq
  %v79 = vshrl.u32 %v78, 7
  %v80 = vsub.s32 %v77, %v79
  %v81 = vrot.slane %v51, %v80
  %v82 = vcombine.high %v81, %v81
  %v84 = vunpack.c.l.s4 1983009808
  %v85 = vunpack.c.0.s8 %v84
  %v86 = vlaneseq
  %v87 = vshrl.u32 %v86, 7
  %v88 = vsub.s32 %v85, %v87
  %v89 = vrot.slane %v52, %v88
  %v90 = vcombine.high %v89, %v89
  %v92 = vunpack.c.l.s4 1983009808
  %v93 = vunpack.c.0.s8 %v92
  %v94 = vlaneseq
  %v95 = vshrl.u32 %v94, 7
  %v96 = vsub.s32 %v93, %v95
  %v97 = vrot.slane %v53, %v96
  %v98 = vcombine.high %v97, %v97
  %v100 = vunpack.c.l.s4 1983009808
  %v101 = vunpack.c.0.s8 %v100
  %v102 = vlaneseq
  %v103 = vshrl.u32 %v102, 7
  %v104 = vsub.s32 %v101, %v103
  %v105 = vrot.slane %v54, %v104
  %v106 = vcombine.high %v105, %v105
  %v108 = vunpack.c.l.s4 1983009808
  %v109 = vunpack.c.0.s8 %v108
  %v110 = vlaneseq
  %v111 = vshrl.u32 %v110, 7
  %v112 = vsub.s32 %v109, %v111
  %v113 = vrot.slane %v57, %v112
  %v114 = vcombine.high %v113, %v113
  %v116 = vunpack.c.l.s4 1983009808
  %v117 = vunpack.c.0.s8 %v116
  %v118 = vlaneseq
  %v119 = vshrl.u32 %v118, 7
  %v120 = vsub.s32 %v117, %v119
  %v121 = vrot.slane %v58, %v120
  %v122 = vcombine.high %v121, %v121
  %v124 = vunpack.c.l.s4 1983009808
  %v125 = vunpack.c.0.s8 %v124
  %v126 = vlaneseq
  %v127 = vshrl.u32 %v126, 7
  %v128 = vsub.s32 %v125, %v127
  %v129 = vrot.slane %v59, %v128
  %v130 = vcombine.high %v129, %v129
  %v132 = vunpack.c.l.s4 1983009808
  %v133 = vunpack.c.0.s8 %v132
  %v134 = vlaneseq
  %v135 = vshrl.u32 %v134, 7
  %v136 = vsub.s32 %v133, %v135
  %v137 = vrot.slane %v60, %v136
  %v138 = vcombine.high %v137, %v137
  %vm139 = vsmask.f32 1280
  %vm140 = vsmask.f32 3336
  %vm141 = vmor %vm139, %vm140
  %vm142 = vsmask.f32 5392
  %vm143 = vmor %vm141, %vm142
  %vm144 = vsmask.f32 7448
  %vm145 = vmor %vm143, %vm144
  %v147 = vshrl.u32 %v81, 16
  %v149 = vrot.slane %v147, 6
  %v150 = vshll.u32 %v81, 16
  %v152 = vrot.slane %v150, 7
  %v153 = vor.u32 %v149, %v152
  %v154 = vrot.slane %v153, 2
  %v156 = vshll.u32 %v82, 16
  %v158 = vrot.slane %v156, 7
  %v159 = vsel %vm145, %v154, %v158
  %v161 = vshrl.u32 %v89, 16
  %v163 = vrot.slane %v161, 6
  %v164 = vshll.u32 %v89, 16
  %v166 = vrot.slane %v164, 7
  %v167 = vor.u32 %v163, %v166
  %v168 = vrot.slane %v167, 2
  %v170 = vshll.u32 %v90, 16
  %v172 = vrot.slane %v170, 7
  %v173 = vsel %vm145, %v168, %v172
  %v175 = vshrl.u32 %v97, 16
  %v177 = vrot.slane %v175, 6
  %v178 = vshll.u32 %v97, 16
  %v180 = vrot.slane %v178, 7
  %v181 = vor.u32 %v177, %v180
  %v182 = vrot.slane %v181, 2
  %v184 = vshll.u32 %v98, 16
  %v186 = vrot.slane %v184, 7
  %v187 = vsel %vm145, %v182, %v186
  %v189 = vshrl.u32 %v105, 16
  %v191 = vrot.slane %v189, 6
  %v192 = vshll.u32 %v105, 16
  %v194 = vrot.slane %v192, 7
  %v195 = vor.u32 %v191, %v194
  %v196 = vrot.slane %v195, 2
  %v198 = vshll.u32 %v106, 16
  %v200 = vrot.slane %v198, 7
  %v201 = vsel %vm145, %v196, %v200
  %v203 = vshrl.u32 %v113, 16
  %v205 = vrot.slane %v203, 6
  %v206 = vshll.u32 %v113, 16
  %v208 = vrot.slane %v206, 7
  %v209 = vor.u32 %v205, %v208
  %v210 = vrot.slane %v209, 2
  %v212 = vshll.u32 %v114, 16
  %v214 = vrot.slane %v212, 7
  %v215 = vsel %vm145, %v210, %v214
  %v217 = vshrl.u32 %v121, 16
  %v219 = vrot.slane %v217, 6
  %v220 = vshll.u32 %v121, 16
  %v222 = vrot.slane %v220, 7
  %v223 = vor.u32 %v219, %v222
  %v224 = vrot.slane %v223, 2
  %v226 = vshll.u32 %v122, 16
  %v228 = vrot.slane %v226, 7
  %v229 = vsel %vm145, %v224, %v228
  %v231 = vshrl.u32 %v129, 16
  %v233 = vrot.slane %v231, 6
  %v234 = vshll.u32 %v129, 16
  %v236 = vrot.slane %v234, 7
  %v237 = vor.u32 %v233, %v236
  %v238 = vrot.slane %v237, 2
  %v240 = vshll.u32 %v130, 16
  %v242 = vrot.slane %v240, 7
  %v243 = vsel %vm145, %v238, %v242
  %v245 = vshrl.u32 %v137, 16
  %v247 = vrot.slane %v245, 6
  %v248 = vshll.u32 %v137, 16
  %v250 = vrot.slane %v248, 7
  %v251 = vor.u32 %v247, %v250
  %v252 = vrot.slane %v251, 2
  %v254 = vshll.u32 %v138, 16
  %v256 = vrot.slane %v254, 7
  %v257 = vsel %vm145, %v252, %v256
  %s258 = scalar_lea.vmem %s1, 16
  %v259 = vld [vmem:[%s258] sm:$0xf]
  %v260 = vld [vmem:[%s258 + $0x4] sm:$0xf]
  %v261 = vld [vmem:[%s258 + $0x8] sm:$0xf]
  %v262 = vld [vmem:[%s258 + $0xc] sm:$0xf]
  %v263 = vcombine.low %v159, %v173
  %v264 = vcombine.low %v187, %v201
  %v266 = vunpack.c.l.s4 1983009808
  %v267 = vunpack.c.0.s8 %v266
  %v268 = vlaneseq
  %v269 = vshrl.u32 %v268, 7
  %v270 = vsub.s32 %v267, %v269
  %v271 = vrot.slane %v263, %v270
  %v273 = vunpack.c.l.s4 1983009808
  %v274 = vunpack.c.0.s8 %v273
  %v275 = vlaneseq
  %v276 = vshrl.u32 %v275, 7
  %v277 = vsub.s32 %v274, %v276
  %v278 = vrot.slane %v264, %v277
  %v279 = vcombine.low %v271, %v278
  %v280 = vcombine.low %v215, %v229
  %v281 = vcombine.low %v243, %v257
  %v283 = vunpack.c.l.s4 1983009808
  %v284 = vunpack.c.0.s8 %v283
  %v285 = vlaneseq
  %v286 = vshrl.u32 %v285, 7
  %v287 = vsub.s32 %v284, %v286
  %v288 = vrot.slane %v280, %v287
  %v290 = vunpack.c.l.s4 1983009808
  %v291 = vunpack.c.0.s8 %v290
  %v292 = vlaneseq
  %v293 = vshrl.u32 %v292, 7
  %v294 = vsub.s32 %v291, %v293
  %v295 = vrot.slane %v281, %v294
  %v296 = vcombine.low %v288, %v295
  %v301 = vunpack.c.l.b16 %v259
  %v302 = vunpack.c.l.b16 %v260
  %v303 = vunpack.c.l.b16 %v261
  %v304 = vunpack.c.l.b16 %v262
  %v305 = vpack.c.b16 %v302, %v301
  %v306 = vpack.c.b16 %v304, %v303
  %vm309 = vcmask 261120
  %v311 = vsel %vm309, %v279, 0
  %v314 = vsel %vm309, %v296, 0
  %316 = vmatprep.subr.bf16.mxu0 0
  %317 = vmatpush1.bf16.msra.mxu0 %v305
  %318 = vmatprep.subr.bf16.mxu0 0
  %319 = vmatpush1.bf16.msra.mxu0 %v306
  %320 = vmatprep.subr.bf16.mxu0 0
  %321 = vmatpush1.bf16.msra.mxu0 0
  %322 = vmatprep.subr.bf16.mxu0 0
  %323 = vmatpush1.bf16.msra.mxu0 0
  %324 = vmatprep.subr.bf16.mxu0 0
  %325 = vmatpush1.bf16.msra.mxu0 0
  %326 = vmatprep.subr.bf16.mxu0 0
  %327 = vmatpush1.bf16.msra.mxu0 0
  %328 = vmatprep.subr.bf16.mxu0 0
  %329 = vmatpush1.bf16.msra.mxu0 0
  %330 = vmatprep.subr.bf16.mxu0 0
  %331 = vmatpush1.bf16.msra.mxu0 0
  %332 = vmatprep.subr.bf16.mxu0 0
  %333 = vmatpush1.bf16.msra.mxu0 0
  %334 = vmatprep.subr.bf16.mxu0 0
  %335 = vmatpush1.bf16.msra.mxu0 0
  %336 = vmatprep.subr.bf16.mxu0 0
  %337 = vmatpush1.bf16.msra.mxu0 0
  %338 = vmatprep.subr.bf16.mxu0 0
  %339 = vmatpush1.bf16.msra.mxu0 0
  %340 = vmatprep.subr.bf16.mxu0 0
  %341 = vmatpush1.bf16.msra.mxu0 0
  %342 = vmatprep.subr.bf16.mxu0 0
  %343 = vmatpush1.bf16.msra.mxu0 0
  %344 = vmatprep.subr.bf16.mxu0 0
  %345 = vmatpush1.bf16.msra.mxu0 0
  %346 = vmatprep.subr.bf16.mxu0 0
  %347 = vmatpush1.bf16.msra.mxu0 0
  %348 = vmatprep.mubr.bf16.mxu0 0
  %349 = vmatmul.mubr.bf16.gmra.mrb[0].mxu0 %v311
  %v350 = vpop.f32.mrb[0].mxu0
  %v351 = vadd.f32 0.0, %v350
  %v352 = vpop.f32.mrb[0].mxu0
  %v353 = vpop.f32.mrb[0].mxu0
  %v354 = vadd.f32 0.0, %v353
  %v355 = vpop.f32.mrb[0].mxu0
  %356 = vmatprep.mubr.bf16.mxu0 0
  %357 = vmatmul.mubr.bf16.gmra.mrb[0].mxu0 %v314
  %v358 = vpop.f32.mrb[0].mxu0
  %v359 = vadd.f32 0.0, %v358
  %v360 = vpop.f32.mrb[0].mxu0
  %v361 = vpop.f32.mrb[0].mxu0
  %v362 = vadd.f32 0.0, %v361
  %v363 = vpop.f32.mrb[0].mxu0
  %364 = vdwg.mxu0
  %v365 = vcombine.low %v51, %v52
  %v366 = vcombine.low %v53, %v54
  %v368 = vunpack.c.l.s4 1983009808
  %v369 = vunpack.c.0.s8 %v368
  %v370 = vlaneseq
  %v371 = vshrl.u32 %v370, 7
  %v372 = vsub.s32 %v369, %v371
  %v373 = vrot.slane %v365, %v372
  %v375 = vunpack.c.l.s4 1983009808
  %v376 = vunpack.c.0.s8 %v375
  %v377 = vlaneseq
  %v378 = vshrl.u32 %v377, 7
  %v379 = vsub.s32 %v376, %v378
  %v380 = vrot.slane %v366, %v379
  %v381 = vcombine.low %v373, %v380
  %v382 = vcombine.low %v57, %v58
  %v383 = vcombine.low %v59, %v60
  %v385 = vunpack.c.l.s4 1983009808
  %v386 = vunpack.c.0.s8 %v385
  %v387 = vlaneseq
  %v388 = vshrl.u32 %v387, 7
  %v389 = vsub.s32 %v386, %v388
  %v390 = vrot.slane %v382, %v389
  %v392 = vunpack.c.l.s4 1983009808
  %v393 = vunpack.c.0.s8 %v392
  %v394 = vlaneseq
  %v395 = vshrl.u32 %v394, 7
  %v396 = vsub.s32 %v393, %v395
  %v397 = vrot.slane %v383, %v396
  %v398 = vcombine.low %v390, %v397
  %v403 = vunpack.c.l.b16 %v63
  %v404 = vunpack.c.l.b16 %v64
  %v405 = vunpack.c.l.b16 %v65
  %v406 = vunpack.c.l.b16 %v66
  %v407 = vpack.c.b16 %v404, %v403
  %v408 = vpack.c.b16 %v406, %v405
  %v412 = vsel %vm309, %v381, 0
  %v415 = vsel %vm309, %v398, 0
  %417 = vmatprep.subr.bf16.mxu0 0
  %418 = vmatpush1.bf16.msra.mxu0 %v407
  %419 = vmatprep.subr.bf16.mxu0 0
  %420 = vmatpush1.bf16.msra.mxu0 %v408
  %421 = vmatprep.subr.bf16.mxu0 0
  %422 = vmatpush1.bf16.msra.mxu0 0
  %423 = vmatprep.subr.bf16.mxu0 0
  %424 = vmatpush1.bf16.msra.mxu0 0
  %425 = vmatprep.subr.bf16.mxu0 0
  %426 = vmatpush1.bf16.msra.mxu0 0
  %427 = vmatprep.subr.bf16.mxu0 0
  %428 = vmatpush1.bf16.msra.mxu0 0
  %429 = vmatprep.subr.bf16.mxu0 0
  %430 = vmatpush1.bf16.msra.mxu0 0
  %431 = vmatprep.subr.bf16.mxu0 0
  %432 = vmatpush1.bf16.msra.mxu0 0
  %433 = vmatprep.subr.bf16.mxu0 0
  %434 = vmatpush1.bf16.msra.mxu0 0
  %435 = vmatprep.subr.bf16.mxu0 0
  %436 = vmatpush1.bf16.msra.mxu0 0
  %437 = vmatprep.subr.bf16.mxu0 0
  %438 = vmatpush1.bf16.msra.mxu0 0
  %439 = vmatprep.subr.bf16.mxu0 0
  %440 = vmatpush1.bf16.msra.mxu0 0
  %441 = vmatprep.subr.bf16.mxu0 0
  %442 = vmatpush1.bf16.msra.mxu0 0
  %443 = vmatprep.subr.bf16.mxu0 0
  %444 = vmatpush1.bf16.msra.mxu0 0
  %445 = vmatprep.subr.bf16.mxu0 0
  %446 = vmatpush1.bf16.msra.mxu0 0
  %447 = vmatprep.subr.bf16.mxu0 0
  %448 = vmatpush1.bf16.msra.mxu0 0
  %449 = vmatprep.mubr.bf16.mxu0 0
  %450 = vmatmul.mubr.bf16.gmra.mrb[0].mxu0 %v412
  %v451 = vpop.f32.mrb[0].mxu0
  %v452 = vadd.f32 %v351, %v451
  %v453 = vpop.f32.mrb[0].mxu0
  %v454 = vpop.f32.mrb[0].mxu0
  %v455 = vadd.f32 %v354, %v454
  %v456 = vpop.f32.mrb[0].mxu0
  %457 = vmatprep.mubr.bf16.mxu0 0
  %458 = vmatmul.mubr.bf16.gmra.mrb[0].mxu0 %v415
  %v459 = vpop.f32.mrb[0].mxu0
  %v460 = vadd.f32 %v359, %v459
  %v461 = vpop.f32.mrb[0].mxu0
  %v462 = vpop.f32.mrb[0].mxu0
  %v463 = vadd.f32 %v362, %v462
  %v464 = vpop.f32.mrb[0].mxu0
  %465 = vdwg.mxu0
  %vm466 = vcmask 1040384
  %vm467 = vcmask 1042434
  %vm468 = vmor %vm466, %vm467
  %vm469 = vcmask 1044484
  %vm470 = vmor %vm468, %vm469
  %vm471 = vcmask 1046534
  %vm472 = vmor %vm470, %vm471
  %v473 = vrot.slane %v81, 7
  %v474 = vrot.slane %v473, 2
  %v475 = vrot.slane %v82, 7
  %v476 = vsel %vm472, %v474, %v475
  %v477 = vrot.slane %v89, 7
  %v478 = vrot.slane %v477, 2
  %v479 = vrot.slane %v90, 7
  %v480 = vsel %vm472, %v478, %v479
  %v481 = vrot.slane %v97, 7
  %v482 = vrot.slane %v481, 2
  %v483 = vrot.slane %v98, 7
  %v484 = vsel %vm472, %v482, %v483
  %v485 = vrot.slane %v105, 7
  %v486 = vrot.slane %v485, 2
  %v487 = vrot.slane %v106, 7
  %v488 = vsel %vm472, %v486, %v487
  %v489 = vrot.slane %v113, 7
  %v490 = vrot.slane %v489, 2
  %v491 = vrot.slane %v114, 7
  %v492 = vsel %vm472, %v490, %v491
  %v493 = vrot.slane %v121, 7
  %v494 = vrot.slane %v493, 2
  %v495 = vrot.slane %v122, 7
  %v496 = vsel %vm472, %v494, %v495
  %v497 = vrot.slane %v129, 7
  %v498 = vrot.slane %v497, 2
  %v499 = vrot.slane %v130, 7
  %v500 = vsel %vm472, %v498, %v499
  %v501 = vrot.slane %v137, 7
  %v502 = vrot.slane %v501, 2
  %v503 = vrot.slane %v138, 7
  %v504 = vsel %vm472, %v502, %v503
  %s505 = scalar_lea.vmem %s1, 32
  %v506 = vld [vmem:[%s505] sm:$0xf]
  %v507 = vld [vmem:[%s505 + $0x4] sm:$0xf]
  %v508 = vld [vmem:[%s505 + $0x8] sm:$0xf]
  %v509 = vld [vmem:[%s505 + $0xc] sm:$0xf]
  %v510 = vcombine.low %v476, %v480
  %v511 = vcombine.low %v484, %v488
  %v513 = vunpack.c.l.s4 1983009808
  %v514 = vunpack.c.0.s8 %v513
  %v515 = vlaneseq
  %v516 = vshrl.u32 %v515, 7
  %v517 = vsub.s32 %v514, %v516
  %v518 = vrot.slane %v510, %v517
  %v520 = vunpack.c.l.s4 1983009808
  %v521 = vunpack.c.0.s8 %v520
  %v522 = vlaneseq
  %v523 = vshrl.u32 %v522, 7
  %v524 = vsub.s32 %v521, %v523
  %v525 = vrot.slane %v511, %v524
  %v526 = vcombine.low %v518, %v525
  %v527 = vcombine.low %v492, %v496
  %v528 = vcombine.low %v500, %v504
  %v530 = vunpack.c.l.s4 1983009808
  %v531 = vunpack.c.0.s8 %v530
  %v532 = vlaneseq
  %v533 = vshrl.u32 %v532, 7
  %v534 = vsub.s32 %v531, %v533
  %v535 = vrot.slane %v527, %v534
  %v537 = vunpack.c.l.s4 1983009808
  %v538 = vunpack.c.0.s8 %v537
  %v539 = vlaneseq
  %v540 = vshrl.u32 %v539, 7
  %v541 = vsub.s32 %v538, %v540
  %v542 = vrot.slane %v528, %v541
  %v543 = vcombine.low %v535, %v542
  %v548 = vunpack.c.l.b16 %v506
  %v549 = vunpack.c.l.b16 %v507
  %v550 = vunpack.c.l.b16 %v508
  %v551 = vunpack.c.l.b16 %v509
  %v552 = vpack.c.b16 %v549, %v548
  %v553 = vpack.c.b16 %v551, %v550
  %v557 = vsel %vm309, %v526, 0
  %v560 = vsel %vm309, %v543, 0
  %562 = vmatprep.subr.bf16.mxu0 0
  %563 = vmatpush1.bf16.msra.mxu0 %v552
  %564 = vmatprep.subr.bf16.mxu0 0
  %565 = vmatpush1.bf16.msra.mxu0 %v553
  %566 = vmatprep.subr.bf16.mxu0 0
  %567 = vmatpush1.bf16.msra.mxu0 0
  %568 = vmatprep.subr.bf16.mxu0 0
  %569 = vmatpush1.bf16.msra.mxu0 0
  %570 = vmatprep.subr.bf16.mxu0 0
  %571 = vmatpush1.bf16.msra.mxu0 0
  %572 = vmatprep.subr.bf16.mxu0 0
  %573 = vmatpush1.bf16.msra.mxu0 0
  %574 = vmatprep.subr.bf16.mxu0 0
  %575 = vmatpush1.bf16.msra.mxu0 0
  %576 = vmatprep.subr.bf16.mxu0 0
  %577 = vmatpush1.bf16.msra.mxu0 0
  %578 = vmatprep.subr.bf16.mxu0 0
  %579 = vmatpush1.bf16.msra.mxu0 0
  %580 = vmatprep.subr.bf16.mxu0 0
  %581 = vmatpush1.bf16.msra.mxu0 0
  %582 = vmatprep.subr.bf16.mxu0 0
  %583 = vmatpush1.bf16.msra.mxu0 0
  %584 = vmatprep.subr.bf16.mxu0 0
  %585 = vmatpush1.bf16.msra.mxu0 0
  %586 = vmatprep.subr.bf16.mxu0 0
  %587 = vmatpush1.bf16.msra.mxu0 0
  %588 = vmatprep.subr.bf16.mxu0 0
  %589 = vmatpush1.bf16.msra.mxu0 0
  %590 = vmatprep.subr.bf16.mxu0 0
  %591 = vmatpush1.bf16.msra.mxu0 0
  %592 = vmatprep.subr.bf16.mxu0 0
  %593 = vmatpush1.bf16.msra.mxu0 0
  %594 = vmatprep.mubr.bf16.mxu0 0
  %595 = vmatmul.mubr.bf16.gmra.mrb[0].mxu0 %v557
  %v596 = vpop.f32.mrb[0].mxu0
  %v597 = vadd.f32 0.0, %v596
  %v598 = vpop.f32.mrb[0].mxu0
  %v599 = vpop.f32.mrb[0].mxu0
  %v600 = vadd.f32 0.0, %v599
  %v601 = vpop.f32.mrb[0].mxu0
  %602 = vmatprep.mubr.bf16.mxu0 0
  %603 = vmatmul.mubr.bf16.gmra.mrb[0].mxu0 %v560
  %v604 = vpop.f32.mrb[0].mxu0
  %v605 = vadd.f32 0.0, %v604
  %v606 = vpop.f32.mrb[0].mxu0
  %v607 = vpop.f32.mrb[0].mxu0
  %v608 = vadd.f32 0.0, %v607
  %v609 = vpop.f32.mrb[0].mxu0
  %610 = vdwg.mxu0
  %v611 = vadd.f32 %v452, %v597
  %v612 = vadd.f32 %v455, %v600
  %v613 = vadd.f32 %v460, %v605
  %v614 = vadd.f32 %v463, %v608
  %s615 = scalar_lea.vmem %s1, 48
  %v616 = vld [vmem:[%s615] sm:$0xf]
  %v617 = vld [vmem:[%s615 + $0x4] sm:$0xf]
  %v618 = vld [vmem:[%s615 + $0x8] sm:$0xf]
  %v619 = vld [vmem:[%s615 + $0xc] sm:$0xf]
  %v622 = vcombine.low %v52, %v53
  %v623 = vcombine.low %v54, %v55
  %v625 = vunpack.c.l.s4 1983009808
  %v626 = vunpack.c.0.s8 %v625
  %v627 = vlaneseq
  %v628 = vshrl.u32 %v627, 7
  %v629 = vsub.s32 %v626, %v628
  %v630 = vrot.slane %v622, %v629
  %v632 = vunpack.c.l.s4 1983009808
  %v633 = vunpack.c.0.s8 %v632
  %v634 = vlaneseq
  %v635 = vshrl.u32 %v634, 7
  %v636 = vsub.s32 %v633, %v635
  %v637 = vrot.slane %v623, %v636
  %v638 = vcombine.low %v630, %v637
  %v639 = vcombine.low %v58, %v59
  %v640 = vcombine.low %v60, %v61
  %v642 = vunpack.c.l.s4 1983009808
  %v643 = vunpack.c.0.s8 %v642
  %v644 = vlaneseq
  %v645 = vshrl.u32 %v644, 7
  %v646 = vsub.s32 %v643, %v645
  %v647 = vrot.slane %v639, %v646
  %v649 = vunpack.c.l.s4 1983009808
  %v650 = vunpack.c.0.s8 %v649
  %v651 = vlaneseq
  %v652 = vshrl.u32 %v651, 7
  %v653 = vsub.s32 %v650, %v652
  %v654 = vrot.slane %v640, %v653
  %v655 = vcombine.low %v647, %v654
  %v660 = vunpack.c.l.b16 %v616
  %v661 = vunpack.c.l.b16 %v617
  %v662 = vunpack.c.l.b16 %v618
  %v663 = vunpack.c.l.b16 %v619
  %v664 = vpack.c.b16 %v661, %v660
  %v665 = vpack.c.b16 %v663, %v662
  %v669 = vsel %vm309, %v638, 0
  %v672 = vsel %vm309, %v655, 0
  %674 = vmatprep.subr.bf16.mxu0 0
  %675 = vmatpush1.bf16.msra.mxu0 %v664
  %676 = vmatprep.subr.bf16.mxu0 0
  %677 = vmatpush1.bf16.msra.mxu0 %v665
  %678 = vmatprep.subr.bf16.mxu0 0
  %679 = vmatpush1.bf16.msra.mxu0 0
  %680 = vmatprep.subr.bf16.mxu0 0
  %681 = vmatpush1.bf16.msra.mxu0 0
  %682 = vmatprep.subr.bf16.mxu0 0
  %683 = vmatpush1.bf16.msra.mxu0 0
  %684 = vmatprep.subr.bf16.mxu0 0
  %685 = vmatpush1.bf16.msra.mxu0 0
  %686 = vmatprep.subr.bf16.mxu0 0
  %687 = vmatpush1.bf16.msra.mxu0 0
  %688 = vmatprep.subr.bf16.mxu0 0
  %689 = vmatpush1.bf16.msra.mxu0 0
  %690 = vmatprep.subr.bf16.mxu0 0
  %691 = vmatpush1.bf16.msra.mxu0 0
  %692 = vmatprep.subr.bf16.mxu0 0
  %693 = vmatpush1.bf16.msra.mxu0 0
  %694 = vmatprep.subr.bf16.mxu0 0
  %695 = vmatpush1.bf16.msra.mxu0 0
  %696 = vmatprep.subr.bf16.mxu0 0
  %697 = vmatpush1.bf16.msra.mxu0 0
  %698 = vmatprep.subr.bf16.mxu0 0
  %699 = vmatpush1.bf16.msra.mxu0 0
  %700 = vmatprep.subr.bf16.mxu0 0
  %701 = vmatpush1.bf16.msra.mxu0 0
  %702 = vmatprep.subr.bf16.mxu0 0
  %703 = vmatpush1.bf16.msra.mxu0 0
  %704 = vmatprep.subr.bf16.mxu0 0
  %705 = vmatpush1.bf16.msra.mxu0 0
  %706 = vmatprep.mubr.bf16.mxu0 0
  %707 = vmatmul.mubr.bf16.gmra.mrb[0].mxu0 %v669
  %v708 = vpop.f32.mrb[0].mxu0
  %v709 = vadd.f32 0.0, %v708
  %v710 = vpop.f32.mrb[0].mxu0
  %v711 = vpop.f32.mrb[0].mxu0
  %v712 = vadd.f32 0.0, %v711
  %v713 = vpop.f32.mrb[0].mxu0
  %714 = vmatprep.mubr.bf16.mxu0 0
  %715 = vmatmul.mubr.bf16.gmra.mrb[0].mxu0 %v672
  %v716 = vpop.f32.mrb[0].mxu0
  %v717 = vadd.f32 0.0, %v716
  %v718 = vpop.f32.mrb[0].mxu0
  %v719 = vpop.f32.mrb[0].mxu0
  %v720 = vadd.f32 0.0, %v719
  %v721 = vpop.f32.mrb[0].mxu0
  %722 = vdwg.mxu0
  %v723 = vadd.f32 %v611, %v709
  %v724 = vadd.f32 %v612, %v712
  %v725 = vadd.f32 %v613, %v717
  %v726 = vadd.f32 %v614, %v720
  %v728 = vunpack.c.l.s4 1983009808
  %v729 = vunpack.c.0.s8 %v728
  %v730 = vlaneseq
  %v731 = vshrl.u32 %v730, 7
  %v732 = vsub.s32 %v729, %v731
  %v733 = vrot.slane %v55, %v732
  %v734 = vcombine.high %v733, %v733
  %v736 = vunpack.c.l.s4 1983009808
  %v737 = vunpack.c.0.s8 %v736
  %v738 = vlaneseq
  %v739 = vshrl.u32 %v738, 7
  %v740 = vsub.s32 %v737, %v739
  %v741 = vrot.slane %v61, %v740
  %v742 = vcombine.high %v741, %v741
  %v744 = vshrl.u32 %v733, 16
  %v746 = vrot.slane %v744, 6
  %v747 = vshll.u32 %v733, 16
  %v749 = vrot.slane %v747, 7
  %v750 = vor.u32 %v746, %v749
  %v751 = vrot.slane %v750, 2
  %v753 = vshll.u32 %v734, 16
  %v755 = vrot.slane %v753, 7
  %v756 = vsel %vm145, %v751, %v755
  %v758 = vshrl.u32 %v741, 16
  %v760 = vrot.slane %v758, 6
  %v761 = vshll.u32 %v741, 16
  %v763 = vrot.slane %v761, 7
  %v764 = vor.u32 %v760, %v763
  %v765 = vrot.slane %v764, 2
  %v767 = vshll.u32 %v742, 16
  %v769 = vrot.slane %v767, 7
  %v770 = vsel %vm145, %v765, %v769
  %s771 = scalar_lea.vmem %s1, 64
  %v772 = vld [vmem:[%s771] sm:$0xf]
  %v773 = vld [vmem:[%s771 + $0x4] sm:$0xf]
  %v774 = vld [vmem:[%s771 + $0x8] sm:$0xf]
  %v775 = vld [vmem:[%s771 + $0xc] sm:$0xf]
  %v776 = vcombine.low %v173, %v187
  %v777 = vcombine.low %v201, %v756
  %v779 = vunpack.c.l.s4 1983009808
  %v780 = vunpack.c.0.s8 %v779
  %v781 = vlaneseq
  %v782 = vshrl.u32 %v781, 7
  %v783 = vsub.s32 %v780, %v782
  %v784 = vrot.slane %v776, %v783
  %v786 = vunpack.c.l.s4 1983009808
  %v787 = vunpack.c.0.s8 %v786
  %v788 = vlaneseq
  %v789 = vshrl.u32 %v788, 7
  %v790 = vsub.s32 %v787, %v789
  %v791 = vrot.slane %v777, %v790
  %v792 = vcombine.low %v784, %v791
  %v793 = vcombine.low %v229, %v243
  %v794 = vcombine.low %v257, %v770
  %v796 = vunpack.c.l.s4 1983009808
  %v797 = vunpack.c.0.s8 %v796
  %v798 = vlaneseq
  %v799 = vshrl.u32 %v798, 7
  %v800 = vsub.s32 %v797, %v799
  %v801 = vrot.slane %v793, %v800
  %v803 = vunpack.c.l.s4 1983009808
  %v804 = vunpack.c.0.s8 %v803
  %v805 = vlaneseq
  %v806 = vshrl.u32 %v805, 7
  %v807 = vsub.s32 %v804, %v806
  %v808 = vrot.slane %v794, %v807
  %v809 = vcombine.low %v801, %v808
  %v814 = vunpack.c.l.b16 %v772
  %v815 = vunpack.c.l.b16 %v773
  %v816 = vunpack.c.l.b16 %v774
  %v817 = vunpack.c.l.b16 %v775
  %v818 = vpack.c.b16 %v815, %v814
  %v819 = vpack.c.b16 %v817, %v816
  %v823 = vsel %vm309, %v792, 0
  %v826 = vsel %vm309, %v809, 0
  %828 = vmatprep.subr.bf16.mxu0 0
  %829 = vmatpush1.bf16.msra.mxu0 %v818
  %830 = vmatprep.subr.bf16.mxu0 0
  %831 = vmatpush1.bf16.msra.mxu0 %v819
  %832 = vmatprep.subr.bf16.mxu0 0
  %833 = vmatpush1.bf16.msra.mxu0 0
  %834 = vmatprep.subr.bf16.mxu0 0
  %835 = vmatpush1.bf16.msra.mxu0 0
  %836 = vmatprep.subr.bf16.mxu0 0
  %837 = vmatpush1.bf16.msra.mxu0 0
  %838 = vmatprep.subr.bf16.mxu0 0
  %839 = vmatpush1.bf16.msra.mxu0 0
  %840 = vmatprep.subr.bf16.mxu0 0
  %841 = vmatpush1.bf16.msra.mxu0 0
  %842 = vmatprep.subr.bf16.mxu0 0
  %843 = vmatpush1.bf16.msra.mxu0 0
  %844 = vmatprep.subr.bf16.mxu0 0
  %845 = vmatpush1.bf16.msra.mxu0 0
  %846 = vmatprep.subr.bf16.mxu0 0
  %847 = vmatpush1.bf16.msra.mxu0 0
  %848 = vmatprep.subr.bf16.mxu0 0
  %849 = vmatpush1.bf16.msra.mxu0 0
  %850 = vmatprep.subr.bf16.mxu0 0
  %851 = vmatpush1.bf16.msra.mxu0 0
  %852 = vmatprep.subr.bf16.mxu0 0
  %853 = vmatpush1.bf16.msra.mxu0 0
  %854 = vmatprep.subr.bf16.mxu0 0
  %855 = vmatpush1.bf16.msra.mxu0 0
  %856 = vmatprep.subr.bf16.mxu0 0
  %857 = vmatpush1.bf16.msra.mxu0 0
  %858 = vmatprep.subr.bf16.mxu0 0
  %859 = vmatpush1.bf16.msra.mxu0 0
  %860 = vmatprep.mubr.bf16.mxu0 0
  %861 = vmatmul.mubr.bf16.gmra.mrb[0].mxu0 %v823
  %v862 = vpop.f32.mrb[0].mxu0
  %v863 = vadd.f32 0.0, %v862
  %v864 = vpop.f32.mrb[0].mxu0
  %v865 = vpop.f32.mrb[0].mxu0
  %v866 = vadd.f32 0.0, %v865
  %v867 = vpop.f32.mrb[0].mxu0
  %868 = vmatprep.mubr.bf16.mxu0 0
  %869 = vmatmul.mubr.bf16.gmra.mrb[0].mxu0 %v826
  %v870 = vpop.f32.mrb[0].mxu0
  %v871 = vadd.f32 0.0, %v870
  %v872 = vpop.f32.mrb[0].mxu0
  %v873 = vpop.f32.mrb[0].mxu0
  %v874 = vadd.f32 0.0, %v873
  %v875 = vpop.f32.mrb[0].mxu0
  %876 = vdwg.mxu0
  %v877 = vadd.f32 %v723, %v863
  %v878 = vadd.f32 %v724, %v866
  %v879 = vadd.f32 %v725, %v871
  %v880 = vadd.f32 %v726, %v874
  %v881 = vrot.slane %v733, 7
  %v882 = vrot.slane %v881, 2
  %v883 = vrot.slane %v734, 7
  %v884 = vsel %vm472, %v882, %v883
  %v885 = vrot.slane %v741, 7
  %v886 = vrot.slane %v885, 2
  %v887 = vrot.slane %v742, 7
  %v888 = vsel %vm472, %v886, %v887
  %s889 = scalar_lea.vmem %s1, 80
  %v890 = vld [vmem:[%s889] sm:$0xf]
  %v891 = vld [vmem:[%s889 + $0x4] sm:$0xf]
  %v892 = vld [vmem:[%s889 + $0x8] sm:$0xf]
  %v893 = vld [vmem:[%s889 + $0xc] sm:$0xf]
  %v894 = vcombine.low %v480, %v484
  %v895 = vcombine.low %v488, %v884
  %v897 = vunpack.c.l.s4 1983009808
  %v898 = vunpack.c.0.s8 %v897
  %v899 = vlaneseq
  %v900 = vshrl.u32 %v899, 7
  %v901 = vsub.s32 %v898, %v900
  %v902 = vrot.slane %v894, %v901
  %v904 = vunpack.c.l.s4 1983009808
  %v905 = vunpack.c.0.s8 %v904
  %v906 = vlaneseq
  %v907 = vshrl.u32 %v906, 7
  %v908 = vsub.s32 %v905, %v907
  %v909 = vrot.slane %v895, %v908
  %v910 = vcombine.low %v902, %v909
  %v911 = vcombine.low %v496, %v500
  %v912 = vcombine.low %v504, %v888
  %v914 = vunpack.c.l.s4 1983009808
  %v915 = vunpack.c.0.s8 %v914
  %v916 = vlaneseq
  %v917 = vshrl.u32 %v916, 7
  %v918 = vsub.s32 %v915, %v917
  %v919 = vrot.slane %v911, %v918
  %v921 = vunpack.c.l.s4 1983009808
  %v922 = vunpack.c.0.s8 %v921
  %v923 = vlaneseq
  %v924 = vshrl.u32 %v923, 7
  %v925 = vsub.s32 %v922, %v924
  %v926 = vrot.slane %v912, %v925
  %v927 = vcombine.low %v919, %v926
  %v932 = vunpack.c.l.b16 %v890
  %v933 = vunpack.c.l.b16 %v891
  %v934 = vunpack.c.l.b16 %v892
  %v935 = vunpack.c.l.b16 %v893
  %v936 = vpack.c.b16 %v933, %v932
  %v937 = vpack.c.b16 %v935, %v934
  %v941 = vsel %vm309, %v910, 0
  %v944 = vsel %vm309, %v927, 0
  %946 = vmatprep.subr.bf16.mxu0 0
  %947 = vmatpush1.bf16.msra.mxu0 %v936
  %948 = vmatprep.subr.bf16.mxu0 0
  %949 = vmatpush1.bf16.msra.mxu0 %v937
  %950 = vmatprep.subr.bf16.mxu0 0
  %951 = vmatpush1.bf16.msra.mxu0 0
  %952 = vmatprep.subr.bf16.mxu0 0
  %953 = vmatpush1.bf16.msra.mxu0 0
  %954 = vmatprep.subr.bf16.mxu0 0
  %955 = vmatpush1.bf16.msra.mxu0 0
  %956 = vmatprep.subr.bf16.mxu0 0
  %957 = vmatpush1.bf16.msra.mxu0 0
  %958 = vmatprep.subr.bf16.mxu0 0
  %959 = vmatpush1.bf16.msra.mxu0 0
  %960 = vmatprep.subr.bf16.mxu0 0
  %961 = vmatpush1.bf16.msra.mxu0 0
  %962 = vmatprep.subr.bf16.mxu0 0
  %963 = vmatpush1.bf16.msra.mxu0 0
  %964 = vmatprep.subr.bf16.mxu0 0
  %965 = vmatpush1.bf16.msra.mxu0 0
  %966 = vmatprep.subr.bf16.mxu0 0
  %967 = vmatpush1.bf16.msra.mxu0 0
  %968 = vmatprep.subr.bf16.mxu0 0
  %969 = vmatpush1.bf16.msra.mxu0 0
  %970 = vmatprep.subr.bf16.mxu0 0
  %971 = vmatpush1.bf16.msra.mxu0 0
  %972 = vmatprep.subr.bf16.mxu0 0
  %973 = vmatpush1.bf16.msra.mxu0 0
  %974 = vmatprep.subr.bf16.mxu0 0
  %975 = vmatpush1.bf16.msra.mxu0 0
  %976 = vmatprep.subr.bf16.mxu0 0
  %977 = vmatpush1.bf16.msra.mxu0 0
  %978 = vmatprep.mubr.bf16.mxu0 0
  %979 = vmatmul.mubr.bf16.gmra.mrb[0].mxu0 %v941
  %v980 = vpop.f32.mrb[0].mxu0
  %v981 = vadd.f32 0.0, %v980
  %v982 = vpop.f32.mrb[0].mxu0
  %v983 = vpop.f32.mrb[0].mxu0
  %v984 = vadd.f32 0.0, %v983
  %v985 = vpop.f32.mrb[0].mxu0
  %986 = vmatprep.mubr.bf16.mxu0 0
  %987 = vmatmul.mubr.bf16.gmra.mrb[0].mxu0 %v944
  %v988 = vpop.f32.mrb[0].mxu0
  %v989 = vadd.f32 0.0, %v988
  %v990 = vpop.f32.mrb[0].mxu0
  %v991 = vpop.f32.mrb[0].mxu0
  %v992 = vadd.f32 0.0, %v991
  %v993 = vpop.f32.mrb[0].mxu0
  %994 = vdwg.mxu0
  %v995 = vadd.f32 %v877, %v981
  %v996 = vadd.f32 %v878, %v984
  %v997 = vadd.f32 %v879, %v989
  %v998 = vadd.f32 %v880, %v992
  %s999 = scalar_lea.vmem %s1, 96
  %v1000 = vld [vmem:[%s999] sm:$0xf]
  %v1001 = vld [vmem:[%s999 + $0x4] sm:$0xf]
  %v1002 = vld [vmem:[%s999 + $0x8] sm:$0xf]
  %v1003 = vld [vmem:[%s999 + $0xc] sm:$0xf]
  %v1006 = vcombine.low %v55, %v56
  %v1008 = vunpack.c.l.s4 1983009808
  %v1009 = vunpack.c.0.s8 %v1008
  %v1010 = vlaneseq
  %v1011 = vshrl.u32 %v1010, 7
  %v1012 = vsub.s32 %v1009, %v1011
  %v1013 = vrot.slane %v1006, %v1012
  %v1014 = vcombine.low %v380, %v1013
  %v1015 = vcombine.low %v61, %v62
  %v1017 = vunpack.c.l.s4 1983009808
  %v1018 = vunpack.c.0.s8 %v1017
  %v1019 = vlaneseq
  %v1020 = vshrl.u32 %v1019, 7
  %v1021 = vsub.s32 %v1018, %v1020
  %v1022 = vrot.slane %v1015, %v1021
  %v1023 = vcombine.low %v397, %v1022
  %v1028 = vunpack.c.l.b16 %v1000
  %v1029 = vunpack.c.l.b16 %v1001
  %v1030 = vunpack.c.l.b16 %v1002
  %v1031 = vunpack.c.l.b16 %v1003
  %v1032 = vpack.c.b16 %v1029, %v1028
  %v1033 = vpack.c.b16 %v1031, %v1030
  %v1037 = vsel %vm309, %v1014, 0
  %v1040 = vsel %vm309, %v1023, 0
  %1042 = vmatprep.subr.bf16.mxu0 0
  %1043 = vmatpush1.bf16.msra.mxu0 %v1032
  %1044 = vmatprep.subr.bf16.mxu0 0
  %1045 = vmatpush1.bf16.msra.mxu0 %v1033
  %1046 = vmatprep.subr.bf16.mxu0 0
  %1047 = vmatpush1.bf16.msra.mxu0 0
  %1048 = vmatprep.subr.bf16.mxu0 0
  %1049 = vmatpush1.bf16.msra.mxu0 0
  %1050 = vmatprep.subr.bf16.mxu0 0
  %1051 = vmatpush1.bf16.msra.mxu0 0
  %1052 = vmatprep.subr.bf16.mxu0 0
  %1053 = vmatpush1.bf16.msra.mxu0 0
  %1054 = vmatprep.subr.bf16.mxu0 0
  %1055 = vmatpush1.bf16.msra.mxu0 0
  %1056 = vmatprep.subr.bf16.mxu0 0
  %1057 = vmatpush1.bf16.msra.mxu0 0
  %1058 = vmatprep.subr.bf16.mxu0 0
  %1059 = vmatpush1.bf16.msra.mxu0 0
  %1060 = vmatprep.subr.bf16.mxu0 0
  %1061 = vmatpush1.bf16.msra.mxu0 0
  %1062 = vmatprep.subr.bf16.mxu0 0
  %1063 = vmatpush1.bf16.msra.mxu0 0
  %1064 = vmatprep.subr.bf16.mxu0 0
  %1065 = vmatpush1.bf16.msra.mxu0 0
  %1066 = vmatprep.subr.bf16.mxu0 0
  %1067 = vmatpush1.bf16.msra.mxu0 0
  %1068 = vmatprep.subr.bf16.mxu0 0
  %1069 = vmatpush1.bf16.msra.mxu0 0
  %1070 = vmatprep.subr.bf16.mxu0 0
  %1071 = vmatpush1.bf16.msra.mxu0 0
  %1072 = vmatprep.subr.bf16.mxu0 0
  %1073 = vmatpush1.bf16.msra.mxu0 0
  %1074 = vmatprep.mubr.bf16.mxu0 0
  %1075 = vmatmul.mubr.bf16.gmra.mrb[0].mxu0 %v1037
  %v1076 = vpop.f32.mrb[0].mxu0
  %v1077 = vadd.f32 0.0, %v1076
  %v1078 = vpop.f32.mrb[0].mxu0
  %v1079 = vpop.f32.mrb[0].mxu0
  %v1080 = vadd.f32 0.0, %v1079
  %v1081 = vpop.f32.mrb[0].mxu0
  %1082 = vmatprep.mubr.bf16.mxu0 0
  %1083 = vmatmul.mubr.bf16.gmra.mrb[0].mxu0 %v1040
  %v1084 = vpop.f32.mrb[0].mxu0
  %v1085 = vadd.f32 0.0, %v1084
  %v1086 = vpop.f32.mrb[0].mxu0
  %v1087 = vpop.f32.mrb[0].mxu0
  %v1088 = vadd.f32 0.0, %v1087
  %v1089 = vpop.f32.mrb[0].mxu0
  %1090 = vdwg.mxu0
  %v1091 = vadd.f32 %v995, %v1077
  %v1092 = vadd.f32 %v996, %v1080
  %v1093 = vadd.f32 %v997, %v1085
  %v1094 = vadd.f32 %v998, %v1088
  %v1096 = vunpack.c.l.s4 1983009808
  %v1097 = vunpack.c.0.s8 %v1096
  %v1098 = vlaneseq
  %v1099 = vshrl.u32 %v1098, 7
  %v1100 = vsub.s32 %v1097, %v1099
  %v1101 = vrot.slane %v56, %v1100
  %v1102 = vcombine.high %v1101, %v1101
  %v1104 = vunpack.c.l.s4 1983009808
  %v1105 = vunpack.c.0.s8 %v1104
  %v1106 = vlaneseq
  %v1107 = vshrl.u32 %v1106, 7
  %v1108 = vsub.s32 %v1105, %v1107
  %v1109 = vrot.slane %v62, %v1108
  %v1110 = vcombine.high %v1109, %v1109
  %v1112 = vshrl.u32 %v1101, 16
  %v1114 = vrot.slane %v1112, 6
  %v1115 = vshll.u32 %v1101, 16
  %v1117 = vrot.slane %v1115, 7
  %v1118 = vor.u32 %v1114, %v1117
  %v1119 = vrot.slane %v1118, 2
  %v1121 = vshll.u32 %v1102, 16
  %v1123 = vrot.slane %v1121, 7
  %v1124 = vsel %vm145, %v1119, %v1123
  %v1126 = vshrl.u32 %v1109, 16
  %v1128 = vrot.slane %v1126, 6
  %v1129 = vshll.u32 %v1109, 16
  %v1131 = vrot.slane %v1129, 7
  %v1132 = vor.u32 %v1128, %v1131
  %v1133 = vrot.slane %v1132, 2
  %v1135 = vshll.u32 %v1110, 16
  %v1137 = vrot.slane %v1135, 7
  %v1138 = vsel %vm145, %v1133, %v1137
  %s1139 = scalar_lea.vmem %s1, 112
  %v1140 = vld [vmem:[%s1139] sm:$0xf]
  %v1141 = vld [vmem:[%s1139 + $0x4] sm:$0xf]
  %v1142 = vld [vmem:[%s1139 + $0x8] sm:$0xf]
  %v1143 = vld [vmem:[%s1139 + $0xc] sm:$0xf]
  %v1144 = vcombine.low %v756, %v1124
  %v1146 = vunpack.c.l.s4 1983009808
  %v1147 = vunpack.c.0.s8 %v1146
  %v1148 = vlaneseq
  %v1149 = vshrl.u32 %v1148, 7
  %v1150 = vsub.s32 %v1147, %v1149
  %v1151 = vrot.slane %v1144, %v1150
  %v1152 = vcombine.low %v278, %v1151
  %v1153 = vcombine.low %v770, %v1138
  %v1155 = vunpack.c.l.s4 1983009808
  %v1156 = vunpack.c.0.s8 %v1155
  %v1157 = vlaneseq
  %v1158 = vshrl.u32 %v1157, 7
  %v1159 = vsub.s32 %v1156, %v1158
  %v1160 = vrot.slane %v1153, %v1159
  %v1161 = vcombine.low %v295, %v1160
  %v1166 = vunpack.c.l.b16 %v1140
  %v1167 = vunpack.c.l.b16 %v1141
  %v1168 = vunpack.c.l.b16 %v1142
  %v1169 = vunpack.c.l.b16 %v1143
  %v1170 = vpack.c.b16 %v1167, %v1166
  %v1171 = vpack.c.b16 %v1169, %v1168
  %v1175 = vsel %vm309, %v1152, 0
  %v1178 = vsel %vm309, %v1161, 0
  %1180 = vmatprep.subr.bf16.mxu0 0
  %1181 = vmatpush1.bf16.msra.mxu0 %v1170
  %1182 = vmatprep.subr.bf16.mxu0 0
  %1183 = vmatpush1.bf16.msra.mxu0 %v1171
  %1184 = vmatprep.subr.bf16.mxu0 0
  %1185 = vmatpush1.bf16.msra.mxu0 0
  %1186 = vmatprep.subr.bf16.mxu0 0
  %1187 = vmatpush1.bf16.msra.mxu0 0
  %1188 = vmatprep.subr.bf16.mxu0 0
  %1189 = vmatpush1.bf16.msra.mxu0 0
  %1190 = vmatprep.subr.bf16.mxu0 0
  %1191 = vmatpush1.bf16.msra.mxu0 0
  %1192 = vmatprep.subr.bf16.mxu0 0
  %1193 = vmatpush1.bf16.msra.mxu0 0
  %1194 = vmatprep.subr.bf16.mxu0 0
  %1195 = vmatpush1.bf16.msra.mxu0 0
  %1196 = vmatprep.subr.bf16.mxu0 0
  %1197 = vmatpush1.bf16.msra.mxu0 0
  %1198 = vmatprep.subr.bf16.mxu0 0
  %1199 = vmatpush1.bf16.msra.mxu0 0
  %1200 = vmatprep.subr.bf16.mxu0 0
  %1201 = vmatpush1.bf16.msra.mxu0 0
  %1202 = vmatprep.subr.bf16.mxu0 0
  %1203 = vmatpush1.bf16.msra.mxu0 0
  %1204 = vmatprep.subr.bf16.mxu0 0
  %1205 = vmatpush1.bf16.msra.mxu0 0
  %1206 = vmatprep.subr.bf16.mxu0 0
  %1207 = vmatpush1.bf16.msra.mxu0 0
  %1208 = vmatprep.subr.bf16.mxu0 0
  %1209 = vmatpush1.bf16.msra.mxu0 0
  %1210 = vmatprep.subr.bf16.mxu0 0
  %1211 = vmatpush1.bf16.msra.mxu0 0
  %1212 = vmatprep.mubr.bf16.mxu0 0
  %1213 = vmatmul.mubr.bf16.gmra.mrb[0].mxu0 %v1175
  %v1214 = vpop.f32.mrb[0].mxu0
  %v1215 = vadd.f32 0.0, %v1214
  %v1216 = vpop.f32.mrb[0].mxu0
  %v1217 = vpop.f32.mrb[0].mxu0
  %v1218 = vadd.f32 0.0, %v1217
  %v1219 = vpop.f32.mrb[0].mxu0
  %1220 = vmatprep.mubr.bf16.mxu0 0
  %1221 = vmatmul.mubr.bf16.gmra.mrb[0].mxu0 %v1178
  %v1222 = vpop.f32.mrb[0].mxu0
  %v1223 = vadd.f32 0.0, %v1222
  %v1224 = vpop.f32.mrb[0].mxu0
  %v1225 = vpop.f32.mrb[0].mxu0
  %v1226 = vadd.f32 0.0, %v1225
  %v1227 = vpop.f32.mrb[0].mxu0
  %1228 = vdwg.mxu0
  %v1229 = vadd.f32 %v1091, %v1215
  %v1230 = vadd.f32 %v1092, %v1218
  %v1231 = vadd.f32 %v1093, %v1223
  %v1232 = vadd.f32 %v1094, %v1226
  %v1233 = vrot.slane %v1101, 7
  %v1234 = vrot.slane %v1233, 2
  %v1235 = vrot.slane %v1102, 7
  %v1236 = vsel %vm472, %v1234, %v1235
  %v1237 = vrot.slane %v1109, 7
  %v1238 = vrot.slane %v1237, 2
  %v1239 = vrot.slane %v1110, 7
  %v1240 = vsel %vm472, %v1238, %v1239
  %s1241 = scalar_lea.vmem %s1, 128
  %v1242 = vld [vmem:[%s1241] sm:$0xf]
  %v1243 = vld [vmem:[%s1241 + $0x4] sm:$0xf]
  %v1244 = vld [vmem:[%s1241 + $0x8] sm:$0xf]
  %v1245 = vld [vmem:[%s1241 + $0xc] sm:$0xf]
  %v1246 = vcombine.low %v884, %v1236
  %v1248 = vunpack.c.l.s4 1983009808
  %v1249 = vunpack.c.0.s8 %v1248
  %v1250 = vlaneseq
  %v1251 = vshrl.u32 %v1250, 7
  %v1252 = vsub.s32 %v1249, %v1251
  %v1253 = vrot.slane %v1246, %v1252
  %v1254 = vcombine.low %v525, %v1253
  %v1255 = vcombine.low %v888, %v1240
  %v1257 = vunpack.c.l.s4 1983009808
  %v1258 = vunpack.c.0.s8 %v1257
  %v1259 = vlaneseq
  %v1260 = vshrl.u32 %v1259, 7
  %v1261 = vsub.s32 %v1258, %v1260
  %v1262 = vrot.slane %v1255, %v1261
  %v1263 = vcombine.low %v542, %v1262
  %v1268 = vunpack.c.l.b16 %v1242
  %v1269 = vunpack.c.l.b16 %v1243
  %v1270 = vunpack.c.l.b16 %v1244
  %v1271 = vunpack.c.l.b16 %v1245
  %v1272 = vpack.c.b16 %v1269, %v1268
  %v1273 = vpack.c.b16 %v1271, %v1270
  %v1277 = vsel %vm309, %v1254, 0
  %v1280 = vsel %vm309, %v1263, 0
  %1282 = vmatprep.subr.bf16.mxu0 0
  %1283 = vmatpush1.bf16.msra.mxu0 %v1272
  %1284 = vmatprep.subr.bf16.mxu0 0
  %1285 = vmatpush1.bf16.msra.mxu0 %v1273
  %1286 = vmatprep.subr.bf16.mxu0 0
  %1287 = vmatpush1.bf16.msra.mxu0 0
  %1288 = vmatprep.subr.bf16.mxu0 0
  %1289 = vmatpush1.bf16.msra.mxu0 0
  %1290 = vmatprep.subr.bf16.mxu0 0
  %1291 = vmatpush1.bf16.msra.mxu0 0
  %1292 = vmatprep.subr.bf16.mxu0 0
  %1293 = vmatpush1.bf16.msra.mxu0 0
  %1294 = vmatprep.subr.bf16.mxu0 0
  %1295 = vmatpush1.bf16.msra.mxu0 0
  %1296 = vmatprep.subr.bf16.mxu0 0
  %1297 = vmatpush1.bf16.msra.mxu0 0
  %1298 = vmatprep.subr.bf16.mxu0 0
  %1299 = vmatpush1.bf16.msra.mxu0 0
  %1300 = vmatprep.subr.bf16.mxu0 0
  %1301 = vmatpush1.bf16.msra.mxu0 0
  %1302 = vmatprep.subr.bf16.mxu0 0
  %1303 = vmatpush1.bf16.msra.mxu0 0
  %1304 = vmatprep.subr.bf16.mxu0 0
  %1305 = vmatpush1.bf16.msra.mxu0 0
  %1306 = vmatprep.subr.bf16.mxu0 0
  %1307 = vmatpush1.bf16.msra.mxu0 0
  %1308 = vmatprep.subr.bf16.mxu0 0
  %1309 = vmatpush1.bf16.msra.mxu0 0
  %1310 = vmatprep.subr.bf16.mxu0 0
  %1311 = vmatpush1.bf16.msra.mxu0 0
  %1312 = vmatprep.subr.bf16.mxu0 0
  %1313 = vmatpush1.bf16.msra.mxu0 0
  %1314 = vmatprep.mubr.bf16.mxu0 0
  %1315 = vmatmul.mubr.bf16.gmra.mrb[0].mxu0 %v1277
  %v1316 = vpop.f32.mrb[0].mxu0
  %v1317 = vadd.f32 0.0, %v1316
  %v1318 = vpop.f32.mrb[0].mxu0
  %v1319 = vpop.f32.mrb[0].mxu0
  %v1320 = vadd.f32 0.0, %v1319
  %v1321 = vpop.f32.mrb[0].mxu0
  %1322 = vmatprep.mubr.bf16.mxu0 0
  %1323 = vmatmul.mubr.bf16.gmra.mrb[0].mxu0 %v1280
  %v1324 = vpop.f32.mrb[0].mxu0
  %v1325 = vadd.f32 0.0, %v1324
  %v1326 = vpop.f32.mrb[0].mxu0
  %v1327 = vpop.f32.mrb[0].mxu0
  %v1328 = vadd.f32 0.0, %v1327
  %v1329 = vpop.f32.mrb[0].mxu0
  %1330 = vdwg.mxu0
  %v1331 = vadd.f32 %v1229, %v1317
  %v1332 = vadd.f32 %v1230, %v1320
  %v1333 = vadd.f32 %v1231, %v1325
  %v1334 = vadd.f32 %v1232, %v1328
  %v1335 = vld [vmem:[%s2] sm:$0x1]
  %v1337 = vlaneseq
  %v1338 = vshrl.u32 %v1337, 7
  %v1339 = vsub.s32 0, %v1338
  %v1340 = vrot.slane %v1335, %v1339
  %v1342 = vadd.f32 %v1331, %v1340
  %v1343 = vadd.f32 %v1332, %v1340
  %v1344 = vadd.f32 %v1333, %v1340
  %v1345 = vadd.f32 %v1334, %v1340
  %v1346 = vmax.f32 %v1342, 0.0
  %v1347 = vmax.f32 %v1343, 0.0
  %v1348 = vmax.f32 %v1344, 0.0
  %v1349 = vmax.f32 %v1345, 0.0
  %v1354 = vcombine.high %v1346, %v1346
  %v1355 = vcombine.high %v1347, %v1347
  %v1356 = vcombine.high %v1348, %v1348
  %v1357 = vcombine.high %v1349, %v1349
  %v1362 = vpack.c.bf16 %v1346, %v1346
  %v1363 = vpack.c.bf16 %v1354, %v1354
  %v1364 = vpack.c.bf16 %v1347, %v1347
  %v1365 = vpack.c.bf16 %v1355, %v1355
  %v1366 = vpack.c.bf16 %v1348, %v1348
  %v1367 = vpack.c.bf16 %v1356, %v1356
  %v1368 = vpack.c.bf16 %v1349, %v1349
  %v1369 = vpack.c.bf16 %v1357, %v1357
  %vm1370 = vcmask 254976
  %1371 = vst.msk [vmem:[%s3] sm:$0x3] %vm1370, %v1362
  %1372 = vst.msk [vmem:[%s3 + $0x2] sm:$0x3] %vm1370, %v1363
  %1373 = vst.msk [vmem:[%s3 + $0x4] sm:$0x3] %vm1370, %v1364
  %1374 = vst.msk [vmem:[%s3 + $0x6] sm:$0x3] %vm1370, %v1365
  %1375 = vst.msk [vmem:[%s3 + $0x8] sm:$0x3] %vm1370, %v1366
  %1376 = vst.msk [vmem:[%s3 + $0xa] sm:$0x3] %vm1370, %v1367
  %1377 = vst.msk [vmem:[%s3 + $0xc] sm:$0x3] %vm1370, %v1368
  %1378 = vst.msk [vmem:[%s3 + $0xe] sm:$0x3] %vm1370, %v1369
  // Predicated region
  $region14: #{encoder_forward.12} parent=0 // pred_check
    _
  $region15: #{encoder_forward.12} parent=0 // pred_check_branch
    %1380 = sbr.rel (0) target = $region17
  $region16: #{encoder_forward.12} parent=0 // pred_region
    _
  $region17: #{encoder_forward.12} parent=0 // pred_fallthru
    _
  // Predicated region
  $region18: #{encoder_forward.12} parent=0 // pred_check
    _
  $region19: #{encoder_forward.12} parent=0 // pred_check_branch
    %1382 = sbr.rel (0) target = $region21
  $region20: #{encoder_forward.12} parent=0 // pred_region
    _
  $region21: #{encoder_forward.12} parent=0 // pred_fallthru
    _

</llo_original>
